<compile_context>
chip_gen: v5e
topology: v5e:2x2
jax: 0.10.0
libtpu: 0.0.40
codegen_flags: <defaults>
</compile_context>

<pallas_src>
import functools

import jax
import jax.numpy as jnp
from jax import lax
from jax.experimental import pallas as pl
from jax.experimental.pallas import tpu as pltpu

K = 7          # depthwise kernel size
PAD = 3        # spatial padding
SUB = 8        # sublane granule
LANE = 128     # lane granule
EPS = 1e-6     # LayerNorm2d epsilon
INV_SQRT2 = 0.7071067811865476


def _round_up(n, m):
    return (n + m - 1) // m * m


# ----------------------------------------------------------------------------
# One-off host-side probes (roll convention, VMEM capacity)
# ----------------------------------------------------------------------------
_ROLL_MODE_CACHE = None


def _probe_roll_mode():
    """Detect pltpu.roll's rotation convention with a tiny one-off kernel.

    Returns "np"   : pltpu.roll matches np.roll (result[i] = x[i - shift]),
            "flip" : opposite rotation direction,
            "slice": roll unusable -> fall back to (correct) strided slices.
    """
    global _ROLL_MODE_CACHE
    if _ROLL_MODE_CACHE is not None:
        return _ROLL_MODE_CACHE
    try:
        def probe_kernel(x_ref, o_ref):
            o_ref[...] = pltpu.roll(x_ref[...], 1, axis=1)

        rows = jnp.arange(24, dtype=jnp.float32).reshape(1, 24, 1)
        x = jnp.broadcast_to(rows, (2, 24, 128))
        y = pl.pallas_call(
            probe_kernel,
            out_shape=jax.ShapeDtypeStruct((2, 24, 128), jnp.float32),
        )(x)
        v = float(jax.device_get(y)[0, 0, 0])
        if v == 23.0:
            _ROLL_MODE_CACHE = "np"
        elif v == 1.0:
            _ROLL_MODE_CACHE = "flip"
        else:
            _ROLL_MODE_CACHE = "slice"
    except Exception:
        _ROLL_MODE_CACHE = "slice"
    return _ROLL_MODE_CACHE


def _vmem_capacity_bytes():
    try:
        return int(pltpu.get_tpu_info().vmem_capacity_bytes)
    except Exception:
        return 64 * 1024 * 1024        # conservative: v7x per-TensorCore VMEM


# ----------------------------------------------------------------------------
# Kernel
# ----------------------------------------------------------------------------
def convnext_block_kernel(x_hbm, wdw_ref, bdw_ref, gamma_ref, beta_ref,
                          w1_ref, b1_ref, w2_ref, b2_ref, scale_ref,
                          o_ref, xbuf, sem, *, channels, roll_mode):
    # x_hbm : (B, H+6, Ws, Cp) padded NHWC input, resident in HBM (pl.ANY)
    # o_ref : (1, TH, Wk, Cp)  output tile (Wk % 8 == 0, Cp % 128 == 0)
    # xbuf  : (2, TH+6, Ws, Cp) double-buffered halo slab (VMEM scratch)
    # sem   : (2,)             DMA completion semaphores
    b = pl.program_id(0)
    i = pl.program_id(1)
    n_i = pl.num_programs(1)

    _, TH, Wk, Cp = o_ref.shape
    THp = TH + 2 * PAD
    Ws = xbuf.shape[2]
    slot = i % 2

    def slab_copy(row_block, s):
        return pltpu.make_async_copy(
            x_hbm.at[b, pl.ds(row_block * TH, THp)],
            xbuf.at[s],
            sem.at[s])

    # Prime the pipeline at the first tile of every image (condition only
    # depends on the inner grid index -> safe under a megacore batch split).
    @pl.when(i == 0)
    def _():
        slab_copy(0, slot).start()

    # Wait for the current tile's slab ...
    slab_copy(i, slot).wait()

    # ... and immediately prefetch the next tile of this image (other slot).
    @pl.when(i + 1 < n_i)
    def _():
        slab_copy(i + 1, 1 - slot).start()
    # TODO(synk): extend the prefetch chain across image boundaries once the
    # batch axis is made sequential (needs a matching wait for the last start).

    cur = xbuf.at[slot]                        # (THp, Ws, Cp) view

    # ---- depthwise 7x7 conv -------------------------------------------------
    slab = cur[...].astype(jnp.float32)        # cast the halo slab to f32 once
    w_dw = wdw_ref[...].astype(jnp.float32)    # (7, 7, Cp), cast hoisted

    def shift_w(kw):
        """(THp, Wk, Cp) view of `slab` shifted left by kw columns."""
        if kw == 0:
            return slab[:, :Wk, :]                              # aligned
        if roll_mode == "np":      # np.roll convention: roll by -kw (mod Ws)
            return pltpu.roll(slab, Ws - kw, axis=1)[:, :Wk, :]
        if roll_mode == "flip":    # opposite rotation convention
            return pltpu.roll(slab, kw, axis=1)[:, :Wk, :]
        return slab[:, kw:kw + Wk, :]          # fallback: misaligned slice

    acc = jnp.zeros((TH, Wk, Cp), jnp.float32)
    res = None
    # TODO(synk): on v6e/v7x this 49-tap MAC could use packed-bf16 VPU operands
    # (with f32 accumulation) for ~1.5x; kept f32 here (v5e has no bf16 VALUs).
    for kw in range(K):
        col = shift_w(kw)                      # (THp, Wk, Cp)
        if kw == PAD:
            # residual = original input at the output pixels (no extra slice)
            res = col[PAD:PAD + TH, :, :]
        wk = w_dw[:, kw, :]                    # (7, Cp)
        for kh in range(K):                    # row shifts (major axis): cheap
            acc = acc + col[kh:kh + TH, :, :] * wk[kh]
    acc = acc + bdw_ref[0].astype(jnp.float32)

    # ---- LayerNorm over the (real) channel axis -----------------------------
    inv_c = 1.0 / channels
    if channels != Cp:                         # defensively mask padded lanes
        lane = lax.broadcasted_iota(jnp.int32, (1, 1, Cp), 2)
        mask = lane < channels
        acc = jnp.where(mask, acc, 0.0)
    u = jnp.sum(acc, axis=-1, keepdims=True) * inv_c
    d = acc - u
    if channels != Cp:
        d = jnp.where(mask, d, 0.0)
    s = jnp.sum(d * d, axis=-1, keepdims=True) * inv_c
    norm = d * lax.rsqrt(s + EPS)
    norm = norm * gamma_ref[0].astype(jnp.float32) \
        + beta_ref[0].astype(jnp.float32)

    # ---- 1x1 conv (C -> 4C): bf16 MXU operands, f32 accumulation ------------
    # Wk % 8 == 0 and Cp % 128 == 0 -> this reshape is a layout no-op.
    h = jnp.dot(norm.reshape(TH * Wk, Cp).astype(jnp.bfloat16), w1_ref[...],
                preferred_element_type=jnp.float32)
    h = h + b1_ref[0].astype(jnp.float32)
    h = 0.5 * h * (1.0 + lax.erf(h * INV_SQRT2))         # exact (erf) GELU
    # TODO(synk): on v6e/v7x the bias-add + GELU could run in bf16 (it feeds a
    # bf16 matmul anyway); kept f32 for numerical headroom and v5e.

    # ---- 1x1 conv (4C -> C) + per-channel scale + residual ------------------
    out = jnp.dot(h.astype(jnp.bfloat16), w2_ref[...],
                  preferred_element_type=jnp.float32)
    out = (out + b2_ref[0].astype(jnp.float32)) * scale_ref[0].astype(jnp.float32)
    o_ref[0] = (out.reshape(TH, Wk, Cp) + res).astype(o_ref.dtype)


# ----------------------------------------------------------------------------
# VMEM footprint model & tile selection (generation aware)
# ----------------------------------------------------------------------------
def _const_footprint_bytes(cp, c4p):
    """Resident constant operands (double-buffered by the default pipeline)."""
    per = (7 * 8 * cp * 4                     # depthwise weight (7,7,Cp)
           + 5 * 8 * cp * 4                   # bdw, gamma, beta, b2, scale
           + 8 * c4p * 4                      # b1
           + cp * c4p * 2 + c4p * cp * 2)     # w1, w2 (bf16)
    # TODO(synk): pipeline_mode=pl.Buffered(1) on these constant BlockSpecs
    # would halve this once single-buffered constants are supported here.
    return 2 * per


def _tile_footprint_bytes(th, ws, wk, cp, c4p, in_bytes, out_bytes):
    thp = th + 2 * PAD
    slab_dma = 2 * thp * ws * cp * in_bytes   # double-buffered halo slab
    slab_f32 = thp * ws * cp * 4              # f32 cast of the slab
    shifted = 2 * thp * ws * cp * 4           # transient rolled copies
    ln = 3 * th * wk * cp * 4                 # acc / d / norm
    hidden = th * wk * c4p * 6                # f32 h + bf16 copy
    out_val = th * wk * cp * 6                # out f32 + norm bf16 copy
    out_dma = 2 * th * wk * cp * out_bytes    # double-buffered output window
    return slab_dma + slab_f32 + shifted + ln + hidden + out_val + out_dma


def _pick_tile_h(H, ws, wk, cp, c4p, in_bytes, out_bytes, budget_bytes):
    """Largest divisor of H whose per-tile VMEM footprint fits the budget."""
    best = 1
    for th in range(1, H + 1):
        if H % th:
            continue
        if _tile_footprint_bytes(th, ws, wk, cp, c4p,
                                 in_bytes, out_bytes) <= budget_bytes:
            best = th
    return best


# ----------------------------------------------------------------------------
# Wrapper
# ----------------------------------------------------------------------------
@functools.partial(jax.jit,
                   static_argnames=("tile_h", "roll_mode", "vmem_limit"))
def _convnext_block_impl(x_nchw, wdw, bdw, gamma, beta, w1, b1, w2, b2, scale,
                         *, tile_h, roll_mode, vmem_limit):
    B, C, H, W = x_nchw.shape
    C4 = 4 * C
    Cp = _round_up(C, LANE)
    C4p = _round_up(C4, LANE)
    Wk = _round_up(W, SUB)                      # kernel output width
    Ws = _round_up(Wk + 2 * PAD, SUB)           # slab width (= Wk + 8)

    # NCHW -> NHWC, zero-pad spatial halo, width and channels.
    # TODO(synk): in a full network keep activations NHWC / channel-padded
    # end-to-end so this transpose+pad glue is amortised across blocks.
    x = jnp.transpose(x_nchw, (0, 2, 3, 1))
    x = jnp.pad(x, ((0, 0), (PAD, PAD), (PAD, Ws - W - PAD), (0, Cp - C)))

    wdw_p = jnp.pad(wdw, ((0, 0), (0, 0), (0, Cp - C)))
    bdw_p = jnp.pad(bdw, (0, Cp - C)).reshape(1, Cp)
    gamma_p = jnp.pad(gamma, (0, Cp - C)).reshape(1, Cp)
    beta_p = jnp.pad(beta, (0, Cp - C)).reshape(1, Cp)
    b1_p = jnp.pad(b1, (0, C4p - C4)).reshape(1, C4p)
    b2_p = jnp.pad(b2, (0, Cp - C)).reshape(1, Cp)
    scale_p = jnp.pad(scale, (0, Cp - C)).reshape(1, Cp)
    # MXU operands pre-cast to bf16 (f32 accumulation inside the kernel).
    w1_p = jnp.pad(w1, ((0, Cp - C), (0, C4p - C4))).astype(jnp.bfloat16)
    w2_p = jnp.pad(w2, ((0, C4p - C4), (0, Cp - C))).astype(jnp.bfloat16)

    n_th = H // tile_h

    out = pl.pallas_call(
        functools.partial(convnext_block_kernel, channels=C,
                          roll_mode=roll_mode),
        out_shape=jax.ShapeDtypeStruct((B, H, Wk, Cp), x_nchw.dtype),
        grid_spec=pltpu.PrefetchScalarGridSpec(
            num_scalar_prefetch=0,
            grid=(B, n_th),
            in_specs=[
                pl.BlockSpec(memory_space=pl.ANY),               # padded image
                pl.BlockSpec((K, K, Cp), lambda b, i: (0, 0, 0)),
                pl.BlockSpec((1, Cp), lambda b, i: (0, 0)),
                pl.BlockSpec((1, Cp), lambda b, i: (0, 0)),
                pl.BlockSpec((1, Cp), lambda b, i: (0, 0)),
                pl.BlockSpec((Cp, C4p), lambda b, i: (0, 0)),
                pl.BlockSpec((1, C4p), lambda b, i: (0, 0)),
                pl.BlockSpec((C4p, Cp), lambda b, i: (0, 0)),
                pl.BlockSpec((1, Cp), lambda b, i: (0, 0)),
                pl.BlockSpec((1, Cp), lambda b, i: (0, 0)),
            ],
            out_specs=pl.BlockSpec((1, tile_h, Wk, Cp),
                                   lambda b, i: (b, i, 0, 0)),
            scratch_shapes=[
                pltpu.VMEM((2, tile_h + 2 * PAD, Ws, Cp), x_nchw.dtype),
                pltpu.SemaphoreType.DMA((2,)),
            ],
        ),
        compiler_params=pltpu.CompilerParams(
            dimension_semantics=("parallel", "arbitrary"),
            vmem_limit_bytes=vmem_limit,
        ),
    )(x, wdw_p, bdw_p, gamma_p, beta_p, w1_p, b1_p, w2_p, b2_p, scale_p)

    # drop width/channel padding, NHWC -> NCHW
    return jnp.transpose(out[:, :, :W, :C], (0, 3, 1, 2))


def convnext_block(x_nchw, wdw, bdw, gamma, beta, w1, b1, w2, b2, scale,
                   tile_h=None):
    """x_nchw: (B, C, H, W) like the PyTorch module.  Returns (B, C, H, W)."""
    B, C, H, W = x_nchw.shape
    C4 = 4 * C
    Cp = _round_up(C, LANE)
    C4p = _round_up(C4, LANE)
    Wk = _round_up(W, SUB)
    Ws = _round_up(Wk + 2 * PAD, SUB)
    in_bytes = x_nchw.dtype.itemsize
    out_bytes = in_bytes

    roll_mode = _probe_roll_mode()

    # Generation-aware VMEM budget (64 MiB/TC on v7x, 128 MiB on v5e/v6e).
    cap = _vmem_capacity_bytes()
    vmem_limit = min(max((cap * 5) // 8, 32 * 1024 * 1024), 100 * 1024 * 1024)
    budget = max(vmem_limit - _const_footprint_bytes(Cp, C4p) - (6 << 20),
                 4 << 20)

    if tile_h is None:
        tile_h = _pick_tile_h(H, Ws, Wk, Cp, C4p, in_bytes, out_bytes, budget)
    assert H % tile_h == 0, "tile_h must divide H"

    # TODO(synk): for v7x with B == 1, add an outer parallel axis that splits
    # the H tiles between the two TensorCores (each half with its own prefetch
    # chain) so neither core idles.
    return _convnext_block_impl(x_nchw, wdw, bdw, gamma, beta,
                                w1, b1, w2, b2, scale,
                                tile_h=int(tile_h), roll_mode=roll_mode,
                                vmem_limit=int(vmem_limit))


# ----------------------------------------------------------------------------
# Pure-JAX reference & self-test
# ----------------------------------------------------------------------------
def ref_forward(x_nchw, wdw, bdw, gamma, beta, w1, b1, w2, b2, scale):
    """Pure-JAX (f32) reference matching the PyTorch module (eval mode)."""
    B, C, H, W = x_nchw.shape
    w = jnp.transpose(wdw, (2, 0, 1))[:, None, :, :]
    out = lax.conv_general_dilated(
        x_nchw, w, window_strides=(1, 1), padding=[(PAD, PAD), (PAD, PAD)],
        feature_group_count=C, dimension_numbers=("NCHW", "OIHW", "NCHW"))
    out = out + bdw[None, :, None, None]
    u = out.mean(1, keepdims=True)
    s = ((out - u) ** 2).mean(1, keepdims=True)
    out = (out - u) / jnp.sqrt(s + EPS)
    out = out * gamma[None, :, None, None] + beta[None, :, None, None]
    h = jnp.einsum('bchw,cd->bdhw', out, w1) + b1[None, :, None, None]
    h = 0.5 * h * (1.0 + lax.erf(h * INV_SQRT2))
    out = jnp.einsum('bdhw,dc->bchw', h, w2) + b2[None, :, None, None]
    out = out * scale[None, :, None, None]
    return x_nchw + out


if __name__ == "__main__":
    B, C, H, W = 2, 4, 16, 16
    C4 = 4 * C
    init_scale = 0.1  # learnable per-channel scale (module default 1e-6)

    key = jax.random.PRNGKey(0)
    ks = jax.random.split(key, 10)
    x = jax.random.normal(ks[0], (B, C, H, W), jnp.float32)

    wdw = jax.random.normal(ks[1], (K, K, C), jnp.float32) * 0.1   # dw weight
    bdw = jax.random.normal(ks[2], (C,), jnp.float32) * 0.1        # dw bias
    gamma = 1.0 + 0.05 * jax.random.normal(ks[7], (C,), jnp.float32)
    beta = 0.05 * jax.random.normal(ks[8], (C,), jnp.float32)
    w1 = jax.random.normal(ks[3], (C, C4), jnp.float32) * 0.1      # C -> 4C
    b1 = jax.random.normal(ks[4], (C4,), jnp.float32) * 0.1
    w2 = jax.random.normal(ks[5], (C4, C), jnp.float32) * 0.1      # 4C -> C
    b2 = jax.random.normal(ks[6], (C,), jnp.float32) * 0.1
    scale = jnp.full((C,), init_scale, jnp.float32)

    args = (x, wdw, bdw, gamma, beta, w1, b1, w2, b2, scale)

    # multi-tile path (exercises the double-buffered halo DMA pipeline)
    out_tiled = jax.block_until_ready(convnext_block(*args, tile_h=8))
    # auto-picked tile (whole image per grid step at this small size)
    out_auto = jax.block_until_ready(convnext_block(*args))

    ref = ref_forward(*args)
    assert out_tiled.shape == (B, C, H, W)
    err1 = jnp.max(jnp.abs(out_tiled - ref))
    err2 = jnp.max(jnp.abs(out_auto - ref))
    # bf16 MXU operands -> slightly looser tolerance than pure-f32.
    assert jnp.allclose(out_tiled, ref, atol=3e-2, rtol=3e-2), \
        f"max abs err (tiled) {err1}"
    assert jnp.allclose(out_auto, ref, atol=3e-2, rtol=3e-2), \
        f"max abs err (auto) {err2}"

    print("KERNEL_OK")
</pallas_src>

<mosaic_0001>
module attributes {stable_mosaic.version = 11 : i64} {
  func.func @probe_kernel(%arg0: memref<2x24x128xf32, #tpu.memory_space<vmem>>, %arg1: memref<2x24x128xf32, #tpu.memory_space<vmem>>) attributes {dimension_semantics = [], scalar_prefetch = 0 : i64, scratch_operands = 0 : i64, tpu.core_type = #tpu.core_type<tc>} {
    %c0 = arith.constant 0 : index
    %c0_0 = arith.constant 0 : index
    %c0_1 = arith.constant 0 : index
    %0 = vector.load %arg0[%c0, %c0_0, %c0_1] : memref<2x24x128xf32, #tpu.memory_space<vmem>>, vector<2x24x128xf32>
    %c1_i32 = arith.constant 1 : i32
    %1 = tpu.dynamic_rotate %0 by %c1_i32 dim 1 : vector<2x24x128xf32>, i32 -> vector<2x24x128xf32>
    %c0_2 = arith.constant 0 : index
    %c0_3 = arith.constant 0 : index
    %c0_4 = arith.constant 0 : index
    %2 = vector.load %arg1[%c0_2, %c0_3, %c0_4] : memref<2x24x128xf32, #tpu.memory_space<vmem>>, vector<2x24x128xf32>
    tpu.vector_store %arg1[%c0_2, %c0_3, %c0_4], %1 {strides = array<i32>} : memref<2x24x128xf32, #tpu.memory_space<vmem>>, vector<2x24x128xf32>,
    return
  }
}

module attributes {stable_mosaic.version = 11 : i64} {
  func.func @convnext_block_kernel(%arg0: i32, %arg1: i32, %arg2: memref<2x22x24x128xf32, #tpu.memory_space<any>>, %arg3: memref<7x7x128xf32, #tpu.memory_space<vmem>>, %arg4: memref<1x128xf32, #tpu.memory_space<vmem>>, %arg5: memref<1x128xf32, #tpu.memory_space<vmem>>, %arg6: memref<1x128xf32, #tpu.memory_space<vmem>>, %arg7: memref<128x128xbf16, #tpu.memory_space<vmem>>, %arg8: memref<1x128xf32, #tpu.memory_space<vmem>>, %arg9: memref<128x128xbf16, #tpu.memory_space<vmem>>, %arg10: memref<1x128xf32, #tpu.memory_space<vmem>>, %arg11: memref<1x128xf32, #tpu.memory_space<vmem>>, %arg12: memref<1x8x16x128xf32, #tpu.memory_space<vmem>>, %arg13: memref<2x14x24x128xf32, #tpu.memory_space<vmem>>, %arg14: memref<2x!tpu.dma_semaphore, #tpu.memory_space<semaphore_mem>>) attributes {dimension_semantics = [#tpu.dimension_semantics<parallel>, #tpu.dimension_semantics<arbitrary>], iteration_bounds = array<i64: 2, 2>, scalar_prefetch = 0 : i64, scratch_operands = 2 : i64, tpu.core_type = #tpu.core_type<tc>, window_params = [{}, {pipeline_mode = #tpu.pipeline_mode<synchronous>, transform_indices = @transform_1, window_bounds = array<i64: 7, 7, 128>}, {pipeline_mode = #tpu.pipeline_mode<synchronous>, transform_indices = @transform_2, window_bounds = array<i64: 1, 128>}, {pipeline_mode = #tpu.pipeline_mode<synchronous>, transform_indices = @transform_3, window_bounds = array<i64: 1, 128>}, {pipeline_mode = #tpu.pipeline_mode<synchronous>, transform_indices = @transform_4, window_bounds = array<i64: 1, 128>}, {pipeline_mode = #tpu.pipeline_mode<synchronous>, transform_indices = @transform_5, window_bounds = array<i64: 128, 128>}, {pipeline_mode = #tpu.pipeline_mode<synchronous>, transform_indices = @transform_6, window_bounds = array<i64: 1, 128>}, {pipeline_mode = #tpu.pipeline_mode<synchronous>, transform_indices = @transform_7, window_bounds = array<i64: 128, 128>}, {pipeline_mode = #tpu.pipeline_mode<synchronous>, transform_indices = @transform_8, window_bounds = array<i64: 1, 128>}, {pipeline_mode = #tpu.pipeline_mode<synchronous>, transform_indices = @transform_9, window_bounds = array<i64: 1, 128>}, {transform_indices = @transform_10, window_bounds = array<i64: 1, 8, 16, 128>}]} {
    %c2_i32 = arith.constant 2 : i32
    %c0_i32 = arith.constant 0 : i32
    %0 = arith.cmpi eq, %c2_i32, %c0_i32 : i32
    %c1_i32 = arith.constant 1 : i32
    %1 = arith.select %0, %c1_i32, %c2_i32 : i32
    %2 = arith.remsi %arg1, %1 : i32
    %c0_i32_0 = arith.constant 0 : i32
    %3 = arith.cmpi ne, %2, %c0_i32_0 : i32
    %c0_i32_1 = arith.constant 0 : i32
    %4 = arith.cmpi slt, %2, %c0_i32_1 : i32
    %c0_i32_2 = arith.constant 0 : i32
    %5 = arith.cmpi slt, %1, %c0_i32_2 : i32
    %6 = arith.xori %4, %5 : i1
    %7 = arith.andi %6, %3 : i1
    %8 = arith.addi %2, %1 : i32
    %9 = arith.select %7, %8, %2 : i32
    %c0_i32_3 = arith.constant 0 : i32
    %10 = arith.cmpi eq, %arg1, %c0_i32_3 : i32
    %11 = arith.extui %10 : i1 to i32
    %c0_i32_4 = arith.constant 0 : i32
    %12 = arith.cmpi ne, %11, %c0_i32_4 : i32
    scf.if %12 {
      %c0_i32_50 = arith.constant 0 : i32
      %c0_i32_51 = arith.constant 0 : i32
      %c0_i32_52 = arith.constant 0 : i32
      %471 = tpu.memref_slice %arg2[%arg0, %c0_i32_50, %c0_i32_51, %c0_i32_52] : memref<2x22x24x128xf32, #tpu.memory_space<any>> -> memref<1x14x24x128xf32, #tpu.memory_space<any>>
      %472 = tpu.memref_squeeze %471 : memref<1x14x24x128xf32, #tpu.memory_space<any>> -> memref<14x24x128xf32, #tpu.memory_space<any>>
      %c0_i32_53 = arith.constant 0 : i32
      %c0_i32_54 = arith.constant 0 : i32
      %c0_i32_55 = arith.constant 0 : i32
      %473 = tpu.memref_slice %arg13[%9, %c0_i32_53, %c0_i32_54, %c0_i32_55] : memref<2x14x24x128xf32, #tpu.memory_space<vmem>> -> memref<1x14x24x128xf32, #tpu.memory_space<vmem>>
      %474 = tpu.memref_squeeze %473 : memref<1x14x24x128xf32, #tpu.memory_space<vmem>> -> memref<14x24x128xf32, #tpu.memory_space<vmem>>
      %475 = tpu.memref_slice %arg14[%9] : memref<2x!tpu.dma_semaphore, #tpu.memory_space<semaphore_mem>> -> memref<1x!tpu.dma_semaphore, #tpu.memory_space<semaphore_mem>>
      %476 = tpu.memref_squeeze %475 : memref<1x!tpu.dma_semaphore, #tpu.memory_space<semaphore_mem>> -> memref<!tpu.dma_semaphore, #tpu.memory_space<semaphore_mem>>
      tpu.enqueue_dma source(%472 : memref<14x24x128xf32, #tpu.memory_space<any>>) target(%474 : memref<14x24x128xf32, #tpu.memory_space<vmem>>) target_semaphore(%476 : memref<!tpu.dma_semaphore, #tpu.memory_space<semaphore_mem>>)
    } else {
    }
    %c8_i32 = arith.constant 8 : i32
    %13 = arith.muli %arg1, %c8_i32 : i32
    %c0_i32_5 = arith.constant 0 : i32
    %c0_i32_6 = arith.constant 0 : i32
    %14 = tpu.memref_slice %arg2[%arg0, %13, %c0_i32_5, %c0_i32_6] : memref<2x22x24x128xf32, #tpu.memory_space<any>> -> memref<1x14x24x128xf32, #tpu.memory_space<any>>
    %15 = tpu.memref_squeeze %14 : memref<1x14x24x128xf32, #tpu.memory_space<any>> -> memref<14x24x128xf32, #tpu.memory_space<any>>
    %c0_i32_7 = arith.constant 0 : i32
    %c0_i32_8 = arith.constant 0 : i32
    %c0_i32_9 = arith.constant 0 : i32
    %16 = tpu.memref_slice %arg13[%9, %c0_i32_7, %c0_i32_8, %c0_i32_9] : memref<2x14x24x128xf32, #tpu.memory_space<vmem>> -> memref<1x14x24x128xf32, #tpu.memory_space<vmem>>
    %17 = tpu.memref_squeeze %16 : memref<1x14x24x128xf32, #tpu.memory_space<vmem>> -> memref<14x24x128xf32, #tpu.memory_space<vmem>>
    %18 = tpu.memref_slice %arg14[%9] : memref<2x!tpu.dma_semaphore, #tpu.memory_space<semaphore_mem>> -> memref<1x!tpu.dma_semaphore, #tpu.memory_space<semaphore_mem>>
    %19 = tpu.memref_squeeze %18 : memref<1x!tpu.dma_semaphore, #tpu.memory_space<semaphore_mem>> -> memref<!tpu.dma_semaphore, #tpu.memory_space<semaphore_mem>>
    tpu.wait_dma2 semaphore(%19 : memref<!tpu.dma_semaphore, #tpu.memory_space<semaphore_mem>>) src(%15 : memref<14x24x128xf32, #tpu.memory_space<any>>) dst(%17 : memref<14x24x128xf32, #tpu.memory_space<vmem>>)
    %c1_i32_10 = arith.constant 1 : i32
    %20 = arith.addi %arg1, %c1_i32_10 : i32
    %c2_i32_11 = arith.constant 2 : i32
    %21 = arith.cmpi slt, %20, %c2_i32_11 : i32
    %22 = arith.extui %21 : i1 to i32
    %c0_i32_12 = arith.constant 0 : i32
    %23 = arith.cmpi ne, %22, %c0_i32_12 : i32
    scf.if %23 {
      %c1_i32_50 = arith.constant 1 : i32
      %471 = arith.addi %arg1, %c1_i32_50 : i32
      %c1_i32_51 = arith.constant 1 : i32
      %472 = arith.subi %c1_i32_51, %9 : i32
      %c8_i32_52 = arith.constant 8 : i32
      %473 = arith.muli %471, %c8_i32_52 : i32
      %c0_i32_53 = arith.constant 0 : i32
      %c0_i32_54 = arith.constant 0 : i32
      %474 = tpu.memref_slice %arg2[%arg0, %473, %c0_i32_53, %c0_i32_54] : memref<2x22x24x128xf32, #tpu.memory_space<any>> -> memref<1x14x24x128xf32, #tpu.memory_space<any>>
      %475 = tpu.memref_squeeze %474 : memref<1x14x24x128xf32, #tpu.memory_space<any>> -> memref<14x24x128xf32, #tpu.memory_space<any>>
      %c0_i32_55 = arith.constant 0 : i32
      %c0_i32_56 = arith.constant 0 : i32
      %c0_i32_57 = arith.constant 0 : i32
      %476 = tpu.memref_slice %arg13[%472, %c0_i32_55, %c0_i32_56, %c0_i32_57] : memref<2x14x24x128xf32, #tpu.memory_space<vmem>> -> memref<1x14x24x128xf32, #tpu.memory_space<vmem>>
      %477 = tpu.memref_squeeze %476 : memref<1x14x24x128xf32, #tpu.memory_space<vmem>> -> memref<14x24x128xf32, #tpu.memory_space<vmem>>
      %478 = tpu.memref_slice %arg14[%472] : memref<2x!tpu.dma_semaphore, #tpu.memory_space<semaphore_mem>> -> memref<1x!tpu.dma_semaphore, #tpu.memory_space<semaphore_mem>>
      %479 = tpu.memref_squeeze %478 : memref<1x!tpu.dma_semaphore, #tpu.memory_space<semaphore_mem>> -> memref<!tpu.dma_semaphore, #tpu.memory_space<semaphore_mem>>
      tpu.enqueue_dma source(%475 : memref<14x24x128xf32, #tpu.memory_space<any>>) target(%477 : memref<14x24x128xf32, #tpu.memory_space<vmem>>) target_semaphore(%479 : memref<!tpu.dma_semaphore, #tpu.memory_space<semaphore_mem>>)
    } else {
    }
    %24 = arith.index_cast %9 : i32 to index
    %c0 = arith.constant 0 : index
    %c0_13 = arith.constant 0 : index
    %c0_14 = arith.constant 0 : index
    %25 = vector.load %arg13[%24, %c0, %c0_13, %c0_14] : memref<2x14x24x128xf32, #tpu.memory_space<vmem>>, vector<1x14x24x128xf32>
    %26 = vector.shape_cast %25 : vector<1x14x24x128xf32> to vector<14x24x128xf32>
    %c0_15 = arith.constant 0 : index
    %c0_16 = arith.constant 0 : index
    %c0_17 = arith.constant 0 : index
    %27 = vector.load %arg3[%c0_15, %c0_16, %c0_17] : memref<7x7x128xf32, #tpu.memory_space<vmem>>, vector<7x7x128xf32>
    %cst = arith.constant 0.000000e+00 : f32
    %28 = vector.broadcast %cst : f32 to vector<8x16x128xf32>
    %29 = vector.extract_strided_slice %26 {offsets = [0, 0, 0], sizes = [14, 16, 128], strides = [1, 1, 1]} : vector<14x24x128xf32> to vector<14x16x128xf32>
    %30 = vector.extract_strided_slice %27 {offsets = [0, 0, 0], sizes = [7, 1, 128], strides = [1, 1, 1]} : vector<7x7x128xf32> to vector<7x1x128xf32>
    %31 = vector.shape_cast %30 : vector<7x1x128xf32> to vector<7x128xf32>
    %32 = vector.extract_strided_slice %29 {offsets = [0, 0, 0], sizes = [8, 16, 128], strides = [1, 1, 1]} : vector<14x16x128xf32> to vector<8x16x128xf32>
    %33 = vector.extract_strided_slice %31 {offsets = [0, 0], sizes = [1, 128], strides = [1, 1]} : vector<7x128xf32> to vector<1x128xf32>
    %34 = vector.shape_cast %33 : vector<1x128xf32> to vector<128xf32>
    %35 = vector.shape_cast %34 : vector<128xf32> to vector<1x1x128xf32>
    %36 = vector.broadcast %35 : vector<1x1x128xf32> to vector<8x16x128xf32>
    %37 = arith.mulf %32, %36 : vector<8x16x128xf32>
    %38 = arith.addf %28, %37 : vector<8x16x128xf32>
    %39 = vector.extract_strided_slice %29 {offsets = [1, 0, 0], sizes = [8, 16, 128], strides = [1, 1, 1]} : vector<14x16x128xf32> to vector<8x16x128xf32>
    %40 = vector.extract_strided_slice %31 {offsets = [1, 0], sizes = [1, 128], strides = [1, 1]} : vector<7x128xf32> to vector<1x128xf32>
    %41 = vector.shape_cast %40 : vector<1x128xf32> to vector<128xf32>
    %42 = vector.shape_cast %41 : vector<128xf32> to vector<1x1x128xf32>
    %43 = vector.broadcast %42 : vector<1x1x128xf32> to vector<8x16x128xf32>
    %44 = arith.mulf %39, %43 : vector<8x16x128xf32>
    %45 = arith.addf %38, %44 : vector<8x16x128xf32>
    %46 = vector.extract_strided_slice %29 {offsets = [2, 0, 0], sizes = [8, 16, 128], strides = [1, 1, 1]} : vector<14x16x128xf32> to vector<8x16x128xf32>
    %47 = vector.extract_strided_slice %31 {offsets = [2, 0], sizes = [1, 128], strides = [1, 1]} : vector<7x128xf32> to vector<1x128xf32>
    %48 = vector.shape_cast %47 : vector<1x128xf32> to vector<128xf32>
    %49 = vector.shape_cast %48 : vector<128xf32> to vector<1x1x128xf32>
    %50 = vector.broadcast %49 : vector<1x1x128xf32> to vector<8x16x128xf32>
    %51 = arith.mulf %46, %50 : vector<8x16x128xf32>
    %52 = arith.addf %45, %51 : vector<8x16x128xf32>
    %53 = vector.extract_strided_slice %29 {offsets = [3, 0, 0], sizes = [8, 16, 128], strides = [1, 1, 1]} : vector<14x16x128xf32> to vector<8x16x128xf32>
    %54 = vector.extract_strided_slice %31 {offsets = [3, 0], sizes = [1, 128], strides = [1, 1]} : vector<7x128xf32> to vector<1x128xf32>
    %55 = vector.shape_cast %54 : vector<1x128xf32> to vector<128xf32>
    %56 = vector.shape_cast %55 : vector<128xf32> to vector<1x1x128xf32>
    %57 = vector.broadcast %56 : vector<1x1x128xf32> to vector<8x16x128xf32>
    %58 = arith.mulf %53, %57 : vector<8x16x128xf32>
    %59 = arith.addf %52, %58 : vector<8x16x128xf32>
    %60 = vector.extract_strided_slice %29 {offsets = [4, 0, 0], sizes = [8, 16, 128], strides = [1, 1, 1]} : vector<14x16x128xf32> to vector<8x16x128xf32>
    %61 = vector.extract_strided_slice %31 {offsets = [4, 0], sizes = [1, 128], strides = [1, 1]} : vector<7x128xf32> to vector<1x128xf32>
    %62 = vector.shape_cast %61 : vector<1x128xf32> to vector<128xf32>
    %63 = vector.shape_cast %62 : vector<128xf32> to vector<1x1x128xf32>
    %64 = vector.broadcast %63 : vector<1x1x128xf32> to vector<8x16x128xf32>
    %65 = arith.mulf %60, %64 : vector<8x16x128xf32>
    %66 = arith.addf %59, %65 : vector<8x16x128xf32>
    %67 = vector.extract_strided_slice %29 {offsets = [5, 0, 0], sizes = [8, 16, 128], strides = [1, 1, 1]} : vector<14x16x128xf32> to vector<8x16x128xf32>
    %68 = vector.extract_strided_slice %31 {offsets = [5, 0], sizes = [1, 128], strides = [1, 1]} : vector<7x128xf32> to vector<1x128xf32>
    %69 = vector.shape_cast %68 : vector<1x128xf32> to vector<128xf32>
    %70 = vector.shape_cast %69 : vector<128xf32> to vector<1x1x128xf32>
    %71 = vector.broadcast %70 : vector<1x1x128xf32> to vector<8x16x128xf32>
    %72 = arith.mulf %67, %71 : vector<8x16x128xf32>
    %73 = arith.addf %66, %72 : vector<8x16x128xf32>
    %74 = vector.extract_strided_slice %29 {offsets = [6, 0, 0], sizes = [8, 16, 128], strides = [1, 1, 1]} : vector<14x16x128xf32> to vector<8x16x128xf32>
    %75 = vector.extract_strided_slice %31 {offsets = [6, 0], sizes = [1, 128], strides = [1, 1]} : vector<7x128xf32> to vector<1x128xf32>
    %76 = vector.shape_cast %75 : vector<1x128xf32> to vector<128xf32>
    %77 = vector.shape_cast %76 : vector<128xf32> to vector<1x1x128xf32>
    %78 = vector.broadcast %77 : vector<1x1x128xf32> to vector<8x16x128xf32>
    %79 = arith.mulf %74, %78 : vector<8x16x128xf32>
    %80 = arith.addf %73, %79 : vector<8x16x128xf32>
    %81 = vector.extract_strided_slice %26 {offsets = [0, 1, 0], sizes = [14, 16, 128], strides = [1, 1, 1]} : vector<14x24x128xf32> to vector<14x16x128xf32>
    %82 = vector.extract_strided_slice %27 {offsets = [0, 1, 0], sizes = [7, 1, 128], strides = [1, 1, 1]} : vector<7x7x128xf32> to vector<7x1x128xf32>
    %83 = vector.shape_cast %82 : vector<7x1x128xf32> to vector<7x128xf32>
    %84 = vector.extract_strided_slice %81 {offsets = [0, 0, 0], sizes = [8, 16, 128], strides = [1, 1, 1]} : vector<14x16x128xf32> to vector<8x16x128xf32>
    %85 = vector.extract_strided_slice %83 {offsets = [0, 0], sizes = [1, 128], strides = [1, 1]} : vector<7x128xf32> to vector<1x128xf32>
    %86 = vector.shape_cast %85 : vector<1x128xf32> to vector<128xf32>
    %87 = vector.shape_cast %86 : vector<128xf32> to vector<1x1x128xf32>
    %88 = vector.broadcast %87 : vector<1x1x128xf32> to vector<8x16x128xf32>
    %89 = arith.mulf %84, %88 : vector<8x16x128xf32>
    %90 = arith.addf %80, %89 : vector<8x16x128xf32>
    %91 = vector.extract_strided_slice %81 {offsets = [1, 0, 0], sizes = [8, 16, 128], strides = [1, 1, 1]} : vector<14x16x128xf32> to vector<8x16x128xf32>
    %92 = vector.extract_strided_slice %83 {offsets = [1, 0], sizes = [1, 128], strides = [1, 1]} : vector<7x128xf32> to vector<1x128xf32>
    %93 = vector.shape_cast %92 : vector<1x128xf32> to vector<128xf32>
    %94 = vector.shape_cast %93 : vector<128xf32> to vector<1x1x128xf32>
    %95 = vector.broadcast %94 : vector<1x1x128xf32> to vector<8x16x128xf32>
    %96 = arith.mulf %91, %95 : vector<8x16x128xf32>
    %97 = arith.addf %90, %96 : vector<8x16x128xf32>
    %98 = vector.extract_strided_slice %81 {offsets = [2, 0, 0], sizes = [8, 16, 128], strides = [1, 1, 1]} : vector<14x16x128xf32> to vector<8x16x128xf32>
    %99 = vector.extract_strided_slice %83 {offsets = [2, 0], sizes = [1, 128], strides = [1, 1]} : vector<7x128xf32> to vector<1x128xf32>
    %100 = vector.shape_cast %99 : vector<1x128xf32> to vector<128xf32>
    %101 = vector.shape_cast %100 : vector<128xf32> to vector<1x1x128xf32>
    %102 = vector.broadcast %101 : vector<1x1x128xf32> to vector<8x16x128xf32>
    %103 = arith.mulf %98, %102 : vector<8x16x128xf32>
    %104 = arith.addf %97, %103 : vector<8x16x128xf32>
    %105 = vector.extract_strided_slice %81 {offsets = [3, 0, 0], sizes = [8, 16, 128], strides = [1, 1, 1]} : vector<14x16x128xf32> to vector<8x16x128xf32>
    %106 = vector.extract_strided_slice %83 {offsets = [3, 0], sizes = [1, 128], strides = [1, 1]} : vector<7x128xf32> to vector<1x128xf32>
    %107 = vector.shape_cast %106 : vector<1x128xf32> to vector<128xf32>
    %108 = vector.shape_cast %107 : vector<128xf32> to vector<1x1x128xf32>
    %109 = vector.broadcast %108 : vector<1x1x128xf32> to vector<8x16x128xf32>
    %110 = arith.mulf %105, %109 : vector<8x16x128xf32>
    %111 = arith.addf %104, %110 : vector<8x16x128xf32>
    %112 = vector.extract_strided_slice %81 {offsets = [4, 0, 0], sizes = [8, 16, 128], strides = [1, 1, 1]} : vector<14x16x128xf32> to vector<8x16x128xf32>
    %113 = vector.extract_strided_slice %83 {offsets = [4, 0], sizes = [1, 128], strides = [1, 1]} : vector<7x128xf32> to vector<1x128xf32>
    %114 = vector.shape_cast %113 : vector<1x128xf32> to vector<128xf32>
    %115 = vector.shape_cast %114 : vector<128xf32> to vector<1x1x128xf32>
    %116 = vector.broadcast %115 : vector<1x1x128xf32> to vector<8x16x128xf32>
    %117 = arith.mulf %112, %116 : vector<8x16x128xf32>
    %118 = arith.addf %111, %117 : vector<8x16x128xf32>
    %119 = vector.extract_strided_slice %81 {offsets = [5, 0, 0], sizes = [8, 16, 128], strides = [1, 1, 1]} : vector<14x16x128xf32> to vector<8x16x128xf32>
    %120 = vector.extract_strided_slice %83 {offsets = [5, 0], sizes = [1, 128], strides = [1, 1]} : vector<7x128xf32> to vector<1x128xf32>
    %121 = vector.shape_cast %120 : vector<1x128xf32> to vector<128xf32>
    %122 = vector.shape_cast %121 : vector<128xf32> to vector<1x1x128xf32>
    %123 = vector.broadcast %122 : vector<1x1x128xf32> to vector<8x16x128xf32>
    %124 = arith.mulf %119, %123 : vector<8x16x128xf32>
    %125 = arith.addf %118, %124 : vector<8x16x128xf32>
    %126 = vector.extract_strided_slice %81 {offsets = [6, 0, 0], sizes = [8, 16, 128], strides = [1, 1, 1]} : vector<14x16x128xf32> to vector<8x16x128xf32>
    %127 = vector.extract_strided_slice %83 {offsets = [6, 0], sizes = [1, 128], strides = [1, 1]} : vector<7x128xf32> to vector<1x128xf32>
    %128 = vector.shape_cast %127 : vector<1x128xf32> to vector<128xf32>
    %129 = vector.shape_cast %128 : vector<128xf32> to vector<1x1x128xf32>
    %130 = vector.broadcast %129 : vector<1x1x128xf32> to vector<8x16x128xf32>
    %131 = arith.mulf %126, %130 : vector<8x16x128xf32>
    %132 = arith.addf %125, %131 : vector<8x16x128xf32>
    %133 = vector.extract_strided_slice %26 {offsets = [0, 2, 0], sizes = [14, 16, 128], strides = [1, 1, 1]} : vector<14x24x128xf32> to vector<14x16x128xf32>
    %134 = vector.extract_strided_slice %27 {offsets = [0, 2, 0], sizes = [7, 1, 128], strides = [1, 1, 1]} : vector<7x7x128xf32> to vector<7x1x128xf32>
    %135 = vector.shape_cast %134 : vector<7x1x128xf32> to vector<7x128xf32>
    %136 = vector.extract_strided_slice %133 {offsets = [0, 0, 0], sizes = [8, 16, 128], strides = [1, 1, 1]} : vector<14x16x128xf32> to vector<8x16x128xf32>
    %137 = vector.extract_strided_slice %135 {offsets = [0, 0], sizes = [1, 128], strides = [1, 1]} : vector<7x128xf32> to vector<1x128xf32>
    %138 = vector.shape_cast %137 : vector<1x128xf32> to vector<128xf32>
    %139 = vector.shape_cast %138 : vector<128xf32> to vector<1x1x128xf32>
    %140 = vector.broadcast %139 : vector<1x1x128xf32> to vector<8x16x128xf32>
    %141 = arith.mulf %136, %140 : vector<8x16x128xf32>
    %142 = arith.addf %132, %141 : vector<8x16x128xf32>
    %143 = vector.extract_strided_slice %133 {offsets = [1, 0, 0], sizes = [8, 16, 128], strides = [1, 1, 1]} : vector<14x16x128xf32> to vector<8x16x128xf32>
    %144 = vector.extract_strided_slice %135 {offsets = [1, 0], sizes = [1, 128], strides = [1, 1]} : vector<7x128xf32> to vector<1x128xf32>
    %145 = vector.shape_cast %144 : vector<1x128xf32> to vector<128xf32>
    %146 = vector.shape_cast %145 : vector<128xf32> to vector<1x1x128xf32>
    %147 = vector.broadcast %146 : vector<1x1x128xf32> to vector<8x16x128xf32>
    %148 = arith.mulf %143, %147 : vector<8x16x128xf32>
    %149 = arith.addf %142, %148 : vector<8x16x128xf32>
    %150 = vector.extract_strided_slice %133 {offsets = [2, 0, 0], sizes = [8, 16, 128], strides = [1, 1, 1]} : vector<14x16x128xf32> to vector<8x16x128xf32>
    %151 = vector.extract_strided_slice %135 {offsets = [2, 0], sizes = [1, 128], strides = [1, 1]} : vector<7x128xf32> to vector<1x128xf32>
    %152 = vector.shape_cast %151 : vector<1x128xf32> to vector<128xf32>
    %153 = vector.shape_cast %152 : vector<128xf32> to vector<1x1x128xf32>
    %154 = vector.broadcast %153 : vector<1x1x128xf32> to vector<8x16x128xf32>
    %155 = arith.mulf %150, %154 : vector<8x16x128xf32>
    %156 = arith.addf %149, %155 : vector<8x16x128xf32>
    %157 = vector.extract_strided_slice %133 {offsets = [3, 0, 0], sizes = [8, 16, 128], strides = [1, 1, 1]} : vector<14x16x128xf32> to vector<8x16x128xf32>
    %158 = vector.extract_strided_slice %135 {offsets = [3, 0], sizes = [1, 128], strides = [1, 1]} : vector<7x128xf32> to vector<1x128xf32>
    %159 = vector.shape_cast %158 : vector<1x128xf32> to vector<128xf32>
    %160 = vector.shape_cast %159 : vector<128xf32> to vector<1x1x128xf32>
    %161 = vector.broadcast %160 : vector<1x1x128xf32> to vector<8x16x128xf32>
    %162 = arith.mulf %157, %161 : vector<8x16x128xf32>
    %163 = arith.addf %156, %162 : vector<8x16x128xf32>
    %164 = vector.extract_strided_slice %133 {offsets = [4, 0, 0], sizes = [8, 16, 128], strides = [1, 1, 1]} : vector<14x16x128xf32> to vector<8x16x128xf32>
    %165 = vector.extract_strided_slice %135 {offsets = [4, 0], sizes = [1, 128], strides = [1, 1]} : vector<7x128xf32> to vector<1x128xf32>
    %166 = vector.shape_cast %165 : vector<1x128xf32> to vector<128xf32>
    %167 = vector.shape_cast %166 : vector<128xf32> to vector<1x1x128xf32>
    %168 = vector.broadcast %167 : vector<1x1x128xf32> to vector<8x16x128xf32>
    %169 = arith.mulf %164, %168 : vector<8x16x128xf32>
    %170 = arith.addf %163, %169 : vector<8x16x128xf32>
    %171 = vector.extract_strided_slice %133 {offsets = [5, 0, 0], sizes = [8, 16, 128], strides = [1, 1, 1]} : vector<14x16x128xf32> to vector<8x16x128xf32>
    %172 = vector.extract_strided_slice %135 {offsets = [5, 0], sizes = [1, 128], strides = [1, 1]} : vector<7x128xf32> to vector<1x128xf32>
    %173 = vector.shape_cast %172 : vector<1x128xf32> to vector<128xf32>
    %174 = vector.shape_cast %173 : vector<128xf32> to vector<1x1x128xf32>
    %175 = vector.broadcast %174 : vector<1x1x128xf32> to vector<8x16x128xf32>
    %176 = arith.mulf %171, %175 : vector<8x16x128xf32>
    %177 = arith.addf %170, %176 : vector<8x16x128xf32>
    %178 = vector.extract_strided_slice %133 {offsets = [6, 0, 0], sizes = [8, 16, 128], strides = [1, 1, 1]} : vector<14x16x128xf32> to vector<8x16x128xf32>
    %179 = vector.extract_strided_slice %135 {offsets = [6, 0], sizes = [1, 128], strides = [1, 1]} : vector<7x128xf32> to vector<1x128xf32>
    %180 = vector.shape_cast %179 : vector<1x128xf32> to vector<128xf32>
    %181 = vector.shape_cast %180 : vector<128xf32> to vector<1x1x128xf32>
    %182 = vector.broadcast %181 : vector<1x1x128xf32> to vector<8x16x128xf32>
    %183 = arith.mulf %178, %182 : vector<8x16x128xf32>
    %184 = arith.addf %177, %183 : vector<8x16x128xf32>
    %185 = vector.extract_strided_slice %26 {offsets = [0, 3, 0], sizes = [14, 16, 128], strides = [1, 1, 1]} : vector<14x24x128xf32> to vector<14x16x128xf32>
    %186 = vector.extract_strided_slice %185 {offsets = [3, 0, 0], sizes = [8, 16, 128], strides = [1, 1, 1]} : vector<14x16x128xf32> to vector<8x16x128xf32>
    %187 = vector.extract_strided_slice %27 {offsets = [0, 3, 0], sizes = [7, 1, 128], strides = [1, 1, 1]} : vector<7x7x128xf32> to vector<7x1x128xf32>
    %188 = vector.shape_cast %187 : vector<7x1x128xf32> to vector<7x128xf32>
    %189 = vector.extract_strided_slice %185 {offsets = [0, 0, 0], sizes = [8, 16, 128], strides = [1, 1, 1]} : vector<14x16x128xf32> to vector<8x16x128xf32>
    %190 = vector.extract_strided_slice %188 {offsets = [0, 0], sizes = [1, 128], strides = [1, 1]} : vector<7x128xf32> to vector<1x128xf32>
    %191 = vector.shape_cast %190 : vector<1x128xf32> to vector<128xf32>
    %192 = vector.shape_cast %191 : vector<128xf32> to vector<1x1x128xf32>
    %193 = vector.broadcast %192 : vector<1x1x128xf32> to vector<8x16x128xf32>
    %194 = arith.mulf %189, %193 : vector<8x16x128xf32>
    %195 = arith.addf %184, %194 : vector<8x16x128xf32>
    %196 = vector.extract_strided_slice %185 {offsets = [1, 0, 0], sizes = [8, 16, 128], strides = [1, 1, 1]} : vector<14x16x128xf32> to vector<8x16x128xf32>
    %197 = vector.extract_strided_slice %188 {offsets = [1, 0], sizes = [1, 128], strides = [1, 1]} : vector<7x128xf32> to vector<1x128xf32>
    %198 = vector.shape_cast %197 : vector<1x128xf32> to vector<128xf32>
    %199 = vector.shape_cast %198 : vector<128xf32> to vector<1x1x128xf32>
    %200 = vector.broadcast %199 : vector<1x1x128xf32> to vector<8x16x128xf32>
    %201 = arith.mulf %196, %200 : vector<8x16x128xf32>
    %202 = arith.addf %195, %201 : vector<8x16x128xf32>
    %203 = vector.extract_strided_slice %185 {offsets = [2, 0, 0], sizes = [8, 16, 128], strides = [1, 1, 1]} : vector<14x16x128xf32> to vector<8x16x128xf32>
    %204 = vector.extract_strided_slice %188 {offsets = [2, 0], sizes = [1, 128], strides = [1, 1]} : vector<7x128xf32> to vector<1x128xf32>
    %205 = vector.shape_cast %204 : vector<1x128xf32> to vector<128xf32>
    %206 = vector.shape_cast %205 : vector<128xf32> to vector<1x1x128xf32>
    %207 = vector.broadcast %206 : vector<1x1x128xf32> to vector<8x16x128xf32>
    %208 = arith.mulf %203, %207 : vector<8x16x128xf32>
    %209 = arith.addf %202, %208 : vector<8x16x128xf32>
    %210 = vector.extract_strided_slice %185 {offsets = [3, 0, 0], sizes = [8, 16, 128], strides = [1, 1, 1]} : vector<14x16x128xf32> to vector<8x16x128xf32>
    %211 = vector.extract_strided_slice %188 {offsets = [3, 0], sizes = [1, 128], strides = [1, 1]} : vector<7x128xf32> to vector<1x128xf32>
    %212 = vector.shape_cast %211 : vector<1x128xf32> to vector<128xf32>
    %213 = vector.shape_cast %212 : vector<128xf32> to vector<1x1x128xf32>
    %214 = vector.broadcast %213 : vector<1x1x128xf32> to vector<8x16x128xf32>
    %215 = arith.mulf %210, %214 : vector<8x16x128xf32>
    %216 = arith.addf %209, %215 : vector<8x16x128xf32>
    %217 = vector.extract_strided_slice %185 {offsets = [4, 0, 0], sizes = [8, 16, 128], strides = [1, 1, 1]} : vector<14x16x128xf32> to vector<8x16x128xf32>
    %218 = vector.extract_strided_slice %188 {offsets = [4, 0], sizes = [1, 128], strides = [1, 1]} : vector<7x128xf32> to vector<1x128xf32>
    %219 = vector.shape_cast %218 : vector<1x128xf32> to vector<128xf32>
    %220 = vector.shape_cast %219 : vector<128xf32> to vector<1x1x128xf32>
    %221 = vector.broadcast %220 : vector<1x1x128xf32> to vector<8x16x128xf32>
    %222 = arith.mulf %217, %221 : vector<8x16x128xf32>
    %223 = arith.addf %216, %222 : vector<8x16x128xf32>
    %224 = vector.extract_strided_slice %185 {offsets = [5, 0, 0], sizes = [8, 16, 128], strides = [1, 1, 1]} : vector<14x16x128xf32> to vector<8x16x128xf32>
    %225 = vector.extract_strided_slice %188 {offsets = [5, 0], sizes = [1, 128], strides = [1, 1]} : vector<7x128xf32> to vector<1x128xf32>
    %226 = vector.shape_cast %225 : vector<1x128xf32> to vector<128xf32>
    %227 = vector.shape_cast %226 : vector<128xf32> to vector<1x1x128xf32>
    %228 = vector.broadcast %227 : vector<1x1x128xf32> to vector<8x16x128xf32>
    %229 = arith.mulf %224, %228 : vector<8x16x128xf32>
    %230 = arith.addf %223, %229 : vector<8x16x128xf32>
    %231 = vector.extract_strided_slice %185 {offsets = [6, 0, 0], sizes = [8, 16, 128], strides = [1, 1, 1]} : vector<14x16x128xf32> to vector<8x16x128xf32>
    %232 = vector.extract_strided_slice %188 {offsets = [6, 0], sizes = [1, 128], strides = [1, 1]} : vector<7x128xf32> to vector<1x128xf32>
    %233 = vector.shape_cast %232 : vector<1x128xf32> to vector<128xf32>
    %234 = vector.shape_cast %233 : vector<128xf32> to vector<1x1x128xf32>
    %235 = vector.broadcast %234 : vector<1x1x128xf32> to vector<8x16x128xf32>
    %236 = arith.mulf %231, %235 : vector<8x16x128xf32>
    %237 = arith.addf %230, %236 : vector<8x16x128xf32>
    %238 = vector.extract_strided_slice %26 {offsets = [0, 4, 0], sizes = [14, 16, 128], strides = [1, 1, 1]} : vector<14x24x128xf32> to vector<14x16x128xf32>
    %239 = vector.extract_strided_slice %27 {offsets = [0, 4, 0], sizes = [7, 1, 128], strides = [1, 1, 1]} : vector<7x7x128xf32> to vector<7x1x128xf32>
    %240 = vector.shape_cast %239 : vector<7x1x128xf32> to vector<7x128xf32>
    %241 = vector.extract_strided_slice %238 {offsets = [0, 0, 0], sizes = [8, 16, 128], strides = [1, 1, 1]} : vector<14x16x128xf32> to vector<8x16x128xf32>
    %242 = vector.extract_strided_slice %240 {offsets = [0, 0], sizes = [1, 128], strides = [1, 1]} : vector<7x128xf32> to vector<1x128xf32>
    %243 = vector.shape_cast %242 : vector<1x128xf32> to vector<128xf32>
    %244 = vector.shape_cast %243 : vector<128xf32> to vector<1x1x128xf32>
    %245 = vector.broadcast %244 : vector<1x1x128xf32> to vector<8x16x128xf32>
    %246 = arith.mulf %241, %245 : vector<8x16x128xf32>
    %247 = arith.addf %237, %246 : vector<8x16x128xf32>
    %248 = vector.extract_strided_slice %238 {offsets = [1, 0, 0], sizes = [8, 16, 128], strides = [1, 1, 1]} : vector<14x16x128xf32> to vector<8x16x128xf32>
    %249 = vector.extract_strided_slice %240 {offsets = [1, 0], sizes = [1, 128], strides = [1, 1]} : vector<7x128xf32> to vector<1x128xf32>
    %250 = vector.shape_cast %249 : vector<1x128xf32> to vector<128xf32>
    %251 = vector.shape_cast %250 : vector<128xf32> to vector<1x1x128xf32>
    %252 = vector.broadcast %251 : vector<1x1x128xf32> to vector<8x16x128xf32>
    %253 = arith.mulf %248, %252 : vector<8x16x128xf32>
    %254 = arith.addf %247, %253 : vector<8x16x128xf32>
    %255 = vector.extract_strided_slice %238 {offsets = [2, 0, 0], sizes = [8, 16, 128], strides = [1, 1, 1]} : vector<14x16x128xf32> to vector<8x16x128xf32>
    %256 = vector.extract_strided_slice %240 {offsets = [2, 0], sizes = [1, 128], strides = [1, 1]} : vector<7x128xf32> to vector<1x128xf32>
    %257 = vector.shape_cast %256 : vector<1x128xf32> to vector<128xf32>
    %258 = vector.shape_cast %257 : vector<128xf32> to vector<1x1x128xf32>
    %259 = vector.broadcast %258 : vector<1x1x128xf32> to vector<8x16x128xf32>
    %260 = arith.mulf %255, %259 : vector<8x16x128xf32>
    %261 = arith.addf %254, %260 : vector<8x16x128xf32>
    %262 = vector.extract_strided_slice %238 {offsets = [3, 0, 0], sizes = [8, 16, 128], strides = [1, 1, 1]} : vector<14x16x128xf32> to vector<8x16x128xf32>
    %263 = vector.extract_strided_slice %240 {offsets = [3, 0], sizes = [1, 128], strides = [1, 1]} : vector<7x128xf32> to vector<1x128xf32>
    %264 = vector.shape_cast %263 : vector<1x128xf32> to vector<128xf32>
    %265 = vector.shape_cast %264 : vector<128xf32> to vector<1x1x128xf32>
    %266 = vector.broadcast %265 : vector<1x1x128xf32> to vector<8x16x128xf32>
    %267 = arith.mulf %262, %266 : vector<8x16x128xf32>
    %268 = arith.addf %261, %267 : vector<8x16x128xf32>
    %269 = vector.extract_strided_slice %238 {offsets = [4, 0, 0], sizes = [8, 16, 128], strides = [1, 1, 1]} : vector<14x16x128xf32> to vector<8x16x128xf32>
    %270 = vector.extract_strided_slice %240 {offsets = [4, 0], sizes = [1, 128], strides = [1, 1]} : vector<7x128xf32> to vector<1x128xf32>
    %271 = vector.shape_cast %270 : vector<1x128xf32> to vector<128xf32>
    %272 = vector.shape_cast %271 : vector<128xf32> to vector<1x1x128xf32>
    %273 = vector.broadcast %272 : vector<1x1x128xf32> to vector<8x16x128xf32>
    %274 = arith.mulf %269, %273 : vector<8x16x128xf32>
    %275 = arith.addf %268, %274 : vector<8x16x128xf32>
    %276 = vector.extract_strided_slice %238 {offsets = [5, 0, 0], sizes = [8, 16, 128], strides = [1, 1, 1]} : vector<14x16x128xf32> to vector<8x16x128xf32>
    %277 = vector.extract_strided_slice %240 {offsets = [5, 0], sizes = [1, 128], strides = [1, 1]} : vector<7x128xf32> to vector<1x128xf32>
    %278 = vector.shape_cast %277 : vector<1x128xf32> to vector<128xf32>
    %279 = vector.shape_cast %278 : vector<128xf32> to vector<1x1x128xf32>
    %280 = vector.broadcast %279 : vector<1x1x128xf32> to vector<8x16x128xf32>
    %281 = arith.mulf %276, %280 : vector<8x16x128xf32>
    %282 = arith.addf %275, %281 : vector<8x16x128xf32>
    %283 = vector.extract_strided_slice %238 {offsets = [6, 0, 0], sizes = [8, 16, 128], strides = [1, 1, 1]} : vector<14x16x128xf32> to vector<8x16x128xf32>
    %284 = vector.extract_strided_slice %240 {offsets = [6, 0], sizes = [1, 128], strides = [1, 1]} : vector<7x128xf32> to vector<1x128xf32>
    %285 = vector.shape_cast %284 : vector<1x128xf32> to vector<128xf32>
    %286 = vector.shape_cast %285 : vector<128xf32> to vector<1x1x128xf32>
    %287 = vector.broadcast %286 : vector<1x1x128xf32> to vector<8x16x128xf32>
    %288 = arith.mulf %283, %287 : vector<8x16x128xf32>
    %289 = arith.addf %282, %288 : vector<8x16x128xf32>
    %290 = vector.extract_strided_slice %26 {offsets = [0, 5, 0], sizes = [14, 16, 128], strides = [1, 1, 1]} : vector<14x24x128xf32> to vector<14x16x128xf32>
    %291 = vector.extract_strided_slice %27 {offsets = [0, 5, 0], sizes = [7, 1, 128], strides = [1, 1, 1]} : vector<7x7x128xf32> to vector<7x1x128xf32>
    %292 = vector.shape_cast %291 : vector<7x1x128xf32> to vector<7x128xf32>
    %293 = vector.extract_strided_slice %290 {offsets = [0, 0, 0], sizes = [8, 16, 128], strides = [1, 1, 1]} : vector<14x16x128xf32> to vector<8x16x128xf32>
    %294 = vector.extract_strided_slice %292 {offsets = [0, 0], sizes = [1, 128], strides = [1, 1]} : vector<7x128xf32> to vector<1x128xf32>
    %295 = vector.shape_cast %294 : vector<1x128xf32> to vector<128xf32>
    %296 = vector.shape_cast %295 : vector<128xf32> to vector<1x1x128xf32>
    %297 = vector.broadcast %296 : vector<1x1x128xf32> to vector<8x16x128xf32>
    %298 = arith.mulf %293, %297 : vector<8x16x128xf32>
    %299 = arith.addf %289, %298 : vector<8x16x128xf32>
    %300 = vector.extract_strided_slice %290 {offsets = [1, 0, 0], sizes = [8, 16, 128], strides = [1, 1, 1]} : vector<14x16x128xf32> to vector<8x16x128xf32>
    %301 = vector.extract_strided_slice %292 {offsets = [1, 0], sizes = [1, 128], strides = [1, 1]} : vector<7x128xf32> to vector<1x128xf32>
    %302 = vector.shape_cast %301 : vector<1x128xf32> to vector<128xf32>
    %303 = vector.shape_cast %302 : vector<128xf32> to vector<1x1x128xf32>
    %304 = vector.broadcast %303 : vector<1x1x128xf32> to vector<8x16x128xf32>
    %305 = arith.mulf %300, %304 : vector<8x16x128xf32>
    %306 = arith.addf %299, %305 : vector<8x16x128xf32>
    %307 = vector.extract_strided_slice %290 {offsets = [2, 0, 0], sizes = [8, 16, 128], strides = [1, 1, 1]} : vector<14x16x128xf32> to vector<8x16x128xf32>
    %308 = vector.extract_strided_slice %292 {offsets = [2, 0], sizes = [1, 128], strides = [1, 1]} : vector<7x128xf32> to vector<1x128xf32>
    %309 = vector.shape_cast %308 : vector<1x128xf32> to vector<128xf32>
    %310 = vector.shape_cast %309 : vector<128xf32> to vector<1x1x128xf32>
    %311 = vector.broadcast %310 : vector<1x1x128xf32> to vector<8x16x128xf32>
    %312 = arith.mulf %307, %311 : vector<8x16x128xf32>
    %313 = arith.addf %306, %312 : vector<8x16x128xf32>
    %314 = vector.extract_strided_slice %290 {offsets = [3, 0, 0], sizes = [8, 16, 128], strides = [1, 1, 1]} : vector<14x16x128xf32> to vector<8x16x128xf32>
    %315 = vector.extract_strided_slice %292 {offsets = [3, 0], sizes = [1, 128], strides = [1, 1]} : vector<7x128xf32> to vector<1x128xf32>
    %316 = vector.shape_cast %315 : vector<1x128xf32> to vector<128xf32>
    %317 = vector.shape_cast %316 : vector<128xf32> to vector<1x1x128xf32>
    %318 = vector.broadcast %317 : vector<1x1x128xf32> to vector<8x16x128xf32>
    %319 = arith.mulf %314, %318 : vector<8x16x128xf32>
    %320 = arith.addf %313, %319 : vector<8x16x128xf32>
    %321 = vector.extract_strided_slice %290 {offsets = [4, 0, 0], sizes = [8, 16, 128], strides = [1, 1, 1]} : vector<14x16x128xf32> to vector<8x16x128xf32>
    %322 = vector.extract_strided_slice %292 {offsets = [4, 0], sizes = [1, 128], strides = [1, 1]} : vector<7x128xf32> to vector<1x128xf32>
    %323 = vector.shape_cast %322 : vector<1x128xf32> to vector<128xf32>
    %324 = vector.shape_cast %323 : vector<128xf32> to vector<1x1x128xf32>
    %325 = vector.broadcast %324 : vector<1x1x128xf32> to vector<8x16x128xf32>
    %326 = arith.mulf %321, %325 : vector<8x16x128xf32>
    %327 = arith.addf %320, %326 : vector<8x16x128xf32>
    %328 = vector.extract_strided_slice %290 {offsets = [5, 0, 0], sizes = [8, 16, 128], strides = [1, 1, 1]} : vector<14x16x128xf32> to vector<8x16x128xf32>
    %329 = vector.extract_strided_slice %292 {offsets = [5, 0], sizes = [1, 128], strides = [1, 1]} : vector<7x128xf32> to vector<1x128xf32>
    %330 = vector.shape_cast %329 : vector<1x128xf32> to vector<128xf32>
    %331 = vector.shape_cast %330 : vector<128xf32> to vector<1x1x128xf32>
    %332 = vector.broadcast %331 : vector<1x1x128xf32> to vector<8x16x128xf32>
    %333 = arith.mulf %328, %332 : vector<8x16x128xf32>
    %334 = arith.addf %327, %333 : vector<8x16x128xf32>
    %335 = vector.extract_strided_slice %290 {offsets = [6, 0, 0], sizes = [8, 16, 128], strides = [1, 1, 1]} : vector<14x16x128xf32> to vector<8x16x128xf32>
    %336 = vector.extract_strided_slice %292 {offsets = [6, 0], sizes = [1, 128], strides = [1, 1]} : vector<7x128xf32> to vector<1x128xf32>
    %337 = vector.shape_cast %336 : vector<1x128xf32> to vector<128xf32>
    %338 = vector.shape_cast %337 : vector<128xf32> to vector<1x1x128xf32>
    %339 = vector.broadcast %338 : vector<1x1x128xf32> to vector<8x16x128xf32>
    %340 = arith.mulf %335, %339 : vector<8x16x128xf32>
    %341 = arith.addf %334, %340 : vector<8x16x128xf32>
    %342 = vector.extract_strided_slice %26 {offsets = [0, 6, 0], sizes = [14, 16, 128], strides = [1, 1, 1]} : vector<14x24x128xf32> to vector<14x16x128xf32>
    %343 = vector.extract_strided_slice %27 {offsets = [0, 6, 0], sizes = [7, 1, 128], strides = [1, 1, 1]} : vector<7x7x128xf32> to vector<7x1x128xf32>
    %344 = vector.shape_cast %343 : vector<7x1x128xf32> to vector<7x128xf32>
    %345 = vector.extract_strided_slice %342 {offsets = [0, 0, 0], sizes = [8, 16, 128], strides = [1, 1, 1]} : vector<14x16x128xf32> to vector<8x16x128xf32>
    %346 = vector.extract_strided_slice %344 {offsets = [0, 0], sizes = [1, 128], strides = [1, 1]} : vector<7x128xf32> to vector<1x128xf32>
    %347 = vector.shape_cast %346 : vector<1x128xf32> to vector<128xf32>
    %348 = vector.shape_cast %347 : vector<128xf32> to vector<1x1x128xf32>
    %349 = vector.broadcast %348 : vector<1x1x128xf32> to vector<8x16x128xf32>
    %350 = arith.mulf %345, %349 : vector<8x16x128xf32>
    %351 = arith.addf %341, %350 : vector<8x16x128xf32>
    %352 = vector.extract_strided_slice %342 {offsets = [1, 0, 0], sizes = [8, 16, 128], strides = [1, 1, 1]} : vector<14x16x128xf32> to vector<8x16x128xf32>
    %353 = vector.extract_strided_slice %344 {offsets = [1, 0], sizes = [1, 128], strides = [1, 1]} : vector<7x128xf32> to vector<1x128xf32>
    %354 = vector.shape_cast %353 : vector<1x128xf32> to vector<128xf32>
    %355 = vector.shape_cast %354 : vector<128xf32> to vector<1x1x128xf32>
    %356 = vector.broadcast %355 : vector<1x1x128xf32> to vector<8x16x128xf32>
    %357 = arith.mulf %352, %356 : vector<8x16x128xf32>
    %358 = arith.addf %351, %357 : vector<8x16x128xf32>
    %359 = vector.extract_strided_slice %342 {offsets = [2, 0, 0], sizes = [8, 16, 128], strides = [1, 1, 1]} : vector<14x16x128xf32> to vector<8x16x128xf32>
    %360 = vector.extract_strided_slice %344 {offsets = [2, 0], sizes = [1, 128], strides = [1, 1]} : vector<7x128xf32> to vector<1x128xf32>
    %361 = vector.shape_cast %360 : vector<1x128xf32> to vector<128xf32>
    %362 = vector.shape_cast %361 : vector<128xf32> to vector<1x1x128xf32>
    %363 = vector.broadcast %362 : vector<1x1x128xf32> to vector<8x16x128xf32>
    %364 = arith.mulf %359, %363 : vector<8x16x128xf32>
    %365 = arith.addf %358, %364 : vector<8x16x128xf32>
    %366 = vector.extract_strided_slice %342 {offsets = [3, 0, 0], sizes = [8, 16, 128], strides = [1, 1, 1]} : vector<14x16x128xf32> to vector<8x16x128xf32>
    %367 = vector.extract_strided_slice %344 {offsets = [3, 0], sizes = [1, 128], strides = [1, 1]} : vector<7x128xf32> to vector<1x128xf32>
    %368 = vector.shape_cast %367 : vector<1x128xf32> to vector<128xf32>
    %369 = vector.shape_cast %368 : vector<128xf32> to vector<1x1x128xf32>
    %370 = vector.broadcast %369 : vector<1x1x128xf32> to vector<8x16x128xf32>
    %371 = arith.mulf %366, %370 : vector<8x16x128xf32>
    %372 = arith.addf %365, %371 : vector<8x16x128xf32>
    %373 = vector.extract_strided_slice %342 {offsets = [4, 0, 0], sizes = [8, 16, 128], strides = [1, 1, 1]} : vector<14x16x128xf32> to vector<8x16x128xf32>
    %374 = vector.extract_strided_slice %344 {offsets = [4, 0], sizes = [1, 128], strides = [1, 1]} : vector<7x128xf32> to vector<1x128xf32>
    %375 = vector.shape_cast %374 : vector<1x128xf32> to vector<128xf32>
    %376 = vector.shape_cast %375 : vector<128xf32> to vector<1x1x128xf32>
    %377 = vector.broadcast %376 : vector<1x1x128xf32> to vector<8x16x128xf32>
    %378 = arith.mulf %373, %377 : vector<8x16x128xf32>
    %379 = arith.addf %372, %378 : vector<8x16x128xf32>
    %380 = vector.extract_strided_slice %342 {offsets = [5, 0, 0], sizes = [8, 16, 128], strides = [1, 1, 1]} : vector<14x16x128xf32> to vector<8x16x128xf32>
    %381 = vector.extract_strided_slice %344 {offsets = [5, 0], sizes = [1, 128], strides = [1, 1]} : vector<7x128xf32> to vector<1x128xf32>
    %382 = vector.shape_cast %381 : vector<1x128xf32> to vector<128xf32>
    %383 = vector.shape_cast %382 : vector<128xf32> to vector<1x1x128xf32>
    %384 = vector.broadcast %383 : vector<1x1x128xf32> to vector<8x16x128xf32>
    %385 = arith.mulf %380, %384 : vector<8x16x128xf32>
    %386 = arith.addf %379, %385 : vector<8x16x128xf32>
    %387 = vector.extract_strided_slice %342 {offsets = [6, 0, 0], sizes = [8, 16, 128], strides = [1, 1, 1]} : vector<14x16x128xf32> to vector<8x16x128xf32>
    %388 = vector.extract_strided_slice %344 {offsets = [6, 0], sizes = [1, 128], strides = [1, 1]} : vector<7x128xf32> to vector<1x128xf32>
    %389 = vector.shape_cast %388 : vector<1x128xf32> to vector<128xf32>
    %390 = vector.shape_cast %389 : vector<128xf32> to vector<1x1x128xf32>
    %391 = vector.broadcast %390 : vector<1x1x128xf32> to vector<8x16x128xf32>
    %392 = arith.mulf %387, %391 : vector<8x16x128xf32>
    %393 = arith.addf %386, %392 : vector<8x16x128xf32>
    %c0_18 = arith.constant 0 : index
    %c0_19 = arith.constant 0 : index
    %394 = vector.load %arg4[%c0_18, %c0_19] : memref<1x128xf32, #tpu.memory_space<vmem>>, vector<1x128xf32>
    %395 = vector.shape_cast %394 : vector<1x128xf32> to vector<128xf32>
    %396 = vector.shape_cast %395 : vector<128xf32> to vector<1x1x128xf32>
    %397 = vector.broadcast %396 : vector<1x1x128xf32> to vector<8x16x128xf32>
    %398 = arith.addf %393, %397 : vector<8x16x128xf32>
    %399 = tpu.iota {dimensions = array<i32: 2>} : vector<1x1x128xi32>
    %c4_i32 = arith.constant 4 : i32
    %400 = vector.broadcast %c4_i32 : i32 to vector<1x1x128xi32>
    %401 = arith.cmpi slt, %399, %400 : vector<1x1x128xi32>
    %cst_20 = arith.constant 0.000000e+00 : f32
    %402 = vector.shape_cast %401 : vector<1x1x128xi1> to vector<1x1x128xi1>
    %403 = vector.broadcast %402 : vector<1x1x128xi1> to vector<8x16x128xi1>
    %404 = vector.broadcast %cst_20 : f32 to vector<8x16x128xf32>
    %405 = arith.select %403, %398, %404 : vector<8x16x128xi1>, vector<8x16x128xf32>
    %cst_21 = arith.constant dense<0.000000e+00> : vector<8x16xf32>
    %406 = vector.multi_reduction <add>, %405, %cst_21 [2] : vector<8x16x128xf32> to vector<8x16xf32>
    %407 = vector.shape_cast %406 : vector<8x16xf32> to vector<8x16x1xf32>
    %cst_22 = arith.constant 2.500000e-01 : f32
    %408 = vector.broadcast %cst_22 : f32 to vector<8x16x1xf32>
    %409 = arith.mulf %407, %408 : vector<8x16x1xf32>
    %410 = vector.broadcast %409 : vector<8x16x1xf32> to vector<8x16x128xf32>
    %411 = arith.subf %405, %410 : vector<8x16x128xf32>
    %cst_23 = arith.constant 0.000000e+00 : f32
    %412 = vector.shape_cast %401 : vector<1x1x128xi1> to vector<1x1x128xi1>
    %413 = vector.broadcast %412 : vector<1x1x128xi1> to vector<8x16x128xi1>
    %414 = vector.broadcast %cst_23 : f32 to vector<8x16x128xf32>
    %415 = arith.select %413, %411, %414 : vector<8x16x128xi1>, vector<8x16x128xf32>
    %416 = arith.mulf %415, %415 : vector<8x16x128xf32>
    %cst_24 = arith.constant dense<0.000000e+00> : vector<8x16xf32>
    %417 = vector.multi_reduction <add>, %416, %cst_24 [2] : vector<8x16x128xf32> to vector<8x16xf32>
    %418 = vector.shape_cast %417 : vector<8x16xf32> to vector<8x16x1xf32>
    %cst_25 = arith.constant 2.500000e-01 : f32
    %419 = vector.broadcast %cst_25 : f32 to vector<8x16x1xf32>
    %420 = arith.mulf %418, %419 : vector<8x16x1xf32>
    %cst_26 = arith.constant 9.99999997E-7 : f32
    %421 = vector.broadcast %cst_26 : f32 to vector<8x16x1xf32>
    %422 = arith.addf %420, %421 : vector<8x16x1xf32>
    %423 = math.rsqrt %422 : vector<8x16x1xf32>
    %424 = vector.broadcast %423 : vector<8x16x1xf32> to vector<8x16x128xf32>
    %425 = arith.mulf %415, %424 : vector<8x16x128xf32>
    %c0_27 = arith.constant 0 : index
    %c0_28 = arith.constant 0 : index
    %426 = vector.load %arg5[%c0_27, %c0_28] : memref<1x128xf32, #tpu.memory_space<vmem>>, vector<1x128xf32>
    %427 = vector.shape_cast %426 : vector<1x128xf32> to vector<128xf32>
    %428 = vector.shape_cast %427 : vector<128xf32> to vector<1x1x128xf32>
    %429 = vector.broadcast %428 : vector<1x1x128xf32> to vector<8x16x128xf32>
    %430 = arith.mulf %425, %429 : vector<8x16x128xf32>
    %c0_29 = arith.constant 0 : index
    %c0_30 = arith.constant 0 : index
    %431 = vector.load %arg6[%c0_29, %c0_30] : memref<1x128xf32, #tpu.memory_space<vmem>>, vector<1x128xf32>
    %432 = vector.shape_cast %431 : vector<1x128xf32> to vector<128xf32>
    %433 = vector.shape_cast %432 : vector<128xf32> to vector<1x1x128xf32>
    %434 = vector.broadcast %433 : vector<1x1x128xf32> to vector<8x16x128xf32>
    %435 = arith.addf %430, %434 : vector<8x16x128xf32>
    %436 = vector.shape_cast %435 : vector<8x16x128xf32> to vector<128x128xf32>
    %437 = arith.truncf %436 : vector<128x128xf32> to vector<128x128xbf16>
    %c0_31 = arith.constant 0 : index
    %c0_32 = arith.constant 0 : index
    %438 = vector.load %arg7[%c0_31, %c0_32] : memref<128x128xbf16, #tpu.memory_space<vmem>>, vector<128x128xbf16>
    %cst_33 = arith.constant dense<0.000000e+00> : vector<128x128xf32>
    %439 = tpu.matmul %437, %438, %cst_33 {dimension_numbers = #tpu.dot_dimension_numbers<[1], [0], [0], [1], [0, 0, 1, 1], [], []>} : vector<128x128xbf16>, vector<128x128xbf16>, vector<128x128xf32> -> vector<128x128xf32>
    %c0_34 = arith.constant 0 : index
    %c0_35 = arith.constant 0 : index
    %440 = vector.load %arg8[%c0_34, %c0_35] : memref<1x128xf32, #tpu.memory_space<vmem>>, vector<1x128xf32>
    %441 = vector.shape_cast %440 : vector<1x128xf32> to vector<128xf32>
    %442 = vector.shape_cast %441 : vector<128xf32> to vector<1x128xf32>
    %443 = vector.broadcast %442 : vector<1x128xf32> to vector<128x128xf32>
    %444 = arith.addf %439, %443 : vector<128x128xf32>
    %cst_36 = arith.constant 5.000000e-01 : f32
    %445 = vector.broadcast %cst_36 : f32 to vector<128x128xf32>
    %446 = arith.mulf %445, %444 : vector<128x128xf32>
    %cst_37 = arith.constant 0.707106769 : f32
    %447 = vector.broadcast %cst_37 : f32 to vector<128x128xf32>
    %448 = arith.mulf %444, %447 : vector<128x128xf32>
    %449 = math.erf %448 : vector<128x128xf32>
    %cst_38 = arith.constant 1.000000e+00 : f32
    %450 = vector.broadcast %cst_38 : f32 to vector<128x128xf32>
    %451 = arith.addf %450, %449 : vector<128x128xf32>
    %452 = arith.mulf %446, %451 : vector<128x128xf32>
    %453 = arith.truncf %452 : vector<128x128xf32> to vector<128x128xbf16>
    %c0_39 = arith.constant 0 : index
    %c0_40 = arith.constant 0 : index
    %454 = vector.load %arg9[%c0_39, %c0_40] : memref<128x128xbf16, #tpu.memory_space<vmem>>, vector<128x128xbf16>
    %cst_41 = arith.constant dense<0.000000e+00> : vector<128x128xf32>
    %455 = tpu.matmul %453, %454, %cst_41 {dimension_numbers = #tpu.dot_dimension_numbers<[1], [0], [0], [1], [0, 0, 1, 1], [], []>} : vector<128x128xbf16>, vector<128x128xbf16>, vector<128x128xf32> -> vector<128x128xf32>
    %c0_42 = arith.constant 0 : index
    %c0_43 = arith.constant 0 : index
    %456 = vector.load %arg10[%c0_42, %c0_43] : memref<1x128xf32, #tpu.memory_space<vmem>>, vector<1x128xf32>
    %457 = vector.shape_cast %456 : vector<1x128xf32> to vector<128xf32>
    %458 = vector.shape_cast %457 : vector<128xf32> to vector<1x128xf32>
    %459 = vector.broadcast %458 : vector<1x128xf32> to vector<128x128xf32>
    %460 = arith.addf %455, %459 : vector<128x128xf32>
    %c0_44 = arith.constant 0 : index
    %c0_45 = arith.constant 0 : index
    %461 = vector.load %arg11[%c0_44, %c0_45] : memref<1x128xf32, #tpu.memory_space<vmem>>, vector<1x128xf32>
    %462 = vector.shape_cast %461 : vector<1x128xf32> to vector<128xf32>
    %463 = vector.shape_cast %462 : vector<128xf32> to vector<1x128xf32>
    %464 = vector.broadcast %463 : vector<1x128xf32> to vector<128x128xf32>
    %465 = arith.mulf %460, %464 : vector<128x128xf32>
    %466 = vector.shape_cast %465 : vector<128x128xf32> to vector<8x16x128xf32>
    %467 = arith.addf %466, %186 : vector<8x16x128xf32>
    %c0_46 = arith.constant 0 : index
    %c0_47 = arith.constant 0 : index
    %c0_48 = arith.constant 0 : index
    %c0_49 = arith.constant 0 : index
    %468 = vector.load %arg12[%c0_46, %c0_47, %c0_48, %c0_49] : memref<1x8x16x128xf32, #tpu.memory_space<vmem>>, vector<1x8x16x128xf32>
    %469 = vector.shape_cast %468 : vector<1x8x16x128xf32> to vector<8x16x128xf32>
    %470 = vector.shape_cast %467 : vector<8x16x128xf32> to vector<1x8x16x128xf32>
    tpu.vector_store %arg12[%c0_46, %c0_47, %c0_48, %c0_49], %470 {strides = array<i32>} : memref<1x8x16x128xf32, #tpu.memory_space<vmem>>, vector<1x8x16x128xf32>,
    return
  }
  func.func @transform_1(%arg0: i32, %arg1: i32) -> (i32, i32, i32) {
    %c0_i32 = arith.constant 0 : i32
    %c0_i32_0 = arith.constant 0 : i32
    %c0_i32_1 = arith.constant 0 : i32
    %c0_i32_2 = arith.constant 0 : i32
    return %c0_i32, %c0_i32_0, %c0_i32_1 : i32, i32, i32
  }
  func.func @transform_2(%arg0: i32, %arg1: i32) -> (i32, i32) {
    %c0_i32 = arith.constant 0 : i32
    %c0_i32_0 = arith.constant 0 : i32
    %c0_i32_1 = arith.constant 0 : i32
    return %c0_i32, %c0_i32_0 : i32, i32
  }
  func.func @transform_3(%arg0: i32, %arg1: i32) -> (i32, i32) {
    %c0_i32 = arith.constant 0 : i32
    %c0_i32_0 = arith.constant 0 : i32
    %c0_i32_1 = arith.constant 0 : i32
    return %c0_i32, %c0_i32_0 : i32, i32
  }
  func.func @transform_4(%arg0: i32, %arg1: i32) -> (i32, i32) {
    %c0_i32 = arith.constant 0 : i32
    %c0_i32_0 = arith.constant 0 : i32
    %c0_i32_1 = arith.constant 0 : i32
    return %c0_i32, %c0_i32_0 : i32, i32
  }
  func.func @transform_5(%arg0: i32, %arg1: i32) -> (i32, i32) {
    %c0_i32 = arith.constant 0 : i32
    %c0_i32_0 = arith.constant 0 : i32
    %c0_i32_1 = arith.constant 0 : i32
    return %c0_i32, %c0_i32_0 : i32, i32
  }
  func.func @transform_6(%arg0: i32, %arg1: i32) -> (i32, i32) {
    %c0_i32 = arith.constant 0 : i32
    %c0_i32_0 = arith.constant 0 : i32
    %c0_i32_1 = arith.constant 0 : i32
    return %c0_i32, %c0_i32_0 : i32, i32
  }
  func.func @transform_7(%arg0: i32, %arg1: i32) -> (i32, i32) {
    %c0_i32 = arith.constant 0 : i32
    %c0_i32_0 = arith.constant 0 : i32
    %c0_i32_1 = arith.constant 0 : i32
    return %c0_i32, %c0_i32_0 : i32, i32
  }
  func.func @transform_8(%arg0: i32, %arg1: i32) -> (i32, i32) {
    %c0_i32 = arith.constant 0 : i32
    %c0_i32_0 = arith.constant 0 : i32
    %c0_i32_1 = arith.constant 0 : i32
    return %c0_i32, %c0_i32_0 : i32, i32
  }
  func.func @transform_9(%arg0: i32, %arg1: i32) -> (i32, i32) {
    %c0_i32 = arith.constant 0 : i32
    %c0_i32_0 = arith.constant 0 : i32
    %c0_i32_1 = arith.constant 0 : i32
    return %c0_i32, %c0_i32_0 : i32, i32
  }
  func.func @transform_10(%arg0: i32, %arg1: i32) -> (i32, i32, i32, i32) {
    %c0_i32 = arith.constant 0 : i32
    %c0_i32_0 = arith.constant 0 : i32
    %c0_i32_1 = arith.constant 0 : i32
    return %arg0, %arg1, %c0_i32, %c0_i32_0 : i32, i32, i32, i32
  }
}

</mosaic_0001>

<llo_original>
// kernel: tpu_custom_call.1
$region0: #{tpu_custom_call.1}
  #allocation0 [shape = 'u32[]', space=smem, size = 0x4, offset = 0x4, fixed_abs, tag = 'smem constant byte address 0x4 - core index']
  #allocation1 [shape = 'u32[72,128]{1,0:T(1,128)}', space=vmem, size = 0x9000, scoped, tag = 'internal scratch']
  %s0 = inlined_call_operand.hbm [shape: f32[2,24,128], index: 0, kind: input, shape index: {}]
  %s1 = inlined_call_operand.hbm [shape: f32[2,24,128], index: 1, kind: output, shape index: {}]
  %s2 = sld [smem:[#allocation0]]
  $region18: #{tpu_custom_call.1} parent=0
    _
  %s4 = ssub.s32 1, %s2
  %s5 = scalar_select 0, %s4, %s2
  $region1: #{tpu_custom_call.1} parent=0
    #allocation2 [shape = 'u8[24576]{0}', space=vmem, size = 0x6000, scoped, tag = 'input window, operand 0, single buffered']
    #allocation3 [shape = 's32[1]{0}', space=sflag, size = 0x4, scoped, tag = 'scoped memory for tpu_custom_call.1']
    #allocation4 [shape = 's32[1]{0}', space=sflag, size = 0x4, scoped, tag = 'scoped memory for tpu_custom_call.1']
    #allocation5 [shape = 'u8[24576]{0}', space=vmem, size = 0x6000, scoped, tag = 'output window, operand 0, single buffered']
    %6 = vsyncpa [#allocation3], 0
    %7 = vsyncpa [#allocation4], 0
    // Predicated region
    $region2: #{tpu_custom_call.1} parent=1 // pred_check
      _
    $region3: #{tpu_custom_call.1} parent=1 // pred_check_branch
      %9 = sbr.rel (0) target = $region5
    $region4: #{tpu_custom_call.1} parent=1 // pred_region
      %11 = vsyncadd [#allocation3], 0
      %s12 = sshll.u32 %s0, 4
      %s13 = int_to_ptr.hbm [resolvable:$true] %s12
      %s14 = sshll.u32 [#allocation2], 4
      %s15 = int_to_ptr.vmem [resolvable:$true] %s14
      %20 = dma.hbm_to_vmem [thread:$0]  %s13, 768, %s15, [#allocation3], 128, 128, 8
    $region5: #{tpu_custom_call.1} parent=1 // pred_fallthru
      _
    // Predicated region
    $region6: #{tpu_custom_call.1} parent=1 // pred_check
      _
    $region7: #{tpu_custom_call.1} parent=1 // pred_check_branch
      %22 = sbr.rel (0) target = $region9
    $region8: #{tpu_custom_call.1} parent=1 // pred_region
      %24 = dma.done [#allocation3], 768
    $region9: #{tpu_custom_call.1} parent=1 // pred_fallthru
      _
    %v25 = vld [vmem:[#allocation2] sm:$0xff]
    %v26 = vld [vmem:[#allocation2 + $0x8] sm:$0xff]
    %v27 = vld [vmem:[#allocation2 + $0x10] sm:$0xff]
    %v28 = vld [vmem:[#allocation2 + $0x18] sm:$0xff]
    %v29 = vld [vmem:[#allocation2 + $0x20] sm:$0xff]
    %v30 = vld [vmem:[#allocation2 + $0x28] sm:$0xff]
    %v31 = vrot.slane %v25, 7
    %v32 = vrot.slane %v28, 7
    %v33 = vrot.slane %v26, 7
    %v34 = vrot.slane %v29, 7
    %v35 = vrot.slane %v27, 7
    %v36 = vrot.slane %v30, 7
    %v37 = vlaneseq
    %v38 = vshrl.u32 %v37, 7
    %vm39 = vcmp.lt.s32.totalorder %v38, 1
    %v40 = vsel %vm39, %v33, %v35
    %v41 = vsel %vm39, %v34, %v36
    %v42 = vsel %vm39, %v31, %v33
    %v43 = vsel %vm39, %v32, %v34
    %v44 = vsel %vm39, %v35, %v31
    %v45 = vsel %vm39, %v36, %v32
    %46 = vst [vmem:[#allocation5] sm:$0xff] %v44
    %47 = vst [vmem:[#allocation5 + $0x8] sm:$0xff] %v42
    %48 = vst [vmem:[#allocation5 + $0x10] sm:$0xff] %v40
    %49 = vst [vmem:[#allocation5 + $0x18] sm:$0xff] %v45
    %50 = vst [vmem:[#allocation5 + $0x20] sm:$0xff] %v43
    %51 = vst [vmem:[#allocation5 + $0x28] sm:$0xff] %v41
    // Predicated region
    $region10: #{tpu_custom_call.1} parent=1 // pred_check
      _
    $region11: #{tpu_custom_call.1} parent=1 // pred_check_branch
      %53 = sbr.rel (0) target = $region13
    $region12: #{tpu_custom_call.1} parent=1 // pred_region
      %55 = vsyncadd [#allocation4], 0
      %s56 = sshll.u32 [#allocation5], 4
      %s57 = int_to_ptr.vmem [resolvable:$true] %s56
      %s58 = sshll.u32 %s1, 4
      %s59 = int_to_ptr.hbm [resolvable:$true] %s58
      %64 = dma.vmem_to_hbm [thread:$0]  %s57, 768, %s59, [#allocation4], 128, 128, 8
    $region13: #{tpu_custom_call.1} parent=1 // pred_fallthru
      _
    // Predicated region
    $region14: #{tpu_custom_call.1} parent=1 // pred_check
      _
    $region15: #{tpu_custom_call.1} parent=1 // pred_check_branch
      %66 = sbr.rel (0) target = $region17
    $region16: #{tpu_custom_call.1} parent=1 // pred_region
      %68 = dma.done [#allocation4], 768
    $region17: #{tpu_custom_call.1} parent=1 // pred_fallthru
      _
    %69 = vsyncpa [#allocation3], 1
    %70 = vsyncpa [#allocation4], 1

// kernel: _convnext_block_impl.1
$region0: #{_convnext_block_impl.1}
  #allocation0 [shape = 'u32[]', space=smem, size = 0x4, offset = 0x4, fixed_abs, tag = 'smem constant byte address 0x4 - core index']
  #allocation1 [shape = 'u32[72,128]{1,0:T(1,128)}', space=vmem, size = 0x9000, scoped, tag = 'internal scratch']
  #allocation2 [shape = 'f32[2,14,24,128]{3,2,1,0:T(8,128)}', space=vmem, size = 0x54000, scoped, tag = 'scratch operand']
  #allocation3 [shape = 's32[2]{0}', space=sflag, size = 0x8, scoped, tag = 'scratch operand']
  #allocation4 [shape = 's32[]', space=sflag, size = 0x4, offset = 0, fixed_abs, tag = 'sflag constant byte address 0x0 - dummy sync flag']
  #allocation5 [shape = 's32[]', space=sflag, size = 0x4, offset = 0, fixed_abs, tag = 'sflag constant byte address 0x0 - dummy sync flag']
  %s0 = inlined_call_operand.vmem [shape: f32[2,22,24,128], index: 0, kind: input, shape index: {}]
  %s1 = inlined_call_operand.vmem [shape: f32[7,7,128], index: 1, kind: input, shape index: {}]
  %s2 = inlined_call_operand.vmem [shape: f32[1,128], index: 2, kind: input, shape index: {}]
  %s3 = inlined_call_operand.vmem [shape: f32[1,128], index: 3, kind: input, shape index: {}]
  %s4 = inlined_call_operand.vmem [shape: f32[1,128], index: 4, kind: input, shape index: {}]
  %s5 = inlined_call_operand.vmem [shape: bf16[128,128], index: 5, kind: input, shape index: {}]
  %s6 = inlined_call_operand.vmem [shape: f32[1,128], index: 6, kind: input, shape index: {}]
  %s7 = inlined_call_operand.vmem [shape: bf16[128,128], index: 7, kind: input, shape index: {}]
  %s8 = inlined_call_operand.vmem [shape: f32[1,128], index: 8, kind: input, shape index: {}]
  %s9 = inlined_call_operand.vmem [shape: f32[1,128], index: 9, kind: input, shape index: {}]
  %s10 = inlined_call_operand.vmem [shape: f32[2,16,16,128], index: 10, kind: output, shape index: {}]
  %s11 = sld [smem:[#allocation0]]
  $region115: #{_convnext_block_impl.1} parent=0
    _
  %s13 = ssub.s32 1, %s11
  %s14 = scalar_select 0, %s13, %s11
  loop: start=0, step=1, limit=6
  $region2: #{_convnext_block_impl.1} parent=0 // loop_pre_header
    _
  $region3: #{_convnext_block_impl.1} parent=0 // loop_header
    %s16 = sphi 0, %s20
    %p17 = scmp.ge.s32.totalorder %s16, 6
    %s23 = sphi 0, %s35
    %s24 = sphi 0, %s31
    %s25 = sphi 0, %s23
    %s26 = sphi 0, %s24
    %s27 = sphi 0, %s25
    %s28 = sphi 0, %s26
    %s36 = sphi 0, %s36
    %s38 = sphi 0, %s36
    %s39 = sphi 0, %s38
    %s53 = sphi 0, %s39
    %s57 = sphi 0, %s57
    %s59 = sphi 0, %s57
    %s60 = sphi 0, %s59
    %s74 = sphi 0, %s60
    %s78 = sphi 0, %s78
    %s80 = sphi 0, %s78
    %s81 = sphi 0, %s80
    %s95 = sphi 0, %s81
    %s99 = sphi 0, %s99
    %s101 = sphi 0, %s99
    %s102 = sphi 0, %s101
    %s116 = sphi 0, %s102
    %s120 = sphi 0, %s120
    %s122 = sphi 0, %s120
    %s123 = sphi 0, %s122
    %s137 = sphi 0, %s123
    %s141 = sphi 0, %s141
    %s143 = sphi 0, %s141
    %s144 = sphi 0, %s143
    %s158 = sphi 0, %s144
    %s162 = sphi 0, %s162
    %s164 = sphi 0, %s162
    %s165 = sphi 0, %s164
    %s179 = sphi 0, %s165
    %s183 = sphi 0, %s183
    %s185 = sphi 0, %s183
    %s186 = sphi 0, %s185
    %s200 = sphi 0, %s186
    %s204 = sphi 0, %s204
    %s206 = sphi 0, %s204
    %s207 = sphi 0, %s206
    %s221 = sphi 0, %s207
    %s229 = sphi 0, %s231
    %s232 = sphi 0, %s229
    %s233 = sphi 0, %s232
    %s249 = sphi 0, %s233
  $region4: #{_convnext_block_impl.1} parent=0 // loop_header_branch
    %19 = sbr.rel (%p17) target = $region8
  $region5: #{_convnext_block_impl.1} parent=0 // loop_body
    %s21 = ssub.s32 %s16, 1
    %s22 = ssub.s32 %s16, 2
    %s29 = sadd.s32 1, %s24
    %p30 = scmp.ge.s32.totalorder %s29, 2
    %s31 = scalar_select %p30, 0, %s29
    %s32 = sadd.s32 1, %s23
    %s33 = scalar_select %p30, %s32, %s23
    %p34 = scmp.ge.s32.totalorder %s33, 2
    %s35 = scalar_select %p34, 0, %s33
    %s37 = sadd.s32 %s36, 1
    %p40 = scmp.eq.s32.totalorder %s16, 3
    %p41 = scmp.ne.s32.totalorder %s36, %s38
    %p42 = scmp.eq.s32.totalorder %s16, 0
    %p43 = por %p41, %p42
    %p44 = scmp.ne.s32.totalorder %s36, %s38
    %p45 = scmp.eq.s32.totalorder %s21, 3
    %p46 = por %p44, %p45
    %p47 = scmp.ne.s32.totalorder %s38, %s39
    %p48 = scmp.eq.s32.totalorder %s21, 0
    %p49 = por %p47, %p48
    %p50 = scmp.ne.s32.totalorder %s38, %s39
    %p51 = scmp.eq.s32.totalorder %s22, 3
    %p52 = por %p50, %p51
    %p54 = scmp.ne.s32.totalorder %s39, %s53
    %p55 = scmp.eq.s32.totalorder %s22, 0
    %p56 = por %p54, %p55
    %s58 = sadd.s32 %s57, 1
    %p61 = scmp.eq.s32.totalorder %s16, 3
    %p62 = scmp.ne.s32.totalorder %s57, %s59
    %p63 = scmp.eq.s32.totalorder %s16, 0
    %p64 = por %p62, %p63
    %p65 = scmp.ne.s32.totalorder %s57, %s59
    %p66 = scmp.eq.s32.totalorder %s21, 3
    %p67 = por %p65, %p66
    %p68 = scmp.ne.s32.totalorder %s59, %s60
    %p69 = scmp.eq.s32.totalorder %s21, 0
    %p70 = por %p68, %p69
    %p71 = scmp.ne.s32.totalorder %s59, %s60
    %p72 = scmp.eq.s32.totalorder %s22, 3
    %p73 = por %p71, %p72
    %p75 = scmp.ne.s32.totalorder %s60, %s74
    %p76 = scmp.eq.s32.totalorder %s22, 0
    %p77 = por %p75, %p76
    %s79 = sadd.s32 %s78, 1
    %p82 = scmp.eq.s32.totalorder %s16, 3
    %p83 = scmp.ne.s32.totalorder %s78, %s80
    %p84 = scmp.eq.s32.totalorder %s16, 0
    %p85 = por %p83, %p84
    %p86 = scmp.ne.s32.totalorder %s78, %s80
    %p87 = scmp.eq.s32.totalorder %s21, 3
    %p88 = por %p86, %p87
    %p89 = scmp.ne.s32.totalorder %s80, %s81
    %p90 = scmp.eq.s32.totalorder %s21, 0
    %p91 = por %p89, %p90
    %p92 = scmp.ne.s32.totalorder %s80, %s81
    %p93 = scmp.eq.s32.totalorder %s22, 3
    %p94 = por %p92, %p93
    %p96 = scmp.ne.s32.totalorder %s81, %s95
    %p97 = scmp.eq.s32.totalorder %s22, 0
    %p98 = por %p96, %p97
    %s100 = sadd.s32 %s99, 1
    %p103 = scmp.eq.s32.totalorder %s16, 3
    %p104 = scmp.ne.s32.totalorder %s99, %s101
    %p105 = scmp.eq.s32.totalorder %s16, 0
    %p106 = por %p104, %p105
    %p107 = scmp.ne.s32.totalorder %s99, %s101
    %p108 = scmp.eq.s32.totalorder %s21, 3
    %p109 = por %p107, %p108
    %p110 = scmp.ne.s32.totalorder %s101, %s102
    %p111 = scmp.eq.s32.totalorder %s21, 0
    %p112 = por %p110, %p111
    %p113 = scmp.ne.s32.totalorder %s101, %s102
    %p114 = scmp.eq.s32.totalorder %s22, 3
    %p115 = por %p113, %p114
    %p117 = scmp.ne.s32.totalorder %s102, %s116
    %p118 = scmp.eq.s32.totalorder %s22, 0
    %p119 = por %p117, %p118
    %s121 = sadd.s32 %s120, 1
    %p124 = scmp.eq.s32.totalorder %s16, 3
    %p125 = scmp.ne.s32.totalorder %s120, %s122
    %p126 = scmp.eq.s32.totalorder %s16, 0
    %p127 = por %p125, %p126
    %p128 = scmp.ne.s32.totalorder %s120, %s122
    %p129 = scmp.eq.s32.totalorder %s21, 3
    %p130 = por %p128, %p129
    %p131 = scmp.ne.s32.totalorder %s122, %s123
    %p132 = scmp.eq.s32.totalorder %s21, 0
    %p133 = por %p131, %p132
    %p134 = scmp.ne.s32.totalorder %s122, %s123
    %p135 = scmp.eq.s32.totalorder %s22, 3
    %p136 = por %p134, %p135
    %p138 = scmp.ne.s32.totalorder %s123, %s137
    %p139 = scmp.eq.s32.totalorder %s22, 0
    %p140 = por %p138, %p139
    %s142 = sadd.s32 %s141, 1
    %p145 = scmp.eq.s32.totalorder %s16, 3
    %p146 = scmp.ne.s32.totalorder %s141, %s143
    %p147 = scmp.eq.s32.totalorder %s16, 0
    %p148 = por %p146, %p147
    %p149 = scmp.ne.s32.totalorder %s141, %s143
    %p150 = scmp.eq.s32.totalorder %s21, 3
    %p151 = por %p149, %p150
    %p152 = scmp.ne.s32.totalorder %s143, %s144
    %p153 = scmp.eq.s32.totalorder %s21, 0
    %p154 = por %p152, %p153
    %p155 = scmp.ne.s32.totalorder %s143, %s144
    %p156 = scmp.eq.s32.totalorder %s22, 3
    %p157 = por %p155, %p156
    %p159 = scmp.ne.s32.totalorder %s144, %s158
    %p160 = scmp.eq.s32.totalorder %s22, 0
    %p161 = por %p159, %p160
    %s163 = sadd.s32 %s162, 1
    %p166 = scmp.eq.s32.totalorder %s16, 3
    %p167 = scmp.ne.s32.totalorder %s162, %s164
    %p168 = scmp.eq.s32.totalorder %s16, 0
    %p169 = por %p167, %p168
    %p170 = scmp.ne.s32.totalorder %s162, %s164
    %p171 = scmp.eq.s32.totalorder %s21, 3
    %p172 = por %p170, %p171
    %p173 = scmp.ne.s32.totalorder %s164, %s165
    %p174 = scmp.eq.s32.totalorder %s21, 0
    %p175 = por %p173, %p174
    %p176 = scmp.ne.s32.totalorder %s164, %s165
    %p177 = scmp.eq.s32.totalorder %s22, 3
    %p178 = por %p176, %p177
    %p180 = scmp.ne.s32.totalorder %s165, %s179
    %p181 = scmp.eq.s32.totalorder %s22, 0
    %p182 = por %p180, %p181
    %s184 = sadd.s32 %s183, 1
    %p187 = scmp.eq.s32.totalorder %s16, 3
    %p188 = scmp.ne.s32.totalorder %s183, %s185
    %p189 = scmp.eq.s32.totalorder %s16, 0
    %p190 = por %p188, %p189
    %p191 = scmp.ne.s32.totalorder %s183, %s185
    %p192 = scmp.eq.s32.totalorder %s21, 3
    %p193 = por %p191, %p192
    %p194 = scmp.ne.s32.totalorder %s185, %s186
    %p195 = scmp.eq.s32.totalorder %s21, 0
    %p196 = por %p194, %p195
    %p197 = scmp.ne.s32.totalorder %s185, %s186
    %p198 = scmp.eq.s32.totalorder %s22, 3
    %p199 = por %p197, %p198
    %p201 = scmp.ne.s32.totalorder %s186, %s200
    %p202 = scmp.eq.s32.totalorder %s22, 0
    %p203 = por %p201, %p202
    %s205 = sadd.s32 %s204, 1
    %p208 = scmp.eq.s32.totalorder %s16, 3
    %p209 = scmp.ne.s32.totalorder %s204, %s206
    %p210 = scmp.eq.s32.totalorder %s16, 0
    %p211 = por %p209, %p210
    %p212 = scmp.ne.s32.totalorder %s204, %s206
    %p213 = scmp.eq.s32.totalorder %s21, 3
    %p214 = por %p212, %p213
    %p215 = scmp.ne.s32.totalorder %s206, %s207
    %p216 = scmp.eq.s32.totalorder %s21, 0
    %p217 = por %p215, %p216
    %p218 = scmp.ne.s32.totalorder %s206, %s207
    %p219 = scmp.eq.s32.totalorder %s22, 3
    %p220 = por %p218, %p219
    %p222 = scmp.ne.s32.totalorder %s207, %s221
    %p223 = scmp.eq.s32.totalorder %s22, 0
    %p224 = por %p222, %p223
    %s225 = ssub.s32 %s23, %s35
    %s226 = ssub.s32 %s24, %s31
    %s227 = sor.u32 %s225, %s226
    %p228 = scmp.eq.s32.totalorder %s227, 0
    %s230 = sadd.s32 %s229, 1
    %s231 = scalar_select %p228, %s229, %s230
    %p234 = pneg %p228
    %p235 = scmp.eq.s32.totalorder %s16, 3
    %p236 = por %p234, %p235
    %p237 = scmp.ne.s32.totalorder %s229, %s232
    %p238 = scmp.eq.s32.totalorder %s16, 0
    %p239 = por %p237, %p238
    %p240 = scmp.ne.s32.totalorder %s229, %s232
    %p241 = scmp.eq.s32.totalorder %s21, 3
    %p242 = por %p240, %p241
    %p243 = scmp.ne.s32.totalorder %s232, %s233
    %p244 = scmp.eq.s32.totalorder %s21, 0
    %p245 = por %p243, %p244
    %p246 = scmp.ne.s32.totalorder %s232, %s233
    %p247 = scmp.eq.s32.totalorder %s22, 3
    %p248 = por %p246, %p247
    %p250 = scmp.ne.s32.totalorder %s233, %s249
    %p251 = scmp.eq.s32.totalorder %s22, 0
    %p252 = por %p250, %p251
    %p253 = scmp.le.s32.totalorder 1, %s16
    %p254 = scmp.lt.s32.totalorder %s16, 5
    %p255 = pnand %p253, %p254
    %p256 = pneg %p255
    // Predicated region
    $region9: #{_convnext_block_impl.1} parent=5 // pred_check
      _
    $region10: #{_convnext_block_impl.1} parent=5 // pred_check_branch
      %258 = sbr.rel (%p255) target = $region12
    $region11: #{_convnext_block_impl.1} parent=5 // pred_region
      %s259 = ssub.s32 %s16, 1
      // Predicated region
      $region13: #{_convnext_block_impl.1} parent=11 // pred_check
        %p260 = pneg %p49
      $region14: #{_convnext_block_impl.1} parent=11 // pred_check_branch
        %262 = sbr.rel (%p260) target = $region16
      $region15: #{_convnext_block_impl.1} parent=11 // pred_region
        _
      $region16: #{_convnext_block_impl.1} parent=11 // pred_fallthru
        _
      // Predicated region
      $region17: #{_convnext_block_impl.1} parent=11 // pred_check
        %p263 = pneg %p70
      $region18: #{_convnext_block_impl.1} parent=11 // pred_check_branch
        %265 = sbr.rel (%p263) target = $region20
      $region19: #{_convnext_block_impl.1} parent=11 // pred_region
        _
      $region20: #{_convnext_block_impl.1} parent=11 // pred_fallthru
        _
      // Predicated region
      $region21: #{_convnext_block_impl.1} parent=11 // pred_check
        %p266 = pneg %p91
      $region22: #{_convnext_block_impl.1} parent=11 // pred_check_branch
        %268 = sbr.rel (%p266) target = $region24
      $region23: #{_convnext_block_impl.1} parent=11 // pred_region
        _
      $region24: #{_convnext_block_impl.1} parent=11 // pred_fallthru
        _
      // Predicated region
      $region25: #{_convnext_block_impl.1} parent=11 // pred_check
        %p269 = pneg %p112
      $region26: #{_convnext_block_impl.1} parent=11 // pred_check_branch
        %271 = sbr.rel (%p269) target = $region28
      $region27: #{_convnext_block_impl.1} parent=11 // pred_region
        _
      $region28: #{_convnext_block_impl.1} parent=11 // pred_fallthru
        _
      // Predicated region
      $region29: #{_convnext_block_impl.1} parent=11 // pred_check
        %p272 = pneg %p133
      $region30: #{_convnext_block_impl.1} parent=11 // pred_check_branch
        %274 = sbr.rel (%p272) target = $region32
      $region31: #{_convnext_block_impl.1} parent=11 // pred_region
        _
      $region32: #{_convnext_block_impl.1} parent=11 // pred_fallthru
        _
      // Predicated region
      $region33: #{_convnext_block_impl.1} parent=11 // pred_check
        %p275 = pneg %p154
      $region34: #{_convnext_block_impl.1} parent=11 // pred_check_branch
        %277 = sbr.rel (%p275) target = $region36
      $region35: #{_convnext_block_impl.1} parent=11 // pred_region
        _
      $region36: #{_convnext_block_impl.1} parent=11 // pred_fallthru
        _
      // Predicated region
      $region37: #{_convnext_block_impl.1} parent=11 // pred_check
        %p278 = pneg %p175
      $region38: #{_convnext_block_impl.1} parent=11 // pred_check_branch
        %280 = sbr.rel (%p278) target = $region40
      $region39: #{_convnext_block_impl.1} parent=11 // pred_region
        _
      $region40: #{_convnext_block_impl.1} parent=11 // pred_fallthru
        _
      // Predicated region
      $region41: #{_convnext_block_impl.1} parent=11 // pred_check
        %p281 = pneg %p196
      $region42: #{_convnext_block_impl.1} parent=11 // pred_check_branch
        %283 = sbr.rel (%p281) target = $region44
      $region43: #{_convnext_block_impl.1} parent=11 // pred_region
        _
      $region44: #{_convnext_block_impl.1} parent=11 // pred_fallthru
        _
      // Predicated region
      $region45: #{_convnext_block_impl.1} parent=11 // pred_check
        %p284 = pneg %p217
      $region46: #{_convnext_block_impl.1} parent=11 // pred_check_branch
        %286 = sbr.rel (%p284) target = $region48
      $region47: #{_convnext_block_impl.1} parent=11 // pred_region
        _
      $region48: #{_convnext_block_impl.1} parent=11 // pred_fallthru
        _
    $region12: #{_convnext_block_impl.1} parent=5 // pred_fallthru
      _
    %p287 = scmp.lt.s32.totalorder %s16, 4
    // Predicated region
    $region49: #{_convnext_block_impl.1} parent=5 // pred_check
      %p288 = pneg %p287
    $region50: #{_convnext_block_impl.1} parent=5 // pred_check_branch
      %290 = sbr.rel (%p288) target = $region52
    $region51: #{_convnext_block_impl.1} parent=5 // pred_region
      _
    $region52: #{_convnext_block_impl.1} parent=5 // pred_fallthru
      _
    %p291 = scmp.le.s32.totalorder 1, %s16
    %p292 = scmp.lt.s32.totalorder %s16, 5
    %p293 = pnand %p291, %p292
    %p294 = pneg %p293
    // Predicated region
    $region53: #{_convnext_block_impl.1} parent=5 // pred_check
      _
    $region54: #{_convnext_block_impl.1} parent=5 // pred_check_branch
      %296 = sbr.rel (%p293) target = $region56
    $region55: #{_convnext_block_impl.1} parent=5 // pred_region
      %s297 = ssub.s32 %s16, 1
      %p298 = pneg %p49
      %p299 = pneg %p46
      %p300 = pneg %p70
      %p301 = pneg %p67
      %p302 = pneg %p91
      %p303 = pneg %p88
      %p304 = pneg %p112
      %p305 = pneg %p109
      %p306 = pneg %p133
      %p307 = pneg %p130
      %p308 = pneg %p154
      %p309 = pneg %p151
      %p310 = pneg %p175
      %p311 = pneg %p172
      %p312 = pneg %p196
      %p313 = pneg %p193
      %p314 = pneg %p217
      %p315 = pneg %p214
      %p316 = pneg %p245
      %p317 = pneg %p242
      %s318 = smul.u32 8, %s26
      %p319 = scmp.lt.s32.totalorder %s25, 1
      %s320 = scalar_select %p319, %s25, 1
      %p321 = scmp.lt.s32.totalorder %s318, 15
      %s322 = scalar_select %p321, %s318, 15
      %s323 = smul.addr %s322, 2
      %s324 = smul.addr %s320, 32
      %s325 = sadd.s32 %s323, %s324
      %s326 = smul.addr %s325, 8
      %s327 = scalar_lea.vmem %s10, %s326
      %s328 = smul.u32 8, %s26
      %p329 = scmp.lt.s32.totalorder %s25, 1
      %s330 = scalar_select %p329, %s25, 1
      %p331 = scmp.lt.s32.totalorder %s328, 15
      %s332 = scalar_select %p331, %s328, 15
      %s333 = smul.addr %s332, 2
      %s334 = smul.addr %s330, 32
      %s335 = sadd.s32 %s333, %s334
      %s336 = smul.addr %s335, 8
      %s337 = scalar_lea.vmem %s10, %s336
      %s338 = smul.u32 8, %s26
      %p339 = scmp.lt.s32.totalorder %s26, 0
      %s340 = ssub.s32 0, %s26
      %s341 = scalar_select %p339, %s340, %s26
      %s342 = sand.u32 %s341, 1
      %s343 = ssub.s32 0, %s342
      %s344 = scalar_select %p339, %s343, %s342
      %p345 = scmp.ne.s32.totalorder %s344, 0
      %p346 = scmp.lt.s32.totalorder %s344, 0
      %p347 = pnand %p346, %p345
      %p348 = pneg %p347
      %s349 = sadd.s32 %s344, 2
      %s350 = scalar_select %p348, %s349, %s344
      %p351 = scmp.eq.s32.totalorder %s26, 0
      // Predicated region
      $region57: #{_convnext_block_impl.1} parent=55 // pred_check
        %p352 = pneg %p351
      $region58: #{_convnext_block_impl.1} parent=55 // pred_check_branch
        %354 = sbr.rel (%p352) target = $region60
      $region59: #{_convnext_block_impl.1} parent=55 // pred_region
        %s355 = smul.u32 %s25, 528
        %s356 = scalar_lea.vmem %s0, %s355
        %s357 = smul.u32 %s350, 336
        %s358 = scalar_lea.vmem [#allocation2], %s357
        %s359 = scalar_lea.sflag [#allocation3], %s350
        // Predicated region
        $region61: #{_convnext_block_impl.1} parent=59 // pred_check
          _
        $region62: #{_convnext_block_impl.1} parent=59 // pred_check_branch
          %361 = sbr.rel (0) target = $region64
        $region63: #{_convnext_block_impl.1} parent=59 // pred_region
          loop: start=0, step=1, limit=1
          $region65: #{_convnext_block_impl.1} parent=63 // loop_pre_header
            _
          $region66: #{_convnext_block_impl.1} parent=63 // loop_header
            %s363 = sphi 0, %s367
            %p364 = scmp.ge.s32.totalorder %s363, 1
            %s368 = sphi %s356, %s356
            %s369 = sphi %s358, %s358
          $region67: #{_convnext_block_impl.1} parent=63 // loop_header_branch
            %366 = sbr.rel (%p364) target = $region71
          $region68: #{_convnext_block_impl.1} parent=63 // loop_body
            %v370 = vld [vmem:[%s368] sm:$0xff]
            %371 = vst [vmem:[%s369] sm:$0xff] %v370
            %v372 = vld [vmem:[%s368 + $0x8] sm:$0xff]
            %373 = vst [vmem:[%s369 + $0x8] sm:$0xff] %v372
            %v374 = vld [vmem:[%s368 + $0x10] sm:$0xff]
            %375 = vst [vmem:[%s369 + $0x10] sm:$0xff] %v374
            %v376 = vld [vmem:[%s368 + $0x18] sm:$0xff]
            %377 = vst [vmem:[%s369 + $0x18] sm:$0xff] %v376
            %v378 = vld [vmem:[%s368 + $0x20] sm:$0xff]
            %379 = vst [vmem:[%s369 + $0x20] sm:$0xff] %v378
            %v380 = vld [vmem:[%s368 + $0x28] sm:$0xff]
            %381 = vst [vmem:[%s369 + $0x28] sm:$0xff] %v380
            %v382 = vld [vmem:[%s368 + $0x30] sm:$0xff]
            %383 = vst [vmem:[%s369 + $0x30] sm:$0xff] %v382
            %v384 = vld [vmem:[%s368 + $0x38] sm:$0xff]
            %385 = vst [vmem:[%s369 + $0x38] sm:$0xff] %v384
            %v386 = vld [vmem:[%s368 + $0x40] sm:$0xff]
            %387 = vst [vmem:[%s369 + $0x40] sm:$0xff] %v386
            %v388 = vld [vmem:[%s368 + $0x48] sm:$0xff]
            %389 = vst [vmem:[%s369 + $0x48] sm:$0xff] %v388
            %v390 = vld [vmem:[%s368 + $0x50] sm:$0xff]
            %391 = vst [vmem:[%s369 + $0x50] sm:$0xff] %v390
            %v392 = vld [vmem:[%s368 + $0x58] sm:$0xff]
            %393 = vst [vmem:[%s369 + $0x58] sm:$0xff] %v392
            %v394 = vld [vmem:[%s368 + $0x60] sm:$0xff]
            %395 = vst [vmem:[%s369 + $0x60] sm:$0xff] %v394
            %v396 = vld [vmem:[%s368 + $0x68] sm:$0xff]
            %397 = vst [vmem:[%s369 + $0x68] sm:$0xff] %v396
            %v398 = vld [vmem:[%s368 + $0x70] sm:$0xff]
            %399 = vst [vmem:[%s369 + $0x70] sm:$0xff] %v398
            %v400 = vld [vmem:[%s368 + $0x78] sm:$0xff]
            %401 = vst [vmem:[%s369 + $0x78] sm:$0xff] %v400
            %v402 = vld [vmem:[%s368 + $0x80] sm:$0xff]
            %403 = vst [vmem:[%s369 + $0x80] sm:$0xff] %v402
            %v404 = vld [vmem:[%s368 + $0x88] sm:$0xff]
            %405 = vst [vmem:[%s369 + $0x88] sm:$0xff] %v404
            %v406 = vld [vmem:[%s368 + $0x90] sm:$0xff]
            %407 = vst [vmem:[%s369 + $0x90] sm:$0xff] %v406
            %v408 = vld [vmem:[%s368 + $0x98] sm:$0xff]
            %409 = vst [vmem:[%s369 + $0x98] sm:$0xff] %v408
            %v410 = vld [vmem:[%s368 + $0xa0] sm:$0xff]
            %411 = vst [vmem:[%s369 + $0xa0] sm:$0xff] %v410
            %v412 = vld [vmem:[%s368 + $0xa8] sm:$0xff]
            %413 = vst [vmem:[%s369 + $0xa8] sm:$0xff] %v412
            %v414 = vld [vmem:[%s368 + $0xb0] sm:$0xff]
            %415 = vst [vmem:[%s369 + $0xb0] sm:$0xff] %v414
            %v416 = vld [vmem:[%s368 + $0xb8] sm:$0xff]
            %417 = vst [vmem:[%s369 + $0xb8] sm:$0xff] %v416
            %v418 = vld [vmem:[%s368 + $0xc0] sm:$0xff]
            %419 = vst [vmem:[%s369 + $0xc0] sm:$0xff] %v418
            %v420 = vld [vmem:[%s368 + $0xc8] sm:$0xff]
            %421 = vst [vmem:[%s369 + $0xc8] sm:$0xff] %v420
            %v422 = vld [vmem:[%s368 + $0xd0] sm:$0xff]
            %423 = vst [vmem:[%s369 + $0xd0] sm:$0xff] %v422
            %v424 = vld [vmem:[%s368 + $0xd8] sm:$0xff]
            %425 = vst [vmem:[%s369 + $0xd8] sm:$0xff] %v424
            %v426 = vld [vmem:[%s368 + $0xe0] sm:$0xff]
            %427 = vst [vmem:[%s369 + $0xe0] sm:$0xff] %v426
            %v428 = vld [vmem:[%s368 + $0xe8] sm:$0xff]
            %429 = vst [vmem:[%s369 + $0xe8] sm:$0xff] %v428
            %v430 = vld [vmem:[%s368 + $0xf0] sm:$0xff]
            %431 = vst [vmem:[%s369 + $0xf0] sm:$0xff] %v430
            %v432 = vld [vmem:[%s368 + $0xf8] sm:$0xff]
            %433 = vst [vmem:[%s369 + $0xf8] sm:$0xff] %v432
            %v434 = vld [vmem:[%s368 + $0x100] sm:$0xff]
            %435 = vst [vmem:[%s369 + $0x100] sm:$0xff] %v434
            %v436 = vld [vmem:[%s368 + $0x108] sm:$0xff]
            %437 = vst [vmem:[%s369 + $0x108] sm:$0xff] %v436
            %v438 = vld [vmem:[%s368 + $0x110] sm:$0xff]
            %439 = vst [vmem:[%s369 + $0x110] sm:$0xff] %v438
            %v440 = vld [vmem:[%s368 + $0x118] sm:$0xff]
            %441 = vst [vmem:[%s369 + $0x118] sm:$0xff] %v440
            %v442 = vld [vmem:[%s368 + $0x120] sm:$0xff]
            %443 = vst [vmem:[%s369 + $0x120] sm:$0xff] %v442
            %v444 = vld [vmem:[%s368 + $0x128] sm:$0xff]
            %445 = vst [vmem:[%s369 + $0x128] sm:$0xff] %v444
            %v446 = vld [vmem:[%s368 + $0x130] sm:$0xff]
            %447 = vst [vmem:[%s369 + $0x130] sm:$0xff] %v446
            %v448 = vld [vmem:[%s368 + $0x138] sm:$0xff]
            %449 = vst [vmem:[%s369 + $0x138] sm:$0xff] %v448
            %v450 = vld [vmem:[%s368 + $0x140] sm:$0xff]
            %451 = vst [vmem:[%s369 + $0x140] sm:$0xff] %v450
            %v452 = vld [vmem:[%s368 + $0x148] sm:$0xff]
            %453 = vst [vmem:[%s369 + $0x148] sm:$0xff] %v452
          $region69: #{_convnext_block_impl.1} parent=63 // loop_footer
            %s367 = sadd.s32 1, %s363
          $region70: #{_convnext_block_impl.1} parent=63 // loop_footer_branch
            %362 = sbr.rel target = $region66
          $region71: #{_convnext_block_impl.1} parent=63 // loop_exit
            _
        $region64: #{_convnext_block_impl.1} parent=59 // pred_fallthru
          _
        // Predicated region
        $region72: #{_convnext_block_impl.1} parent=59 // pred_check
          _
        $region73: #{_convnext_block_impl.1} parent=59 // pred_check_branch
          %455 = sbr.rel target = $region75
        $region74: #{_convnext_block_impl.1} parent=59 // pred_region
          _
        $region75: #{_convnext_block_impl.1} parent=59 // pred_fallthru
          _
        // Predicated region
        $region76: #{_convnext_block_impl.1} parent=59 // pred_check
          _
        $region77: #{_convnext_block_impl.1} parent=59 // pred_check_branch
          %458 = sbr.rel (0) target = $region79
        $region78: #{_convnext_block_impl.1} parent=59 // pred_region
          %459 = vsyncadd %s359, 5376
        $region79: #{_convnext_block_impl.1} parent=59 // pred_fallthru
          _
      $region60: #{_convnext_block_impl.1} parent=55 // pred_fallthru
        _
      %s460 = smul.u32 %s350, 336
      %s461 = scalar_lea.vmem [#allocation2], %s460
      %s462 = scalar_lea.sflag [#allocation3], %s350
      %s463 = smul.u32 14, 24
      %s464 = smul.u32 %s463, 1
      %s465 = sshll.u32 %s464, 4
      %466 = dma.done %s462, %s465
      %s467 = sadd.s32 %s26, 1
      %p468 = scmp.lt.s32.totalorder %s467, 2
      // Predicated region
      $region80: #{_convnext_block_impl.1} parent=55 // pred_check
        %p469 = pneg %p468
      $region81: #{_convnext_block_impl.1} parent=55 // pred_check_branch
        %471 = sbr.rel (%p469) target = $region83
      $region82: #{_convnext_block_impl.1} parent=55 // pred_region
        %s472 = ssub.s32 1, %s350
        %s473 = smul.u32 %s467, 8
        %s474 = smul.u32 %s473, 24
        %s475 = smul.u32 %s25, 528
        %s476 = sadd.s32 %s474, %s475
        %s477 = scalar_lea.vmem %s0, %s476
        %s478 = smul.u32 %s472, 336
        %s479 = scalar_lea.vmem [#allocation2], %s478
        %s480 = scalar_lea.sflag [#allocation3], %s472
        // Predicated region
        $region84: #{_convnext_block_impl.1} parent=82 // pred_check
          _
        $region85: #{_convnext_block_impl.1} parent=82 // pred_check_branch
          %482 = sbr.rel (0) target = $region87
        $region86: #{_convnext_block_impl.1} parent=82 // pred_region
          loop: start=0, step=1, limit=1
          $region88: #{_convnext_block_impl.1} parent=86 // loop_pre_header
            _
          $region89: #{_convnext_block_impl.1} parent=86 // loop_header
            %s484 = sphi 0, %s488
            %p485 = scmp.ge.s32.totalorder %s484, 1
            %s489 = sphi %s477, %s477
            %s490 = sphi %s479, %s479
          $region90: #{_convnext_block_impl.1} parent=86 // loop_header_branch
            %487 = sbr.rel (%p485) target = $region94
          $region91: #{_convnext_block_impl.1} parent=86 // loop_body
            %v491 = vld [vmem:[%s489] sm:$0xff]
            %492 = vst [vmem:[%s490] sm:$0xff] %v491
            %v493 = vld [vmem:[%s489 + $0x8] sm:$0xff]
            %494 = vst [vmem:[%s490 + $0x8] sm:$0xff] %v493
            %v495 = vld [vmem:[%s489 + $0x10] sm:$0xff]
            %496 = vst [vmem:[%s490 + $0x10] sm:$0xff] %v495
            %v497 = vld [vmem:[%s489 + $0x18] sm:$0xff]
            %498 = vst [vmem:[%s490 + $0x18] sm:$0xff] %v497
            %v499 = vld [vmem:[%s489 + $0x20] sm:$0xff]
            %500 = vst [vmem:[%s490 + $0x20] sm:$0xff] %v499
            %v501 = vld [vmem:[%s489 + $0x28] sm:$0xff]
            %502 = vst [vmem:[%s490 + $0x28] sm:$0xff] %v501
            %v503 = vld [vmem:[%s489 + $0x30] sm:$0xff]
            %504 = vst [vmem:[%s490 + $0x30] sm:$0xff] %v503
            %v505 = vld [vmem:[%s489 + $0x38] sm:$0xff]
            %506 = vst [vmem:[%s490 + $0x38] sm:$0xff] %v505
            %v507 = vld [vmem:[%s489 + $0x40] sm:$0xff]
            %508 = vst [vmem:[%s490 + $0x40] sm:$0xff] %v507
            %v509 = vld [vmem:[%s489 + $0x48] sm:$0xff]
            %510 = vst [vmem:[%s490 + $0x48] sm:$0xff] %v509
            %v511 = vld [vmem:[%s489 + $0x50] sm:$0xff]
            %512 = vst [vmem:[%s490 + $0x50] sm:$0xff] %v511
            %v513 = vld [vmem:[%s489 + $0x58] sm:$0xff]
            %514 = vst [vmem:[%s490 + $0x58] sm:$0xff] %v513
            %v515 = vld [vmem:[%s489 + $0x60] sm:$0xff]
            %516 = vst [vmem:[%s490 + $0x60] sm:$0xff] %v515
            %v517 = vld [vmem:[%s489 + $0x68] sm:$0xff]
            %518 = vst [vmem:[%s490 + $0x68] sm:$0xff] %v517
            %v519 = vld [vmem:[%s489 + $0x70] sm:$0xff]
            %520 = vst [vmem:[%s490 + $0x70] sm:$0xff] %v519
            %v521 = vld [vmem:[%s489 + $0x78] sm:$0xff]
            %522 = vst [vmem:[%s490 + $0x78] sm:$0xff] %v521
            %v523 = vld [vmem:[%s489 + $0x80] sm:$0xff]
            %524 = vst [vmem:[%s490 + $0x80] sm:$0xff] %v523
            %v525 = vld [vmem:[%s489 + $0x88] sm:$0xff]
            %526 = vst [vmem:[%s490 + $0x88] sm:$0xff] %v525
            %v527 = vld [vmem:[%s489 + $0x90] sm:$0xff]
            %528 = vst [vmem:[%s490 + $0x90] sm:$0xff] %v527
            %v529 = vld [vmem:[%s489 + $0x98] sm:$0xff]
            %530 = vst [vmem:[%s490 + $0x98] sm:$0xff] %v529
            %v531 = vld [vmem:[%s489 + $0xa0] sm:$0xff]
            %532 = vst [vmem:[%s490 + $0xa0] sm:$0xff] %v531
            %v533 = vld [vmem:[%s489 + $0xa8] sm:$0xff]
            %534 = vst [vmem:[%s490 + $0xa8] sm:$0xff] %v533
            %v535 = vld [vmem:[%s489 + $0xb0] sm:$0xff]
            %536 = vst [vmem:[%s490 + $0xb0] sm:$0xff] %v535
            %v537 = vld [vmem:[%s489 + $0xb8] sm:$0xff]
            %538 = vst [vmem:[%s490 + $0xb8] sm:$0xff] %v537
            %v539 = vld [vmem:[%s489 + $0xc0] sm:$0xff]
            %540 = vst [vmem:[%s490 + $0xc0] sm:$0xff] %v539
            %v541 = vld [vmem:[%s489 + $0xc8] sm:$0xff]
            %542 = vst [vmem:[%s490 + $0xc8] sm:$0xff] %v541
            %v543 = vld [vmem:[%s489 + $0xd0] sm:$0xff]
            %544 = vst [vmem:[%s490 + $0xd0] sm:$0xff] %v543
            %v545 = vld [vmem:[%s489 + $0xd8] sm:$0xff]
            %546 = vst [vmem:[%s490 + $0xd8] sm:$0xff] %v545
            %v547 = vld [vmem:[%s489 + $0xe0] sm:$0xff]
            %548 = vst [vmem:[%s490 + $0xe0] sm:$0xff] %v547
            %v549 = vld [vmem:[%s489 + $0xe8] sm:$0xff]
            %550 = vst [vmem:[%s490 + $0xe8] sm:$0xff] %v549
            %v551 = vld [vmem:[%s489 + $0xf0] sm:$0xff]
            %552 = vst [vmem:[%s490 + $0xf0] sm:$0xff] %v551
            %v553 = vld [vmem:[%s489 + $0xf8] sm:$0xff]
            %554 = vst [vmem:[%s490 + $0xf8] sm:$0xff] %v553
            %v555 = vld [vmem:[%s489 + $0x100] sm:$0xff]
            %556 = vst [vmem:[%s490 + $0x100] sm:$0xff] %v555
            %v557 = vld [vmem:[%s489 + $0x108] sm:$0xff]
            %558 = vst [vmem:[%s490 + $0x108] sm:$0xff] %v557
            %v559 = vld [vmem:[%s489 + $0x110] sm:$0xff]
            %560 = vst [vmem:[%s490 + $0x110] sm:$0xff] %v559
            %v561 = vld [vmem:[%s489 + $0x118] sm:$0xff]
            %562 = vst [vmem:[%s490 + $0x118] sm:$0xff] %v561
            %v563 = vld [vmem:[%s489 + $0x120] sm:$0xff]
            %564 = vst [vmem:[%s490 + $0x120] sm:$0xff] %v563
            %v565 = vld [vmem:[%s489 + $0x128] sm:$0xff]
            %566 = vst [vmem:[%s490 + $0x128] sm:$0xff] %v565
            %v567 = vld [vmem:[%s489 + $0x130] sm:$0xff]
            %568 = vst [vmem:[%s490 + $0x130] sm:$0xff] %v567
            %v569 = vld [vmem:[%s489 + $0x138] sm:$0xff]
            %570 = vst [vmem:[%s490 + $0x138] sm:$0xff] %v569
            %v571 = vld [vmem:[%s489 + $0x140] sm:$0xff]
            %572 = vst [vmem:[%s490 + $0x140] sm:$0xff] %v571
            %v573 = vld [vmem:[%s489 + $0x148] sm:$0xff]
            %574 = vst [vmem:[%s490 + $0x148] sm:$0xff] %v573
          $region92: #{_convnext_block_impl.1} parent=86 // loop_footer
            %s488 = sadd.s32 1, %s484
          $region93: #{_convnext_block_impl.1} parent=86 // loop_footer_branch
            %483 = sbr.rel target = $region89
          $region94: #{_convnext_block_impl.1} parent=86 // loop_exit
            _
        $region87: #{_convnext_block_impl.1} parent=82 // pred_fallthru
          _
        // Predicated region
        $region95: #{_convnext_block_impl.1} parent=82 // pred_check
          _
        $region96: #{_convnext_block_impl.1} parent=82 // pred_check_branch
          %576 = sbr.rel target = $region98
        $region97: #{_convnext_block_impl.1} parent=82 // pred_region
          _
        $region98: #{_convnext_block_impl.1} parent=82 // pred_fallthru
          _
        // Predicated region
        $region99: #{_convnext_block_impl.1} parent=82 // pred_check
          _
        $region100: #{_convnext_block_impl.1} parent=82 // pred_check_branch
          %579 = sbr.rel (0) target = $region102
        $region101: #{_convnext_block_impl.1} parent=82 // pred_region
          %580 = vsyncadd %s480, 5376
        $region102: #{_convnext_block_impl.1} parent=82 // pred_fallthru
          _
      $region83: #{_convnext_block_impl.1} parent=55 // pred_fallthru
        _
      %v581 = vld [vmem:[%s461] sm:$0xff]
      %v582 = vld [vmem:[%s461 + $0x8] sm:$0xff]
      %v583 = vld [vmem:[%s461 + $0x10] sm:$0xff]
      %v584 = vld [vmem:[%s461 + $0x18] sm:$0xff]
      %v585 = vld [vmem:[%s461 + $0x20] sm:$0xff]
      %v586 = vld [vmem:[%s461 + $0x28] sm:$0xff]
      %v587 = vld [vmem:[%s461 + $0x30] sm:$0xff]
      %v588 = vld [vmem:[%s461 + $0x38] sm:$0xff]
      %v589 = vld [vmem:[%s461 + $0x40] sm:$0xff]
      %v590 = vld [vmem:[%s461 + $0x48] sm:$0xff]
      %v591 = vld [vmem:[%s461 + $0x50] sm:$0xff]
      %v592 = vld [vmem:[%s461 + $0x58] sm:$0xff]
      %v593 = vld [vmem:[%s461 + $0x60] sm:$0xff]
      %v594 = vld [vmem:[%s461 + $0x68] sm:$0xff]
      %v595 = vld [vmem:[%s461 + $0x70] sm:$0xff]
      %v596 = vld [vmem:[%s461 + $0x78] sm:$0xff]
      %v597 = vld [vmem:[%s461 + $0x80] sm:$0xff]
      %v598 = vld [vmem:[%s461 + $0x88] sm:$0xff]
      %v599 = vld [vmem:[%s461 + $0x90] sm:$0xff]
      %v600 = vld [vmem:[%s461 + $0x98] sm:$0xff]
      %v601 = vld [vmem:[%s461 + $0xa0] sm:$0xff]
      %v602 = vld [vmem:[%s461 + $0xa8] sm:$0xff]
      %v603 = vld [vmem:[%s461 + $0xb0] sm:$0xff]
      %v604 = vld [vmem:[%s461 + $0xb8] sm:$0xff]
      %v605 = vld [vmem:[%s461 + $0xc0] sm:$0xff]
      %v606 = vld [vmem:[%s461 + $0xc8] sm:$0xff]
      %v607 = vld [vmem:[%s461 + $0xd0] sm:$0xff]
      %v608 = vld [vmem:[%s461 + $0xd8] sm:$0xff]
      %v609 = vld [vmem:[%s461 + $0xe0] sm:$0xff]
      %v610 = vld [vmem:[%s461 + $0xe8] sm:$0xff]
      %v611 = vld [vmem:[%s461 + $0xf0] sm:$0xff]
      %v612 = vld [vmem:[%s461 + $0xf8] sm:$0xff]
      %v613 = vld [vmem:[%s461 + $0x100] sm:$0xff]
      %v614 = vld [vmem:[%s461 + $0x108] sm:$0xff]
      %v615 = vld [vmem:[%s461 + $0x110] sm:$0xff]
      %v616 = vld [vmem:[%s461 + $0x118] sm:$0xff]
      %v617 = vld [vmem:[%s461 + $0x120] sm:$0xff]
      %v618 = vld [vmem:[%s461 + $0x128] sm:$0xff]
      %v619 = vld [vmem:[%s461 + $0x130] sm:$0xff]
      %v620 = vld [vmem:[%s461 + $0x138] sm:$0xff]
      %v621 = vld [vmem:[%s461 + $0x140] sm:$0xff]
      %v622 = vld [vmem:[%s461 + $0x148] sm:$0xff]
      %v623 = vld [vmem:[%s1] sm:$0x7f]
      %v624 = vld [vmem:[%s1 + $0x8] sm:$0x7f]
      %v625 = vld [vmem:[%s1 + $0x10] sm:$0x7f]
      %v626 = vld [vmem:[%s1 + $0x18] sm:$0x7f]
      %v627 = vld [vmem:[%s1 + $0x20] sm:$0x7f]
      %v628 = vld [vmem:[%s1 + $0x28] sm:$0x7f]
      %v629 = vld [vmem:[%s1 + $0x30] sm:$0x7f]
      %v630 = vperm.slane %v623, 0
      %v631 = vmul.f32 %v581, %v630
      %v632 = vmul.f32 %v582, %v630
      %v633 = vmul.f32 %v584, %v630
      %v634 = vmul.f32 %v585, %v630
      %v635 = vmul.f32 %v587, %v630
      %v636 = vmul.f32 %v588, %v630
      %v637 = vmul.f32 %v590, %v630
      %v638 = vmul.f32 %v591, %v630
      %v639 = vmul.f32 %v593, %v630
      %v640 = vmul.f32 %v594, %v630
      %v641 = vmul.f32 %v596, %v630
      %v642 = vmul.f32 %v597, %v630
      %v643 = vmul.f32 %v599, %v630
      %v644 = vmul.f32 %v600, %v630
      %v645 = vmul.f32 %v602, %v630
      %v646 = vmul.f32 %v603, %v630
      %v647 = vadd.f32 %v631, 0.0
      %v648 = vadd.f32 %v632, 0.0
      %v649 = vadd.f32 %v633, 0.0
      %v650 = vadd.f32 %v634, 0.0
      %v651 = vadd.f32 %v635, 0.0
      %v652 = vadd.f32 %v636, 0.0
      %v653 = vadd.f32 %v637, 0.0
      %v654 = vadd.f32 %v638, 0.0
      %v655 = vadd.f32 %v639, 0.0
      %v656 = vadd.f32 %v640, 0.0
      %v657 = vadd.f32 %v641, 0.0
      %v658 = vadd.f32 %v642, 0.0
      %v659 = vadd.f32 %v643, 0.0
      %v660 = vadd.f32 %v644, 0.0
      %v661 = vadd.f32 %v645, 0.0
      %v662 = vadd.f32 %v646, 0.0
      %v663 = vperm.slane %v624, 0
      %v664 = vmul.f32 %v584, %v663
      %v665 = vmul.f32 %v585, %v663
      %v666 = vmul.f32 %v587, %v663
      %v667 = vmul.f32 %v588, %v663
      %v668 = vmul.f32 %v590, %v663
      %v669 = vmul.f32 %v591, %v663
      %v670 = vmul.f32 %v593, %v663
      %v671 = vmul.f32 %v594, %v663
      %v672 = vmul.f32 %v596, %v663
      %v673 = vmul.f32 %v597, %v663
      %v674 = vmul.f32 %v599, %v663
      %v675 = vmul.f32 %v600, %v663
      %v676 = vmul.f32 %v602, %v663
      %v677 = vmul.f32 %v603, %v663
      %v678 = vmul.f32 %v605, %v663
      %v679 = vmul.f32 %v606, %v663
      %v680 = vadd.f32 %v647, %v664
      %v681 = vadd.f32 %v648, %v665
      %v682 = vadd.f32 %v649, %v666
      %v683 = vadd.f32 %v650, %v667
      %v684 = vadd.f32 %v651, %v668
      %v685 = vadd.f32 %v652, %v669
      %v686 = vadd.f32 %v653, %v670
      %v687 = vadd.f32 %v654, %v671
      %v688 = vadd.f32 %v655, %v672
      %v689 = vadd.f32 %v656, %v673
      %v690 = vadd.f32 %v657, %v674
      %v691 = vadd.f32 %v658, %v675
      %v692 = vadd.f32 %v659, %v676
      %v693 = vadd.f32 %v660, %v677
      %v694 = vadd.f32 %v661, %v678
      %v695 = vadd.f32 %v662, %v679
      %v696 = vperm.slane %v625, 0
      %v697 = vmul.f32 %v587, %v696
      %v698 = vmul.f32 %v588, %v696
      %v699 = vmul.f32 %v590, %v696
      %v700 = vmul.f32 %v591, %v696
      %v701 = vmul.f32 %v593, %v696
      %v702 = vmul.f32 %v594, %v696
      %v703 = vmul.f32 %v596, %v696
      %v704 = vmul.f32 %v597, %v696
      %v705 = vmul.f32 %v599, %v696
      %v706 = vmul.f32 %v600, %v696
      %v707 = vmul.f32 %v602, %v696
      %v708 = vmul.f32 %v603, %v696
      %v709 = vmul.f32 %v605, %v696
      %v710 = vmul.f32 %v606, %v696
      %v711 = vmul.f32 %v608, %v696
      %v712 = vmul.f32 %v609, %v696
      %v713 = vadd.f32 %v680, %v697
      %v714 = vadd.f32 %v681, %v698
      %v715 = vadd.f32 %v682, %v699
      %v716 = vadd.f32 %v683, %v700
      %v717 = vadd.f32 %v684, %v701
      %v718 = vadd.f32 %v685, %v702
      %v719 = vadd.f32 %v686, %v703
      %v720 = vadd.f32 %v687, %v704
      %v721 = vadd.f32 %v688, %v705
      %v722 = vadd.f32 %v689, %v706
      %v723 = vadd.f32 %v690, %v707
      %v724 = vadd.f32 %v691, %v708
      %v725 = vadd.f32 %v692, %v709
      %v726 = vadd.f32 %v693, %v710
      %v727 = vadd.f32 %v694, %v711
      %v728 = vadd.f32 %v695, %v712
      %v729 = vperm.slane %v626, 0
      %v730 = vmul.f32 %v590, %v729
      %v731 = vmul.f32 %v591, %v729
      %v732 = vmul.f32 %v593, %v729
      %v733 = vmul.f32 %v594, %v729
      %v734 = vmul.f32 %v596, %v729
      %v735 = vmul.f32 %v597, %v729
      %v736 = vmul.f32 %v599, %v729
      %v737 = vmul.f32 %v600, %v729
      %v738 = vmul.f32 %v602, %v729
      %v739 = vmul.f32 %v603, %v729
      %v740 = vmul.f32 %v605, %v729
      %v741 = vmul.f32 %v606, %v729
      %v742 = vmul.f32 %v608, %v729
      %v743 = vmul.f32 %v609, %v729
      %v744 = vmul.f32 %v611, %v729
      %v745 = vmul.f32 %v612, %v729
      %v746 = vadd.f32 %v713, %v730
      %v747 = vadd.f32 %v714, %v731
      %v748 = vadd.f32 %v715, %v732
      %v749 = vadd.f32 %v716, %v733
      %v750 = vadd.f32 %v717, %v734
      %v751 = vadd.f32 %v718, %v735
      %v752 = vadd.f32 %v719, %v736
      %v753 = vadd.f32 %v720, %v737
      %v754 = vadd.f32 %v721, %v738
      %v755 = vadd.f32 %v722, %v739
      %v756 = vadd.f32 %v723, %v740
      %v757 = vadd.f32 %v724, %v741
      %v758 = vadd.f32 %v725, %v742
      %v759 = vadd.f32 %v726, %v743
      %v760 = vadd.f32 %v727, %v744
      %v761 = vadd.f32 %v728, %v745
      %v762 = vperm.slane %v627, 0
      %v763 = vmul.f32 %v593, %v762
      %v764 = vmul.f32 %v594, %v762
      %v765 = vmul.f32 %v596, %v762
      %v766 = vmul.f32 %v597, %v762
      %v767 = vmul.f32 %v599, %v762
      %v768 = vmul.f32 %v600, %v762
      %v769 = vmul.f32 %v602, %v762
      %v770 = vmul.f32 %v603, %v762
      %v771 = vmul.f32 %v605, %v762
      %v772 = vmul.f32 %v606, %v762
      %v773 = vmul.f32 %v608, %v762
      %v774 = vmul.f32 %v609, %v762
      %v775 = vmul.f32 %v611, %v762
      %v776 = vmul.f32 %v612, %v762
      %v777 = vmul.f32 %v614, %v762
      %v778 = vmul.f32 %v615, %v762
      %v779 = vadd.f32 %v746, %v763
      %v780 = vadd.f32 %v747, %v764
      %v781 = vadd.f32 %v748, %v765
      %v782 = vadd.f32 %v749, %v766
      %v783 = vadd.f32 %v750, %v767
      %v784 = vadd.f32 %v751, %v768
      %v785 = vadd.f32 %v752, %v769
      %v786 = vadd.f32 %v753, %v770
      %v787 = vadd.f32 %v754, %v771
      %v788 = vadd.f32 %v755, %v772
      %v789 = vadd.f32 %v756, %v773
      %v790 = vadd.f32 %v757, %v774
      %v791 = vadd.f32 %v758, %v775
      %v792 = vadd.f32 %v759, %v776
      %v793 = vadd.f32 %v760, %v777
      %v794 = vadd.f32 %v761, %v778
      %v795 = vperm.slane %v628, 0
      %v796 = vmul.f32 %v596, %v795
      %v797 = vmul.f32 %v597, %v795
      %v798 = vmul.f32 %v599, %v795
      %v799 = vmul.f32 %v600, %v795
      %v800 = vmul.f32 %v602, %v795
      %v801 = vmul.f32 %v603, %v795
      %v802 = vmul.f32 %v605, %v795
      %v803 = vmul.f32 %v606, %v795
      %v804 = vmul.f32 %v608, %v795
      %v805 = vmul.f32 %v609, %v795
      %v806 = vmul.f32 %v611, %v795
      %v807 = vmul.f32 %v612, %v795
      %v808 = vmul.f32 %v614, %v795
      %v809 = vmul.f32 %v615, %v795
      %v810 = vmul.f32 %v617, %v795
      %v811 = vmul.f32 %v618, %v795
      %v812 = vadd.f32 %v779, %v796
      %v813 = vadd.f32 %v780, %v797
      %v814 = vadd.f32 %v781, %v798
      %v815 = vadd.f32 %v782, %v799
      %v816 = vadd.f32 %v783, %v800
      %v817 = vadd.f32 %v784, %v801
      %v818 = vadd.f32 %v785, %v802
      %v819 = vadd.f32 %v786, %v803
      %v820 = vadd.f32 %v787, %v804
      %v821 = vadd.f32 %v788, %v805
      %v822 = vadd.f32 %v789, %v806
      %v823 = vadd.f32 %v790, %v807
      %v824 = vadd.f32 %v791, %v808
      %v825 = vadd.f32 %v792, %v809
      %v826 = vadd.f32 %v793, %v810
      %v827 = vadd.f32 %v794, %v811
      %v828 = vperm.slane %v629, 0
      %v829 = vmul.f32 %v599, %v828
      %v830 = vmul.f32 %v600, %v828
      %v831 = vmul.f32 %v602, %v828
      %v832 = vmul.f32 %v603, %v828
      %v833 = vmul.f32 %v605, %v828
      %v834 = vmul.f32 %v606, %v828
      %v835 = vmul.f32 %v608, %v828
      %v836 = vmul.f32 %v609, %v828
      %v837 = vmul.f32 %v611, %v828
      %v838 = vmul.f32 %v612, %v828
      %v839 = vmul.f32 %v614, %v828
      %v840 = vmul.f32 %v615, %v828
      %v841 = vmul.f32 %v617, %v828
      %v842 = vmul.f32 %v618, %v828
      %v843 = vmul.f32 %v620, %v828
      %v844 = vmul.f32 %v621, %v828
      %v845 = vadd.f32 %v812, %v829
      %v846 = vadd.f32 %v813, %v830
      %v847 = vadd.f32 %v814, %v831
      %v848 = vadd.f32 %v815, %v832
      %v849 = vadd.f32 %v816, %v833
      %v850 = vadd.f32 %v817, %v834
      %v851 = vadd.f32 %v818, %v835
      %v852 = vadd.f32 %v819, %v836
      %v853 = vadd.f32 %v820, %v837
      %v854 = vadd.f32 %v821, %v838
      %v855 = vadd.f32 %v822, %v839
      %v856 = vadd.f32 %v823, %v840
      %v857 = vadd.f32 %v824, %v841
      %v858 = vadd.f32 %v825, %v842
      %v859 = vadd.f32 %v826, %v843
      %v860 = vadd.f32 %v827, %v844
      %v861 = vperm.slane %v623, 1
      %v862 = vmul.f32 %v581, %v861
      %v863 = vmul.f32 %v582, %v861
      %v864 = vmul.f32 %v583, %v861
      %v865 = vmul.f32 %v584, %v861
      %v866 = vmul.f32 %v585, %v861
      %v867 = vmul.f32 %v586, %v861
      %v868 = vmul.f32 %v587, %v861
      %v869 = vmul.f32 %v588, %v861
      %v870 = vmul.f32 %v589, %v861
      %v871 = vmul.f32 %v590, %v861
      %v872 = vmul.f32 %v591, %v861
      %v873 = vmul.f32 %v592, %v861
      %v874 = vmul.f32 %v593, %v861
      %v875 = vmul.f32 %v594, %v861
      %v876 = vmul.f32 %v595, %v861
      %v877 = vmul.f32 %v596, %v861
      %v878 = vmul.f32 %v597, %v861
      %v879 = vmul.f32 %v598, %v861
      %v880 = vmul.f32 %v599, %v861
      %v881 = vmul.f32 %v600, %v861
      %v882 = vmul.f32 %v601, %v861
      %v883 = vmul.f32 %v602, %v861
      %v884 = vmul.f32 %v603, %v861
      %v885 = vmul.f32 %v604, %v861
      %vm910 = vcmask 1046528
      %v911 = vrot.slane %v862, 1
      %v912 = vrot.slane %v863, 1
      %v913 = vsel %vm910, %v911, %v912
      %v914 = vrot.slane %v864, 1
      %v915 = vsel %vm910, %v912, %v914
      %v916 = vrot.slane %v865, 1
      %v917 = vrot.slane %v866, 1
      %v918 = vsel %vm910, %v916, %v917
      %v919 = vrot.slane %v867, 1
      %v920 = vsel %vm910, %v917, %v919
      %v921 = vrot.slane %v868, 1
      %v922 = vrot.slane %v869, 1
      %v923 = vsel %vm910, %v921, %v922
      %v924 = vrot.slane %v870, 1
      %v925 = vsel %vm910, %v922, %v924
      %v926 = vrot.slane %v871, 1
      %v927 = vrot.slane %v872, 1
      %v928 = vsel %vm910, %v926, %v927
      %v929 = vrot.slane %v873, 1
      %v930 = vsel %vm910, %v927, %v929
      %v931 = vrot.slane %v874, 1
      %v932 = vrot.slane %v875, 1
      %v933 = vsel %vm910, %v931, %v932
      %v934 = vrot.slane %v876, 1
      %v935 = vsel %vm910, %v932, %v934
      %v936 = vrot.slane %v877, 1
      %v937 = vrot.slane %v878, 1
      %v938 = vsel %vm910, %v936, %v937
      %v939 = vrot.slane %v879, 1
      %v940 = vsel %vm910, %v937, %v939
      %v941 = vrot.slane %v880, 1
      %v942 = vrot.slane %v881, 1
      %v943 = vsel %vm910, %v941, %v942
      %v944 = vrot.slane %v882, 1
      %v945 = vsel %vm910, %v942, %v944
      %v946 = vrot.slane %v883, 1
      %v947 = vrot.slane %v884, 1
      %v948 = vsel %vm910, %v946, %v947
      %v949 = vrot.slane %v885, 1
      %v950 = vsel %vm910, %v947, %v949
      %v967 = vadd.f32 %v845, %v913
      %v968 = vadd.f32 %v846, %v915
      %v969 = vadd.f32 %v847, %v918
      %v970 = vadd.f32 %v848, %v920
      %v971 = vadd.f32 %v849, %v923
      %v972 = vadd.f32 %v850, %v925
      %v973 = vadd.f32 %v851, %v928
      %v974 = vadd.f32 %v852, %v930
      %v975 = vadd.f32 %v853, %v933
      %v976 = vadd.f32 %v854, %v935
      %v977 = vadd.f32 %v855, %v938
      %v978 = vadd.f32 %v856, %v940
      %v979 = vadd.f32 %v857, %v943
      %v980 = vadd.f32 %v858, %v945
      %v981 = vadd.f32 %v859, %v948
      %v982 = vadd.f32 %v860, %v950
      %v983 = vperm.slane %v624, 1
      %v984 = vmul.f32 %v584, %v983
      %v985 = vmul.f32 %v585, %v983
      %v986 = vmul.f32 %v586, %v983
      %v987 = vmul.f32 %v587, %v983
      %v988 = vmul.f32 %v588, %v983
      %v989 = vmul.f32 %v589, %v983
      %v990 = vmul.f32 %v590, %v983
      %v991 = vmul.f32 %v591, %v983
      %v992 = vmul.f32 %v592, %v983
      %v993 = vmul.f32 %v593, %v983
      %v994 = vmul.f32 %v594, %v983
      %v995 = vmul.f32 %v595, %v983
      %v996 = vmul.f32 %v596, %v983
      %v997 = vmul.f32 %v597, %v983
      %v998 = vmul.f32 %v598, %v983
      %v999 = vmul.f32 %v599, %v983
      %v1000 = vmul.f32 %v600, %v983
      %v1001 = vmul.f32 %v601, %v983
      %v1002 = vmul.f32 %v602, %v983
      %v1003 = vmul.f32 %v603, %v983
      %v1004 = vmul.f32 %v604, %v983
      %v1005 = vmul.f32 %v605, %v983
      %v1006 = vmul.f32 %v606, %v983
      %v1007 = vmul.f32 %v607, %v983
      %v1032 = vrot.slane %v984, 1
      %v1033 = vrot.slane %v985, 1
      %v1034 = vsel %vm910, %v1032, %v1033
      %v1035 = vrot.slane %v986, 1
      %v1036 = vsel %vm910, %v1033, %v1035
      %v1037 = vrot.slane %v987, 1
      %v1038 = vrot.slane %v988, 1
      %v1039 = vsel %vm910, %v1037, %v1038
      %v1040 = vrot.slane %v989, 1
      %v1041 = vsel %vm910, %v1038, %v1040
      %v1042 = vrot.slane %v990, 1
      %v1043 = vrot.slane %v991, 1
      %v1044 = vsel %vm910, %v1042, %v1043
      %v1045 = vrot.slane %v992, 1
      %v1046 = vsel %vm910, %v1043, %v1045
      %v1047 = vrot.slane %v993, 1
      %v1048 = vrot.slane %v994, 1
      %v1049 = vsel %vm910, %v1047, %v1048
      %v1050 = vrot.slane %v995, 1
      %v1051 = vsel %vm910, %v1048, %v1050
      %v1052 = vrot.slane %v996, 1
      %v1053 = vrot.slane %v997, 1
      %v1054 = vsel %vm910, %v1052, %v1053
      %v1055 = vrot.slane %v998, 1
      %v1056 = vsel %vm910, %v1053, %v1055
      %v1057 = vrot.slane %v999, 1
      %v1058 = vrot.slane %v1000, 1
      %v1059 = vsel %vm910, %v1057, %v1058
      %v1060 = vrot.slane %v1001, 1
      %v1061 = vsel %vm910, %v1058, %v1060
      %v1062 = vrot.slane %v1002, 1
      %v1063 = vrot.slane %v1003, 1
      %v1064 = vsel %vm910, %v1062, %v1063
      %v1065 = vrot.slane %v1004, 1
      %v1066 = vsel %vm910, %v1063, %v1065
      %v1067 = vrot.slane %v1005, 1
      %v1068 = vrot.slane %v1006, 1
      %v1069 = vsel %vm910, %v1067, %v1068
      %v1070 = vrot.slane %v1007, 1
      %v1071 = vsel %vm910, %v1068, %v1070
      %v1088 = vadd.f32 %v967, %v1034
      %v1089 = vadd.f32 %v968, %v1036
      %v1090 = vadd.f32 %v969, %v1039
      %v1091 = vadd.f32 %v970, %v1041
      %v1092 = vadd.f32 %v971, %v1044
      %v1093 = vadd.f32 %v972, %v1046
      %v1094 = vadd.f32 %v973, %v1049
      %v1095 = vadd.f32 %v974, %v1051
      %v1096 = vadd.f32 %v975, %v1054
      %v1097 = vadd.f32 %v976, %v1056
      %v1098 = vadd.f32 %v977, %v1059
      %v1099 = vadd.f32 %v978, %v1061
      %v1100 = vadd.f32 %v979, %v1064
      %v1101 = vadd.f32 %v980, %v1066
      %v1102 = vadd.f32 %v981, %v1069
      %v1103 = vadd.f32 %v982, %v1071
      %v1104 = vperm.slane %v625, 1
      %v1105 = vmul.f32 %v587, %v1104
      %v1106 = vmul.f32 %v588, %v1104
      %v1107 = vmul.f32 %v589, %v1104
      %v1108 = vmul.f32 %v590, %v1104
      %v1109 = vmul.f32 %v591, %v1104
      %v1110 = vmul.f32 %v592, %v1104
      %v1111 = vmul.f32 %v593, %v1104
      %v1112 = vmul.f32 %v594, %v1104
      %v1113 = vmul.f32 %v595, %v1104
      %v1114 = vmul.f32 %v596, %v1104
      %v1115 = vmul.f32 %v597, %v1104
      %v1116 = vmul.f32 %v598, %v1104
      %v1117 = vmul.f32 %v599, %v1104
      %v1118 = vmul.f32 %v600, %v1104
      %v1119 = vmul.f32 %v601, %v1104
      %v1120 = vmul.f32 %v602, %v1104
      %v1121 = vmul.f32 %v603, %v1104
      %v1122 = vmul.f32 %v604, %v1104
      %v1123 = vmul.f32 %v605, %v1104
      %v1124 = vmul.f32 %v606, %v1104
      %v1125 = vmul.f32 %v607, %v1104
      %v1126 = vmul.f32 %v608, %v1104
      %v1127 = vmul.f32 %v609, %v1104
      %v1128 = vmul.f32 %v610, %v1104
      %v1153 = vrot.slane %v1105, 1
      %v1154 = vrot.slane %v1106, 1
      %v1155 = vsel %vm910, %v1153, %v1154
      %v1156 = vrot.slane %v1107, 1
      %v1157 = vsel %vm910, %v1154, %v1156
      %v1158 = vrot.slane %v1108, 1
      %v1159 = vrot.slane %v1109, 1
      %v1160 = vsel %vm910, %v1158, %v1159
      %v1161 = vrot.slane %v1110, 1
      %v1162 = vsel %vm910, %v1159, %v1161
      %v1163 = vrot.slane %v1111, 1
      %v1164 = vrot.slane %v1112, 1
      %v1165 = vsel %vm910, %v1163, %v1164
      %v1166 = vrot.slane %v1113, 1
      %v1167 = vsel %vm910, %v1164, %v1166
      %v1168 = vrot.slane %v1114, 1
      %v1169 = vrot.slane %v1115, 1
      %v1170 = vsel %vm910, %v1168, %v1169
      %v1171 = vrot.slane %v1116, 1
      %v1172 = vsel %vm910, %v1169, %v1171
      %v1173 = vrot.slane %v1117, 1
      %v1174 = vrot.slane %v1118, 1
      %v1175 = vsel %vm910, %v1173, %v1174
      %v1176 = vrot.slane %v1119, 1
      %v1177 = vsel %vm910, %v1174, %v1176
      %v1178 = vrot.slane %v1120, 1
      %v1179 = vrot.slane %v1121, 1
      %v1180 = vsel %vm910, %v1178, %v1179
      %v1181 = vrot.slane %v1122, 1
      %v1182 = vsel %vm910, %v1179, %v1181
      %v1183 = vrot.slane %v1123, 1
      %v1184 = vrot.slane %v1124, 1
      %v1185 = vsel %vm910, %v1183, %v1184
      %v1186 = vrot.slane %v1125, 1
      %v1187 = vsel %vm910, %v1184, %v1186
      %v1188 = vrot.slane %v1126, 1
      %v1189 = vrot.slane %v1127, 1
      %v1190 = vsel %vm910, %v1188, %v1189
      %v1191 = vrot.slane %v1128, 1
      %v1192 = vsel %vm910, %v1189, %v1191
      %v1209 = vadd.f32 %v1088, %v1155
      %v1210 = vadd.f32 %v1089, %v1157
      %v1211 = vadd.f32 %v1090, %v1160
      %v1212 = vadd.f32 %v1091, %v1162
      %v1213 = vadd.f32 %v1092, %v1165
      %v1214 = vadd.f32 %v1093, %v1167
      %v1215 = vadd.f32 %v1094, %v1170
      %v1216 = vadd.f32 %v1095, %v1172
      %v1217 = vadd.f32 %v1096, %v1175
      %v1218 = vadd.f32 %v1097, %v1177
      %v1219 = vadd.f32 %v1098, %v1180
      %v1220 = vadd.f32 %v1099, %v1182
      %v1221 = vadd.f32 %v1100, %v1185
      %v1222 = vadd.f32 %v1101, %v1187
      %v1223 = vadd.f32 %v1102, %v1190
      %v1224 = vadd.f32 %v1103, %v1192
      %v1225 = vperm.slane %v626, 1
      %v1226 = vmul.f32 %v590, %v1225
      %v1227 = vmul.f32 %v591, %v1225
      %v1228 = vmul.f32 %v592, %v1225
      %v1229 = vmul.f32 %v593, %v1225
      %v1230 = vmul.f32 %v594, %v1225
      %v1231 = vmul.f32 %v595, %v1225
      %v1232 = vmul.f32 %v596, %v1225
      %v1233 = vmul.f32 %v597, %v1225
      %v1234 = vmul.f32 %v598, %v1225
      %v1235 = vmul.f32 %v599, %v1225
      %v1236 = vmul.f32 %v600, %v1225
      %v1237 = vmul.f32 %v601, %v1225
      %v1238 = vmul.f32 %v602, %v1225
      %v1239 = vmul.f32 %v603, %v1225
      %v1240 = vmul.f32 %v604, %v1225
      %v1241 = vmul.f32 %v605, %v1225
      %v1242 = vmul.f32 %v606, %v1225
      %v1243 = vmul.f32 %v607, %v1225
      %v1244 = vmul.f32 %v608, %v1225
      %v1245 = vmul.f32 %v609, %v1225
      %v1246 = vmul.f32 %v610, %v1225
      %v1247 = vmul.f32 %v611, %v1225
      %v1248 = vmul.f32 %v612, %v1225
      %v1249 = vmul.f32 %v613, %v1225
      %v1274 = vrot.slane %v1226, 1
      %v1275 = vrot.slane %v1227, 1
      %v1276 = vsel %vm910, %v1274, %v1275
      %v1277 = vrot.slane %v1228, 1
      %v1278 = vsel %vm910, %v1275, %v1277
      %v1279 = vrot.slane %v1229, 1
      %v1280 = vrot.slane %v1230, 1
      %v1281 = vsel %vm910, %v1279, %v1280
      %v1282 = vrot.slane %v1231, 1
      %v1283 = vsel %vm910, %v1280, %v1282
      %v1284 = vrot.slane %v1232, 1
      %v1285 = vrot.slane %v1233, 1
      %v1286 = vsel %vm910, %v1284, %v1285
      %v1287 = vrot.slane %v1234, 1
      %v1288 = vsel %vm910, %v1285, %v1287
      %v1289 = vrot.slane %v1235, 1
      %v1290 = vrot.slane %v1236, 1
      %v1291 = vsel %vm910, %v1289, %v1290
      %v1292 = vrot.slane %v1237, 1
      %v1293 = vsel %vm910, %v1290, %v1292
      %v1294 = vrot.slane %v1238, 1
      %v1295 = vrot.slane %v1239, 1
      %v1296 = vsel %vm910, %v1294, %v1295
      %v1297 = vrot.slane %v1240, 1
      %v1298 = vsel %vm910, %v1295, %v1297
      %v1299 = vrot.slane %v1241, 1
      %v1300 = vrot.slane %v1242, 1
      %v1301 = vsel %vm910, %v1299, %v1300
      %v1302 = vrot.slane %v1243, 1
      %v1303 = vsel %vm910, %v1300, %v1302
      %v1304 = vrot.slane %v1244, 1
      %v1305 = vrot.slane %v1245, 1
      %v1306 = vsel %vm910, %v1304, %v1305
      %v1307 = vrot.slane %v1246, 1
      %v1308 = vsel %vm910, %v1305, %v1307
      %v1309 = vrot.slane %v1247, 1
      %v1310 = vrot.slane %v1248, 1
      %v1311 = vsel %vm910, %v1309, %v1310
      %v1312 = vrot.slane %v1249, 1
      %v1313 = vsel %vm910, %v1310, %v1312
      %v1330 = vadd.f32 %v1209, %v1276
      %v1331 = vadd.f32 %v1210, %v1278
      %v1332 = vadd.f32 %v1211, %v1281
      %v1333 = vadd.f32 %v1212, %v1283
      %v1334 = vadd.f32 %v1213, %v1286
      %v1335 = vadd.f32 %v1214, %v1288
      %v1336 = vadd.f32 %v1215, %v1291
      %v1337 = vadd.f32 %v1216, %v1293
      %v1338 = vadd.f32 %v1217, %v1296
      %v1339 = vadd.f32 %v1218, %v1298
      %v1340 = vadd.f32 %v1219, %v1301
      %v1341 = vadd.f32 %v1220, %v1303
      %v1342 = vadd.f32 %v1221, %v1306
      %v1343 = vadd.f32 %v1222, %v1308
      %v1344 = vadd.f32 %v1223, %v1311
      %v1345 = vadd.f32 %v1224, %v1313
      %v1346 = vperm.slane %v627, 1
      %v1347 = vmul.f32 %v593, %v1346
      %v1348 = vmul.f32 %v594, %v1346
      %v1349 = vmul.f32 %v595, %v1346
      %v1350 = vmul.f32 %v596, %v1346
      %v1351 = vmul.f32 %v597, %v1346
      %v1352 = vmul.f32 %v598, %v1346
      %v1353 = vmul.f32 %v599, %v1346
      %v1354 = vmul.f32 %v600, %v1346
      %v1355 = vmul.f32 %v601, %v1346
      %v1356 = vmul.f32 %v602, %v1346
      %v1357 = vmul.f32 %v603, %v1346
      %v1358 = vmul.f32 %v604, %v1346
      %v1359 = vmul.f32 %v605, %v1346
      %v1360 = vmul.f32 %v606, %v1346
      %v1361 = vmul.f32 %v607, %v1346
      %v1362 = vmul.f32 %v608, %v1346
      %v1363 = vmul.f32 %v609, %v1346
      %v1364 = vmul.f32 %v610, %v1346
      %v1365 = vmul.f32 %v611, %v1346
      %v1366 = vmul.f32 %v612, %v1346
      %v1367 = vmul.f32 %v613, %v1346
      %v1368 = vmul.f32 %v614, %v1346
      %v1369 = vmul.f32 %v615, %v1346
      %v1370 = vmul.f32 %v616, %v1346
      %v1395 = vrot.slane %v1347, 1
      %v1396 = vrot.slane %v1348, 1
      %v1397 = vsel %vm910, %v1395, %v1396
      %v1398 = vrot.slane %v1349, 1
      %v1399 = vsel %vm910, %v1396, %v1398
      %v1400 = vrot.slane %v1350, 1
      %v1401 = vrot.slane %v1351, 1
      %v1402 = vsel %vm910, %v1400, %v1401
      %v1403 = vrot.slane %v1352, 1
      %v1404 = vsel %vm910, %v1401, %v1403
      %v1405 = vrot.slane %v1353, 1
      %v1406 = vrot.slane %v1354, 1
      %v1407 = vsel %vm910, %v1405, %v1406
      %v1408 = vrot.slane %v1355, 1
      %v1409 = vsel %vm910, %v1406, %v1408
      %v1410 = vrot.slane %v1356, 1
      %v1411 = vrot.slane %v1357, 1
      %v1412 = vsel %vm910, %v1410, %v1411
      %v1413 = vrot.slane %v1358, 1
      %v1414 = vsel %vm910, %v1411, %v1413
      %v1415 = vrot.slane %v1359, 1
      %v1416 = vrot.slane %v1360, 1
      %v1417 = vsel %vm910, %v1415, %v1416
      %v1418 = vrot.slane %v1361, 1
      %v1419 = vsel %vm910, %v1416, %v1418
      %v1420 = vrot.slane %v1362, 1
      %v1421 = vrot.slane %v1363, 1
      %v1422 = vsel %vm910, %v1420, %v1421
      %v1423 = vrot.slane %v1364, 1
      %v1424 = vsel %vm910, %v1421, %v1423
      %v1425 = vrot.slane %v1365, 1
      %v1426 = vrot.slane %v1366, 1
      %v1427 = vsel %vm910, %v1425, %v1426
      %v1428 = vrot.slane %v1367, 1
      %v1429 = vsel %vm910, %v1426, %v1428
      %v1430 = vrot.slane %v1368, 1
      %v1431 = vrot.slane %v1369, 1
      %v1432 = vsel %vm910, %v1430, %v1431
      %v1433 = vrot.slane %v1370, 1
      %v1434 = vsel %vm910, %v1431, %v1433
      %v1451 = vadd.f32 %v1330, %v1397
      %v1452 = vadd.f32 %v1331, %v1399
      %v1453 = vadd.f32 %v1332, %v1402
      %v1454 = vadd.f32 %v1333, %v1404
      %v1455 = vadd.f32 %v1334, %v1407
      %v1456 = vadd.f32 %v1335, %v1409
      %v1457 = vadd.f32 %v1336, %v1412
      %v1458 = vadd.f32 %v1337, %v1414
      %v1459 = vadd.f32 %v1338, %v1417
      %v1460 = vadd.f32 %v1339, %v1419
      %v1461 = vadd.f32 %v1340, %v1422
      %v1462 = vadd.f32 %v1341, %v1424
      %v1463 = vadd.f32 %v1342, %v1427
      %v1464 = vadd.f32 %v1343, %v1429
      %v1465 = vadd.f32 %v1344, %v1432
      %v1466 = vadd.f32 %v1345, %v1434
      %v1467 = vperm.slane %v628, 1
      %v1468 = vmul.f32 %v596, %v1467
      %v1469 = vmul.f32 %v597, %v1467
      %v1470 = vmul.f32 %v598, %v1467
      %v1471 = vmul.f32 %v599, %v1467
      %v1472 = vmul.f32 %v600, %v1467
      %v1473 = vmul.f32 %v601, %v1467
      %v1474 = vmul.f32 %v602, %v1467
      %v1475 = vmul.f32 %v603, %v1467
      %v1476 = vmul.f32 %v604, %v1467
      %v1477 = vmul.f32 %v605, %v1467
      %v1478 = vmul.f32 %v606, %v1467
      %v1479 = vmul.f32 %v607, %v1467
      %v1480 = vmul.f32 %v608, %v1467
      %v1481 = vmul.f32 %v609, %v1467
      %v1482 = vmul.f32 %v610, %v1467
      %v1483 = vmul.f32 %v611, %v1467
      %v1484 = vmul.f32 %v612, %v1467
      %v1485 = vmul.f32 %v613, %v1467
      %v1486 = vmul.f32 %v614, %v1467
      %v1487 = vmul.f32 %v615, %v1467
      %v1488 = vmul.f32 %v616, %v1467
      %v1489 = vmul.f32 %v617, %v1467
      %v1490 = vmul.f32 %v618, %v1467
      %v1491 = vmul.f32 %v619, %v1467
      %v1516 = vrot.slane %v1468, 1
      %v1517 = vrot.slane %v1469, 1
      %v1518 = vsel %vm910, %v1516, %v1517
      %v1519 = vrot.slane %v1470, 1
      %v1520 = vsel %vm910, %v1517, %v1519
      %v1521 = vrot.slane %v1471, 1
      %v1522 = vrot.slane %v1472, 1
      %v1523 = vsel %vm910, %v1521, %v1522
      %v1524 = vrot.slane %v1473, 1
      %v1525 = vsel %vm910, %v1522, %v1524
      %v1526 = vrot.slane %v1474, 1
      %v1527 = vrot.slane %v1475, 1
      %v1528 = vsel %vm910, %v1526, %v1527
      %v1529 = vrot.slane %v1476, 1
      %v1530 = vsel %vm910, %v1527, %v1529
      %v1531 = vrot.slane %v1477, 1
      %v1532 = vrot.slane %v1478, 1
      %v1533 = vsel %vm910, %v1531, %v1532
      %v1534 = vrot.slane %v1479, 1
      %v1535 = vsel %vm910, %v1532, %v1534
      %v1536 = vrot.slane %v1480, 1
      %v1537 = vrot.slane %v1481, 1
      %v1538 = vsel %vm910, %v1536, %v1537
      %v1539 = vrot.slane %v1482, 1
      %v1540 = vsel %vm910, %v1537, %v1539
      %v1541 = vrot.slane %v1483, 1
      %v1542 = vrot.slane %v1484, 1
      %v1543 = vsel %vm910, %v1541, %v1542
      %v1544 = vrot.slane %v1485, 1
      %v1545 = vsel %vm910, %v1542, %v1544
      %v1546 = vrot.slane %v1486, 1
      %v1547 = vrot.slane %v1487, 1
      %v1548 = vsel %vm910, %v1546, %v1547
      %v1549 = vrot.slane %v1488, 1
      %v1550 = vsel %vm910, %v1547, %v1549
      %v1551 = vrot.slane %v1489, 1
      %v1552 = vrot.slane %v1490, 1
      %v1553 = vsel %vm910, %v1551, %v1552
      %v1554 = vrot.slane %v1491, 1
      %v1555 = vsel %vm910, %v1552, %v1554
      %v1572 = vadd.f32 %v1451, %v1518
      %v1573 = vadd.f32 %v1452, %v1520
      %v1574 = vadd.f32 %v1453, %v1523
      %v1575 = vadd.f32 %v1454, %v1525
      %v1576 = vadd.f32 %v1455, %v1528
      %v1577 = vadd.f32 %v1456, %v1530
      %v1578 = vadd.f32 %v1457, %v1533
      %v1579 = vadd.f32 %v1458, %v1535
      %v1580 = vadd.f32 %v1459, %v1538
      %v1581 = vadd.f32 %v1460, %v1540
      %v1582 = vadd.f32 %v1461, %v1543
      %v1583 = vadd.f32 %v1462, %v1545
      %v1584 = vadd.f32 %v1463, %v1548
      %v1585 = vadd.f32 %v1464, %v1550
      %v1586 = vadd.f32 %v1465, %v1553
      %v1587 = vadd.f32 %v1466, %v1555
      %v1588 = vperm.slane %v629, 1
      %v1589 = vmul.f32 %v599, %v1588
      %v1590 = vmul.f32 %v600, %v1588
      %v1591 = vmul.f32 %v601, %v1588
      %v1592 = vmul.f32 %v602, %v1588
      %v1593 = vmul.f32 %v603, %v1588
      %v1594 = vmul.f32 %v604, %v1588
      %v1595 = vmul.f32 %v605, %v1588
      %v1596 = vmul.f32 %v606, %v1588
      %v1597 = vmul.f32 %v607, %v1588
      %v1598 = vmul.f32 %v608, %v1588
      %v1599 = vmul.f32 %v609, %v1588
      %v1600 = vmul.f32 %v610, %v1588
      %v1601 = vmul.f32 %v611, %v1588
      %v1602 = vmul.f32 %v612, %v1588
      %v1603 = vmul.f32 %v613, %v1588
      %v1604 = vmul.f32 %v614, %v1588
      %v1605 = vmul.f32 %v615, %v1588
      %v1606 = vmul.f32 %v616, %v1588
      %v1607 = vmul.f32 %v617, %v1588
      %v1608 = vmul.f32 %v618, %v1588
      %v1609 = vmul.f32 %v619, %v1588
      %v1610 = vmul.f32 %v620, %v1588
      %v1611 = vmul.f32 %v621, %v1588
      %v1612 = vmul.f32 %v622, %v1588
      %v1637 = vrot.slane %v1589, 1
      %v1638 = vrot.slane %v1590, 1
      %v1639 = vsel %vm910, %v1637, %v1638
      %v1640 = vrot.slane %v1591, 1
      %v1641 = vsel %vm910, %v1638, %v1640
      %v1642 = vrot.slane %v1592, 1
      %v1643 = vrot.slane %v1593, 1
      %v1644 = vsel %vm910, %v1642, %v1643
      %v1645 = vrot.slane %v1594, 1
      %v1646 = vsel %vm910, %v1643, %v1645
      %v1647 = vrot.slane %v1595, 1
      %v1648 = vrot.slane %v1596, 1
      %v1649 = vsel %vm910, %v1647, %v1648
      %v1650 = vrot.slane %v1597, 1
      %v1651 = vsel %vm910, %v1648, %v1650
      %v1652 = vrot.slane %v1598, 1
      %v1653 = vrot.slane %v1599, 1
      %v1654 = vsel %vm910, %v1652, %v1653
      %v1655 = vrot.slane %v1600, 1
      %v1656 = vsel %vm910, %v1653, %v1655
      %v1657 = vrot.slane %v1601, 1
      %v1658 = vrot.slane %v1602, 1
      %v1659 = vsel %vm910, %v1657, %v1658
      %v1660 = vrot.slane %v1603, 1
      %v1661 = vsel %vm910, %v1658, %v1660
      %v1662 = vrot.slane %v1604, 1
      %v1663 = vrot.slane %v1605, 1
      %v1664 = vsel %vm910, %v1662, %v1663
      %v1665 = vrot.slane %v1606, 1
      %v1666 = vsel %vm910, %v1663, %v1665
      %v1667 = vrot.slane %v1607, 1
      %v1668 = vrot.slane %v1608, 1
      %v1669 = vsel %vm910, %v1667, %v1668
      %v1670 = vrot.slane %v1609, 1
      %v1671 = vsel %vm910, %v1668, %v1670
      %v1672 = vrot.slane %v1610, 1
      %v1673 = vrot.slane %v1611, 1
      %v1674 = vsel %vm910, %v1672, %v1673
      %v1675 = vrot.slane %v1612, 1
      %v1676 = vsel %vm910, %v1673, %v1675
      %v1693 = vadd.f32 %v1572, %v1639
      %v1694 = vadd.f32 %v1573, %v1641
      %v1695 = vadd.f32 %v1574, %v1644
      %v1696 = vadd.f32 %v1575, %v1646
      %v1697 = vadd.f32 %v1576, %v1649
      %v1698 = vadd.f32 %v1577, %v1651
      %v1699 = vadd.f32 %v1578, %v1654
      %v1700 = vadd.f32 %v1579, %v1656
      %v1701 = vadd.f32 %v1580, %v1659
      %v1702 = vadd.f32 %v1581, %v1661
      %v1703 = vadd.f32 %v1582, %v1664
      %v1704 = vadd.f32 %v1583, %v1666
      %v1705 = vadd.f32 %v1584, %v1669
      %v1706 = vadd.f32 %v1585, %v1671
      %v1707 = vadd.f32 %v1586, %v1674
      %v1708 = vadd.f32 %v1587, %v1676
      %v1709 = vperm.slane %v623, 2
      %v1710 = vmul.f32 %v581, %v1709
      %v1711 = vmul.f32 %v582, %v1709
      %v1712 = vmul.f32 %v583, %v1709
      %v1713 = vmul.f32 %v584, %v1709
      %v1714 = vmul.f32 %v585, %v1709
      %v1715 = vmul.f32 %v586, %v1709
      %v1716 = vmul.f32 %v587, %v1709
      %v1717 = vmul.f32 %v588, %v1709
      %v1718 = vmul.f32 %v589, %v1709
      %v1719 = vmul.f32 %v590, %v1709
      %v1720 = vmul.f32 %v591, %v1709
      %v1721 = vmul.f32 %v592, %v1709
      %v1722 = vmul.f32 %v593, %v1709
      %v1723 = vmul.f32 %v594, %v1709
      %v1724 = vmul.f32 %v595, %v1709
      %v1725 = vmul.f32 %v596, %v1709
      %v1726 = vmul.f32 %v597, %v1709
      %v1727 = vmul.f32 %v598, %v1709
      %v1728 = vmul.f32 %v599, %v1709
      %v1729 = vmul.f32 %v600, %v1709
      %v1730 = vmul.f32 %v601, %v1709
      %v1731 = vmul.f32 %v602, %v1709
      %v1732 = vmul.f32 %v603, %v1709
      %v1733 = vmul.f32 %v604, %v1709
      %vm1758 = vcmask 1045504
      %v1759 = vrot.slane %v1710, 2
      %v1760 = vrot.slane %v1711, 2
      %v1761 = vsel %vm1758, %v1759, %v1760
      %v1762 = vrot.slane %v1712, 2
      %v1763 = vsel %vm1758, %v1760, %v1762
      %v1764 = vrot.slane %v1713, 2
      %v1765 = vrot.slane %v1714, 2
      %v1766 = vsel %vm1758, %v1764, %v1765
      %v1767 = vrot.slane %v1715, 2
      %v1768 = vsel %vm1758, %v1765, %v1767
      %v1769 = vrot.slane %v1716, 2
      %v1770 = vrot.slane %v1717, 2
      %v1771 = vsel %vm1758, %v1769, %v1770
      %v1772 = vrot.slane %v1718, 2
      %v1773 = vsel %vm1758, %v1770, %v1772
      %v1774 = vrot.slane %v1719, 2
      %v1775 = vrot.slane %v1720, 2
      %v1776 = vsel %vm1758, %v1774, %v1775
      %v1777 = vrot.slane %v1721, 2
      %v1778 = vsel %vm1758, %v1775, %v1777
      %v1779 = vrot.slane %v1722, 2
      %v1780 = vrot.slane %v1723, 2
      %v1781 = vsel %vm1758, %v1779, %v1780
      %v1782 = vrot.slane %v1724, 2
      %v1783 = vsel %vm1758, %v1780, %v1782
      %v1784 = vrot.slane %v1725, 2
      %v1785 = vrot.slane %v1726, 2
      %v1786 = vsel %vm1758, %v1784, %v1785
      %v1787 = vrot.slane %v1727, 2
      %v1788 = vsel %vm1758, %v1785, %v1787
      %v1789 = vrot.slane %v1728, 2
      %v1790 = vrot.slane %v1729, 2
      %v1791 = vsel %vm1758, %v1789, %v1790
      %v1792 = vrot.slane %v1730, 2
      %v1793 = vsel %vm1758, %v1790, %v1792
      %v1794 = vrot.slane %v1731, 2
      %v1795 = vrot.slane %v1732, 2
      %v1796 = vsel %vm1758, %v1794, %v1795
      %v1797 = vrot.slane %v1733, 2
      %v1798 = vsel %vm1758, %v1795, %v1797
      %v1815 = vadd.f32 %v1693, %v1761
      %v1816 = vadd.f32 %v1694, %v1763
      %v1817 = vadd.f32 %v1695, %v1766
      %v1818 = vadd.f32 %v1696, %v1768
      %v1819 = vadd.f32 %v1697, %v1771
      %v1820 = vadd.f32 %v1698, %v1773
      %v1821 = vadd.f32 %v1699, %v1776
      %v1822 = vadd.f32 %v1700, %v1778
      %v1823 = vadd.f32 %v1701, %v1781
      %v1824 = vadd.f32 %v1702, %v1783
      %v1825 = vadd.f32 %v1703, %v1786
      %v1826 = vadd.f32 %v1704, %v1788
      %v1827 = vadd.f32 %v1705, %v1791
      %v1828 = vadd.f32 %v1706, %v1793
      %v1829 = vadd.f32 %v1707, %v1796
      %v1830 = vadd.f32 %v1708, %v1798
      %v1831 = vperm.slane %v624, 2
      %v1832 = vmul.f32 %v584, %v1831
      %v1833 = vmul.f32 %v585, %v1831
      %v1834 = vmul.f32 %v586, %v1831
      %v1835 = vmul.f32 %v587, %v1831
      %v1836 = vmul.f32 %v588, %v1831
      %v1837 = vmul.f32 %v589, %v1831
      %v1838 = vmul.f32 %v590, %v1831
      %v1839 = vmul.f32 %v591, %v1831
      %v1840 = vmul.f32 %v592, %v1831
      %v1841 = vmul.f32 %v593, %v1831
      %v1842 = vmul.f32 %v594, %v1831
      %v1843 = vmul.f32 %v595, %v1831
      %v1844 = vmul.f32 %v596, %v1831
      %v1845 = vmul.f32 %v597, %v1831
      %v1846 = vmul.f32 %v598, %v1831
      %v1847 = vmul.f32 %v599, %v1831
      %v1848 = vmul.f32 %v600, %v1831
      %v1849 = vmul.f32 %v601, %v1831
      %v1850 = vmul.f32 %v602, %v1831
      %v1851 = vmul.f32 %v603, %v1831
      %v1852 = vmul.f32 %v604, %v1831
      %v1853 = vmul.f32 %v605, %v1831
      %v1854 = vmul.f32 %v606, %v1831
      %v1855 = vmul.f32 %v607, %v1831
      %v1880 = vrot.slane %v1832, 2
      %v1881 = vrot.slane %v1833, 2
      %v1882 = vsel %vm1758, %v1880, %v1881
      %v1883 = vrot.slane %v1834, 2
      %v1884 = vsel %vm1758, %v1881, %v1883
      %v1885 = vrot.slane %v1835, 2
      %v1886 = vrot.slane %v1836, 2
      %v1887 = vsel %vm1758, %v1885, %v1886
      %v1888 = vrot.slane %v1837, 2
      %v1889 = vsel %vm1758, %v1886, %v1888
      %v1890 = vrot.slane %v1838, 2
      %v1891 = vrot.slane %v1839, 2
      %v1892 = vsel %vm1758, %v1890, %v1891
      %v1893 = vrot.slane %v1840, 2
      %v1894 = vsel %vm1758, %v1891, %v1893
      %v1895 = vrot.slane %v1841, 2
      %v1896 = vrot.slane %v1842, 2
      %v1897 = vsel %vm1758, %v1895, %v1896
      %v1898 = vrot.slane %v1843, 2
      %v1899 = vsel %vm1758, %v1896, %v1898
      %v1900 = vrot.slane %v1844, 2
      %v1901 = vrot.slane %v1845, 2
      %v1902 = vsel %vm1758, %v1900, %v1901
      %v1903 = vrot.slane %v1846, 2
      %v1904 = vsel %vm1758, %v1901, %v1903
      %v1905 = vrot.slane %v1847, 2
      %v1906 = vrot.slane %v1848, 2
      %v1907 = vsel %vm1758, %v1905, %v1906
      %v1908 = vrot.slane %v1849, 2
      %v1909 = vsel %vm1758, %v1906, %v1908
      %v1910 = vrot.slane %v1850, 2
      %v1911 = vrot.slane %v1851, 2
      %v1912 = vsel %vm1758, %v1910, %v1911
      %v1913 = vrot.slane %v1852, 2
      %v1914 = vsel %vm1758, %v1911, %v1913
      %v1915 = vrot.slane %v1853, 2
      %v1916 = vrot.slane %v1854, 2
      %v1917 = vsel %vm1758, %v1915, %v1916
      %v1918 = vrot.slane %v1855, 2
      %v1919 = vsel %vm1758, %v1916, %v1918
      %v1936 = vadd.f32 %v1815, %v1882
      %v1937 = vadd.f32 %v1816, %v1884
      %v1938 = vadd.f32 %v1817, %v1887
      %v1939 = vadd.f32 %v1818, %v1889
      %v1940 = vadd.f32 %v1819, %v1892
      %v1941 = vadd.f32 %v1820, %v1894
      %v1942 = vadd.f32 %v1821, %v1897
      %v1943 = vadd.f32 %v1822, %v1899
      %v1944 = vadd.f32 %v1823, %v1902
      %v1945 = vadd.f32 %v1824, %v1904
      %v1946 = vadd.f32 %v1825, %v1907
      %v1947 = vadd.f32 %v1826, %v1909
      %v1948 = vadd.f32 %v1827, %v1912
      %v1949 = vadd.f32 %v1828, %v1914
      %v1950 = vadd.f32 %v1829, %v1917
      %v1951 = vadd.f32 %v1830, %v1919
      %v1952 = vperm.slane %v625, 2
      %v1953 = vmul.f32 %v587, %v1952
      %v1954 = vmul.f32 %v588, %v1952
      %v1955 = vmul.f32 %v589, %v1952
      %v1956 = vmul.f32 %v590, %v1952
      %v1957 = vmul.f32 %v591, %v1952
      %v1958 = vmul.f32 %v592, %v1952
      %v1959 = vmul.f32 %v593, %v1952
      %v1960 = vmul.f32 %v594, %v1952
      %v1961 = vmul.f32 %v595, %v1952
      %v1962 = vmul.f32 %v596, %v1952
      %v1963 = vmul.f32 %v597, %v1952
      %v1964 = vmul.f32 %v598, %v1952
      %v1965 = vmul.f32 %v599, %v1952
      %v1966 = vmul.f32 %v600, %v1952
      %v1967 = vmul.f32 %v601, %v1952
      %v1968 = vmul.f32 %v602, %v1952
      %v1969 = vmul.f32 %v603, %v1952
      %v1970 = vmul.f32 %v604, %v1952
      %v1971 = vmul.f32 %v605, %v1952
      %v1972 = vmul.f32 %v606, %v1952
      %v1973 = vmul.f32 %v607, %v1952
      %v1974 = vmul.f32 %v608, %v1952
      %v1975 = vmul.f32 %v609, %v1952
      %v1976 = vmul.f32 %v610, %v1952
      %v2001 = vrot.slane %v1953, 2
      %v2002 = vrot.slane %v1954, 2
      %v2003 = vsel %vm1758, %v2001, %v2002
      %v2004 = vrot.slane %v1955, 2
      %v2005 = vsel %vm1758, %v2002, %v2004
      %v2006 = vrot.slane %v1956, 2
      %v2007 = vrot.slane %v1957, 2
      %v2008 = vsel %vm1758, %v2006, %v2007
      %v2009 = vrot.slane %v1958, 2
      %v2010 = vsel %vm1758, %v2007, %v2009
      %v2011 = vrot.slane %v1959, 2
      %v2012 = vrot.slane %v1960, 2
      %v2013 = vsel %vm1758, %v2011, %v2012
      %v2014 = vrot.slane %v1961, 2
      %v2015 = vsel %vm1758, %v2012, %v2014
      %v2016 = vrot.slane %v1962, 2
      %v2017 = vrot.slane %v1963, 2
      %v2018 = vsel %vm1758, %v2016, %v2017
      %v2019 = vrot.slane %v1964, 2
      %v2020 = vsel %vm1758, %v2017, %v2019
      %v2021 = vrot.slane %v1965, 2
      %v2022 = vrot.slane %v1966, 2
      %v2023 = vsel %vm1758, %v2021, %v2022
      %v2024 = vrot.slane %v1967, 2
      %v2025 = vsel %vm1758, %v2022, %v2024
      %v2026 = vrot.slane %v1968, 2
      %v2027 = vrot.slane %v1969, 2
      %v2028 = vsel %vm1758, %v2026, %v2027
      %v2029 = vrot.slane %v1970, 2
      %v2030 = vsel %vm1758, %v2027, %v2029
      %v2031 = vrot.slane %v1971, 2
      %v2032 = vrot.slane %v1972, 2
      %v2033 = vsel %vm1758, %v2031, %v2032
      %v2034 = vrot.slane %v1973, 2
      %v2035 = vsel %vm1758, %v2032, %v2034
      %v2036 = vrot.slane %v1974, 2
      %v2037 = vrot.slane %v1975, 2
      %v2038 = vsel %vm1758, %v2036, %v2037
      %v2039 = vrot.slane %v1976, 2
      %v2040 = vsel %vm1758, %v2037, %v2039
      %v2057 = vadd.f32 %v1936, %v2003
      %v2058 = vadd.f32 %v1937, %v2005
      %v2059 = vadd.f32 %v1938, %v2008
      %v2060 = vadd.f32 %v1939, %v2010
      %v2061 = vadd.f32 %v1940, %v2013
      %v2062 = vadd.f32 %v1941, %v2015
      %v2063 = vadd.f32 %v1942, %v2018
      %v2064 = vadd.f32 %v1943, %v2020
      %v2065 = vadd.f32 %v1944, %v2023
      %v2066 = vadd.f32 %v1945, %v2025
      %v2067 = vadd.f32 %v1946, %v2028
      %v2068 = vadd.f32 %v1947, %v2030
      %v2069 = vadd.f32 %v1948, %v2033
      %v2070 = vadd.f32 %v1949, %v2035
      %v2071 = vadd.f32 %v1950, %v2038
      %v2072 = vadd.f32 %v1951, %v2040
      %v2073 = vperm.slane %v626, 2
      %v2074 = vmul.f32 %v590, %v2073
      %v2075 = vmul.f32 %v591, %v2073
      %v2076 = vmul.f32 %v592, %v2073
      %v2077 = vmul.f32 %v593, %v2073
      %v2078 = vmul.f32 %v594, %v2073
      %v2079 = vmul.f32 %v595, %v2073
      %v2080 = vmul.f32 %v596, %v2073
      %v2081 = vmul.f32 %v597, %v2073
      %v2082 = vmul.f32 %v598, %v2073
      %v2083 = vmul.f32 %v599, %v2073
      %v2084 = vmul.f32 %v600, %v2073
      %v2085 = vmul.f32 %v601, %v2073
      %v2086 = vmul.f32 %v602, %v2073
      %v2087 = vmul.f32 %v603, %v2073
      %v2088 = vmul.f32 %v604, %v2073
      %v2089 = vmul.f32 %v605, %v2073
      %v2090 = vmul.f32 %v606, %v2073
      %v2091 = vmul.f32 %v607, %v2073
      %v2092 = vmul.f32 %v608, %v2073
      %v2093 = vmul.f32 %v609, %v2073
      %v2094 = vmul.f32 %v610, %v2073
      %v2095 = vmul.f32 %v611, %v2073
      %v2096 = vmul.f32 %v612, %v2073
      %v2097 = vmul.f32 %v613, %v2073
      %v2122 = vrot.slane %v2074, 2
      %v2123 = vrot.slane %v2075, 2
      %v2124 = vsel %vm1758, %v2122, %v2123
      %v2125 = vrot.slane %v2076, 2
      %v2126 = vsel %vm1758, %v2123, %v2125
      %v2127 = vrot.slane %v2077, 2
      %v2128 = vrot.slane %v2078, 2
      %v2129 = vsel %vm1758, %v2127, %v2128
      %v2130 = vrot.slane %v2079, 2
      %v2131 = vsel %vm1758, %v2128, %v2130
      %v2132 = vrot.slane %v2080, 2
      %v2133 = vrot.slane %v2081, 2
      %v2134 = vsel %vm1758, %v2132, %v2133
      %v2135 = vrot.slane %v2082, 2
      %v2136 = vsel %vm1758, %v2133, %v2135
      %v2137 = vrot.slane %v2083, 2
      %v2138 = vrot.slane %v2084, 2
      %v2139 = vsel %vm1758, %v2137, %v2138
      %v2140 = vrot.slane %v2085, 2
      %v2141 = vsel %vm1758, %v2138, %v2140
      %v2142 = vrot.slane %v2086, 2
      %v2143 = vrot.slane %v2087, 2
      %v2144 = vsel %vm1758, %v2142, %v2143
      %v2145 = vrot.slane %v2088, 2
      %v2146 = vsel %vm1758, %v2143, %v2145
      %v2147 = vrot.slane %v2089, 2
      %v2148 = vrot.slane %v2090, 2
      %v2149 = vsel %vm1758, %v2147, %v2148
      %v2150 = vrot.slane %v2091, 2
      %v2151 = vsel %vm1758, %v2148, %v2150
      %v2152 = vrot.slane %v2092, 2
      %v2153 = vrot.slane %v2093, 2
      %v2154 = vsel %vm1758, %v2152, %v2153
      %v2155 = vrot.slane %v2094, 2
      %v2156 = vsel %vm1758, %v2153, %v2155
      %v2157 = vrot.slane %v2095, 2
      %v2158 = vrot.slane %v2096, 2
      %v2159 = vsel %vm1758, %v2157, %v2158
      %v2160 = vrot.slane %v2097, 2
      %v2161 = vsel %vm1758, %v2158, %v2160
      %v2178 = vadd.f32 %v2057, %v2124
      %v2179 = vadd.f32 %v2058, %v2126
      %v2180 = vadd.f32 %v2059, %v2129
      %v2181 = vadd.f32 %v2060, %v2131
      %v2182 = vadd.f32 %v2061, %v2134
      %v2183 = vadd.f32 %v2062, %v2136
      %v2184 = vadd.f32 %v2063, %v2139
      %v2185 = vadd.f32 %v2064, %v2141
      %v2186 = vadd.f32 %v2065, %v2144
      %v2187 = vadd.f32 %v2066, %v2146
      %v2188 = vadd.f32 %v2067, %v2149
      %v2189 = vadd.f32 %v2068, %v2151
      %v2190 = vadd.f32 %v2069, %v2154
      %v2191 = vadd.f32 %v2070, %v2156
      %v2192 = vadd.f32 %v2071, %v2159
      %v2193 = vadd.f32 %v2072, %v2161
      %v2194 = vperm.slane %v627, 2
      %v2195 = vmul.f32 %v593, %v2194
      %v2196 = vmul.f32 %v594, %v2194
      %v2197 = vmul.f32 %v595, %v2194
      %v2198 = vmul.f32 %v596, %v2194
      %v2199 = vmul.f32 %v597, %v2194
      %v2200 = vmul.f32 %v598, %v2194
      %v2201 = vmul.f32 %v599, %v2194
      %v2202 = vmul.f32 %v600, %v2194
      %v2203 = vmul.f32 %v601, %v2194
      %v2204 = vmul.f32 %v602, %v2194
      %v2205 = vmul.f32 %v603, %v2194
      %v2206 = vmul.f32 %v604, %v2194
      %v2207 = vmul.f32 %v605, %v2194
      %v2208 = vmul.f32 %v606, %v2194
      %v2209 = vmul.f32 %v607, %v2194
      %v2210 = vmul.f32 %v608, %v2194
      %v2211 = vmul.f32 %v609, %v2194
      %v2212 = vmul.f32 %v610, %v2194
      %v2213 = vmul.f32 %v611, %v2194
      %v2214 = vmul.f32 %v612, %v2194
      %v2215 = vmul.f32 %v613, %v2194
      %v2216 = vmul.f32 %v614, %v2194
      %v2217 = vmul.f32 %v615, %v2194
      %v2218 = vmul.f32 %v616, %v2194
      %v2243 = vrot.slane %v2195, 2
      %v2244 = vrot.slane %v2196, 2
      %v2245 = vsel %vm1758, %v2243, %v2244
      %v2246 = vrot.slane %v2197, 2
      %v2247 = vsel %vm1758, %v2244, %v2246
      %v2248 = vrot.slane %v2198, 2
      %v2249 = vrot.slane %v2199, 2
      %v2250 = vsel %vm1758, %v2248, %v2249
      %v2251 = vrot.slane %v2200, 2
      %v2252 = vsel %vm1758, %v2249, %v2251
      %v2253 = vrot.slane %v2201, 2
      %v2254 = vrot.slane %v2202, 2
      %v2255 = vsel %vm1758, %v2253, %v2254
      %v2256 = vrot.slane %v2203, 2
      %v2257 = vsel %vm1758, %v2254, %v2256
      %v2258 = vrot.slane %v2204, 2
      %v2259 = vrot.slane %v2205, 2
      %v2260 = vsel %vm1758, %v2258, %v2259
      %v2261 = vrot.slane %v2206, 2
      %v2262 = vsel %vm1758, %v2259, %v2261
      %v2263 = vrot.slane %v2207, 2
      %v2264 = vrot.slane %v2208, 2
      %v2265 = vsel %vm1758, %v2263, %v2264
      %v2266 = vrot.slane %v2209, 2
      %v2267 = vsel %vm1758, %v2264, %v2266
      %v2268 = vrot.slane %v2210, 2
      %v2269 = vrot.slane %v2211, 2
      %v2270 = vsel %vm1758, %v2268, %v2269
      %v2271 = vrot.slane %v2212, 2
      %v2272 = vsel %vm1758, %v2269, %v2271
      %v2273 = vrot.slane %v2213, 2
      %v2274 = vrot.slane %v2214, 2
      %v2275 = vsel %vm1758, %v2273, %v2274
      %v2276 = vrot.slane %v2215, 2
      %v2277 = vsel %vm1758, %v2274, %v2276
      %v2278 = vrot.slane %v2216, 2
      %v2279 = vrot.slane %v2217, 2
      %v2280 = vsel %vm1758, %v2278, %v2279
      %v2281 = vrot.slane %v2218, 2
      %v2282 = vsel %vm1758, %v2279, %v2281
      %v2299 = vadd.f32 %v2178, %v2245
      %v2300 = vadd.f32 %v2179, %v2247
      %v2301 = vadd.f32 %v2180, %v2250
      %v2302 = vadd.f32 %v2181, %v2252
      %v2303 = vadd.f32 %v2182, %v2255
      %v2304 = vadd.f32 %v2183, %v2257
      %v2305 = vadd.f32 %v2184, %v2260
      %v2306 = vadd.f32 %v2185, %v2262
      %v2307 = vadd.f32 %v2186, %v2265
      %v2308 = vadd.f32 %v2187, %v2267
      %v2309 = vadd.f32 %v2188, %v2270
      %v2310 = vadd.f32 %v2189, %v2272
      %v2311 = vadd.f32 %v2190, %v2275
      %v2312 = vadd.f32 %v2191, %v2277
      %v2313 = vadd.f32 %v2192, %v2280
      %v2314 = vadd.f32 %v2193, %v2282
      %v2315 = vperm.slane %v628, 2
      %v2316 = vmul.f32 %v596, %v2315
      %v2317 = vmul.f32 %v597, %v2315
      %v2318 = vmul.f32 %v598, %v2315
      %v2319 = vmul.f32 %v599, %v2315
      %v2320 = vmul.f32 %v600, %v2315
      %v2321 = vmul.f32 %v601, %v2315
      %v2322 = vmul.f32 %v602, %v2315
      %v2323 = vmul.f32 %v603, %v2315
      %v2324 = vmul.f32 %v604, %v2315
      %v2325 = vmul.f32 %v605, %v2315
      %v2326 = vmul.f32 %v606, %v2315
      %v2327 = vmul.f32 %v607, %v2315
      %v2328 = vmul.f32 %v608, %v2315
      %v2329 = vmul.f32 %v609, %v2315
      %v2330 = vmul.f32 %v610, %v2315
      %v2331 = vmul.f32 %v611, %v2315
      %v2332 = vmul.f32 %v612, %v2315
      %v2333 = vmul.f32 %v613, %v2315
      %v2334 = vmul.f32 %v614, %v2315
      %v2335 = vmul.f32 %v615, %v2315
      %v2336 = vmul.f32 %v616, %v2315
      %v2337 = vmul.f32 %v617, %v2315
      %v2338 = vmul.f32 %v618, %v2315
      %v2339 = vmul.f32 %v619, %v2315
      %v2364 = vrot.slane %v2316, 2
      %v2365 = vrot.slane %v2317, 2
      %v2366 = vsel %vm1758, %v2364, %v2365
      %v2367 = vrot.slane %v2318, 2
      %v2368 = vsel %vm1758, %v2365, %v2367
      %v2369 = vrot.slane %v2319, 2
      %v2370 = vrot.slane %v2320, 2
      %v2371 = vsel %vm1758, %v2369, %v2370
      %v2372 = vrot.slane %v2321, 2
      %v2373 = vsel %vm1758, %v2370, %v2372
      %v2374 = vrot.slane %v2322, 2
      %v2375 = vrot.slane %v2323, 2
      %v2376 = vsel %vm1758, %v2374, %v2375
      %v2377 = vrot.slane %v2324, 2
      %v2378 = vsel %vm1758, %v2375, %v2377
      %v2379 = vrot.slane %v2325, 2
      %v2380 = vrot.slane %v2326, 2
      %v2381 = vsel %vm1758, %v2379, %v2380
      %v2382 = vrot.slane %v2327, 2
      %v2383 = vsel %vm1758, %v2380, %v2382
      %v2384 = vrot.slane %v2328, 2
      %v2385 = vrot.slane %v2329, 2
      %v2386 = vsel %vm1758, %v2384, %v2385
      %v2387 = vrot.slane %v2330, 2
      %v2388 = vsel %vm1758, %v2385, %v2387
      %v2389 = vrot.slane %v2331, 2
      %v2390 = vrot.slane %v2332, 2
      %v2391 = vsel %vm1758, %v2389, %v2390
      %v2392 = vrot.slane %v2333, 2
      %v2393 = vsel %vm1758, %v2390, %v2392
      %v2394 = vrot.slane %v2334, 2
      %v2395 = vrot.slane %v2335, 2
      %v2396 = vsel %vm1758, %v2394, %v2395
      %v2397 = vrot.slane %v2336, 2
      %v2398 = vsel %vm1758, %v2395, %v2397
      %v2399 = vrot.slane %v2337, 2
      %v2400 = vrot.slane %v2338, 2
      %v2401 = vsel %vm1758, %v2399, %v2400
      %v2402 = vrot.slane %v2339, 2
      %v2403 = vsel %vm1758, %v2400, %v2402
      %v2420 = vadd.f32 %v2299, %v2366
      %v2421 = vadd.f32 %v2300, %v2368
      %v2422 = vadd.f32 %v2301, %v2371
      %v2423 = vadd.f32 %v2302, %v2373
      %v2424 = vadd.f32 %v2303, %v2376
      %v2425 = vadd.f32 %v2304, %v2378
      %v2426 = vadd.f32 %v2305, %v2381
      %v2427 = vadd.f32 %v2306, %v2383
      %v2428 = vadd.f32 %v2307, %v2386
      %v2429 = vadd.f32 %v2308, %v2388
      %v2430 = vadd.f32 %v2309, %v2391
      %v2431 = vadd.f32 %v2310, %v2393
      %v2432 = vadd.f32 %v2311, %v2396
      %v2433 = vadd.f32 %v2312, %v2398
      %v2434 = vadd.f32 %v2313, %v2401
      %v2435 = vadd.f32 %v2314, %v2403
      %v2436 = vperm.slane %v629, 2
      %v2437 = vmul.f32 %v599, %v2436
      %v2438 = vmul.f32 %v600, %v2436
      %v2439 = vmul.f32 %v601, %v2436
      %v2440 = vmul.f32 %v602, %v2436
      %v2441 = vmul.f32 %v603, %v2436
      %v2442 = vmul.f32 %v604, %v2436
      %v2443 = vmul.f32 %v605, %v2436
      %v2444 = vmul.f32 %v606, %v2436
      %v2445 = vmul.f32 %v607, %v2436
      %v2446 = vmul.f32 %v608, %v2436
      %v2447 = vmul.f32 %v609, %v2436
      %v2448 = vmul.f32 %v610, %v2436
      %v2449 = vmul.f32 %v611, %v2436
      %v2450 = vmul.f32 %v612, %v2436
      %v2451 = vmul.f32 %v613, %v2436
      %v2452 = vmul.f32 %v614, %v2436
      %v2453 = vmul.f32 %v615, %v2436
      %v2454 = vmul.f32 %v616, %v2436
      %v2455 = vmul.f32 %v617, %v2436
      %v2456 = vmul.f32 %v618, %v2436
      %v2457 = vmul.f32 %v619, %v2436
      %v2458 = vmul.f32 %v620, %v2436
      %v2459 = vmul.f32 %v621, %v2436
      %v2460 = vmul.f32 %v622, %v2436
      %v2485 = vrot.slane %v2437, 2
      %v2486 = vrot.slane %v2438, 2
      %v2487 = vsel %vm1758, %v2485, %v2486
      %v2488 = vrot.slane %v2439, 2
      %v2489 = vsel %vm1758, %v2486, %v2488
      %v2490 = vrot.slane %v2440, 2
      %v2491 = vrot.slane %v2441, 2
      %v2492 = vsel %vm1758, %v2490, %v2491
      %v2493 = vrot.slane %v2442, 2
      %v2494 = vsel %vm1758, %v2491, %v2493
      %v2495 = vrot.slane %v2443, 2
      %v2496 = vrot.slane %v2444, 2
      %v2497 = vsel %vm1758, %v2495, %v2496
      %v2498 = vrot.slane %v2445, 2
      %v2499 = vsel %vm1758, %v2496, %v2498
      %v2500 = vrot.slane %v2446, 2
      %v2501 = vrot.slane %v2447, 2
      %v2502 = vsel %vm1758, %v2500, %v2501
      %v2503 = vrot.slane %v2448, 2
      %v2504 = vsel %vm1758, %v2501, %v2503
      %v2505 = vrot.slane %v2449, 2
      %v2506 = vrot.slane %v2450, 2
      %v2507 = vsel %vm1758, %v2505, %v2506
      %v2508 = vrot.slane %v2451, 2
      %v2509 = vsel %vm1758, %v2506, %v2508
      %v2510 = vrot.slane %v2452, 2
      %v2511 = vrot.slane %v2453, 2
      %v2512 = vsel %vm1758, %v2510, %v2511
      %v2513 = vrot.slane %v2454, 2
      %v2514 = vsel %vm1758, %v2511, %v2513
      %v2515 = vrot.slane %v2455, 2
      %v2516 = vrot.slane %v2456, 2
      %v2517 = vsel %vm1758, %v2515, %v2516
      %v2518 = vrot.slane %v2457, 2
      %v2519 = vsel %vm1758, %v2516, %v2518
      %v2520 = vrot.slane %v2458, 2
      %v2521 = vrot.slane %v2459, 2
      %v2522 = vsel %vm1758, %v2520, %v2521
      %v2523 = vrot.slane %v2460, 2
      %v2524 = vsel %vm1758, %v2521, %v2523
      %v2541 = vadd.f32 %v2420, %v2487
      %v2542 = vadd.f32 %v2421, %v2489
      %v2543 = vadd.f32 %v2422, %v2492
      %v2544 = vadd.f32 %v2423, %v2494
      %v2545 = vadd.f32 %v2424, %v2497
      %v2546 = vadd.f32 %v2425, %v2499
      %v2547 = vadd.f32 %v2426, %v2502
      %v2548 = vadd.f32 %v2427, %v2504
      %v2549 = vadd.f32 %v2428, %v2507
      %v2550 = vadd.f32 %v2429, %v2509
      %v2551 = vadd.f32 %v2430, %v2512
      %v2552 = vadd.f32 %v2431, %v2514
      %v2553 = vadd.f32 %v2432, %v2517
      %v2554 = vadd.f32 %v2433, %v2519
      %v2555 = vadd.f32 %v2434, %v2522
      %v2556 = vadd.f32 %v2435, %v2524
      %v2557 = vperm.slane %v623, 3
      %v2558 = vmul.f32 %v581, %v2557
      %v2559 = vmul.f32 %v582, %v2557
      %v2560 = vmul.f32 %v583, %v2557
      %v2561 = vmul.f32 %v584, %v2557
      %v2562 = vmul.f32 %v585, %v2557
      %v2563 = vmul.f32 %v586, %v2557
      %v2564 = vmul.f32 %v587, %v2557
      %v2565 = vmul.f32 %v588, %v2557
      %v2566 = vmul.f32 %v589, %v2557
      %v2567 = vmul.f32 %v590, %v2557
      %v2568 = vmul.f32 %v591, %v2557
      %v2569 = vmul.f32 %v592, %v2557
      %v2570 = vmul.f32 %v593, %v2557
      %v2571 = vmul.f32 %v594, %v2557
      %v2572 = vmul.f32 %v595, %v2557
      %v2573 = vmul.f32 %v596, %v2557
      %v2574 = vmul.f32 %v597, %v2557
      %v2575 = vmul.f32 %v598, %v2557
      %v2576 = vmul.f32 %v599, %v2557
      %v2577 = vmul.f32 %v600, %v2557
      %v2578 = vmul.f32 %v601, %v2557
      %v2579 = vmul.f32 %v602, %v2557
      %v2580 = vmul.f32 %v603, %v2557
      %v2581 = vmul.f32 %v604, %v2557
      %vm2606 = vcmask 1044480
      %v2607 = vrot.slane %v2558, 3
      %v2608 = vrot.slane %v2559, 3
      %v2609 = vsel %vm2606, %v2607, %v2608
      %v2610 = vrot.slane %v2560, 3
      %v2611 = vsel %vm2606, %v2608, %v2610
      %v2612 = vrot.slane %v2561, 3
      %v2613 = vrot.slane %v2562, 3
      %v2614 = vsel %vm2606, %v2612, %v2613
      %v2615 = vrot.slane %v2563, 3
      %v2616 = vsel %vm2606, %v2613, %v2615
      %v2617 = vrot.slane %v2564, 3
      %v2618 = vrot.slane %v2565, 3
      %v2619 = vsel %vm2606, %v2617, %v2618
      %v2620 = vrot.slane %v2566, 3
      %v2621 = vsel %vm2606, %v2618, %v2620
      %v2622 = vrot.slane %v2567, 3
      %v2623 = vrot.slane %v2568, 3
      %v2624 = vsel %vm2606, %v2622, %v2623
      %v2625 = vrot.slane %v2569, 3
      %v2626 = vsel %vm2606, %v2623, %v2625
      %v2627 = vrot.slane %v2570, 3
      %v2628 = vrot.slane %v2571, 3
      %v2629 = vsel %vm2606, %v2627, %v2628
      %v2630 = vrot.slane %v2572, 3
      %v2631 = vsel %vm2606, %v2628, %v2630
      %v2632 = vrot.slane %v2573, 3
      %v2633 = vrot.slane %v2574, 3
      %v2634 = vsel %vm2606, %v2632, %v2633
      %v2635 = vrot.slane %v2575, 3
      %v2636 = vsel %vm2606, %v2633, %v2635
      %v2637 = vrot.slane %v2576, 3
      %v2638 = vrot.slane %v2577, 3
      %v2639 = vsel %vm2606, %v2637, %v2638
      %v2640 = vrot.slane %v2578, 3
      %v2641 = vsel %vm2606, %v2638, %v2640
      %v2642 = vrot.slane %v2579, 3
      %v2643 = vrot.slane %v2580, 3
      %v2644 = vsel %vm2606, %v2642, %v2643
      %v2645 = vrot.slane %v2581, 3
      %v2646 = vsel %vm2606, %v2643, %v2645
      %v2663 = vadd.f32 %v2541, %v2609
      %v2664 = vadd.f32 %v2542, %v2611
      %v2665 = vadd.f32 %v2543, %v2614
      %v2666 = vadd.f32 %v2544, %v2616
      %v2667 = vadd.f32 %v2545, %v2619
      %v2668 = vadd.f32 %v2546, %v2621
      %v2669 = vadd.f32 %v2547, %v2624
      %v2670 = vadd.f32 %v2548, %v2626
      %v2671 = vadd.f32 %v2549, %v2629
      %v2672 = vadd.f32 %v2550, %v2631
      %v2673 = vadd.f32 %v2551, %v2634
      %v2674 = vadd.f32 %v2552, %v2636
      %v2675 = vadd.f32 %v2553, %v2639
      %v2676 = vadd.f32 %v2554, %v2641
      %v2677 = vadd.f32 %v2555, %v2644
      %v2678 = vadd.f32 %v2556, %v2646
      %v2679 = vperm.slane %v624, 3
      %v2680 = vmul.f32 %v584, %v2679
      %v2681 = vmul.f32 %v585, %v2679
      %v2682 = vmul.f32 %v586, %v2679
      %v2683 = vmul.f32 %v587, %v2679
      %v2684 = vmul.f32 %v588, %v2679
      %v2685 = vmul.f32 %v589, %v2679
      %v2686 = vmul.f32 %v590, %v2679
      %v2687 = vmul.f32 %v591, %v2679
      %v2688 = vmul.f32 %v592, %v2679
      %v2689 = vmul.f32 %v593, %v2679
      %v2690 = vmul.f32 %v594, %v2679
      %v2691 = vmul.f32 %v595, %v2679
      %v2692 = vmul.f32 %v596, %v2679
      %v2693 = vmul.f32 %v597, %v2679
      %v2694 = vmul.f32 %v598, %v2679
      %v2695 = vmul.f32 %v599, %v2679
      %v2696 = vmul.f32 %v600, %v2679
      %v2697 = vmul.f32 %v601, %v2679
      %v2698 = vmul.f32 %v602, %v2679
      %v2699 = vmul.f32 %v603, %v2679
      %v2700 = vmul.f32 %v604, %v2679
      %v2701 = vmul.f32 %v605, %v2679
      %v2702 = vmul.f32 %v606, %v2679
      %v2703 = vmul.f32 %v607, %v2679
      %v2728 = vrot.slane %v2680, 3
      %v2729 = vrot.slane %v2681, 3
      %v2730 = vsel %vm2606, %v2728, %v2729
      %v2731 = vrot.slane %v2682, 3
      %v2732 = vsel %vm2606, %v2729, %v2731
      %v2733 = vrot.slane %v2683, 3
      %v2734 = vrot.slane %v2684, 3
      %v2735 = vsel %vm2606, %v2733, %v2734
      %v2736 = vrot.slane %v2685, 3
      %v2737 = vsel %vm2606, %v2734, %v2736
      %v2738 = vrot.slane %v2686, 3
      %v2739 = vrot.slane %v2687, 3
      %v2740 = vsel %vm2606, %v2738, %v2739
      %v2741 = vrot.slane %v2688, 3
      %v2742 = vsel %vm2606, %v2739, %v2741
      %v2743 = vrot.slane %v2689, 3
      %v2744 = vrot.slane %v2690, 3
      %v2745 = vsel %vm2606, %v2743, %v2744
      %v2746 = vrot.slane %v2691, 3
      %v2747 = vsel %vm2606, %v2744, %v2746
      %v2748 = vrot.slane %v2692, 3
      %v2749 = vrot.slane %v2693, 3
      %v2750 = vsel %vm2606, %v2748, %v2749
      %v2751 = vrot.slane %v2694, 3
      %v2752 = vsel %vm2606, %v2749, %v2751
      %v2753 = vrot.slane %v2695, 3
      %v2754 = vrot.slane %v2696, 3
      %v2755 = vsel %vm2606, %v2753, %v2754
      %v2756 = vrot.slane %v2697, 3
      %v2757 = vsel %vm2606, %v2754, %v2756
      %v2758 = vrot.slane %v2698, 3
      %v2759 = vrot.slane %v2699, 3
      %v2760 = vsel %vm2606, %v2758, %v2759
      %v2761 = vrot.slane %v2700, 3
      %v2762 = vsel %vm2606, %v2759, %v2761
      %v2763 = vrot.slane %v2701, 3
      %v2764 = vrot.slane %v2702, 3
      %v2765 = vsel %vm2606, %v2763, %v2764
      %v2766 = vrot.slane %v2703, 3
      %v2767 = vsel %vm2606, %v2764, %v2766
      %v2784 = vadd.f32 %v2663, %v2730
      %v2785 = vadd.f32 %v2664, %v2732
      %v2786 = vadd.f32 %v2665, %v2735
      %v2787 = vadd.f32 %v2666, %v2737
      %v2788 = vadd.f32 %v2667, %v2740
      %v2789 = vadd.f32 %v2668, %v2742
      %v2790 = vadd.f32 %v2669, %v2745
      %v2791 = vadd.f32 %v2670, %v2747
      %v2792 = vadd.f32 %v2671, %v2750
      %v2793 = vadd.f32 %v2672, %v2752
      %v2794 = vadd.f32 %v2673, %v2755
      %v2795 = vadd.f32 %v2674, %v2757
      %v2796 = vadd.f32 %v2675, %v2760
      %v2797 = vadd.f32 %v2676, %v2762
      %v2798 = vadd.f32 %v2677, %v2765
      %v2799 = vadd.f32 %v2678, %v2767
      %v2800 = vperm.slane %v625, 3
      %v2801 = vmul.f32 %v587, %v2800
      %v2802 = vmul.f32 %v588, %v2800
      %v2803 = vmul.f32 %v589, %v2800
      %v2804 = vmul.f32 %v590, %v2800
      %v2805 = vmul.f32 %v591, %v2800
      %v2806 = vmul.f32 %v592, %v2800
      %v2807 = vmul.f32 %v593, %v2800
      %v2808 = vmul.f32 %v594, %v2800
      %v2809 = vmul.f32 %v595, %v2800
      %v2810 = vmul.f32 %v596, %v2800
      %v2811 = vmul.f32 %v597, %v2800
      %v2812 = vmul.f32 %v598, %v2800
      %v2813 = vmul.f32 %v599, %v2800
      %v2814 = vmul.f32 %v600, %v2800
      %v2815 = vmul.f32 %v601, %v2800
      %v2816 = vmul.f32 %v602, %v2800
      %v2817 = vmul.f32 %v603, %v2800
      %v2818 = vmul.f32 %v604, %v2800
      %v2819 = vmul.f32 %v605, %v2800
      %v2820 = vmul.f32 %v606, %v2800
      %v2821 = vmul.f32 %v607, %v2800
      %v2822 = vmul.f32 %v608, %v2800
      %v2823 = vmul.f32 %v609, %v2800
      %v2824 = vmul.f32 %v610, %v2800
      %v2849 = vrot.slane %v2801, 3
      %v2850 = vrot.slane %v2802, 3
      %v2851 = vsel %vm2606, %v2849, %v2850
      %v2852 = vrot.slane %v2803, 3
      %v2853 = vsel %vm2606, %v2850, %v2852
      %v2854 = vrot.slane %v2804, 3
      %v2855 = vrot.slane %v2805, 3
      %v2856 = vsel %vm2606, %v2854, %v2855
      %v2857 = vrot.slane %v2806, 3
      %v2858 = vsel %vm2606, %v2855, %v2857
      %v2859 = vrot.slane %v2807, 3
      %v2860 = vrot.slane %v2808, 3
      %v2861 = vsel %vm2606, %v2859, %v2860
      %v2862 = vrot.slane %v2809, 3
      %v2863 = vsel %vm2606, %v2860, %v2862
      %v2864 = vrot.slane %v2810, 3
      %v2865 = vrot.slane %v2811, 3
      %v2866 = vsel %vm2606, %v2864, %v2865
      %v2867 = vrot.slane %v2812, 3
      %v2868 = vsel %vm2606, %v2865, %v2867
      %v2869 = vrot.slane %v2813, 3
      %v2870 = vrot.slane %v2814, 3
      %v2871 = vsel %vm2606, %v2869, %v2870
      %v2872 = vrot.slane %v2815, 3
      %v2873 = vsel %vm2606, %v2870, %v2872
      %v2874 = vrot.slane %v2816, 3
      %v2875 = vrot.slane %v2817, 3
      %v2876 = vsel %vm2606, %v2874, %v2875
      %v2877 = vrot.slane %v2818, 3
      %v2878 = vsel %vm2606, %v2875, %v2877
      %v2879 = vrot.slane %v2819, 3
      %v2880 = vrot.slane %v2820, 3
      %v2881 = vsel %vm2606, %v2879, %v2880
      %v2882 = vrot.slane %v2821, 3
      %v2883 = vsel %vm2606, %v2880, %v2882
      %v2884 = vrot.slane %v2822, 3
      %v2885 = vrot.slane %v2823, 3
      %v2886 = vsel %vm2606, %v2884, %v2885
      %v2887 = vrot.slane %v2824, 3
      %v2888 = vsel %vm2606, %v2885, %v2887
      %v2905 = vadd.f32 %v2784, %v2851
      %v2906 = vadd.f32 %v2785, %v2853
      %v2907 = vadd.f32 %v2786, %v2856
      %v2908 = vadd.f32 %v2787, %v2858
      %v2909 = vadd.f32 %v2788, %v2861
      %v2910 = vadd.f32 %v2789, %v2863
      %v2911 = vadd.f32 %v2790, %v2866
      %v2912 = vadd.f32 %v2791, %v2868
      %v2913 = vadd.f32 %v2792, %v2871
      %v2914 = vadd.f32 %v2793, %v2873
      %v2915 = vadd.f32 %v2794, %v2876
      %v2916 = vadd.f32 %v2795, %v2878
      %v2917 = vadd.f32 %v2796, %v2881
      %v2918 = vadd.f32 %v2797, %v2883
      %v2919 = vadd.f32 %v2798, %v2886
      %v2920 = vadd.f32 %v2799, %v2888
      %v2921 = vperm.slane %v626, 3
      %v2922 = vmul.f32 %v590, %v2921
      %v2923 = vmul.f32 %v591, %v2921
      %v2924 = vmul.f32 %v592, %v2921
      %v2925 = vmul.f32 %v593, %v2921
      %v2926 = vmul.f32 %v594, %v2921
      %v2927 = vmul.f32 %v595, %v2921
      %v2928 = vmul.f32 %v596, %v2921
      %v2929 = vmul.f32 %v597, %v2921
      %v2930 = vmul.f32 %v598, %v2921
      %v2931 = vmul.f32 %v599, %v2921
      %v2932 = vmul.f32 %v600, %v2921
      %v2933 = vmul.f32 %v601, %v2921
      %v2934 = vmul.f32 %v602, %v2921
      %v2935 = vmul.f32 %v603, %v2921
      %v2936 = vmul.f32 %v604, %v2921
      %v2937 = vmul.f32 %v605, %v2921
      %v2938 = vmul.f32 %v606, %v2921
      %v2939 = vmul.f32 %v607, %v2921
      %v2940 = vmul.f32 %v608, %v2921
      %v2941 = vmul.f32 %v609, %v2921
      %v2942 = vmul.f32 %v610, %v2921
      %v2943 = vmul.f32 %v611, %v2921
      %v2944 = vmul.f32 %v612, %v2921
      %v2945 = vmul.f32 %v613, %v2921
      %v2970 = vrot.slane %v2922, 3
      %v2971 = vrot.slane %v2923, 3
      %v2972 = vsel %vm2606, %v2970, %v2971
      %v2973 = vrot.slane %v2924, 3
      %v2974 = vsel %vm2606, %v2971, %v2973
      %v2975 = vrot.slane %v2925, 3
      %v2976 = vrot.slane %v2926, 3
      %v2977 = vsel %vm2606, %v2975, %v2976
      %v2978 = vrot.slane %v2927, 3
      %v2979 = vsel %vm2606, %v2976, %v2978
      %v2980 = vrot.slane %v2928, 3
      %v2981 = vrot.slane %v2929, 3
      %v2982 = vsel %vm2606, %v2980, %v2981
      %v2983 = vrot.slane %v2930, 3
      %v2984 = vsel %vm2606, %v2981, %v2983
      %v2985 = vrot.slane %v2931, 3
      %v2986 = vrot.slane %v2932, 3
      %v2987 = vsel %vm2606, %v2985, %v2986
      %v2988 = vrot.slane %v2933, 3
      %v2989 = vsel %vm2606, %v2986, %v2988
      %v2990 = vrot.slane %v2934, 3
      %v2991 = vrot.slane %v2935, 3
      %v2992 = vsel %vm2606, %v2990, %v2991
      %v2993 = vrot.slane %v2936, 3
      %v2994 = vsel %vm2606, %v2991, %v2993
      %v2995 = vrot.slane %v2937, 3
      %v2996 = vrot.slane %v2938, 3
      %v2997 = vsel %vm2606, %v2995, %v2996
      %v2998 = vrot.slane %v2939, 3
      %v2999 = vsel %vm2606, %v2996, %v2998
      %v3000 = vrot.slane %v2940, 3
      %v3001 = vrot.slane %v2941, 3
      %v3002 = vsel %vm2606, %v3000, %v3001
      %v3003 = vrot.slane %v2942, 3
      %v3004 = vsel %vm2606, %v3001, %v3003
      %v3005 = vrot.slane %v2943, 3
      %v3006 = vrot.slane %v2944, 3
      %v3007 = vsel %vm2606, %v3005, %v3006
      %v3008 = vrot.slane %v2945, 3
      %v3009 = vsel %vm2606, %v3006, %v3008
      %v3026 = vadd.f32 %v2905, %v2972
      %v3027 = vadd.f32 %v2906, %v2974
      %v3028 = vadd.f32 %v2907, %v2977
      %v3029 = vadd.f32 %v2908, %v2979
      %v3030 = vadd.f32 %v2909, %v2982
      %v3031 = vadd.f32 %v2910, %v2984
      %v3032 = vadd.f32 %v2911, %v2987
      %v3033 = vadd.f32 %v2912, %v2989
      %v3034 = vadd.f32 %v2913, %v2992
      %v3035 = vadd.f32 %v2914, %v2994
      %v3036 = vadd.f32 %v2915, %v2997
      %v3037 = vadd.f32 %v2916, %v2999
      %v3038 = vadd.f32 %v2917, %v3002
      %v3039 = vadd.f32 %v2918, %v3004
      %v3040 = vadd.f32 %v2919, %v3007
      %v3041 = vadd.f32 %v2920, %v3009
      %v3042 = vperm.slane %v627, 3
      %v3043 = vmul.f32 %v593, %v3042
      %v3044 = vmul.f32 %v594, %v3042
      %v3045 = vmul.f32 %v595, %v3042
      %v3046 = vmul.f32 %v596, %v3042
      %v3047 = vmul.f32 %v597, %v3042
      %v3048 = vmul.f32 %v598, %v3042
      %v3049 = vmul.f32 %v599, %v3042
      %v3050 = vmul.f32 %v600, %v3042
      %v3051 = vmul.f32 %v601, %v3042
      %v3052 = vmul.f32 %v602, %v3042
      %v3053 = vmul.f32 %v603, %v3042
      %v3054 = vmul.f32 %v604, %v3042
      %v3055 = vmul.f32 %v605, %v3042
      %v3056 = vmul.f32 %v606, %v3042
      %v3057 = vmul.f32 %v607, %v3042
      %v3058 = vmul.f32 %v608, %v3042
      %v3059 = vmul.f32 %v609, %v3042
      %v3060 = vmul.f32 %v610, %v3042
      %v3061 = vmul.f32 %v611, %v3042
      %v3062 = vmul.f32 %v612, %v3042
      %v3063 = vmul.f32 %v613, %v3042
      %v3064 = vmul.f32 %v614, %v3042
      %v3065 = vmul.f32 %v615, %v3042
      %v3066 = vmul.f32 %v616, %v3042
      %v3091 = vrot.slane %v3043, 3
      %v3092 = vrot.slane %v3044, 3
      %v3093 = vsel %vm2606, %v3091, %v3092
      %v3094 = vrot.slane %v3045, 3
      %v3095 = vsel %vm2606, %v3092, %v3094
      %v3096 = vrot.slane %v3046, 3
      %v3097 = vrot.slane %v3047, 3
      %v3098 = vsel %vm2606, %v3096, %v3097
      %v3099 = vrot.slane %v3048, 3
      %v3100 = vsel %vm2606, %v3097, %v3099
      %v3101 = vrot.slane %v3049, 3
      %v3102 = vrot.slane %v3050, 3
      %v3103 = vsel %vm2606, %v3101, %v3102
      %v3104 = vrot.slane %v3051, 3
      %v3105 = vsel %vm2606, %v3102, %v3104
      %v3106 = vrot.slane %v3052, 3
      %v3107 = vrot.slane %v3053, 3
      %v3108 = vsel %vm2606, %v3106, %v3107
      %v3109 = vrot.slane %v3054, 3
      %v3110 = vsel %vm2606, %v3107, %v3109
      %v3111 = vrot.slane %v3055, 3
      %v3112 = vrot.slane %v3056, 3
      %v3113 = vsel %vm2606, %v3111, %v3112
      %v3114 = vrot.slane %v3057, 3
      %v3115 = vsel %vm2606, %v3112, %v3114
      %v3116 = vrot.slane %v3058, 3
      %v3117 = vrot.slane %v3059, 3
      %v3118 = vsel %vm2606, %v3116, %v3117
      %v3119 = vrot.slane %v3060, 3
      %v3120 = vsel %vm2606, %v3117, %v3119
      %v3121 = vrot.slane %v3061, 3
      %v3122 = vrot.slane %v3062, 3
      %v3123 = vsel %vm2606, %v3121, %v3122
      %v3124 = vrot.slane %v3063, 3
      %v3125 = vsel %vm2606, %v3122, %v3124
      %v3126 = vrot.slane %v3064, 3
      %v3127 = vrot.slane %v3065, 3
      %v3128 = vsel %vm2606, %v3126, %v3127
      %v3129 = vrot.slane %v3066, 3
      %v3130 = vsel %vm2606, %v3127, %v3129
      %v3147 = vadd.f32 %v3026, %v3093
      %v3148 = vadd.f32 %v3027, %v3095
      %v3149 = vadd.f32 %v3028, %v3098
      %v3150 = vadd.f32 %v3029, %v3100
      %v3151 = vadd.f32 %v3030, %v3103
      %v3152 = vadd.f32 %v3031, %v3105
      %v3153 = vadd.f32 %v3032, %v3108
      %v3154 = vadd.f32 %v3033, %v3110
      %v3155 = vadd.f32 %v3034, %v3113
      %v3156 = vadd.f32 %v3035, %v3115
      %v3157 = vadd.f32 %v3036, %v3118
      %v3158 = vadd.f32 %v3037, %v3120
      %v3159 = vadd.f32 %v3038, %v3123
      %v3160 = vadd.f32 %v3039, %v3125
      %v3161 = vadd.f32 %v3040, %v3128
      %v3162 = vadd.f32 %v3041, %v3130
      %v3163 = vperm.slane %v628, 3
      %v3164 = vmul.f32 %v596, %v3163
      %v3165 = vmul.f32 %v597, %v3163
      %v3166 = vmul.f32 %v598, %v3163
      %v3167 = vmul.f32 %v599, %v3163
      %v3168 = vmul.f32 %v600, %v3163
      %v3169 = vmul.f32 %v601, %v3163
      %v3170 = vmul.f32 %v602, %v3163
      %v3171 = vmul.f32 %v603, %v3163
      %v3172 = vmul.f32 %v604, %v3163
      %v3173 = vmul.f32 %v605, %v3163
      %v3174 = vmul.f32 %v606, %v3163
      %v3175 = vmul.f32 %v607, %v3163
      %v3176 = vmul.f32 %v608, %v3163
      %v3177 = vmul.f32 %v609, %v3163
      %v3178 = vmul.f32 %v610, %v3163
      %v3179 = vmul.f32 %v611, %v3163
      %v3180 = vmul.f32 %v612, %v3163
      %v3181 = vmul.f32 %v613, %v3163
      %v3182 = vmul.f32 %v614, %v3163
      %v3183 = vmul.f32 %v615, %v3163
      %v3184 = vmul.f32 %v616, %v3163
      %v3185 = vmul.f32 %v617, %v3163
      %v3186 = vmul.f32 %v618, %v3163
      %v3187 = vmul.f32 %v619, %v3163
      %v3212 = vrot.slane %v3164, 3
      %v3213 = vrot.slane %v3165, 3
      %v3214 = vsel %vm2606, %v3212, %v3213
      %v3215 = vrot.slane %v3166, 3
      %v3216 = vsel %vm2606, %v3213, %v3215
      %v3217 = vrot.slane %v3167, 3
      %v3218 = vrot.slane %v3168, 3
      %v3219 = vsel %vm2606, %v3217, %v3218
      %v3220 = vrot.slane %v3169, 3
      %v3221 = vsel %vm2606, %v3218, %v3220
      %v3222 = vrot.slane %v3170, 3
      %v3223 = vrot.slane %v3171, 3
      %v3224 = vsel %vm2606, %v3222, %v3223
      %v3225 = vrot.slane %v3172, 3
      %v3226 = vsel %vm2606, %v3223, %v3225
      %v3227 = vrot.slane %v3173, 3
      %v3228 = vrot.slane %v3174, 3
      %v3229 = vsel %vm2606, %v3227, %v3228
      %v3230 = vrot.slane %v3175, 3
      %v3231 = vsel %vm2606, %v3228, %v3230
      %v3232 = vrot.slane %v3176, 3
      %v3233 = vrot.slane %v3177, 3
      %v3234 = vsel %vm2606, %v3232, %v3233
      %v3235 = vrot.slane %v3178, 3
      %v3236 = vsel %vm2606, %v3233, %v3235
      %v3237 = vrot.slane %v3179, 3
      %v3238 = vrot.slane %v3180, 3
      %v3239 = vsel %vm2606, %v3237, %v3238
      %v3240 = vrot.slane %v3181, 3
      %v3241 = vsel %vm2606, %v3238, %v3240
      %v3242 = vrot.slane %v3182, 3
      %v3243 = vrot.slane %v3183, 3
      %v3244 = vsel %vm2606, %v3242, %v3243
      %v3245 = vrot.slane %v3184, 3
      %v3246 = vsel %vm2606, %v3243, %v3245
      %v3247 = vrot.slane %v3185, 3
      %v3248 = vrot.slane %v3186, 3
      %v3249 = vsel %vm2606, %v3247, %v3248
      %v3250 = vrot.slane %v3187, 3
      %v3251 = vsel %vm2606, %v3248, %v3250
      %v3268 = vadd.f32 %v3147, %v3214
      %v3269 = vadd.f32 %v3148, %v3216
      %v3270 = vadd.f32 %v3149, %v3219
      %v3271 = vadd.f32 %v3150, %v3221
      %v3272 = vadd.f32 %v3151, %v3224
      %v3273 = vadd.f32 %v3152, %v3226
      %v3274 = vadd.f32 %v3153, %v3229
      %v3275 = vadd.f32 %v3154, %v3231
      %v3276 = vadd.f32 %v3155, %v3234
      %v3277 = vadd.f32 %v3156, %v3236
      %v3278 = vadd.f32 %v3157, %v3239
      %v3279 = vadd.f32 %v3158, %v3241
      %v3280 = vadd.f32 %v3159, %v3244
      %v3281 = vadd.f32 %v3160, %v3246
      %v3282 = vadd.f32 %v3161, %v3249
      %v3283 = vadd.f32 %v3162, %v3251
      %v3284 = vperm.slane %v629, 3
      %v3285 = vmul.f32 %v599, %v3284
      %v3286 = vmul.f32 %v600, %v3284
      %v3287 = vmul.f32 %v601, %v3284
      %v3288 = vmul.f32 %v602, %v3284
      %v3289 = vmul.f32 %v603, %v3284
      %v3290 = vmul.f32 %v604, %v3284
      %v3291 = vmul.f32 %v605, %v3284
      %v3292 = vmul.f32 %v606, %v3284
      %v3293 = vmul.f32 %v607, %v3284
      %v3294 = vmul.f32 %v608, %v3284
      %v3295 = vmul.f32 %v609, %v3284
      %v3296 = vmul.f32 %v610, %v3284
      %v3297 = vmul.f32 %v611, %v3284
      %v3298 = vmul.f32 %v612, %v3284
      %v3299 = vmul.f32 %v613, %v3284
      %v3300 = vmul.f32 %v614, %v3284
      %v3301 = vmul.f32 %v615, %v3284
      %v3302 = vmul.f32 %v616, %v3284
      %v3303 = vmul.f32 %v617, %v3284
      %v3304 = vmul.f32 %v618, %v3284
      %v3305 = vmul.f32 %v619, %v3284
      %v3306 = vmul.f32 %v620, %v3284
      %v3307 = vmul.f32 %v621, %v3284
      %v3308 = vmul.f32 %v622, %v3284
      %v3333 = vrot.slane %v3285, 3
      %v3334 = vrot.slane %v3286, 3
      %v3335 = vsel %vm2606, %v3333, %v3334
      %v3336 = vrot.slane %v3287, 3
      %v3337 = vsel %vm2606, %v3334, %v3336
      %v3338 = vrot.slane %v3288, 3
      %v3339 = vrot.slane %v3289, 3
      %v3340 = vsel %vm2606, %v3338, %v3339
      %v3341 = vrot.slane %v3290, 3
      %v3342 = vsel %vm2606, %v3339, %v3341
      %v3343 = vrot.slane %v3291, 3
      %v3344 = vrot.slane %v3292, 3
      %v3345 = vsel %vm2606, %v3343, %v3344
      %v3346 = vrot.slane %v3293, 3
      %v3347 = vsel %vm2606, %v3344, %v3346
      %v3348 = vrot.slane %v3294, 3
      %v3349 = vrot.slane %v3295, 3
      %v3350 = vsel %vm2606, %v3348, %v3349
      %v3351 = vrot.slane %v3296, 3
      %v3352 = vsel %vm2606, %v3349, %v3351
      %v3353 = vrot.slane %v3297, 3
      %v3354 = vrot.slane %v3298, 3
      %v3355 = vsel %vm2606, %v3353, %v3354
      %v3356 = vrot.slane %v3299, 3
      %v3357 = vsel %vm2606, %v3354, %v3356
      %v3358 = vrot.slane %v3300, 3
      %v3359 = vrot.slane %v3301, 3
      %v3360 = vsel %vm2606, %v3358, %v3359
      %v3361 = vrot.slane %v3302, 3
      %v3362 = vsel %vm2606, %v3359, %v3361
      %v3363 = vrot.slane %v3303, 3
      %v3364 = vrot.slane %v3304, 3
      %v3365 = vsel %vm2606, %v3363, %v3364
      %v3366 = vrot.slane %v3305, 3
      %v3367 = vsel %vm2606, %v3364, %v3366
      %v3368 = vrot.slane %v3306, 3
      %v3369 = vrot.slane %v3307, 3
      %v3370 = vsel %vm2606, %v3368, %v3369
      %v3371 = vrot.slane %v3308, 3
      %v3372 = vsel %vm2606, %v3369, %v3371
      %v3389 = vadd.f32 %v3268, %v3335
      %v3390 = vadd.f32 %v3269, %v3337
      %v3391 = vadd.f32 %v3270, %v3340
      %v3392 = vadd.f32 %v3271, %v3342
      %v3393 = vadd.f32 %v3272, %v3345
      %v3394 = vadd.f32 %v3273, %v3347
      %v3395 = vadd.f32 %v3274, %v3350
      %v3396 = vadd.f32 %v3275, %v3352
      %v3397 = vadd.f32 %v3276, %v3355
      %v3398 = vadd.f32 %v3277, %v3357
      %v3399 = vadd.f32 %v3278, %v3360
      %v3400 = vadd.f32 %v3279, %v3362
      %v3401 = vadd.f32 %v3280, %v3365
      %v3402 = vadd.f32 %v3281, %v3367
      %v3403 = vadd.f32 %v3282, %v3370
      %v3404 = vadd.f32 %v3283, %v3372
      %v3405 = vperm.slane %v623, 4
      %v3406 = vmul.f32 %v581, %v3405
      %v3407 = vmul.f32 %v582, %v3405
      %v3408 = vmul.f32 %v583, %v3405
      %v3409 = vmul.f32 %v584, %v3405
      %v3410 = vmul.f32 %v585, %v3405
      %v3411 = vmul.f32 %v586, %v3405
      %v3412 = vmul.f32 %v587, %v3405
      %v3413 = vmul.f32 %v588, %v3405
      %v3414 = vmul.f32 %v589, %v3405
      %v3415 = vmul.f32 %v590, %v3405
      %v3416 = vmul.f32 %v591, %v3405
      %v3417 = vmul.f32 %v592, %v3405
      %v3418 = vmul.f32 %v593, %v3405
      %v3419 = vmul.f32 %v594, %v3405
      %v3420 = vmul.f32 %v595, %v3405
      %v3421 = vmul.f32 %v596, %v3405
      %v3422 = vmul.f32 %v597, %v3405
      %v3423 = vmul.f32 %v598, %v3405
      %v3424 = vmul.f32 %v599, %v3405
      %v3425 = vmul.f32 %v600, %v3405
      %v3426 = vmul.f32 %v601, %v3405
      %v3427 = vmul.f32 %v602, %v3405
      %v3428 = vmul.f32 %v603, %v3405
      %v3429 = vmul.f32 %v604, %v3405
      %vm3454 = vcmask 1043456
      %v3455 = vrot.slane %v3406, 4
      %v3456 = vrot.slane %v3407, 4
      %v3457 = vsel %vm3454, %v3455, %v3456
      %v3458 = vrot.slane %v3408, 4
      %v3459 = vsel %vm3454, %v3456, %v3458
      %v3460 = vrot.slane %v3409, 4
      %v3461 = vrot.slane %v3410, 4
      %v3462 = vsel %vm3454, %v3460, %v3461
      %v3463 = vrot.slane %v3411, 4
      %v3464 = vsel %vm3454, %v3461, %v3463
      %v3465 = vrot.slane %v3412, 4
      %v3466 = vrot.slane %v3413, 4
      %v3467 = vsel %vm3454, %v3465, %v3466
      %v3468 = vrot.slane %v3414, 4
      %v3469 = vsel %vm3454, %v3466, %v3468
      %v3470 = vrot.slane %v3415, 4
      %v3471 = vrot.slane %v3416, 4
      %v3472 = vsel %vm3454, %v3470, %v3471
      %v3473 = vrot.slane %v3417, 4
      %v3474 = vsel %vm3454, %v3471, %v3473
      %v3475 = vrot.slane %v3418, 4
      %v3476 = vrot.slane %v3419, 4
      %v3477 = vsel %vm3454, %v3475, %v3476
      %v3478 = vrot.slane %v3420, 4
      %v3479 = vsel %vm3454, %v3476, %v3478
      %v3480 = vrot.slane %v3421, 4
      %v3481 = vrot.slane %v3422, 4
      %v3482 = vsel %vm3454, %v3480, %v3481
      %v3483 = vrot.slane %v3423, 4
      %v3484 = vsel %vm3454, %v3481, %v3483
      %v3485 = vrot.slane %v3424, 4
      %v3486 = vrot.slane %v3425, 4
      %v3487 = vsel %vm3454, %v3485, %v3486
      %v3488 = vrot.slane %v3426, 4
      %v3489 = vsel %vm3454, %v3486, %v3488
      %v3490 = vrot.slane %v3427, 4
      %v3491 = vrot.slane %v3428, 4
      %v3492 = vsel %vm3454, %v3490, %v3491
      %v3493 = vrot.slane %v3429, 4
      %v3494 = vsel %vm3454, %v3491, %v3493
      %v3511 = vadd.f32 %v3389, %v3457
      %v3512 = vadd.f32 %v3390, %v3459
      %v3513 = vadd.f32 %v3391, %v3462
      %v3514 = vadd.f32 %v3392, %v3464
      %v3515 = vadd.f32 %v3393, %v3467
      %v3516 = vadd.f32 %v3394, %v3469
      %v3517 = vadd.f32 %v3395, %v3472
      %v3518 = vadd.f32 %v3396, %v3474
      %v3519 = vadd.f32 %v3397, %v3477
      %v3520 = vadd.f32 %v3398, %v3479
      %v3521 = vadd.f32 %v3399, %v3482
      %v3522 = vadd.f32 %v3400, %v3484
      %v3523 = vadd.f32 %v3401, %v3487
      %v3524 = vadd.f32 %v3402, %v3489
      %v3525 = vadd.f32 %v3403, %v3492
      %v3526 = vadd.f32 %v3404, %v3494
      %v3527 = vperm.slane %v624, 4
      %v3528 = vmul.f32 %v584, %v3527
      %v3529 = vmul.f32 %v585, %v3527
      %v3530 = vmul.f32 %v586, %v3527
      %v3531 = vmul.f32 %v587, %v3527
      %v3532 = vmul.f32 %v588, %v3527
      %v3533 = vmul.f32 %v589, %v3527
      %v3534 = vmul.f32 %v590, %v3527
      %v3535 = vmul.f32 %v591, %v3527
      %v3536 = vmul.f32 %v592, %v3527
      %v3537 = vmul.f32 %v593, %v3527
      %v3538 = vmul.f32 %v594, %v3527
      %v3539 = vmul.f32 %v595, %v3527
      %v3540 = vmul.f32 %v596, %v3527
      %v3541 = vmul.f32 %v597, %v3527
      %v3542 = vmul.f32 %v598, %v3527
      %v3543 = vmul.f32 %v599, %v3527
      %v3544 = vmul.f32 %v600, %v3527
      %v3545 = vmul.f32 %v601, %v3527
      %v3546 = vmul.f32 %v602, %v3527
      %v3547 = vmul.f32 %v603, %v3527
      %v3548 = vmul.f32 %v604, %v3527
      %v3549 = vmul.f32 %v605, %v3527
      %v3550 = vmul.f32 %v606, %v3527
      %v3551 = vmul.f32 %v607, %v3527
      %v3576 = vrot.slane %v3528, 4
      %v3577 = vrot.slane %v3529, 4
      %v3578 = vsel %vm3454, %v3576, %v3577
      %v3579 = vrot.slane %v3530, 4
      %v3580 = vsel %vm3454, %v3577, %v3579
      %v3581 = vrot.slane %v3531, 4
      %v3582 = vrot.slane %v3532, 4
      %v3583 = vsel %vm3454, %v3581, %v3582
      %v3584 = vrot.slane %v3533, 4
      %v3585 = vsel %vm3454, %v3582, %v3584
      %v3586 = vrot.slane %v3534, 4
      %v3587 = vrot.slane %v3535, 4
      %v3588 = vsel %vm3454, %v3586, %v3587
      %v3589 = vrot.slane %v3536, 4
      %v3590 = vsel %vm3454, %v3587, %v3589
      %v3591 = vrot.slane %v3537, 4
      %v3592 = vrot.slane %v3538, 4
      %v3593 = vsel %vm3454, %v3591, %v3592
      %v3594 = vrot.slane %v3539, 4
      %v3595 = vsel %vm3454, %v3592, %v3594
      %v3596 = vrot.slane %v3540, 4
      %v3597 = vrot.slane %v3541, 4
      %v3598 = vsel %vm3454, %v3596, %v3597
      %v3599 = vrot.slane %v3542, 4
      %v3600 = vsel %vm3454, %v3597, %v3599
      %v3601 = vrot.slane %v3543, 4
      %v3602 = vrot.slane %v3544, 4
      %v3603 = vsel %vm3454, %v3601, %v3602
      %v3604 = vrot.slane %v3545, 4
      %v3605 = vsel %vm3454, %v3602, %v3604
      %v3606 = vrot.slane %v3546, 4
      %v3607 = vrot.slane %v3547, 4
      %v3608 = vsel %vm3454, %v3606, %v3607
      %v3609 = vrot.slane %v3548, 4
      %v3610 = vsel %vm3454, %v3607, %v3609
      %v3611 = vrot.slane %v3549, 4
      %v3612 = vrot.slane %v3550, 4
      %v3613 = vsel %vm3454, %v3611, %v3612
      %v3614 = vrot.slane %v3551, 4
      %v3615 = vsel %vm3454, %v3612, %v3614
      %v3632 = vadd.f32 %v3511, %v3578
      %v3633 = vadd.f32 %v3512, %v3580
      %v3634 = vadd.f32 %v3513, %v3583
      %v3635 = vadd.f32 %v3514, %v3585
      %v3636 = vadd.f32 %v3515, %v3588
      %v3637 = vadd.f32 %v3516, %v3590
      %v3638 = vadd.f32 %v3517, %v3593
      %v3639 = vadd.f32 %v3518, %v3595
      %v3640 = vadd.f32 %v3519, %v3598
      %v3641 = vadd.f32 %v3520, %v3600
      %v3642 = vadd.f32 %v3521, %v3603
      %v3643 = vadd.f32 %v3522, %v3605
      %v3644 = vadd.f32 %v3523, %v3608
      %v3645 = vadd.f32 %v3524, %v3610
      %v3646 = vadd.f32 %v3525, %v3613
      %v3647 = vadd.f32 %v3526, %v3615
      %v3648 = vperm.slane %v625, 4
      %v3649 = vmul.f32 %v587, %v3648
      %v3650 = vmul.f32 %v588, %v3648
      %v3651 = vmul.f32 %v589, %v3648
      %v3652 = vmul.f32 %v590, %v3648
      %v3653 = vmul.f32 %v591, %v3648
      %v3654 = vmul.f32 %v592, %v3648
      %v3655 = vmul.f32 %v593, %v3648
      %v3656 = vmul.f32 %v594, %v3648
      %v3657 = vmul.f32 %v595, %v3648
      %v3658 = vmul.f32 %v596, %v3648
      %v3659 = vmul.f32 %v597, %v3648
      %v3660 = vmul.f32 %v598, %v3648
      %v3661 = vmul.f32 %v599, %v3648
      %v3662 = vmul.f32 %v600, %v3648
      %v3663 = vmul.f32 %v601, %v3648
      %v3664 = vmul.f32 %v602, %v3648
      %v3665 = vmul.f32 %v603, %v3648
      %v3666 = vmul.f32 %v604, %v3648
      %v3667 = vmul.f32 %v605, %v3648
      %v3668 = vmul.f32 %v606, %v3648
      %v3669 = vmul.f32 %v607, %v3648
      %v3670 = vmul.f32 %v608, %v3648
      %v3671 = vmul.f32 %v609, %v3648
      %v3672 = vmul.f32 %v610, %v3648
      %v3697 = vrot.slane %v3649, 4
      %v3698 = vrot.slane %v3650, 4
      %v3699 = vsel %vm3454, %v3697, %v3698
      %v3700 = vrot.slane %v3651, 4
      %v3701 = vsel %vm3454, %v3698, %v3700
      %v3702 = vrot.slane %v3652, 4
      %v3703 = vrot.slane %v3653, 4
      %v3704 = vsel %vm3454, %v3702, %v3703
      %v3705 = vrot.slane %v3654, 4
      %v3706 = vsel %vm3454, %v3703, %v3705
      %v3707 = vrot.slane %v3655, 4
      %v3708 = vrot.slane %v3656, 4
      %v3709 = vsel %vm3454, %v3707, %v3708
      %v3710 = vrot.slane %v3657, 4
      %v3711 = vsel %vm3454, %v3708, %v3710
      %v3712 = vrot.slane %v3658, 4
      %v3713 = vrot.slane %v3659, 4
      %v3714 = vsel %vm3454, %v3712, %v3713
      %v3715 = vrot.slane %v3660, 4
      %v3716 = vsel %vm3454, %v3713, %v3715
      %v3717 = vrot.slane %v3661, 4
      %v3718 = vrot.slane %v3662, 4
      %v3719 = vsel %vm3454, %v3717, %v3718
      %v3720 = vrot.slane %v3663, 4
      %v3721 = vsel %vm3454, %v3718, %v3720
      %v3722 = vrot.slane %v3664, 4
      %v3723 = vrot.slane %v3665, 4
      %v3724 = vsel %vm3454, %v3722, %v3723
      %v3725 = vrot.slane %v3666, 4
      %v3726 = vsel %vm3454, %v3723, %v3725
      %v3727 = vrot.slane %v3667, 4
      %v3728 = vrot.slane %v3668, 4
      %v3729 = vsel %vm3454, %v3727, %v3728
      %v3730 = vrot.slane %v3669, 4
      %v3731 = vsel %vm3454, %v3728, %v3730
      %v3732 = vrot.slane %v3670, 4
      %v3733 = vrot.slane %v3671, 4
      %v3734 = vsel %vm3454, %v3732, %v3733
      %v3735 = vrot.slane %v3672, 4
      %v3736 = vsel %vm3454, %v3733, %v3735
      %v3753 = vadd.f32 %v3632, %v3699
      %v3754 = vadd.f32 %v3633, %v3701
      %v3755 = vadd.f32 %v3634, %v3704
      %v3756 = vadd.f32 %v3635, %v3706
      %v3757 = vadd.f32 %v3636, %v3709
      %v3758 = vadd.f32 %v3637, %v3711
      %v3759 = vadd.f32 %v3638, %v3714
      %v3760 = vadd.f32 %v3639, %v3716
      %v3761 = vadd.f32 %v3640, %v3719
      %v3762 = vadd.f32 %v3641, %v3721
      %v3763 = vadd.f32 %v3642, %v3724
      %v3764 = vadd.f32 %v3643, %v3726
      %v3765 = vadd.f32 %v3644, %v3729
      %v3766 = vadd.f32 %v3645, %v3731
      %v3767 = vadd.f32 %v3646, %v3734
      %v3768 = vadd.f32 %v3647, %v3736
      %v3769 = vperm.slane %v626, 4
      %v3770 = vmul.f32 %v590, %v3769
      %v3771 = vmul.f32 %v591, %v3769
      %v3772 = vmul.f32 %v592, %v3769
      %v3773 = vmul.f32 %v593, %v3769
      %v3774 = vmul.f32 %v594, %v3769
      %v3775 = vmul.f32 %v595, %v3769
      %v3776 = vmul.f32 %v596, %v3769
      %v3777 = vmul.f32 %v597, %v3769
      %v3778 = vmul.f32 %v598, %v3769
      %v3779 = vmul.f32 %v599, %v3769
      %v3780 = vmul.f32 %v600, %v3769
      %v3781 = vmul.f32 %v601, %v3769
      %v3782 = vmul.f32 %v602, %v3769
      %v3783 = vmul.f32 %v603, %v3769
      %v3784 = vmul.f32 %v604, %v3769
      %v3785 = vmul.f32 %v605, %v3769
      %v3786 = vmul.f32 %v606, %v3769
      %v3787 = vmul.f32 %v607, %v3769
      %v3788 = vmul.f32 %v608, %v3769
      %v3789 = vmul.f32 %v609, %v3769
      %v3790 = vmul.f32 %v610, %v3769
      %v3791 = vmul.f32 %v611, %v3769
      %v3792 = vmul.f32 %v612, %v3769
      %v3793 = vmul.f32 %v613, %v3769
      %v3818 = vrot.slane %v3770, 4
      %v3819 = vrot.slane %v3771, 4
      %v3820 = vsel %vm3454, %v3818, %v3819
      %v3821 = vrot.slane %v3772, 4
      %v3822 = vsel %vm3454, %v3819, %v3821
      %v3823 = vrot.slane %v3773, 4
      %v3824 = vrot.slane %v3774, 4
      %v3825 = vsel %vm3454, %v3823, %v3824
      %v3826 = vrot.slane %v3775, 4
      %v3827 = vsel %vm3454, %v3824, %v3826
      %v3828 = vrot.slane %v3776, 4
      %v3829 = vrot.slane %v3777, 4
      %v3830 = vsel %vm3454, %v3828, %v3829
      %v3831 = vrot.slane %v3778, 4
      %v3832 = vsel %vm3454, %v3829, %v3831
      %v3833 = vrot.slane %v3779, 4
      %v3834 = vrot.slane %v3780, 4
      %v3835 = vsel %vm3454, %v3833, %v3834
      %v3836 = vrot.slane %v3781, 4
      %v3837 = vsel %vm3454, %v3834, %v3836
      %v3838 = vrot.slane %v3782, 4
      %v3839 = vrot.slane %v3783, 4
      %v3840 = vsel %vm3454, %v3838, %v3839
      %v3841 = vrot.slane %v3784, 4
      %v3842 = vsel %vm3454, %v3839, %v3841
      %v3843 = vrot.slane %v3785, 4
      %v3844 = vrot.slane %v3786, 4
      %v3845 = vsel %vm3454, %v3843, %v3844
      %v3846 = vrot.slane %v3787, 4
      %v3847 = vsel %vm3454, %v3844, %v3846
      %v3848 = vrot.slane %v3788, 4
      %v3849 = vrot.slane %v3789, 4
      %v3850 = vsel %vm3454, %v3848, %v3849
      %v3851 = vrot.slane %v3790, 4
      %v3852 = vsel %vm3454, %v3849, %v3851
      %v3853 = vrot.slane %v3791, 4
      %v3854 = vrot.slane %v3792, 4
      %v3855 = vsel %vm3454, %v3853, %v3854
      %v3856 = vrot.slane %v3793, 4
      %v3857 = vsel %vm3454, %v3854, %v3856
      %v3874 = vadd.f32 %v3753, %v3820
      %v3875 = vadd.f32 %v3754, %v3822
      %v3876 = vadd.f32 %v3755, %v3825
      %v3877 = vadd.f32 %v3756, %v3827
      %v3878 = vadd.f32 %v3757, %v3830
      %v3879 = vadd.f32 %v3758, %v3832
      %v3880 = vadd.f32 %v3759, %v3835
      %v3881 = vadd.f32 %v3760, %v3837
      %v3882 = vadd.f32 %v3761, %v3840
      %v3883 = vadd.f32 %v3762, %v3842
      %v3884 = vadd.f32 %v3763, %v3845
      %v3885 = vadd.f32 %v3764, %v3847
      %v3886 = vadd.f32 %v3765, %v3850
      %v3887 = vadd.f32 %v3766, %v3852
      %v3888 = vadd.f32 %v3767, %v3855
      %v3889 = vadd.f32 %v3768, %v3857
      %v3890 = vperm.slane %v627, 4
      %v3891 = vmul.f32 %v593, %v3890
      %v3892 = vmul.f32 %v594, %v3890
      %v3893 = vmul.f32 %v595, %v3890
      %v3894 = vmul.f32 %v596, %v3890
      %v3895 = vmul.f32 %v597, %v3890
      %v3896 = vmul.f32 %v598, %v3890
      %v3897 = vmul.f32 %v599, %v3890
      %v3898 = vmul.f32 %v600, %v3890
      %v3899 = vmul.f32 %v601, %v3890
      %v3900 = vmul.f32 %v602, %v3890
      %v3901 = vmul.f32 %v603, %v3890
      %v3902 = vmul.f32 %v604, %v3890
      %v3903 = vmul.f32 %v605, %v3890
      %v3904 = vmul.f32 %v606, %v3890
      %v3905 = vmul.f32 %v607, %v3890
      %v3906 = vmul.f32 %v608, %v3890
      %v3907 = vmul.f32 %v609, %v3890
      %v3908 = vmul.f32 %v610, %v3890
      %v3909 = vmul.f32 %v611, %v3890
      %v3910 = vmul.f32 %v612, %v3890
      %v3911 = vmul.f32 %v613, %v3890
      %v3912 = vmul.f32 %v614, %v3890
      %v3913 = vmul.f32 %v615, %v3890
      %v3914 = vmul.f32 %v616, %v3890
      %v3939 = vrot.slane %v3891, 4
      %v3940 = vrot.slane %v3892, 4
      %v3941 = vsel %vm3454, %v3939, %v3940
      %v3942 = vrot.slane %v3893, 4
      %v3943 = vsel %vm3454, %v3940, %v3942
      %v3944 = vrot.slane %v3894, 4
      %v3945 = vrot.slane %v3895, 4
      %v3946 = vsel %vm3454, %v3944, %v3945
      %v3947 = vrot.slane %v3896, 4
      %v3948 = vsel %vm3454, %v3945, %v3947
      %v3949 = vrot.slane %v3897, 4
      %v3950 = vrot.slane %v3898, 4
      %v3951 = vsel %vm3454, %v3949, %v3950
      %v3952 = vrot.slane %v3899, 4
      %v3953 = vsel %vm3454, %v3950, %v3952
      %v3954 = vrot.slane %v3900, 4
      %v3955 = vrot.slane %v3901, 4
      %v3956 = vsel %vm3454, %v3954, %v3955
      %v3957 = vrot.slane %v3902, 4
      %v3958 = vsel %vm3454, %v3955, %v3957
      %v3959 = vrot.slane %v3903, 4
      %v3960 = vrot.slane %v3904, 4
      %v3961 = vsel %vm3454, %v3959, %v3960
      %v3962 = vrot.slane %v3905, 4
      %v3963 = vsel %vm3454, %v3960, %v3962
      %v3964 = vrot.slane %v3906, 4
      %v3965 = vrot.slane %v3907, 4
      %v3966 = vsel %vm3454, %v3964, %v3965
      %v3967 = vrot.slane %v3908, 4
      %v3968 = vsel %vm3454, %v3965, %v3967
      %v3969 = vrot.slane %v3909, 4
      %v3970 = vrot.slane %v3910, 4
      %v3971 = vsel %vm3454, %v3969, %v3970
      %v3972 = vrot.slane %v3911, 4
      %v3973 = vsel %vm3454, %v3970, %v3972
      %v3974 = vrot.slane %v3912, 4
      %v3975 = vrot.slane %v3913, 4
      %v3976 = vsel %vm3454, %v3974, %v3975
      %v3977 = vrot.slane %v3914, 4
      %v3978 = vsel %vm3454, %v3975, %v3977
      %v3995 = vadd.f32 %v3874, %v3941
      %v3996 = vadd.f32 %v3875, %v3943
      %v3997 = vadd.f32 %v3876, %v3946
      %v3998 = vadd.f32 %v3877, %v3948
      %v3999 = vadd.f32 %v3878, %v3951
      %v4000 = vadd.f32 %v3879, %v3953
      %v4001 = vadd.f32 %v3880, %v3956
      %v4002 = vadd.f32 %v3881, %v3958
      %v4003 = vadd.f32 %v3882, %v3961
      %v4004 = vadd.f32 %v3883, %v3963
      %v4005 = vadd.f32 %v3884, %v3966
      %v4006 = vadd.f32 %v3885, %v3968
      %v4007 = vadd.f32 %v3886, %v3971
      %v4008 = vadd.f32 %v3887, %v3973
      %v4009 = vadd.f32 %v3888, %v3976
      %v4010 = vadd.f32 %v3889, %v3978
      %v4011 = vperm.slane %v628, 4
      %v4012 = vmul.f32 %v596, %v4011
      %v4013 = vmul.f32 %v597, %v4011
      %v4014 = vmul.f32 %v598, %v4011
      %v4015 = vmul.f32 %v599, %v4011
      %v4016 = vmul.f32 %v600, %v4011
      %v4017 = vmul.f32 %v601, %v4011
      %v4018 = vmul.f32 %v602, %v4011
      %v4019 = vmul.f32 %v603, %v4011
      %v4020 = vmul.f32 %v604, %v4011
      %v4021 = vmul.f32 %v605, %v4011
      %v4022 = vmul.f32 %v606, %v4011
      %v4023 = vmul.f32 %v607, %v4011
      %v4024 = vmul.f32 %v608, %v4011
      %v4025 = vmul.f32 %v609, %v4011
      %v4026 = vmul.f32 %v610, %v4011
      %v4027 = vmul.f32 %v611, %v4011
      %v4028 = vmul.f32 %v612, %v4011
      %v4029 = vmul.f32 %v613, %v4011
      %v4030 = vmul.f32 %v614, %v4011
      %v4031 = vmul.f32 %v615, %v4011
      %v4032 = vmul.f32 %v616, %v4011
      %v4033 = vmul.f32 %v617, %v4011
      %v4034 = vmul.f32 %v618, %v4011
      %v4035 = vmul.f32 %v619, %v4011
      %v4060 = vrot.slane %v4012, 4
      %v4061 = vrot.slane %v4013, 4
      %v4062 = vsel %vm3454, %v4060, %v4061
      %v4063 = vrot.slane %v4014, 4
      %v4064 = vsel %vm3454, %v4061, %v4063
      %v4065 = vrot.slane %v4015, 4
      %v4066 = vrot.slane %v4016, 4
      %v4067 = vsel %vm3454, %v4065, %v4066
      %v4068 = vrot.slane %v4017, 4
      %v4069 = vsel %vm3454, %v4066, %v4068
      %v4070 = vrot.slane %v4018, 4
      %v4071 = vrot.slane %v4019, 4
      %v4072 = vsel %vm3454, %v4070, %v4071
      %v4073 = vrot.slane %v4020, 4
      %v4074 = vsel %vm3454, %v4071, %v4073
      %v4075 = vrot.slane %v4021, 4
      %v4076 = vrot.slane %v4022, 4
      %v4077 = vsel %vm3454, %v4075, %v4076
      %v4078 = vrot.slane %v4023, 4
      %v4079 = vsel %vm3454, %v4076, %v4078
      %v4080 = vrot.slane %v4024, 4
      %v4081 = vrot.slane %v4025, 4
      %v4082 = vsel %vm3454, %v4080, %v4081
      %v4083 = vrot.slane %v4026, 4
      %v4084 = vsel %vm3454, %v4081, %v4083
      %v4085 = vrot.slane %v4027, 4
      %v4086 = vrot.slane %v4028, 4
      %v4087 = vsel %vm3454, %v4085, %v4086
      %v4088 = vrot.slane %v4029, 4
      %v4089 = vsel %vm3454, %v4086, %v4088
      %v4090 = vrot.slane %v4030, 4
      %v4091 = vrot.slane %v4031, 4
      %v4092 = vsel %vm3454, %v4090, %v4091
      %v4093 = vrot.slane %v4032, 4
      %v4094 = vsel %vm3454, %v4091, %v4093
      %v4095 = vrot.slane %v4033, 4
      %v4096 = vrot.slane %v4034, 4
      %v4097 = vsel %vm3454, %v4095, %v4096
      %v4098 = vrot.slane %v4035, 4
      %v4099 = vsel %vm3454, %v4096, %v4098
      %v4116 = vadd.f32 %v3995, %v4062
      %v4117 = vadd.f32 %v3996, %v4064
      %v4118 = vadd.f32 %v3997, %v4067
      %v4119 = vadd.f32 %v3998, %v4069
      %v4120 = vadd.f32 %v3999, %v4072
      %v4121 = vadd.f32 %v4000, %v4074
      %v4122 = vadd.f32 %v4001, %v4077
      %v4123 = vadd.f32 %v4002, %v4079
      %v4124 = vadd.f32 %v4003, %v4082
      %v4125 = vadd.f32 %v4004, %v4084
      %v4126 = vadd.f32 %v4005, %v4087
      %v4127 = vadd.f32 %v4006, %v4089
      %v4128 = vadd.f32 %v4007, %v4092
      %v4129 = vadd.f32 %v4008, %v4094
      %v4130 = vadd.f32 %v4009, %v4097
      %v4131 = vadd.f32 %v4010, %v4099
      %v4132 = vperm.slane %v629, 4
      %v4133 = vmul.f32 %v599, %v4132
      %v4134 = vmul.f32 %v600, %v4132
      %v4135 = vmul.f32 %v601, %v4132
      %v4136 = vmul.f32 %v602, %v4132
      %v4137 = vmul.f32 %v603, %v4132
      %v4138 = vmul.f32 %v604, %v4132
      %v4139 = vmul.f32 %v605, %v4132
      %v4140 = vmul.f32 %v606, %v4132
      %v4141 = vmul.f32 %v607, %v4132
      %v4142 = vmul.f32 %v608, %v4132
      %v4143 = vmul.f32 %v609, %v4132
      %v4144 = vmul.f32 %v610, %v4132
      %v4145 = vmul.f32 %v611, %v4132
      %v4146 = vmul.f32 %v612, %v4132
      %v4147 = vmul.f32 %v613, %v4132
      %v4148 = vmul.f32 %v614, %v4132
      %v4149 = vmul.f32 %v615, %v4132
      %v4150 = vmul.f32 %v616, %v4132
      %v4151 = vmul.f32 %v617, %v4132
      %v4152 = vmul.f32 %v618, %v4132
      %v4153 = vmul.f32 %v619, %v4132
      %v4154 = vmul.f32 %v620, %v4132
      %v4155 = vmul.f32 %v621, %v4132
      %v4156 = vmul.f32 %v622, %v4132
      %v4181 = vrot.slane %v4133, 4
      %v4182 = vrot.slane %v4134, 4
      %v4183 = vsel %vm3454, %v4181, %v4182
      %v4184 = vrot.slane %v4135, 4
      %v4185 = vsel %vm3454, %v4182, %v4184
      %v4186 = vrot.slane %v4136, 4
      %v4187 = vrot.slane %v4137, 4
      %v4188 = vsel %vm3454, %v4186, %v4187
      %v4189 = vrot.slane %v4138, 4
      %v4190 = vsel %vm3454, %v4187, %v4189
      %v4191 = vrot.slane %v4139, 4
      %v4192 = vrot.slane %v4140, 4
      %v4193 = vsel %vm3454, %v4191, %v4192
      %v4194 = vrot.slane %v4141, 4
      %v4195 = vsel %vm3454, %v4192, %v4194
      %v4196 = vrot.slane %v4142, 4
      %v4197 = vrot.slane %v4143, 4
      %v4198 = vsel %vm3454, %v4196, %v4197
      %v4199 = vrot.slane %v4144, 4
      %v4200 = vsel %vm3454, %v4197, %v4199
      %v4201 = vrot.slane %v4145, 4
      %v4202 = vrot.slane %v4146, 4
      %v4203 = vsel %vm3454, %v4201, %v4202
      %v4204 = vrot.slane %v4147, 4
      %v4205 = vsel %vm3454, %v4202, %v4204
      %v4206 = vrot.slane %v4148, 4
      %v4207 = vrot.slane %v4149, 4
      %v4208 = vsel %vm3454, %v4206, %v4207
      %v4209 = vrot.slane %v4150, 4
      %v4210 = vsel %vm3454, %v4207, %v4209
      %v4211 = vrot.slane %v4151, 4
      %v4212 = vrot.slane %v4152, 4
      %v4213 = vsel %vm3454, %v4211, %v4212
      %v4214 = vrot.slane %v4153, 4
      %v4215 = vsel %vm3454, %v4212, %v4214
      %v4216 = vrot.slane %v4154, 4
      %v4217 = vrot.slane %v4155, 4
      %v4218 = vsel %vm3454, %v4216, %v4217
      %v4219 = vrot.slane %v4156, 4
      %v4220 = vsel %vm3454, %v4217, %v4219
      %v4237 = vadd.f32 %v4116, %v4183
      %v4238 = vadd.f32 %v4117, %v4185
      %v4239 = vadd.f32 %v4118, %v4188
      %v4240 = vadd.f32 %v4119, %v4190
      %v4241 = vadd.f32 %v4120, %v4193
      %v4242 = vadd.f32 %v4121, %v4195
      %v4243 = vadd.f32 %v4122, %v4198
      %v4244 = vadd.f32 %v4123, %v4200
      %v4245 = vadd.f32 %v4124, %v4203
      %v4246 = vadd.f32 %v4125, %v4205
      %v4247 = vadd.f32 %v4126, %v4208
      %v4248 = vadd.f32 %v4127, %v4210
      %v4249 = vadd.f32 %v4128, %v4213
      %v4250 = vadd.f32 %v4129, %v4215
      %v4251 = vadd.f32 %v4130, %v4218
      %v4252 = vadd.f32 %v4131, %v4220
      %v4253 = vperm.slane %v623, 5
      %v4254 = vmul.f32 %v581, %v4253
      %v4255 = vmul.f32 %v582, %v4253
      %v4256 = vmul.f32 %v583, %v4253
      %v4257 = vmul.f32 %v584, %v4253
      %v4258 = vmul.f32 %v585, %v4253
      %v4259 = vmul.f32 %v586, %v4253
      %v4260 = vmul.f32 %v587, %v4253
      %v4261 = vmul.f32 %v588, %v4253
      %v4262 = vmul.f32 %v589, %v4253
      %v4263 = vmul.f32 %v590, %v4253
      %v4264 = vmul.f32 %v591, %v4253
      %v4265 = vmul.f32 %v592, %v4253
      %v4266 = vmul.f32 %v593, %v4253
      %v4267 = vmul.f32 %v594, %v4253
      %v4268 = vmul.f32 %v595, %v4253
      %v4269 = vmul.f32 %v596, %v4253
      %v4270 = vmul.f32 %v597, %v4253
      %v4271 = vmul.f32 %v598, %v4253
      %v4272 = vmul.f32 %v599, %v4253
      %v4273 = vmul.f32 %v600, %v4253
      %v4274 = vmul.f32 %v601, %v4253
      %v4275 = vmul.f32 %v602, %v4253
      %v4276 = vmul.f32 %v603, %v4253
      %v4277 = vmul.f32 %v604, %v4253
      %vm4302 = vcmask 1042432
      %v4303 = vrot.slane %v4254, 5
      %v4304 = vrot.slane %v4255, 5
      %v4305 = vsel %vm4302, %v4303, %v4304
      %v4306 = vrot.slane %v4256, 5
      %v4307 = vsel %vm4302, %v4304, %v4306
      %v4308 = vrot.slane %v4257, 5
      %v4309 = vrot.slane %v4258, 5
      %v4310 = vsel %vm4302, %v4308, %v4309
      %v4311 = vrot.slane %v4259, 5
      %v4312 = vsel %vm4302, %v4309, %v4311
      %v4313 = vrot.slane %v4260, 5
      %v4314 = vrot.slane %v4261, 5
      %v4315 = vsel %vm4302, %v4313, %v4314
      %v4316 = vrot.slane %v4262, 5
      %v4317 = vsel %vm4302, %v4314, %v4316
      %v4318 = vrot.slane %v4263, 5
      %v4319 = vrot.slane %v4264, 5
      %v4320 = vsel %vm4302, %v4318, %v4319
      %v4321 = vrot.slane %v4265, 5
      %v4322 = vsel %vm4302, %v4319, %v4321
      %v4323 = vrot.slane %v4266, 5
      %v4324 = vrot.slane %v4267, 5
      %v4325 = vsel %vm4302, %v4323, %v4324
      %v4326 = vrot.slane %v4268, 5
      %v4327 = vsel %vm4302, %v4324, %v4326
      %v4328 = vrot.slane %v4269, 5
      %v4329 = vrot.slane %v4270, 5
      %v4330 = vsel %vm4302, %v4328, %v4329
      %v4331 = vrot.slane %v4271, 5
      %v4332 = vsel %vm4302, %v4329, %v4331
      %v4333 = vrot.slane %v4272, 5
      %v4334 = vrot.slane %v4273, 5
      %v4335 = vsel %vm4302, %v4333, %v4334
      %v4336 = vrot.slane %v4274, 5
      %v4337 = vsel %vm4302, %v4334, %v4336
      %v4338 = vrot.slane %v4275, 5
      %v4339 = vrot.slane %v4276, 5
      %v4340 = vsel %vm4302, %v4338, %v4339
      %v4341 = vrot.slane %v4277, 5
      %v4342 = vsel %vm4302, %v4339, %v4341
      %v4359 = vadd.f32 %v4237, %v4305
      %v4360 = vadd.f32 %v4238, %v4307
      %v4361 = vadd.f32 %v4239, %v4310
      %v4362 = vadd.f32 %v4240, %v4312
      %v4363 = vadd.f32 %v4241, %v4315
      %v4364 = vadd.f32 %v4242, %v4317
      %v4365 = vadd.f32 %v4243, %v4320
      %v4366 = vadd.f32 %v4244, %v4322
      %v4367 = vadd.f32 %v4245, %v4325
      %v4368 = vadd.f32 %v4246, %v4327
      %v4369 = vadd.f32 %v4247, %v4330
      %v4370 = vadd.f32 %v4248, %v4332
      %v4371 = vadd.f32 %v4249, %v4335
      %v4372 = vadd.f32 %v4250, %v4337
      %v4373 = vadd.f32 %v4251, %v4340
      %v4374 = vadd.f32 %v4252, %v4342
      %v4375 = vperm.slane %v624, 5
      %v4376 = vmul.f32 %v584, %v4375
      %v4377 = vmul.f32 %v585, %v4375
      %v4378 = vmul.f32 %v586, %v4375
      %v4379 = vmul.f32 %v587, %v4375
      %v4380 = vmul.f32 %v588, %v4375
      %v4381 = vmul.f32 %v589, %v4375
      %v4382 = vmul.f32 %v590, %v4375
      %v4383 = vmul.f32 %v591, %v4375
      %v4384 = vmul.f32 %v592, %v4375
      %v4385 = vmul.f32 %v593, %v4375
      %v4386 = vmul.f32 %v594, %v4375
      %v4387 = vmul.f32 %v595, %v4375
      %v4388 = vmul.f32 %v596, %v4375
      %v4389 = vmul.f32 %v597, %v4375
      %v4390 = vmul.f32 %v598, %v4375
      %v4391 = vmul.f32 %v599, %v4375
      %v4392 = vmul.f32 %v600, %v4375
      %v4393 = vmul.f32 %v601, %v4375
      %v4394 = vmul.f32 %v602, %v4375
      %v4395 = vmul.f32 %v603, %v4375
      %v4396 = vmul.f32 %v604, %v4375
      %v4397 = vmul.f32 %v605, %v4375
      %v4398 = vmul.f32 %v606, %v4375
      %v4399 = vmul.f32 %v607, %v4375
      %v4424 = vrot.slane %v4376, 5
      %v4425 = vrot.slane %v4377, 5
      %v4426 = vsel %vm4302, %v4424, %v4425
      %v4427 = vrot.slane %v4378, 5
      %v4428 = vsel %vm4302, %v4425, %v4427
      %v4429 = vrot.slane %v4379, 5
      %v4430 = vrot.slane %v4380, 5
      %v4431 = vsel %vm4302, %v4429, %v4430
      %v4432 = vrot.slane %v4381, 5
      %v4433 = vsel %vm4302, %v4430, %v4432
      %v4434 = vrot.slane %v4382, 5
      %v4435 = vrot.slane %v4383, 5
      %v4436 = vsel %vm4302, %v4434, %v4435
      %v4437 = vrot.slane %v4384, 5
      %v4438 = vsel %vm4302, %v4435, %v4437
      %v4439 = vrot.slane %v4385, 5
      %v4440 = vrot.slane %v4386, 5
      %v4441 = vsel %vm4302, %v4439, %v4440
      %v4442 = vrot.slane %v4387, 5
      %v4443 = vsel %vm4302, %v4440, %v4442
      %v4444 = vrot.slane %v4388, 5
      %v4445 = vrot.slane %v4389, 5
      %v4446 = vsel %vm4302, %v4444, %v4445
      %v4447 = vrot.slane %v4390, 5
      %v4448 = vsel %vm4302, %v4445, %v4447
      %v4449 = vrot.slane %v4391, 5
      %v4450 = vrot.slane %v4392, 5
      %v4451 = vsel %vm4302, %v4449, %v4450
      %v4452 = vrot.slane %v4393, 5
      %v4453 = vsel %vm4302, %v4450, %v4452
      %v4454 = vrot.slane %v4394, 5
      %v4455 = vrot.slane %v4395, 5
      %v4456 = vsel %vm4302, %v4454, %v4455
      %v4457 = vrot.slane %v4396, 5
      %v4458 = vsel %vm4302, %v4455, %v4457
      %v4459 = vrot.slane %v4397, 5
      %v4460 = vrot.slane %v4398, 5
      %v4461 = vsel %vm4302, %v4459, %v4460
      %v4462 = vrot.slane %v4399, 5
      %v4463 = vsel %vm4302, %v4460, %v4462
      %v4480 = vadd.f32 %v4359, %v4426
      %v4481 = vadd.f32 %v4360, %v4428
      %v4482 = vadd.f32 %v4361, %v4431
      %v4483 = vadd.f32 %v4362, %v4433
      %v4484 = vadd.f32 %v4363, %v4436
      %v4485 = vadd.f32 %v4364, %v4438
      %v4486 = vadd.f32 %v4365, %v4441
      %v4487 = vadd.f32 %v4366, %v4443
      %v4488 = vadd.f32 %v4367, %v4446
      %v4489 = vadd.f32 %v4368, %v4448
      %v4490 = vadd.f32 %v4369, %v4451
      %v4491 = vadd.f32 %v4370, %v4453
      %v4492 = vadd.f32 %v4371, %v4456
      %v4493 = vadd.f32 %v4372, %v4458
      %v4494 = vadd.f32 %v4373, %v4461
      %v4495 = vadd.f32 %v4374, %v4463
      %v4496 = vperm.slane %v625, 5
      %v4497 = vmul.f32 %v587, %v4496
      %v4498 = vmul.f32 %v588, %v4496
      %v4499 = vmul.f32 %v589, %v4496
      %v4500 = vmul.f32 %v590, %v4496
      %v4501 = vmul.f32 %v591, %v4496
      %v4502 = vmul.f32 %v592, %v4496
      %v4503 = vmul.f32 %v593, %v4496
      %v4504 = vmul.f32 %v594, %v4496
      %v4505 = vmul.f32 %v595, %v4496
      %v4506 = vmul.f32 %v596, %v4496
      %v4507 = vmul.f32 %v597, %v4496
      %v4508 = vmul.f32 %v598, %v4496
      %v4509 = vmul.f32 %v599, %v4496
      %v4510 = vmul.f32 %v600, %v4496
      %v4511 = vmul.f32 %v601, %v4496
      %v4512 = vmul.f32 %v602, %v4496
      %v4513 = vmul.f32 %v603, %v4496
      %v4514 = vmul.f32 %v604, %v4496
      %v4515 = vmul.f32 %v605, %v4496
      %v4516 = vmul.f32 %v606, %v4496
      %v4517 = vmul.f32 %v607, %v4496
      %v4518 = vmul.f32 %v608, %v4496
      %v4519 = vmul.f32 %v609, %v4496
      %v4520 = vmul.f32 %v610, %v4496
      %v4545 = vrot.slane %v4497, 5
      %v4546 = vrot.slane %v4498, 5
      %v4547 = vsel %vm4302, %v4545, %v4546
      %v4548 = vrot.slane %v4499, 5
      %v4549 = vsel %vm4302, %v4546, %v4548
      %v4550 = vrot.slane %v4500, 5
      %v4551 = vrot.slane %v4501, 5
      %v4552 = vsel %vm4302, %v4550, %v4551
      %v4553 = vrot.slane %v4502, 5
      %v4554 = vsel %vm4302, %v4551, %v4553
      %v4555 = vrot.slane %v4503, 5
      %v4556 = vrot.slane %v4504, 5
      %v4557 = vsel %vm4302, %v4555, %v4556
      %v4558 = vrot.slane %v4505, 5
      %v4559 = vsel %vm4302, %v4556, %v4558
      %v4560 = vrot.slane %v4506, 5
      %v4561 = vrot.slane %v4507, 5
      %v4562 = vsel %vm4302, %v4560, %v4561
      %v4563 = vrot.slane %v4508, 5
      %v4564 = vsel %vm4302, %v4561, %v4563
      %v4565 = vrot.slane %v4509, 5
      %v4566 = vrot.slane %v4510, 5
      %v4567 = vsel %vm4302, %v4565, %v4566
      %v4568 = vrot.slane %v4511, 5
      %v4569 = vsel %vm4302, %v4566, %v4568
      %v4570 = vrot.slane %v4512, 5
      %v4571 = vrot.slane %v4513, 5
      %v4572 = vsel %vm4302, %v4570, %v4571
      %v4573 = vrot.slane %v4514, 5
      %v4574 = vsel %vm4302, %v4571, %v4573
      %v4575 = vrot.slane %v4515, 5
      %v4576 = vrot.slane %v4516, 5
      %v4577 = vsel %vm4302, %v4575, %v4576
      %v4578 = vrot.slane %v4517, 5
      %v4579 = vsel %vm4302, %v4576, %v4578
      %v4580 = vrot.slane %v4518, 5
      %v4581 = vrot.slane %v4519, 5
      %v4582 = vsel %vm4302, %v4580, %v4581
      %v4583 = vrot.slane %v4520, 5
      %v4584 = vsel %vm4302, %v4581, %v4583
      %v4601 = vadd.f32 %v4480, %v4547
      %v4602 = vadd.f32 %v4481, %v4549
      %v4603 = vadd.f32 %v4482, %v4552
      %v4604 = vadd.f32 %v4483, %v4554
      %v4605 = vadd.f32 %v4484, %v4557
      %v4606 = vadd.f32 %v4485, %v4559
      %v4607 = vadd.f32 %v4486, %v4562
      %v4608 = vadd.f32 %v4487, %v4564
      %v4609 = vadd.f32 %v4488, %v4567
      %v4610 = vadd.f32 %v4489, %v4569
      %v4611 = vadd.f32 %v4490, %v4572
      %v4612 = vadd.f32 %v4491, %v4574
      %v4613 = vadd.f32 %v4492, %v4577
      %v4614 = vadd.f32 %v4493, %v4579
      %v4615 = vadd.f32 %v4494, %v4582
      %v4616 = vadd.f32 %v4495, %v4584
      %v4617 = vperm.slane %v626, 5
      %v4618 = vmul.f32 %v590, %v4617
      %v4619 = vmul.f32 %v591, %v4617
      %v4620 = vmul.f32 %v592, %v4617
      %v4621 = vmul.f32 %v593, %v4617
      %v4622 = vmul.f32 %v594, %v4617
      %v4623 = vmul.f32 %v595, %v4617
      %v4624 = vmul.f32 %v596, %v4617
      %v4625 = vmul.f32 %v597, %v4617
      %v4626 = vmul.f32 %v598, %v4617
      %v4627 = vmul.f32 %v599, %v4617
      %v4628 = vmul.f32 %v600, %v4617
      %v4629 = vmul.f32 %v601, %v4617
      %v4630 = vmul.f32 %v602, %v4617
      %v4631 = vmul.f32 %v603, %v4617
      %v4632 = vmul.f32 %v604, %v4617
      %v4633 = vmul.f32 %v605, %v4617
      %v4634 = vmul.f32 %v606, %v4617
      %v4635 = vmul.f32 %v607, %v4617
      %v4636 = vmul.f32 %v608, %v4617
      %v4637 = vmul.f32 %v609, %v4617
      %v4638 = vmul.f32 %v610, %v4617
      %v4639 = vmul.f32 %v611, %v4617
      %v4640 = vmul.f32 %v612, %v4617
      %v4641 = vmul.f32 %v613, %v4617
      %v4666 = vrot.slane %v4618, 5
      %v4667 = vrot.slane %v4619, 5
      %v4668 = vsel %vm4302, %v4666, %v4667
      %v4669 = vrot.slane %v4620, 5
      %v4670 = vsel %vm4302, %v4667, %v4669
      %v4671 = vrot.slane %v4621, 5
      %v4672 = vrot.slane %v4622, 5
      %v4673 = vsel %vm4302, %v4671, %v4672
      %v4674 = vrot.slane %v4623, 5
      %v4675 = vsel %vm4302, %v4672, %v4674
      %v4676 = vrot.slane %v4624, 5
      %v4677 = vrot.slane %v4625, 5
      %v4678 = vsel %vm4302, %v4676, %v4677
      %v4679 = vrot.slane %v4626, 5
      %v4680 = vsel %vm4302, %v4677, %v4679
      %v4681 = vrot.slane %v4627, 5
      %v4682 = vrot.slane %v4628, 5
      %v4683 = vsel %vm4302, %v4681, %v4682
      %v4684 = vrot.slane %v4629, 5
      %v4685 = vsel %vm4302, %v4682, %v4684
      %v4686 = vrot.slane %v4630, 5
      %v4687 = vrot.slane %v4631, 5
      %v4688 = vsel %vm4302, %v4686, %v4687
      %v4689 = vrot.slane %v4632, 5
      %v4690 = vsel %vm4302, %v4687, %v4689
      %v4691 = vrot.slane %v4633, 5
      %v4692 = vrot.slane %v4634, 5
      %v4693 = vsel %vm4302, %v4691, %v4692
      %v4694 = vrot.slane %v4635, 5
      %v4695 = vsel %vm4302, %v4692, %v4694
      %v4696 = vrot.slane %v4636, 5
      %v4697 = vrot.slane %v4637, 5
      %v4698 = vsel %vm4302, %v4696, %v4697
      %v4699 = vrot.slane %v4638, 5
      %v4700 = vsel %vm4302, %v4697, %v4699
      %v4701 = vrot.slane %v4639, 5
      %v4702 = vrot.slane %v4640, 5
      %v4703 = vsel %vm4302, %v4701, %v4702
      %v4704 = vrot.slane %v4641, 5
      %v4705 = vsel %vm4302, %v4702, %v4704
      %v4722 = vadd.f32 %v4601, %v4668
      %v4723 = vadd.f32 %v4602, %v4670
      %v4724 = vadd.f32 %v4603, %v4673
      %v4725 = vadd.f32 %v4604, %v4675
      %v4726 = vadd.f32 %v4605, %v4678
      %v4727 = vadd.f32 %v4606, %v4680
      %v4728 = vadd.f32 %v4607, %v4683
      %v4729 = vadd.f32 %v4608, %v4685
      %v4730 = vadd.f32 %v4609, %v4688
      %v4731 = vadd.f32 %v4610, %v4690
      %v4732 = vadd.f32 %v4611, %v4693
      %v4733 = vadd.f32 %v4612, %v4695
      %v4734 = vadd.f32 %v4613, %v4698
      %v4735 = vadd.f32 %v4614, %v4700
      %v4736 = vadd.f32 %v4615, %v4703
      %v4737 = vadd.f32 %v4616, %v4705
      %v4738 = vperm.slane %v627, 5
      %v4739 = vmul.f32 %v593, %v4738
      %v4740 = vmul.f32 %v594, %v4738
      %v4741 = vmul.f32 %v595, %v4738
      %v4742 = vmul.f32 %v596, %v4738
      %v4743 = vmul.f32 %v597, %v4738
      %v4744 = vmul.f32 %v598, %v4738
      %v4745 = vmul.f32 %v599, %v4738
      %v4746 = vmul.f32 %v600, %v4738
      %v4747 = vmul.f32 %v601, %v4738
      %v4748 = vmul.f32 %v602, %v4738
      %v4749 = vmul.f32 %v603, %v4738
      %v4750 = vmul.f32 %v604, %v4738
      %v4751 = vmul.f32 %v605, %v4738
      %v4752 = vmul.f32 %v606, %v4738
      %v4753 = vmul.f32 %v607, %v4738
      %v4754 = vmul.f32 %v608, %v4738
      %v4755 = vmul.f32 %v609, %v4738
      %v4756 = vmul.f32 %v610, %v4738
      %v4757 = vmul.f32 %v611, %v4738
      %v4758 = vmul.f32 %v612, %v4738
      %v4759 = vmul.f32 %v613, %v4738
      %v4760 = vmul.f32 %v614, %v4738
      %v4761 = vmul.f32 %v615, %v4738
      %v4762 = vmul.f32 %v616, %v4738
      %v4787 = vrot.slane %v4739, 5
      %v4788 = vrot.slane %v4740, 5
      %v4789 = vsel %vm4302, %v4787, %v4788
      %v4790 = vrot.slane %v4741, 5
      %v4791 = vsel %vm4302, %v4788, %v4790
      %v4792 = vrot.slane %v4742, 5
      %v4793 = vrot.slane %v4743, 5
      %v4794 = vsel %vm4302, %v4792, %v4793
      %v4795 = vrot.slane %v4744, 5
      %v4796 = vsel %vm4302, %v4793, %v4795
      %v4797 = vrot.slane %v4745, 5
      %v4798 = vrot.slane %v4746, 5
      %v4799 = vsel %vm4302, %v4797, %v4798
      %v4800 = vrot.slane %v4747, 5
      %v4801 = vsel %vm4302, %v4798, %v4800
      %v4802 = vrot.slane %v4748, 5
      %v4803 = vrot.slane %v4749, 5
      %v4804 = vsel %vm4302, %v4802, %v4803
      %v4805 = vrot.slane %v4750, 5
      %v4806 = vsel %vm4302, %v4803, %v4805
      %v4807 = vrot.slane %v4751, 5
      %v4808 = vrot.slane %v4752, 5
      %v4809 = vsel %vm4302, %v4807, %v4808
      %v4810 = vrot.slane %v4753, 5
      %v4811 = vsel %vm4302, %v4808, %v4810
      %v4812 = vrot.slane %v4754, 5
      %v4813 = vrot.slane %v4755, 5
      %v4814 = vsel %vm4302, %v4812, %v4813
      %v4815 = vrot.slane %v4756, 5
      %v4816 = vsel %vm4302, %v4813, %v4815
      %v4817 = vrot.slane %v4757, 5
      %v4818 = vrot.slane %v4758, 5
      %v4819 = vsel %vm4302, %v4817, %v4818
      %v4820 = vrot.slane %v4759, 5
      %v4821 = vsel %vm4302, %v4818, %v4820
      %v4822 = vrot.slane %v4760, 5
      %v4823 = vrot.slane %v4761, 5
      %v4824 = vsel %vm4302, %v4822, %v4823
      %v4825 = vrot.slane %v4762, 5
      %v4826 = vsel %vm4302, %v4823, %v4825
      %v4843 = vadd.f32 %v4722, %v4789
      %v4844 = vadd.f32 %v4723, %v4791
      %v4845 = vadd.f32 %v4724, %v4794
      %v4846 = vadd.f32 %v4725, %v4796
      %v4847 = vadd.f32 %v4726, %v4799
      %v4848 = vadd.f32 %v4727, %v4801
      %v4849 = vadd.f32 %v4728, %v4804
      %v4850 = vadd.f32 %v4729, %v4806
      %v4851 = vadd.f32 %v4730, %v4809
      %v4852 = vadd.f32 %v4731, %v4811
      %v4853 = vadd.f32 %v4732, %v4814
      %v4854 = vadd.f32 %v4733, %v4816
      %v4855 = vadd.f32 %v4734, %v4819
      %v4856 = vadd.f32 %v4735, %v4821
      %v4857 = vadd.f32 %v4736, %v4824
      %v4858 = vadd.f32 %v4737, %v4826
      %v4859 = vperm.slane %v628, 5
      %v4860 = vmul.f32 %v596, %v4859
      %v4861 = vmul.f32 %v597, %v4859
      %v4862 = vmul.f32 %v598, %v4859
      %v4863 = vmul.f32 %v599, %v4859
      %v4864 = vmul.f32 %v600, %v4859
      %v4865 = vmul.f32 %v601, %v4859
      %v4866 = vmul.f32 %v602, %v4859
      %v4867 = vmul.f32 %v603, %v4859
      %v4868 = vmul.f32 %v604, %v4859
      %v4869 = vmul.f32 %v605, %v4859
      %v4870 = vmul.f32 %v606, %v4859
      %v4871 = vmul.f32 %v607, %v4859
      %v4872 = vmul.f32 %v608, %v4859
      %v4873 = vmul.f32 %v609, %v4859
      %v4874 = vmul.f32 %v610, %v4859
      %v4875 = vmul.f32 %v611, %v4859
      %v4876 = vmul.f32 %v612, %v4859
      %v4877 = vmul.f32 %v613, %v4859
      %v4878 = vmul.f32 %v614, %v4859
      %v4879 = vmul.f32 %v615, %v4859
      %v4880 = vmul.f32 %v616, %v4859
      %v4881 = vmul.f32 %v617, %v4859
      %v4882 = vmul.f32 %v618, %v4859
      %v4883 = vmul.f32 %v619, %v4859
      %v4908 = vrot.slane %v4860, 5
      %v4909 = vrot.slane %v4861, 5
      %v4910 = vsel %vm4302, %v4908, %v4909
      %v4911 = vrot.slane %v4862, 5
      %v4912 = vsel %vm4302, %v4909, %v4911
      %v4913 = vrot.slane %v4863, 5
      %v4914 = vrot.slane %v4864, 5
      %v4915 = vsel %vm4302, %v4913, %v4914
      %v4916 = vrot.slane %v4865, 5
      %v4917 = vsel %vm4302, %v4914, %v4916
      %v4918 = vrot.slane %v4866, 5
      %v4919 = vrot.slane %v4867, 5
      %v4920 = vsel %vm4302, %v4918, %v4919
      %v4921 = vrot.slane %v4868, 5
      %v4922 = vsel %vm4302, %v4919, %v4921
      %v4923 = vrot.slane %v4869, 5
      %v4924 = vrot.slane %v4870, 5
      %v4925 = vsel %vm4302, %v4923, %v4924
      %v4926 = vrot.slane %v4871, 5
      %v4927 = vsel %vm4302, %v4924, %v4926
      %v4928 = vrot.slane %v4872, 5
      %v4929 = vrot.slane %v4873, 5
      %v4930 = vsel %vm4302, %v4928, %v4929
      %v4931 = vrot.slane %v4874, 5
      %v4932 = vsel %vm4302, %v4929, %v4931
      %v4933 = vrot.slane %v4875, 5
      %v4934 = vrot.slane %v4876, 5
      %v4935 = vsel %vm4302, %v4933, %v4934
      %v4936 = vrot.slane %v4877, 5
      %v4937 = vsel %vm4302, %v4934, %v4936
      %v4938 = vrot.slane %v4878, 5
      %v4939 = vrot.slane %v4879, 5
      %v4940 = vsel %vm4302, %v4938, %v4939
      %v4941 = vrot.slane %v4880, 5
      %v4942 = vsel %vm4302, %v4939, %v4941
      %v4943 = vrot.slane %v4881, 5
      %v4944 = vrot.slane %v4882, 5
      %v4945 = vsel %vm4302, %v4943, %v4944
      %v4946 = vrot.slane %v4883, 5
      %v4947 = vsel %vm4302, %v4944, %v4946
      %v4964 = vadd.f32 %v4843, %v4910
      %v4965 = vadd.f32 %v4844, %v4912
      %v4966 = vadd.f32 %v4845, %v4915
      %v4967 = vadd.f32 %v4846, %v4917
      %v4968 = vadd.f32 %v4847, %v4920
      %v4969 = vadd.f32 %v4848, %v4922
      %v4970 = vadd.f32 %v4849, %v4925
      %v4971 = vadd.f32 %v4850, %v4927
      %v4972 = vadd.f32 %v4851, %v4930
      %v4973 = vadd.f32 %v4852, %v4932
      %v4974 = vadd.f32 %v4853, %v4935
      %v4975 = vadd.f32 %v4854, %v4937
      %v4976 = vadd.f32 %v4855, %v4940
      %v4977 = vadd.f32 %v4856, %v4942
      %v4978 = vadd.f32 %v4857, %v4945
      %v4979 = vadd.f32 %v4858, %v4947
      %v4980 = vperm.slane %v629, 5
      %v4981 = vmul.f32 %v599, %v4980
      %v4982 = vmul.f32 %v600, %v4980
      %v4983 = vmul.f32 %v601, %v4980
      %v4984 = vmul.f32 %v602, %v4980
      %v4985 = vmul.f32 %v603, %v4980
      %v4986 = vmul.f32 %v604, %v4980
      %v4987 = vmul.f32 %v605, %v4980
      %v4988 = vmul.f32 %v606, %v4980
      %v4989 = vmul.f32 %v607, %v4980
      %v4990 = vmul.f32 %v608, %v4980
      %v4991 = vmul.f32 %v609, %v4980
      %v4992 = vmul.f32 %v610, %v4980
      %v4993 = vmul.f32 %v611, %v4980
      %v4994 = vmul.f32 %v612, %v4980
      %v4995 = vmul.f32 %v613, %v4980
      %v4996 = vmul.f32 %v614, %v4980
      %v4997 = vmul.f32 %v615, %v4980
      %v4998 = vmul.f32 %v616, %v4980
      %v4999 = vmul.f32 %v617, %v4980
      %v5000 = vmul.f32 %v618, %v4980
      %v5001 = vmul.f32 %v619, %v4980
      %v5002 = vmul.f32 %v620, %v4980
      %v5003 = vmul.f32 %v621, %v4980
      %v5004 = vmul.f32 %v622, %v4980
      %v5029 = vrot.slane %v4981, 5
      %v5030 = vrot.slane %v4982, 5
      %v5031 = vsel %vm4302, %v5029, %v5030
      %v5032 = vrot.slane %v4983, 5
      %v5033 = vsel %vm4302, %v5030, %v5032
      %v5034 = vrot.slane %v4984, 5
      %v5035 = vrot.slane %v4985, 5
      %v5036 = vsel %vm4302, %v5034, %v5035
      %v5037 = vrot.slane %v4986, 5
      %v5038 = vsel %vm4302, %v5035, %v5037
      %v5039 = vrot.slane %v4987, 5
      %v5040 = vrot.slane %v4988, 5
      %v5041 = vsel %vm4302, %v5039, %v5040
      %v5042 = vrot.slane %v4989, 5
      %v5043 = vsel %vm4302, %v5040, %v5042
      %v5044 = vrot.slane %v4990, 5
      %v5045 = vrot.slane %v4991, 5
      %v5046 = vsel %vm4302, %v5044, %v5045
      %v5047 = vrot.slane %v4992, 5
      %v5048 = vsel %vm4302, %v5045, %v5047
      %v5049 = vrot.slane %v4993, 5
      %v5050 = vrot.slane %v4994, 5
      %v5051 = vsel %vm4302, %v5049, %v5050
      %v5052 = vrot.slane %v4995, 5
      %v5053 = vsel %vm4302, %v5050, %v5052
      %v5054 = vrot.slane %v4996, 5
      %v5055 = vrot.slane %v4997, 5
      %v5056 = vsel %vm4302, %v5054, %v5055
      %v5057 = vrot.slane %v4998, 5
      %v5058 = vsel %vm4302, %v5055, %v5057
      %v5059 = vrot.slane %v4999, 5
      %v5060 = vrot.slane %v5000, 5
      %v5061 = vsel %vm4302, %v5059, %v5060
      %v5062 = vrot.slane %v5001, 5
      %v5063 = vsel %vm4302, %v5060, %v5062
      %v5064 = vrot.slane %v5002, 5
      %v5065 = vrot.slane %v5003, 5
      %v5066 = vsel %vm4302, %v5064, %v5065
      %v5067 = vrot.slane %v5004, 5
      %v5068 = vsel %vm4302, %v5065, %v5067
      %v5085 = vadd.f32 %v4964, %v5031
      %v5086 = vadd.f32 %v4965, %v5033
      %v5087 = vadd.f32 %v4966, %v5036
      %v5088 = vadd.f32 %v4967, %v5038
      %v5089 = vadd.f32 %v4968, %v5041
      %v5090 = vadd.f32 %v4969, %v5043
      %v5091 = vadd.f32 %v4970, %v5046
      %v5092 = vadd.f32 %v4971, %v5048
      %v5093 = vadd.f32 %v4972, %v5051
      %v5094 = vadd.f32 %v4973, %v5053
      %v5095 = vadd.f32 %v4974, %v5056
      %v5096 = vadd.f32 %v4975, %v5058
      %v5097 = vadd.f32 %v4976, %v5061
      %v5098 = vadd.f32 %v4977, %v5063
      %v5099 = vadd.f32 %v4978, %v5066
      %v5100 = vadd.f32 %v4979, %v5068
      %v5101 = vperm.slane %v623, 6
      %v5102 = vmul.f32 %v581, %v5101
      %v5103 = vmul.f32 %v582, %v5101
      %v5104 = vmul.f32 %v583, %v5101
      %v5105 = vmul.f32 %v584, %v5101
      %v5106 = vmul.f32 %v585, %v5101
      %v5107 = vmul.f32 %v586, %v5101
      %v5108 = vmul.f32 %v587, %v5101
      %v5109 = vmul.f32 %v588, %v5101
      %v5110 = vmul.f32 %v589, %v5101
      %v5111 = vmul.f32 %v590, %v5101
      %v5112 = vmul.f32 %v591, %v5101
      %v5113 = vmul.f32 %v592, %v5101
      %v5114 = vmul.f32 %v593, %v5101
      %v5115 = vmul.f32 %v594, %v5101
      %v5116 = vmul.f32 %v595, %v5101
      %v5117 = vmul.f32 %v596, %v5101
      %v5118 = vmul.f32 %v597, %v5101
      %v5119 = vmul.f32 %v598, %v5101
      %v5120 = vmul.f32 %v599, %v5101
      %v5121 = vmul.f32 %v600, %v5101
      %v5122 = vmul.f32 %v601, %v5101
      %v5123 = vmul.f32 %v602, %v5101
      %v5124 = vmul.f32 %v603, %v5101
      %v5125 = vmul.f32 %v604, %v5101
      %vm5150 = vcmask 1041408
      %v5151 = vrot.slane %v5102, 6
      %v5152 = vrot.slane %v5103, 6
      %v5153 = vsel %vm5150, %v5151, %v5152
      %v5154 = vrot.slane %v5104, 6
      %v5155 = vsel %vm5150, %v5152, %v5154
      %v5156 = vrot.slane %v5105, 6
      %v5157 = vrot.slane %v5106, 6
      %v5158 = vsel %vm5150, %v5156, %v5157
      %v5159 = vrot.slane %v5107, 6
      %v5160 = vsel %vm5150, %v5157, %v5159
      %v5161 = vrot.slane %v5108, 6
      %v5162 = vrot.slane %v5109, 6
      %v5163 = vsel %vm5150, %v5161, %v5162
      %v5164 = vrot.slane %v5110, 6
      %v5165 = vsel %vm5150, %v5162, %v5164
      %v5166 = vrot.slane %v5111, 6
      %v5167 = vrot.slane %v5112, 6
      %v5168 = vsel %vm5150, %v5166, %v5167
      %v5169 = vrot.slane %v5113, 6
      %v5170 = vsel %vm5150, %v5167, %v5169
      %v5171 = vrot.slane %v5114, 6
      %v5172 = vrot.slane %v5115, 6
      %v5173 = vsel %vm5150, %v5171, %v5172
      %v5174 = vrot.slane %v5116, 6
      %v5175 = vsel %vm5150, %v5172, %v5174
      %v5176 = vrot.slane %v5117, 6
      %v5177 = vrot.slane %v5118, 6
      %v5178 = vsel %vm5150, %v5176, %v5177
      %v5179 = vrot.slane %v5119, 6
      %v5180 = vsel %vm5150, %v5177, %v5179
      %v5181 = vrot.slane %v5120, 6
      %v5182 = vrot.slane %v5121, 6
      %v5183 = vsel %vm5150, %v5181, %v5182
      %v5184 = vrot.slane %v5122, 6
      %v5185 = vsel %vm5150, %v5182, %v5184
      %v5186 = vrot.slane %v5123, 6
      %v5187 = vrot.slane %v5124, 6
      %v5188 = vsel %vm5150, %v5186, %v5187
      %v5189 = vrot.slane %v5125, 6
      %v5190 = vsel %vm5150, %v5187, %v5189
      %v5207 = vadd.f32 %v5085, %v5153
      %v5208 = vadd.f32 %v5086, %v5155
      %v5209 = vadd.f32 %v5087, %v5158
      %v5210 = vadd.f32 %v5088, %v5160
      %v5211 = vadd.f32 %v5089, %v5163
      %v5212 = vadd.f32 %v5090, %v5165
      %v5213 = vadd.f32 %v5091, %v5168
      %v5214 = vadd.f32 %v5092, %v5170
      %v5215 = vadd.f32 %v5093, %v5173
      %v5216 = vadd.f32 %v5094, %v5175
      %v5217 = vadd.f32 %v5095, %v5178
      %v5218 = vadd.f32 %v5096, %v5180
      %v5219 = vadd.f32 %v5097, %v5183
      %v5220 = vadd.f32 %v5098, %v5185
      %v5221 = vadd.f32 %v5099, %v5188
      %v5222 = vadd.f32 %v5100, %v5190
      %v5223 = vperm.slane %v624, 6
      %v5224 = vmul.f32 %v584, %v5223
      %v5225 = vmul.f32 %v585, %v5223
      %v5226 = vmul.f32 %v586, %v5223
      %v5227 = vmul.f32 %v587, %v5223
      %v5228 = vmul.f32 %v588, %v5223
      %v5229 = vmul.f32 %v589, %v5223
      %v5230 = vmul.f32 %v590, %v5223
      %v5231 = vmul.f32 %v591, %v5223
      %v5232 = vmul.f32 %v592, %v5223
      %v5233 = vmul.f32 %v593, %v5223
      %v5234 = vmul.f32 %v594, %v5223
      %v5235 = vmul.f32 %v595, %v5223
      %v5236 = vmul.f32 %v596, %v5223
      %v5237 = vmul.f32 %v597, %v5223
      %v5238 = vmul.f32 %v598, %v5223
      %v5239 = vmul.f32 %v599, %v5223
      %v5240 = vmul.f32 %v600, %v5223
      %v5241 = vmul.f32 %v601, %v5223
      %v5242 = vmul.f32 %v602, %v5223
      %v5243 = vmul.f32 %v603, %v5223
      %v5244 = vmul.f32 %v604, %v5223
      %v5245 = vmul.f32 %v605, %v5223
      %v5246 = vmul.f32 %v606, %v5223
      %v5247 = vmul.f32 %v607, %v5223
      %v5272 = vrot.slane %v5224, 6
      %v5273 = vrot.slane %v5225, 6
      %v5274 = vsel %vm5150, %v5272, %v5273
      %v5275 = vrot.slane %v5226, 6
      %v5276 = vsel %vm5150, %v5273, %v5275
      %v5277 = vrot.slane %v5227, 6
      %v5278 = vrot.slane %v5228, 6
      %v5279 = vsel %vm5150, %v5277, %v5278
      %v5280 = vrot.slane %v5229, 6
      %v5281 = vsel %vm5150, %v5278, %v5280
      %v5282 = vrot.slane %v5230, 6
      %v5283 = vrot.slane %v5231, 6
      %v5284 = vsel %vm5150, %v5282, %v5283
      %v5285 = vrot.slane %v5232, 6
      %v5286 = vsel %vm5150, %v5283, %v5285
      %v5287 = vrot.slane %v5233, 6
      %v5288 = vrot.slane %v5234, 6
      %v5289 = vsel %vm5150, %v5287, %v5288
      %v5290 = vrot.slane %v5235, 6
      %v5291 = vsel %vm5150, %v5288, %v5290
      %v5292 = vrot.slane %v5236, 6
      %v5293 = vrot.slane %v5237, 6
      %v5294 = vsel %vm5150, %v5292, %v5293
      %v5295 = vrot.slane %v5238, 6
      %v5296 = vsel %vm5150, %v5293, %v5295
      %v5297 = vrot.slane %v5239, 6
      %v5298 = vrot.slane %v5240, 6
      %v5299 = vsel %vm5150, %v5297, %v5298
      %v5300 = vrot.slane %v5241, 6
      %v5301 = vsel %vm5150, %v5298, %v5300
      %v5302 = vrot.slane %v5242, 6
      %v5303 = vrot.slane %v5243, 6
      %v5304 = vsel %vm5150, %v5302, %v5303
      %v5305 = vrot.slane %v5244, 6
      %v5306 = vsel %vm5150, %v5303, %v5305
      %v5307 = vrot.slane %v5245, 6
      %v5308 = vrot.slane %v5246, 6
      %v5309 = vsel %vm5150, %v5307, %v5308
      %v5310 = vrot.slane %v5247, 6
      %v5311 = vsel %vm5150, %v5308, %v5310
      %v5328 = vadd.f32 %v5207, %v5274
      %v5329 = vadd.f32 %v5208, %v5276
      %v5330 = vadd.f32 %v5209, %v5279
      %v5331 = vadd.f32 %v5210, %v5281
      %v5332 = vadd.f32 %v5211, %v5284
      %v5333 = vadd.f32 %v5212, %v5286
      %v5334 = vadd.f32 %v5213, %v5289
      %v5335 = vadd.f32 %v5214, %v5291
      %v5336 = vadd.f32 %v5215, %v5294
      %v5337 = vadd.f32 %v5216, %v5296
      %v5338 = vadd.f32 %v5217, %v5299
      %v5339 = vadd.f32 %v5218, %v5301
      %v5340 = vadd.f32 %v5219, %v5304
      %v5341 = vadd.f32 %v5220, %v5306
      %v5342 = vadd.f32 %v5221, %v5309
      %v5343 = vadd.f32 %v5222, %v5311
      %v5344 = vperm.slane %v625, 6
      %v5345 = vmul.f32 %v587, %v5344
      %v5346 = vmul.f32 %v588, %v5344
      %v5347 = vmul.f32 %v589, %v5344
      %v5348 = vmul.f32 %v590, %v5344
      %v5349 = vmul.f32 %v591, %v5344
      %v5350 = vmul.f32 %v592, %v5344
      %v5351 = vmul.f32 %v593, %v5344
      %v5352 = vmul.f32 %v594, %v5344
      %v5353 = vmul.f32 %v595, %v5344
      %v5354 = vmul.f32 %v596, %v5344
      %v5355 = vmul.f32 %v597, %v5344
      %v5356 = vmul.f32 %v598, %v5344
      %v5357 = vmul.f32 %v599, %v5344
      %v5358 = vmul.f32 %v600, %v5344
      %v5359 = vmul.f32 %v601, %v5344
      %v5360 = vmul.f32 %v602, %v5344
      %v5361 = vmul.f32 %v603, %v5344
      %v5362 = vmul.f32 %v604, %v5344
      %v5363 = vmul.f32 %v605, %v5344
      %v5364 = vmul.f32 %v606, %v5344
      %v5365 = vmul.f32 %v607, %v5344
      %v5366 = vmul.f32 %v608, %v5344
      %v5367 = vmul.f32 %v609, %v5344
      %v5368 = vmul.f32 %v610, %v5344
      %v5393 = vrot.slane %v5345, 6
      %v5394 = vrot.slane %v5346, 6
      %v5395 = vsel %vm5150, %v5393, %v5394
      %v5396 = vrot.slane %v5347, 6
      %v5397 = vsel %vm5150, %v5394, %v5396
      %v5398 = vrot.slane %v5348, 6
      %v5399 = vrot.slane %v5349, 6
      %v5400 = vsel %vm5150, %v5398, %v5399
      %v5401 = vrot.slane %v5350, 6
      %v5402 = vsel %vm5150, %v5399, %v5401
      %v5403 = vrot.slane %v5351, 6
      %v5404 = vrot.slane %v5352, 6
      %v5405 = vsel %vm5150, %v5403, %v5404
      %v5406 = vrot.slane %v5353, 6
      %v5407 = vsel %vm5150, %v5404, %v5406
      %v5408 = vrot.slane %v5354, 6
      %v5409 = vrot.slane %v5355, 6
      %v5410 = vsel %vm5150, %v5408, %v5409
      %v5411 = vrot.slane %v5356, 6
      %v5412 = vsel %vm5150, %v5409, %v5411
      %v5413 = vrot.slane %v5357, 6
      %v5414 = vrot.slane %v5358, 6
      %v5415 = vsel %vm5150, %v5413, %v5414
      %v5416 = vrot.slane %v5359, 6
      %v5417 = vsel %vm5150, %v5414, %v5416
      %v5418 = vrot.slane %v5360, 6
      %v5419 = vrot.slane %v5361, 6
      %v5420 = vsel %vm5150, %v5418, %v5419
      %v5421 = vrot.slane %v5362, 6
      %v5422 = vsel %vm5150, %v5419, %v5421
      %v5423 = vrot.slane %v5363, 6
      %v5424 = vrot.slane %v5364, 6
      %v5425 = vsel %vm5150, %v5423, %v5424
      %v5426 = vrot.slane %v5365, 6
      %v5427 = vsel %vm5150, %v5424, %v5426
      %v5428 = vrot.slane %v5366, 6
      %v5429 = vrot.slane %v5367, 6
      %v5430 = vsel %vm5150, %v5428, %v5429
      %v5431 = vrot.slane %v5368, 6
      %v5432 = vsel %vm5150, %v5429, %v5431
      %v5449 = vadd.f32 %v5328, %v5395
      %v5450 = vadd.f32 %v5329, %v5397
      %v5451 = vadd.f32 %v5330, %v5400
      %v5452 = vadd.f32 %v5331, %v5402
      %v5453 = vadd.f32 %v5332, %v5405
      %v5454 = vadd.f32 %v5333, %v5407
      %v5455 = vadd.f32 %v5334, %v5410
      %v5456 = vadd.f32 %v5335, %v5412
      %v5457 = vadd.f32 %v5336, %v5415
      %v5458 = vadd.f32 %v5337, %v5417
      %v5459 = vadd.f32 %v5338, %v5420
      %v5460 = vadd.f32 %v5339, %v5422
      %v5461 = vadd.f32 %v5340, %v5425
      %v5462 = vadd.f32 %v5341, %v5427
      %v5463 = vadd.f32 %v5342, %v5430
      %v5464 = vadd.f32 %v5343, %v5432
      %v5465 = vperm.slane %v626, 6
      %v5466 = vmul.f32 %v590, %v5465
      %v5467 = vmul.f32 %v591, %v5465
      %v5468 = vmul.f32 %v592, %v5465
      %v5469 = vmul.f32 %v593, %v5465
      %v5470 = vmul.f32 %v594, %v5465
      %v5471 = vmul.f32 %v595, %v5465
      %v5472 = vmul.f32 %v596, %v5465
      %v5473 = vmul.f32 %v597, %v5465
      %v5474 = vmul.f32 %v598, %v5465
      %v5475 = vmul.f32 %v599, %v5465
      %v5476 = vmul.f32 %v600, %v5465
      %v5477 = vmul.f32 %v601, %v5465
      %v5478 = vmul.f32 %v602, %v5465
      %v5479 = vmul.f32 %v603, %v5465
      %v5480 = vmul.f32 %v604, %v5465
      %v5481 = vmul.f32 %v605, %v5465
      %v5482 = vmul.f32 %v606, %v5465
      %v5483 = vmul.f32 %v607, %v5465
      %v5484 = vmul.f32 %v608, %v5465
      %v5485 = vmul.f32 %v609, %v5465
      %v5486 = vmul.f32 %v610, %v5465
      %v5487 = vmul.f32 %v611, %v5465
      %v5488 = vmul.f32 %v612, %v5465
      %v5489 = vmul.f32 %v613, %v5465
      %v5514 = vrot.slane %v5466, 6
      %v5515 = vrot.slane %v5467, 6
      %v5516 = vsel %vm5150, %v5514, %v5515
      %v5517 = vrot.slane %v5468, 6
      %v5518 = vsel %vm5150, %v5515, %v5517
      %v5519 = vrot.slane %v5469, 6
      %v5520 = vrot.slane %v5470, 6
      %v5521 = vsel %vm5150, %v5519, %v5520
      %v5522 = vrot.slane %v5471, 6
      %v5523 = vsel %vm5150, %v5520, %v5522
      %v5524 = vrot.slane %v5472, 6
      %v5525 = vrot.slane %v5473, 6
      %v5526 = vsel %vm5150, %v5524, %v5525
      %v5527 = vrot.slane %v5474, 6
      %v5528 = vsel %vm5150, %v5525, %v5527
      %v5529 = vrot.slane %v5475, 6
      %v5530 = vrot.slane %v5476, 6
      %v5531 = vsel %vm5150, %v5529, %v5530
      %v5532 = vrot.slane %v5477, 6
      %v5533 = vsel %vm5150, %v5530, %v5532
      %v5534 = vrot.slane %v5478, 6
      %v5535 = vrot.slane %v5479, 6
      %v5536 = vsel %vm5150, %v5534, %v5535
      %v5537 = vrot.slane %v5480, 6
      %v5538 = vsel %vm5150, %v5535, %v5537
      %v5539 = vrot.slane %v5481, 6
      %v5540 = vrot.slane %v5482, 6
      %v5541 = vsel %vm5150, %v5539, %v5540
      %v5542 = vrot.slane %v5483, 6
      %v5543 = vsel %vm5150, %v5540, %v5542
      %v5544 = vrot.slane %v5484, 6
      %v5545 = vrot.slane %v5485, 6
      %v5546 = vsel %vm5150, %v5544, %v5545
      %v5547 = vrot.slane %v5486, 6
      %v5548 = vsel %vm5150, %v5545, %v5547
      %v5549 = vrot.slane %v5487, 6
      %v5550 = vrot.slane %v5488, 6
      %v5551 = vsel %vm5150, %v5549, %v5550
      %v5552 = vrot.slane %v5489, 6
      %v5553 = vsel %vm5150, %v5550, %v5552
      %v5570 = vadd.f32 %v5449, %v5516
      %v5571 = vadd.f32 %v5450, %v5518
      %v5572 = vadd.f32 %v5451, %v5521
      %v5573 = vadd.f32 %v5452, %v5523
      %v5574 = vadd.f32 %v5453, %v5526
      %v5575 = vadd.f32 %v5454, %v5528
      %v5576 = vadd.f32 %v5455, %v5531
      %v5577 = vadd.f32 %v5456, %v5533
      %v5578 = vadd.f32 %v5457, %v5536
      %v5579 = vadd.f32 %v5458, %v5538
      %v5580 = vadd.f32 %v5459, %v5541
      %v5581 = vadd.f32 %v5460, %v5543
      %v5582 = vadd.f32 %v5461, %v5546
      %v5583 = vadd.f32 %v5462, %v5548
      %v5584 = vadd.f32 %v5463, %v5551
      %v5585 = vadd.f32 %v5464, %v5553
      %v5586 = vperm.slane %v627, 6
      %v5587 = vmul.f32 %v593, %v5586
      %v5588 = vmul.f32 %v594, %v5586
      %v5589 = vmul.f32 %v595, %v5586
      %v5590 = vmul.f32 %v596, %v5586
      %v5591 = vmul.f32 %v597, %v5586
      %v5592 = vmul.f32 %v598, %v5586
      %v5593 = vmul.f32 %v599, %v5586
      %v5594 = vmul.f32 %v600, %v5586
      %v5595 = vmul.f32 %v601, %v5586
      %v5596 = vmul.f32 %v602, %v5586
      %v5597 = vmul.f32 %v603, %v5586
      %v5598 = vmul.f32 %v604, %v5586
      %v5599 = vmul.f32 %v605, %v5586
      %v5600 = vmul.f32 %v606, %v5586
      %v5601 = vmul.f32 %v607, %v5586
      %v5602 = vmul.f32 %v608, %v5586
      %v5603 = vmul.f32 %v609, %v5586
      %v5604 = vmul.f32 %v610, %v5586
      %v5605 = vmul.f32 %v611, %v5586
      %v5606 = vmul.f32 %v612, %v5586
      %v5607 = vmul.f32 %v613, %v5586
      %v5608 = vmul.f32 %v614, %v5586
      %v5609 = vmul.f32 %v615, %v5586
      %v5610 = vmul.f32 %v616, %v5586
      %v5635 = vrot.slane %v5587, 6
      %v5636 = vrot.slane %v5588, 6
      %v5637 = vsel %vm5150, %v5635, %v5636
      %v5638 = vrot.slane %v5589, 6
      %v5639 = vsel %vm5150, %v5636, %v5638
      %v5640 = vrot.slane %v5590, 6
      %v5641 = vrot.slane %v5591, 6
      %v5642 = vsel %vm5150, %v5640, %v5641
      %v5643 = vrot.slane %v5592, 6
      %v5644 = vsel %vm5150, %v5641, %v5643
      %v5645 = vrot.slane %v5593, 6
      %v5646 = vrot.slane %v5594, 6
      %v5647 = vsel %vm5150, %v5645, %v5646
      %v5648 = vrot.slane %v5595, 6
      %v5649 = vsel %vm5150, %v5646, %v5648
      %v5650 = vrot.slane %v5596, 6
      %v5651 = vrot.slane %v5597, 6
      %v5652 = vsel %vm5150, %v5650, %v5651
      %v5653 = vrot.slane %v5598, 6
      %v5654 = vsel %vm5150, %v5651, %v5653
      %v5655 = vrot.slane %v5599, 6
      %v5656 = vrot.slane %v5600, 6
      %v5657 = vsel %vm5150, %v5655, %v5656
      %v5658 = vrot.slane %v5601, 6
      %v5659 = vsel %vm5150, %v5656, %v5658
      %v5660 = vrot.slane %v5602, 6
      %v5661 = vrot.slane %v5603, 6
      %v5662 = vsel %vm5150, %v5660, %v5661
      %v5663 = vrot.slane %v5604, 6
      %v5664 = vsel %vm5150, %v5661, %v5663
      %v5665 = vrot.slane %v5605, 6
      %v5666 = vrot.slane %v5606, 6
      %v5667 = vsel %vm5150, %v5665, %v5666
      %v5668 = vrot.slane %v5607, 6
      %v5669 = vsel %vm5150, %v5666, %v5668
      %v5670 = vrot.slane %v5608, 6
      %v5671 = vrot.slane %v5609, 6
      %v5672 = vsel %vm5150, %v5670, %v5671
      %v5673 = vrot.slane %v5610, 6
      %v5674 = vsel %vm5150, %v5671, %v5673
      %v5691 = vadd.f32 %v5570, %v5637
      %v5692 = vadd.f32 %v5571, %v5639
      %v5693 = vadd.f32 %v5572, %v5642
      %v5694 = vadd.f32 %v5573, %v5644
      %v5695 = vadd.f32 %v5574, %v5647
      %v5696 = vadd.f32 %v5575, %v5649
      %v5697 = vadd.f32 %v5576, %v5652
      %v5698 = vadd.f32 %v5577, %v5654
      %v5699 = vadd.f32 %v5578, %v5657
      %v5700 = vadd.f32 %v5579, %v5659
      %v5701 = vadd.f32 %v5580, %v5662
      %v5702 = vadd.f32 %v5581, %v5664
      %v5703 = vadd.f32 %v5582, %v5667
      %v5704 = vadd.f32 %v5583, %v5669
      %v5705 = vadd.f32 %v5584, %v5672
      %v5706 = vadd.f32 %v5585, %v5674
      %v5707 = vperm.slane %v628, 6
      %v5708 = vmul.f32 %v596, %v5707
      %v5709 = vmul.f32 %v597, %v5707
      %v5710 = vmul.f32 %v598, %v5707
      %v5711 = vmul.f32 %v599, %v5707
      %v5712 = vmul.f32 %v600, %v5707
      %v5713 = vmul.f32 %v601, %v5707
      %v5714 = vmul.f32 %v602, %v5707
      %v5715 = vmul.f32 %v603, %v5707
      %v5716 = vmul.f32 %v604, %v5707
      %v5717 = vmul.f32 %v605, %v5707
      %v5718 = vmul.f32 %v606, %v5707
      %v5719 = vmul.f32 %v607, %v5707
      %v5720 = vmul.f32 %v608, %v5707
      %v5721 = vmul.f32 %v609, %v5707
      %v5722 = vmul.f32 %v610, %v5707
      %v5723 = vmul.f32 %v611, %v5707
      %v5724 = vmul.f32 %v612, %v5707
      %v5725 = vmul.f32 %v613, %v5707
      %v5726 = vmul.f32 %v614, %v5707
      %v5727 = vmul.f32 %v615, %v5707
      %v5728 = vmul.f32 %v616, %v5707
      %v5729 = vmul.f32 %v617, %v5707
      %v5730 = vmul.f32 %v618, %v5707
      %v5731 = vmul.f32 %v619, %v5707
      %v5756 = vrot.slane %v5708, 6
      %v5757 = vrot.slane %v5709, 6
      %v5758 = vsel %vm5150, %v5756, %v5757
      %v5759 = vrot.slane %v5710, 6
      %v5760 = vsel %vm5150, %v5757, %v5759
      %v5761 = vrot.slane %v5711, 6
      %v5762 = vrot.slane %v5712, 6
      %v5763 = vsel %vm5150, %v5761, %v5762
      %v5764 = vrot.slane %v5713, 6
      %v5765 = vsel %vm5150, %v5762, %v5764
      %v5766 = vrot.slane %v5714, 6
      %v5767 = vrot.slane %v5715, 6
      %v5768 = vsel %vm5150, %v5766, %v5767
      %v5769 = vrot.slane %v5716, 6
      %v5770 = vsel %vm5150, %v5767, %v5769
      %v5771 = vrot.slane %v5717, 6
      %v5772 = vrot.slane %v5718, 6
      %v5773 = vsel %vm5150, %v5771, %v5772
      %v5774 = vrot.slane %v5719, 6
      %v5775 = vsel %vm5150, %v5772, %v5774
      %v5776 = vrot.slane %v5720, 6
      %v5777 = vrot.slane %v5721, 6
      %v5778 = vsel %vm5150, %v5776, %v5777
      %v5779 = vrot.slane %v5722, 6
      %v5780 = vsel %vm5150, %v5777, %v5779
      %v5781 = vrot.slane %v5723, 6
      %v5782 = vrot.slane %v5724, 6
      %v5783 = vsel %vm5150, %v5781, %v5782
      %v5784 = vrot.slane %v5725, 6
      %v5785 = vsel %vm5150, %v5782, %v5784
      %v5786 = vrot.slane %v5726, 6
      %v5787 = vrot.slane %v5727, 6
      %v5788 = vsel %vm5150, %v5786, %v5787
      %v5789 = vrot.slane %v5728, 6
      %v5790 = vsel %vm5150, %v5787, %v5789
      %v5791 = vrot.slane %v5729, 6
      %v5792 = vrot.slane %v5730, 6
      %v5793 = vsel %vm5150, %v5791, %v5792
      %v5794 = vrot.slane %v5731, 6
      %v5795 = vsel %vm5150, %v5792, %v5794
      %v5812 = vadd.f32 %v5691, %v5758
      %v5813 = vadd.f32 %v5692, %v5760
      %v5814 = vadd.f32 %v5693, %v5763
      %v5815 = vadd.f32 %v5694, %v5765
      %v5816 = vadd.f32 %v5695, %v5768
      %v5817 = vadd.f32 %v5696, %v5770
      %v5818 = vadd.f32 %v5697, %v5773
      %v5819 = vadd.f32 %v5698, %v5775
      %v5820 = vadd.f32 %v5699, %v5778
      %v5821 = vadd.f32 %v5700, %v5780
      %v5822 = vadd.f32 %v5701, %v5783
      %v5823 = vadd.f32 %v5702, %v5785
      %v5824 = vadd.f32 %v5703, %v5788
      %v5825 = vadd.f32 %v5704, %v5790
      %v5826 = vadd.f32 %v5705, %v5793
      %v5827 = vadd.f32 %v5706, %v5795
      %v5828 = vperm.slane %v629, 6
      %v5829 = vmul.f32 %v599, %v5828
      %v5830 = vmul.f32 %v600, %v5828
      %v5831 = vmul.f32 %v601, %v5828
      %v5832 = vmul.f32 %v602, %v5828
      %v5833 = vmul.f32 %v603, %v5828
      %v5834 = vmul.f32 %v604, %v5828
      %v5835 = vmul.f32 %v605, %v5828
      %v5836 = vmul.f32 %v606, %v5828
      %v5837 = vmul.f32 %v607, %v5828
      %v5838 = vmul.f32 %v608, %v5828
      %v5839 = vmul.f32 %v609, %v5828
      %v5840 = vmul.f32 %v610, %v5828
      %v5841 = vmul.f32 %v611, %v5828
      %v5842 = vmul.f32 %v612, %v5828
      %v5843 = vmul.f32 %v613, %v5828
      %v5844 = vmul.f32 %v614, %v5828
      %v5845 = vmul.f32 %v615, %v5828
      %v5846 = vmul.f32 %v616, %v5828
      %v5847 = vmul.f32 %v617, %v5828
      %v5848 = vmul.f32 %v618, %v5828
      %v5849 = vmul.f32 %v619, %v5828
      %v5850 = vmul.f32 %v620, %v5828
      %v5851 = vmul.f32 %v621, %v5828
      %v5852 = vmul.f32 %v622, %v5828
      %v5877 = vrot.slane %v5829, 6
      %v5878 = vrot.slane %v5830, 6
      %v5879 = vsel %vm5150, %v5877, %v5878
      %v5880 = vrot.slane %v5831, 6
      %v5881 = vsel %vm5150, %v5878, %v5880
      %v5882 = vrot.slane %v5832, 6
      %v5883 = vrot.slane %v5833, 6
      %v5884 = vsel %vm5150, %v5882, %v5883
      %v5885 = vrot.slane %v5834, 6
      %v5886 = vsel %vm5150, %v5883, %v5885
      %v5887 = vrot.slane %v5835, 6
      %v5888 = vrot.slane %v5836, 6
      %v5889 = vsel %vm5150, %v5887, %v5888
      %v5890 = vrot.slane %v5837, 6
      %v5891 = vsel %vm5150, %v5888, %v5890
      %v5892 = vrot.slane %v5838, 6
      %v5893 = vrot.slane %v5839, 6
      %v5894 = vsel %vm5150, %v5892, %v5893
      %v5895 = vrot.slane %v5840, 6
      %v5896 = vsel %vm5150, %v5893, %v5895
      %v5897 = vrot.slane %v5841, 6
      %v5898 = vrot.slane %v5842, 6
      %v5899 = vsel %vm5150, %v5897, %v5898
      %v5900 = vrot.slane %v5843, 6
      %v5901 = vsel %vm5150, %v5898, %v5900
      %v5902 = vrot.slane %v5844, 6
      %v5903 = vrot.slane %v5845, 6
      %v5904 = vsel %vm5150, %v5902, %v5903
      %v5905 = vrot.slane %v5846, 6
      %v5906 = vsel %vm5150, %v5903, %v5905
      %v5907 = vrot.slane %v5847, 6
      %v5908 = vrot.slane %v5848, 6
      %v5909 = vsel %vm5150, %v5907, %v5908
      %v5910 = vrot.slane %v5849, 6
      %v5911 = vsel %vm5150, %v5908, %v5910
      %v5912 = vrot.slane %v5850, 6
      %v5913 = vrot.slane %v5851, 6
      %v5914 = vsel %vm5150, %v5912, %v5913
      %v5915 = vrot.slane %v5852, 6
      %v5916 = vsel %vm5150, %v5913, %v5915
      %v5933 = vadd.f32 %v5812, %v5879
      %v5934 = vadd.f32 %v5813, %v5881
      %v5935 = vadd.f32 %v5814, %v5884
      %v5936 = vadd.f32 %v5815, %v5886
      %v5937 = vadd.f32 %v5816, %v5889
      %v5938 = vadd.f32 %v5817, %v5891
      %v5939 = vadd.f32 %v5818, %v5894
      %v5940 = vadd.f32 %v5819, %v5896
      %v5941 = vadd.f32 %v5820, %v5899
      %v5942 = vadd.f32 %v5821, %v5901
      %v5943 = vadd.f32 %v5822, %v5904
      %v5944 = vadd.f32 %v5823, %v5906
      %v5945 = vadd.f32 %v5824, %v5909
      %v5946 = vadd.f32 %v5825, %v5911
      %v5947 = vadd.f32 %v5826, %v5914
      %v5948 = vadd.f32 %v5827, %v5916
      %v5949 = vld [vmem:[%s2] sm:$0x1]
      %v5951 = vperm.slane %v5949, 0
      %v5953 = vadd.f32 %v5933, %v5951
      %v5954 = vadd.f32 %v5934, %v5951
      %v5955 = vadd.f32 %v5935, %v5951
      %v5956 = vadd.f32 %v5936, %v5951
      %v5957 = vadd.f32 %v5937, %v5951
      %v5958 = vadd.f32 %v5938, %v5951
      %v5959 = vadd.f32 %v5939, %v5951
      %v5960 = vadd.f32 %v5940, %v5951
      %v5961 = vadd.f32 %v5941, %v5951
      %v5962 = vadd.f32 %v5942, %v5951
      %v5963 = vadd.f32 %v5943, %v5951
      %v5964 = vadd.f32 %v5944, %v5951
      %v5965 = vadd.f32 %v5945, %v5951
      %v5966 = vadd.f32 %v5946, %v5951
      %v5967 = vadd.f32 %v5947, %v5951
      %v5968 = vadd.f32 %v5948, %v5951
      %v5969 = vlaneseq
      %v5970 = vand.u32 %v5969, 127
      %vm5971 = vcmp.lt.s32.totalorder %v5970, 4
      %v5972 = vsel %vm5971, 1, 0
      %vm5973 = vcmp.eq.s32.totalorder %v5972, 1
      %v5974 = vsel %vm5973, %v5953, 0.0
      %v5975 = vsel %vm5973, %v5954, 0.0
      %v5976 = vsel %vm5973, %v5955, 0.0
      %v5977 = vsel %vm5973, %v5956, 0.0
      %v5978 = vsel %vm5973, %v5957, 0.0
      %v5979 = vsel %vm5973, %v5958, 0.0
      %v5980 = vsel %vm5973, %v5959, 0.0
      %v5981 = vsel %vm5973, %v5960, 0.0
      %v5982 = vsel %vm5973, %v5961, 0.0
      %v5983 = vsel %vm5973, %v5962, 0.0
      %v5984 = vsel %vm5973, %v5963, 0.0
      %v5985 = vsel %vm5973, %v5964, 0.0
      %v5986 = vsel %vm5973, %v5965, 0.0
      %v5987 = vsel %vm5973, %v5966, 0.0
      %v5988 = vsel %vm5973, %v5967, 0.0
      %v5989 = vsel %vm5973, %v5968, 0.0
      %5990 = vadd.xlane.f32.xlu0 %v5974
      %v5991 = vpop.xlane.xlu0 %5990
      %5992 = vadd.xlane.f32.xlu0 %v5975
      %v5993 = vpop.xlane.xlu0 %5992
      %5994 = vadd.xlane.f32.xlu0 %v5976
      %v5995 = vpop.xlane.xlu0 %5994
      %5996 = vadd.xlane.f32.xlu0 %v5977
      %v5997 = vpop.xlane.xlu0 %5996
      %5998 = vadd.xlane.f32.xlu0 %v5978
      %v5999 = vpop.xlane.xlu0 %5998
      %6000 = vadd.xlane.f32.xlu0 %v5979
      %v6001 = vpop.xlane.xlu0 %6000
      %6002 = vadd.xlane.f32.xlu0 %v5980
      %v6003 = vpop.xlane.xlu0 %6002
      %6004 = vadd.xlane.f32.xlu0 %v5981
      %v6005 = vpop.xlane.xlu0 %6004
      %6006 = vadd.xlane.f32.xlu0 %v5982
      %v6007 = vpop.xlane.xlu0 %6006
      %6008 = vadd.xlane.f32.xlu0 %v5983
      %v6009 = vpop.xlane.xlu0 %6008
      %6010 = vadd.xlane.f32.xlu0 %v5984
      %v6011 = vpop.xlane.xlu0 %6010
      %6012 = vadd.xlane.f32.xlu0 %v5985
      %v6013 = vpop.xlane.xlu0 %6012
      %6014 = vadd.xlane.f32.xlu0 %v5986
      %v6015 = vpop.xlane.xlu0 %6014
      %6016 = vadd.xlane.f32.xlu0 %v5987
      %v6017 = vpop.xlane.xlu0 %6016
      %6018 = vadd.xlane.f32.xlu0 %v5988
      %v6019 = vpop.xlane.xlu0 %6018
      %6020 = vadd.xlane.f32.xlu0 %v5989
      %v6021 = vpop.xlane.xlu0 %6020
      %v6022 = vmul.f32 %v5991, 0.25
      %v6023 = vmul.f32 %v5993, 0.25
      %v6024 = vmul.f32 %v5995, 0.25
      %v6025 = vmul.f32 %v5997, 0.25
      %v6026 = vmul.f32 %v5999, 0.25
      %v6027 = vmul.f32 %v6001, 0.25
      %v6028 = vmul.f32 %v6003, 0.25
      %v6029 = vmul.f32 %v6005, 0.25
      %v6030 = vmul.f32 %v6007, 0.25
      %v6031 = vmul.f32 %v6009, 0.25
      %v6032 = vmul.f32 %v6011, 0.25
      %v6033 = vmul.f32 %v6013, 0.25
      %v6034 = vmul.f32 %v6015, 0.25
      %v6035 = vmul.f32 %v6017, 0.25
      %v6036 = vmul.f32 %v6019, 0.25
      %v6037 = vmul.f32 %v6021, 0.25
      %v6038 = vsub.f32 %v5974, %v6022
      %v6039 = vsub.f32 %v5975, %v6023
      %v6040 = vsub.f32 %v5976, %v6024
      %v6041 = vsub.f32 %v5977, %v6025
      %v6042 = vsub.f32 %v5978, %v6026
      %v6043 = vsub.f32 %v5979, %v6027
      %v6044 = vsub.f32 %v5980, %v6028
      %v6045 = vsub.f32 %v5981, %v6029
      %v6046 = vsub.f32 %v5982, %v6030
      %v6047 = vsub.f32 %v5983, %v6031
      %v6048 = vsub.f32 %v5984, %v6032
      %v6049 = vsub.f32 %v5985, %v6033
      %v6050 = vsub.f32 %v5986, %v6034
      %v6051 = vsub.f32 %v5987, %v6035
      %v6052 = vsub.f32 %v5988, %v6036
      %v6053 = vsub.f32 %v5989, %v6037
      %v6054 = vsel %vm5973, %v6038, 0.0
      %v6055 = vsel %vm5973, %v6039, 0.0
      %v6056 = vsel %vm5973, %v6040, 0.0
      %v6057 = vsel %vm5973, %v6041, 0.0
      %v6058 = vsel %vm5973, %v6042, 0.0
      %v6059 = vsel %vm5973, %v6043, 0.0
      %v6060 = vsel %vm5973, %v6044, 0.0
      %v6061 = vsel %vm5973, %v6045, 0.0
      %v6062 = vsel %vm5973, %v6046, 0.0
      %v6063 = vsel %vm5973, %v6047, 0.0
      %v6064 = vsel %vm5973, %v6048, 0.0
      %v6065 = vsel %vm5973, %v6049, 0.0
      %v6066 = vsel %vm5973, %v6050, 0.0
      %v6067 = vsel %vm5973, %v6051, 0.0
      %v6068 = vsel %vm5973, %v6052, 0.0
      %v6069 = vsel %vm5973, %v6053, 0.0
      %v6070 = vmul.f32 %v6054, %v6054
      %v6071 = vmul.f32 %v6055, %v6055
      %v6072 = vmul.f32 %v6056, %v6056
      %v6073 = vmul.f32 %v6057, %v6057
      %v6074 = vmul.f32 %v6058, %v6058
      %v6075 = vmul.f32 %v6059, %v6059
      %v6076 = vmul.f32 %v6060, %v6060
      %v6077 = vmul.f32 %v6061, %v6061
      %v6078 = vmul.f32 %v6062, %v6062
      %v6079 = vmul.f32 %v6063, %v6063
      %v6080 = vmul.f32 %v6064, %v6064
      %v6081 = vmul.f32 %v6065, %v6065
      %v6082 = vmul.f32 %v6066, %v6066
      %v6083 = vmul.f32 %v6067, %v6067
      %v6084 = vmul.f32 %v6068, %v6068
      %v6085 = vmul.f32 %v6069, %v6069
      %6086 = vadd.xlane.f32.xlu0 %v6070
      %v6087 = vpop.xlane.xlu0 %6086
      %6088 = vadd.xlane.f32.xlu0 %v6071
      %v6089 = vpop.xlane.xlu0 %6088
      %6090 = vadd.xlane.f32.xlu0 %v6072
      %v6091 = vpop.xlane.xlu0 %6090
      %6092 = vadd.xlane.f32.xlu0 %v6073
      %v6093 = vpop.xlane.xlu0 %6092
      %6094 = vadd.xlane.f32.xlu0 %v6074
      %v6095 = vpop.xlane.xlu0 %6094
      %6096 = vadd.xlane.f32.xlu0 %v6075
      %v6097 = vpop.xlane.xlu0 %6096
      %6098 = vadd.xlane.f32.xlu0 %v6076
      %v6099 = vpop.xlane.xlu0 %6098
      %6100 = vadd.xlane.f32.xlu0 %v6077
      %v6101 = vpop.xlane.xlu0 %6100
      %6102 = vadd.xlane.f32.xlu0 %v6078
      %v6103 = vpop.xlane.xlu0 %6102
      %6104 = vadd.xlane.f32.xlu0 %v6079
      %v6105 = vpop.xlane.xlu0 %6104
      %6106 = vadd.xlane.f32.xlu0 %v6080
      %v6107 = vpop.xlane.xlu0 %6106
      %6108 = vadd.xlane.f32.xlu0 %v6081
      %v6109 = vpop.xlane.xlu0 %6108
      %6110 = vadd.xlane.f32.xlu0 %v6082
      %v6111 = vpop.xlane.xlu0 %6110
      %6112 = vadd.xlane.f32.xlu0 %v6083
      %v6113 = vpop.xlane.xlu0 %6112
      %6114 = vadd.xlane.f32.xlu0 %v6084
      %v6115 = vpop.xlane.xlu0 %6114
      %6116 = vadd.xlane.f32.xlu0 %v6085
      %v6117 = vpop.xlane.xlu0 %6116
      %v6118 = vmul.f32 %v6087, 0.25
      %v6119 = vmul.f32 %v6089, 0.25
      %v6120 = vmul.f32 %v6091, 0.25
      %v6121 = vmul.f32 %v6093, 0.25
      %v6122 = vmul.f32 %v6095, 0.25
      %v6123 = vmul.f32 %v6097, 0.25
      %v6124 = vmul.f32 %v6099, 0.25
      %v6125 = vmul.f32 %v6101, 0.25
      %v6126 = vmul.f32 %v6103, 0.25
      %v6127 = vmul.f32 %v6105, 0.25
      %v6128 = vmul.f32 %v6107, 0.25
      %v6129 = vmul.f32 %v6109, 0.25
      %v6130 = vmul.f32 %v6111, 0.25
      %v6131 = vmul.f32 %v6113, 0.25
      %v6132 = vmul.f32 %v6115, 0.25
      %v6133 = vmul.f32 %v6117, 0.25
      %v6134 = vadd.f32 %v6118, 1e-06
      %v6135 = vadd.f32 %v6119, 1e-06
      %v6136 = vadd.f32 %v6120, 1e-06
      %v6137 = vadd.f32 %v6121, 1e-06
      %v6138 = vadd.f32 %v6122, 1e-06
      %v6139 = vadd.f32 %v6123, 1e-06
      %v6140 = vadd.f32 %v6124, 1e-06
      %v6141 = vadd.f32 %v6125, 1e-06
      %v6142 = vadd.f32 %v6126, 1e-06
      %v6143 = vadd.f32 %v6127, 1e-06
      %v6144 = vadd.f32 %v6128, 1e-06
      %v6145 = vadd.f32 %v6129, 1e-06
      %v6146 = vadd.f32 %v6130, 1e-06
      %v6147 = vadd.f32 %v6131, 1e-06
      %v6148 = vadd.f32 %v6132, 1e-06
      %v6149 = vadd.f32 %v6133, 1e-06
      %v6150 = vrsqrt.pop %v6134
      %v6151 = vmul.f32 %v6150, %v6134
      %v6152 = vmul.f32 %v6151, %v6150
      %v6153 = vmul.f32 0.5, %v6152
      %v6154 = vsub.f32 1.5, %v6153
      %v6155 = vmul.f32 %v6150, %v6154
      %vm6156 = vweird.f32 %v6134
      %vm6157 = vweird.f32 %v6150
      %vm6158 = vmor %vm6156, %vm6157
      %v6159 = vsel %vm6158, %v6150, %v6155
      %v6160 = vrsqrt.pop %v6135
      %v6161 = vmul.f32 %v6160, %v6135
      %v6162 = vmul.f32 %v6161, %v6160
      %v6163 = vmul.f32 0.5, %v6162
      %v6164 = vsub.f32 1.5, %v6163
      %v6165 = vmul.f32 %v6160, %v6164
      %vm6166 = vweird.f32 %v6135
      %vm6167 = vweird.f32 %v6160
      %vm6168 = vmor %vm6166, %vm6167
      %v6169 = vsel %vm6168, %v6160, %v6165
      %v6170 = vrsqrt.pop %v6136
      %v6171 = vmul.f32 %v6170, %v6136
      %v6172 = vmul.f32 %v6171, %v6170
      %v6173 = vmul.f32 0.5, %v6172
      %v6174 = vsub.f32 1.5, %v6173
      %v6175 = vmul.f32 %v6170, %v6174
      %vm6176 = vweird.f32 %v6136
      %vm6177 = vweird.f32 %v6170
      %vm6178 = vmor %vm6176, %vm6177
      %v6179 = vsel %vm6178, %v6170, %v6175
      %v6180 = vrsqrt.pop %v6137
      %v6181 = vmul.f32 %v6180, %v6137
      %v6182 = vmul.f32 %v6181, %v6180
      %v6183 = vmul.f32 0.5, %v6182
      %v6184 = vsub.f32 1.5, %v6183
      %v6185 = vmul.f32 %v6180, %v6184
      %vm6186 = vweird.f32 %v6137
      %vm6187 = vweird.f32 %v6180
      %vm6188 = vmor %vm6186, %vm6187
      %v6189 = vsel %vm6188, %v6180, %v6185
      %v6190 = vrsqrt.pop %v6138
      %v6191 = vmul.f32 %v6190, %v6138
      %v6192 = vmul.f32 %v6191, %v6190
      %v6193 = vmul.f32 0.5, %v6192
      %v6194 = vsub.f32 1.5, %v6193
      %v6195 = vmul.f32 %v6190, %v6194
      %vm6196 = vweird.f32 %v6138
      %vm6197 = vweird.f32 %v6190
      %vm6198 = vmor %vm6196, %vm6197
      %v6199 = vsel %vm6198, %v6190, %v6195
      %v6200 = vrsqrt.pop %v6139
      %v6201 = vmul.f32 %v6200, %v6139
      %v6202 = vmul.f32 %v6201, %v6200
      %v6203 = vmul.f32 0.5, %v6202
      %v6204 = vsub.f32 1.5, %v6203
      %v6205 = vmul.f32 %v6200, %v6204
      %vm6206 = vweird.f32 %v6139
      %vm6207 = vweird.f32 %v6200
      %vm6208 = vmor %vm6206, %vm6207
      %v6209 = vsel %vm6208, %v6200, %v6205
      %v6210 = vrsqrt.pop %v6140
      %v6211 = vmul.f32 %v6210, %v6140
      %v6212 = vmul.f32 %v6211, %v6210
      %v6213 = vmul.f32 0.5, %v6212
      %v6214 = vsub.f32 1.5, %v6213
      %v6215 = vmul.f32 %v6210, %v6214
      %vm6216 = vweird.f32 %v6140
      %vm6217 = vweird.f32 %v6210
      %vm6218 = vmor %vm6216, %vm6217
      %v6219 = vsel %vm6218, %v6210, %v6215
      %v6220 = vrsqrt.pop %v6141
      %v6221 = vmul.f32 %v6220, %v6141
      %v6222 = vmul.f32 %v6221, %v6220
      %v6223 = vmul.f32 0.5, %v6222
      %v6224 = vsub.f32 1.5, %v6223
      %v6225 = vmul.f32 %v6220, %v6224
      %vm6226 = vweird.f32 %v6141
      %vm6227 = vweird.f32 %v6220
      %vm6228 = vmor %vm6226, %vm6227
      %v6229 = vsel %vm6228, %v6220, %v6225
      %v6230 = vrsqrt.pop %v6142
      %v6231 = vmul.f32 %v6230, %v6142
      %v6232 = vmul.f32 %v6231, %v6230
      %v6233 = vmul.f32 0.5, %v6232
      %v6234 = vsub.f32 1.5, %v6233
      %v6235 = vmul.f32 %v6230, %v6234
      %vm6236 = vweird.f32 %v6142
      %vm6237 = vweird.f32 %v6230
      %vm6238 = vmor %vm6236, %vm6237
      %v6239 = vsel %vm6238, %v6230, %v6235
      %v6240 = vrsqrt.pop %v6143
      %v6241 = vmul.f32 %v6240, %v6143
      %v6242 = vmul.f32 %v6241, %v6240
      %v6243 = vmul.f32 0.5, %v6242
      %v6244 = vsub.f32 1.5, %v6243
      %v6245 = vmul.f32 %v6240, %v6244
      %vm6246 = vweird.f32 %v6143
      %vm6247 = vweird.f32 %v6240
      %vm6248 = vmor %vm6246, %vm6247
      %v6249 = vsel %vm6248, %v6240, %v6245
      %v6250 = vrsqrt.pop %v6144
      %v6251 = vmul.f32 %v6250, %v6144
      %v6252 = vmul.f32 %v6251, %v6250
      %v6253 = vmul.f32 0.5, %v6252
      %v6254 = vsub.f32 1.5, %v6253
      %v6255 = vmul.f32 %v6250, %v6254
      %vm6256 = vweird.f32 %v6144
      %vm6257 = vweird.f32 %v6250
      %vm6258 = vmor %vm6256, %vm6257
      %v6259 = vsel %vm6258, %v6250, %v6255
      %v6260 = vrsqrt.pop %v6145
      %v6261 = vmul.f32 %v6260, %v6145
      %v6262 = vmul.f32 %v6261, %v6260
      %v6263 = vmul.f32 0.5, %v6262
      %v6264 = vsub.f32 1.5, %v6263
      %v6265 = vmul.f32 %v6260, %v6264
      %vm6266 = vweird.f32 %v6145
      %vm6267 = vweird.f32 %v6260
      %vm6268 = vmor %vm6266, %vm6267
      %v6269 = vsel %vm6268, %v6260, %v6265
      %v6270 = vrsqrt.pop %v6146
      %v6271 = vmul.f32 %v6270, %v6146
      %v6272 = vmul.f32 %v6271, %v6270
      %v6273 = vmul.f32 0.5, %v6272
      %v6274 = vsub.f32 1.5, %v6273
      %v6275 = vmul.f32 %v6270, %v6274
      %vm6276 = vweird.f32 %v6146
      %vm6277 = vweird.f32 %v6270
      %vm6278 = vmor %vm6276, %vm6277
      %v6279 = vsel %vm6278, %v6270, %v6275
      %v6280 = vrsqrt.pop %v6147
      %v6281 = vmul.f32 %v6280, %v6147
      %v6282 = vmul.f32 %v6281, %v6280
      %v6283 = vmul.f32 0.5, %v6282
      %v6284 = vsub.f32 1.5, %v6283
      %v6285 = vmul.f32 %v6280, %v6284
      %vm6286 = vweird.f32 %v6147
      %vm6287 = vweird.f32 %v6280
      %vm6288 = vmor %vm6286, %vm6287
      %v6289 = vsel %vm6288, %v6280, %v6285
      %v6290 = vrsqrt.pop %v6148
      %v6291 = vmul.f32 %v6290, %v6148
      %v6292 = vmul.f32 %v6291, %v6290
      %v6293 = vmul.f32 0.5, %v6292
      %v6294 = vsub.f32 1.5, %v6293
      %v6295 = vmul.f32 %v6290, %v6294
      %vm6296 = vweird.f32 %v6148
      %vm6297 = vweird.f32 %v6290
      %vm6298 = vmor %vm6296, %vm6297
      %v6299 = vsel %vm6298, %v6290, %v6295
      %v6300 = vrsqrt.pop %v6149
      %v6301 = vmul.f32 %v6300, %v6149
      %v6302 = vmul.f32 %v6301, %v6300
      %v6303 = vmul.f32 0.5, %v6302
      %v6304 = vsub.f32 1.5, %v6303
      %v6305 = vmul.f32 %v6300, %v6304
      %vm6306 = vweird.f32 %v6149
      %vm6307 = vweird.f32 %v6300
      %vm6308 = vmor %vm6306, %vm6307
      %v6309 = vsel %vm6308, %v6300, %v6305
      %v6310 = vmul.f32 %v6054, %v6159
      %v6311 = vmul.f32 %v6055, %v6169
      %v6312 = vmul.f32 %v6056, %v6179
      %v6313 = vmul.f32 %v6057, %v6189
      %v6314 = vmul.f32 %v6058, %v6199
      %v6315 = vmul.f32 %v6059, %v6209
      %v6316 = vmul.f32 %v6060, %v6219
      %v6317 = vmul.f32 %v6061, %v6229
      %v6318 = vmul.f32 %v6062, %v6239
      %v6319 = vmul.f32 %v6063, %v6249
      %v6320 = vmul.f32 %v6064, %v6259
      %v6321 = vmul.f32 %v6065, %v6269
      %v6322 = vmul.f32 %v6066, %v6279
      %v6323 = vmul.f32 %v6067, %v6289
      %v6324 = vmul.f32 %v6068, %v6299
      %v6325 = vmul.f32 %v6069, %v6309
      %v6326 = vld [vmem:[%s3] sm:$0x1]
      %v6328 = vperm.slane %v6326, 0
      %v6330 = vmul.f32 %v6310, %v6328
      %v6331 = vmul.f32 %v6311, %v6328
      %v6332 = vmul.f32 %v6312, %v6328
      %v6333 = vmul.f32 %v6313, %v6328
      %v6334 = vmul.f32 %v6314, %v6328
      %v6335 = vmul.f32 %v6315, %v6328
      %v6336 = vmul.f32 %v6316, %v6328
      %v6337 = vmul.f32 %v6317, %v6328
      %v6338 = vmul.f32 %v6318, %v6328
      %v6339 = vmul.f32 %v6319, %v6328
      %v6340 = vmul.f32 %v6320, %v6328
      %v6341 = vmul.f32 %v6321, %v6328
      %v6342 = vmul.f32 %v6322, %v6328
      %v6343 = vmul.f32 %v6323, %v6328
      %v6344 = vmul.f32 %v6324, %v6328
      %v6345 = vmul.f32 %v6325, %v6328
      %v6346 = vld [vmem:[%s4] sm:$0x1]
      %v6348 = vperm.slane %v6346, 0
      %v6350 = vadd.f32 %v6330, %v6348
      %v6351 = vadd.f32 %v6331, %v6348
      %v6352 = vadd.f32 %v6332, %v6348
      %v6353 = vadd.f32 %v6333, %v6348
      %v6354 = vadd.f32 %v6334, %v6348
      %v6355 = vadd.f32 %v6335, %v6348
      %v6356 = vadd.f32 %v6336, %v6348
      %v6357 = vadd.f32 %v6337, %v6348
      %v6358 = vadd.f32 %v6338, %v6348
      %v6359 = vadd.f32 %v6339, %v6348
      %v6360 = vadd.f32 %v6340, %v6348
      %v6361 = vadd.f32 %v6341, %v6348
      %v6362 = vadd.f32 %v6342, %v6348
      %v6363 = vadd.f32 %v6343, %v6348
      %v6364 = vadd.f32 %v6344, %v6348
      %v6365 = vadd.f32 %v6345, %v6348
      %v6366 = vpack.c.bf16 %v6351, %v6350
      %v6367 = vpack.c.bf16 %v6353, %v6352
      %v6368 = vpack.c.bf16 %v6355, %v6354
      %v6369 = vpack.c.bf16 %v6357, %v6356
      %v6370 = vpack.c.bf16 %v6359, %v6358
      %v6371 = vpack.c.bf16 %v6361, %v6360
      %v6372 = vpack.c.bf16 %v6363, %v6362
      %v6373 = vpack.c.bf16 %v6365, %v6364
      %v6374 = vld [vmem:[%s5] sm:$0xf]
      %v6375 = vld [vmem:[%s5 + $0x4] sm:$0xf]
      %v6376 = vld [vmem:[%s5 + $0x8] sm:$0xf]
      %v6377 = vld [vmem:[%s5 + $0xc] sm:$0xf]
      %v6378 = vld [vmem:[%s5 + $0x10] sm:$0xf]
      %v6379 = vld [vmem:[%s5 + $0x14] sm:$0xf]
      %v6380 = vld [vmem:[%s5 + $0x18] sm:$0xf]
      %v6381 = vld [vmem:[%s5 + $0x1c] sm:$0xf]
      %v6382 = vld [vmem:[%s5 + $0x20] sm:$0xf]
      %v6383 = vld [vmem:[%s5 + $0x24] sm:$0xf]
      %v6384 = vld [vmem:[%s5 + $0x28] sm:$0xf]
      %v6385 = vld [vmem:[%s5 + $0x2c] sm:$0xf]
      %v6386 = vld [vmem:[%s5 + $0x30] sm:$0xf]
      %v6387 = vld [vmem:[%s5 + $0x34] sm:$0xf]
      %v6388 = vld [vmem:[%s5 + $0x38] sm:$0xf]
      %v6389 = vld [vmem:[%s5 + $0x3c] sm:$0xf]
      %v6390 = vld [vmem:[%s6] sm:$0x1]
      %v6392 = vperm.slane %v6390, 0
      %v6410 = vunpack.c.l.b16 %v6374
      %v6411 = vunpack.c.l.b16 %v6375
      %v6412 = vunpack.c.l.b16 %v6376
      %v6413 = vunpack.c.l.b16 %v6377
      %v6414 = vunpack.c.l.b16 %v6378
      %v6415 = vunpack.c.l.b16 %v6379
      %v6416 = vunpack.c.l.b16 %v6380
      %v6417 = vunpack.c.l.b16 %v6381
      %v6418 = vunpack.c.l.b16 %v6382
      %v6419 = vunpack.c.l.b16 %v6383
      %v6420 = vunpack.c.l.b16 %v6384
      %v6421 = vunpack.c.l.b16 %v6385
      %v6422 = vunpack.c.l.b16 %v6386
      %v6423 = vunpack.c.l.b16 %v6387
      %v6424 = vunpack.c.l.b16 %v6388
      %v6425 = vunpack.c.l.b16 %v6389
      %v6426 = vpack.c.b16 %v6411, %v6410
      %v6427 = vpack.c.b16 %v6413, %v6412
      %v6428 = vpack.c.b16 %v6415, %v6414
      %v6429 = vpack.c.b16 %v6417, %v6416
      %v6430 = vpack.c.b16 %v6419, %v6418
      %v6431 = vpack.c.b16 %v6421, %v6420
      %v6432 = vpack.c.b16 %v6423, %v6422
      %v6433 = vpack.c.b16 %v6425, %v6424
      %6442 = vmatpush.bf16.msra.mxu0 %v6433
      %6443 = vmatpush.bf16.msra.mxu0 %v6432
      %6444 = vmatpush.bf16.msra.mxu0 %v6431
      %6445 = vmatpush.bf16.msra.mxu0 %v6430
      %6446 = vmatpush.bf16.msra.mxu0 %v6429
      %6447 = vmatpush.bf16.msra.mxu0 %v6428
      %6448 = vmatpush.bf16.msra.mxu0 %v6427
      %6449 = vmatpush.bf16.msra.mxu0 %v6426
      %6450 = vmatmul.bf16.gmra.mxu0 %v6366
      %v6451 = vpop.f32.mrf.mxu0
      %v6452 = vadd.f32 %v6392, %v6451
      %v6453 = vpop.f32.mrf.mxu0
      %v6454 = vadd.f32 %v6392, %v6453
      %6455 = vmatmul.bf16.gmra.mxu0 %v6367
      %v6456 = vpop.f32.mrf.mxu0
      %v6457 = vadd.f32 %v6392, %v6456
      %v6458 = vpop.f32.mrf.mxu0
      %v6459 = vadd.f32 %v6392, %v6458
      %6460 = vmatmul.bf16.gmra.mxu0 %v6368
      %v6461 = vpop.f32.mrf.mxu0
      %v6462 = vadd.f32 %v6392, %v6461
      %v6463 = vpop.f32.mrf.mxu0
      %v6464 = vadd.f32 %v6392, %v6463
      %6465 = vmatmul.bf16.gmra.mxu0 %v6369
      %v6466 = vpop.f32.mrf.mxu0
      %v6467 = vadd.f32 %v6392, %v6466
      %v6468 = vpop.f32.mrf.mxu0
      %v6469 = vadd.f32 %v6392, %v6468
      %6470 = vmatmul.bf16.gmra.mxu0 %v6370
      %v6471 = vpop.f32.mrf.mxu0
      %v6472 = vadd.f32 %v6392, %v6471
      %v6473 = vpop.f32.mrf.mxu0
      %v6474 = vadd.f32 %v6392, %v6473
      %6475 = vmatmul.bf16.gmra.mxu0 %v6371
      %v6476 = vpop.f32.mrf.mxu0
      %v6477 = vadd.f32 %v6392, %v6476
      %v6478 = vpop.f32.mrf.mxu0
      %v6479 = vadd.f32 %v6392, %v6478
      %6480 = vmatmul.bf16.gmra.mxu0 %v6372
      %v6481 = vpop.f32.mrf.mxu0
      %v6482 = vadd.f32 %v6392, %v6481
      %v6483 = vpop.f32.mrf.mxu0
      %v6484 = vadd.f32 %v6392, %v6483
      %6485 = vmatmul.bf16.gmra.mxu0 %v6373
      %v6486 = vpop.f32.mrf.mxu0
      %v6487 = vadd.f32 %v6392, %v6486
      %v6488 = vpop.f32.mrf.mxu0
      %v6489 = vadd.f32 %v6392, %v6488
      %6490 = vdwg.mxu0
      %v6491 = vmul.f32 %v6452, 0.5
      %v6492 = vmul.f32 %v6454, 0.5
      %v6493 = vmul.f32 %v6457, 0.5
      %v6494 = vmul.f32 %v6459, 0.5
      %v6495 = vmul.f32 %v6462, 0.5
      %v6496 = vmul.f32 %v6464, 0.5
      %v6497 = vmul.f32 %v6467, 0.5
      %v6498 = vmul.f32 %v6469, 0.5
      %v6499 = vmul.f32 %v6472, 0.5
      %v6500 = vmul.f32 %v6474, 0.5
      %v6501 = vmul.f32 %v6477, 0.5
      %v6502 = vmul.f32 %v6479, 0.5
      %v6503 = vmul.f32 %v6482, 0.5
      %v6504 = vmul.f32 %v6484, 0.5
      %v6505 = vmul.f32 %v6487, 0.5
      %v6506 = vmul.f32 %v6489, 0.5
      %v6507 = vmul.f32 %v6452, 0.70710677
      %v6508 = vmul.f32 %v6454, 0.70710677
      %v6509 = vmul.f32 %v6457, 0.70710677
      %v6510 = vmul.f32 %v6459, 0.70710677
      %v6511 = vmul.f32 %v6462, 0.70710677
      %v6512 = vmul.f32 %v6464, 0.70710677
      %v6513 = vmul.f32 %v6467, 0.70710677
      %v6514 = vmul.f32 %v6469, 0.70710677
      %v6515 = vmul.f32 %v6472, 0.70710677
      %v6516 = vmul.f32 %v6474, 0.70710677
      %v6517 = vmul.f32 %v6477, 0.70710677
      %v6518 = vmul.f32 %v6479, 0.70710677
      %v6519 = vmul.f32 %v6482, 0.70710677
      %v6520 = vmul.f32 %v6484, 0.70710677
      %v6521 = vmul.f32 %v6487, 0.70710677
      %v6522 = vmul.f32 %v6489, 0.70710677
      %v6523 = vmul.f32 %v6507, %v6507
      %v6524 = vmin.f32 16.0, %v6523
      %v6525 = vmul.f32 %v6524, 2.1237322e-06
      %v6526 = vadd.f32 %v6525, 0.00028619796
      %v6527 = vmul.f32 %v6524, %v6526
      %v6528 = vadd.f32 %v6527, 0.0036580483
      %v6529 = vmul.f32 %v6524, %v6528
      %v6530 = vadd.f32 %v6529, 0.05243302
      %v6531 = vmul.f32 %v6524, %v6530
      %v6532 = vadd.f32 %v6531, 0.18741608
      %v6533 = vmul.f32 %v6524, %v6532
      %v6534 = vadd.f32 %v6533, 1.1283791
      %v6535 = vmul.f32 %v6507, %v6534
      %v6536 = vmul.f32 %v6524, 3.8918573e-05
      %v6537 = vadd.f32 %v6536, 0.001143296
      %v6538 = vmul.f32 %v6524, %v6537
      %v6539 = vadd.f32 %v6538, 0.014752088
      %v6540 = vmul.f32 %v6524, %v6539
      %v6541 = vadd.f32 %v6540, 0.112945676
      %v6542 = vmul.f32 %v6524, %v6541
      %v6543 = vadd.f32 %v6542, 0.4994258
      %v6544 = vmul.f32 %v6524, %v6543
      %v6545 = vadd.f32 %v6544, 1.0
      %v6546 = vrcp.pop %v6545
      %v6547 = vmul.f32 %v6545, %v6546
      %v6548 = vsub.f32 1.0, %v6547
      %v6549 = vmul.f32 %v6546, %v6548
      %v6550 = vadd.f32 %v6546, %v6549
      %vm6551 = vweird.f32 %v6545
      %vm6552 = vweird.f32 %v6546
      %vm6553 = vmor %vm6551, %vm6552
      %v6554 = vsel %vm6553, %v6546, %v6550
      %v6555 = vand.u32 2147483647, %v6545
      %vm6556 = vcmp.eq.f32.partialorder %v6555, 8.507059e+37
      %v6557 = vand.u32 %v6545, 2147483648
      %v6558 = vor.u32 1.1754944e-38, %v6557
      %v6559 = vsel %vm6556, %v6558, %v6554
      %v6560 = vmul.f32 %v6535, %v6559
      %v6561 = vmin.f32 %v6560, 1.0
      %v6562 = vmax.f32 %v6561, -1.0
      %v6563 = vmul.f32 %v6508, %v6508
      %v6564 = vmin.f32 16.0, %v6563
      %v6565 = vmul.f32 %v6564, 2.1237322e-06
      %v6566 = vadd.f32 %v6565, 0.00028619796
      %v6567 = vmul.f32 %v6564, %v6566
      %v6568 = vadd.f32 %v6567, 0.0036580483
      %v6569 = vmul.f32 %v6564, %v6568
      %v6570 = vadd.f32 %v6569, 0.05243302
      %v6571 = vmul.f32 %v6564, %v6570
      %v6572 = vadd.f32 %v6571, 0.18741608
      %v6573 = vmul.f32 %v6564, %v6572
      %v6574 = vadd.f32 %v6573, 1.1283791
      %v6575 = vmul.f32 %v6508, %v6574
      %v6576 = vmul.f32 %v6564, 3.8918573e-05
      %v6577 = vadd.f32 %v6576, 0.001143296
      %v6578 = vmul.f32 %v6564, %v6577
      %v6579 = vadd.f32 %v6578, 0.014752088
      %v6580 = vmul.f32 %v6564, %v6579
      %v6581 = vadd.f32 %v6580, 0.112945676
      %v6582 = vmul.f32 %v6564, %v6581
      %v6583 = vadd.f32 %v6582, 0.4994258
      %v6584 = vmul.f32 %v6564, %v6583
      %v6585 = vadd.f32 %v6584, 1.0
      %v6586 = vrcp.pop %v6585
      %v6587 = vmul.f32 %v6585, %v6586
      %v6588 = vsub.f32 1.0, %v6587
      %v6589 = vmul.f32 %v6586, %v6588
      %v6590 = vadd.f32 %v6586, %v6589
      %vm6591 = vweird.f32 %v6585
      %vm6592 = vweird.f32 %v6586
      %vm6593 = vmor %vm6591, %vm6592
      %v6594 = vsel %vm6593, %v6586, %v6590
      %v6595 = vand.u32 2147483647, %v6585
      %vm6596 = vcmp.eq.f32.partialorder %v6595, 8.507059e+37
      %v6597 = vand.u32 %v6585, 2147483648
      %v6598 = vor.u32 1.1754944e-38, %v6597
      %v6599 = vsel %vm6596, %v6598, %v6594
      %v6600 = vmul.f32 %v6575, %v6599
      %v6601 = vmin.f32 %v6600, 1.0
      %v6602 = vmax.f32 %v6601, -1.0
      %v6603 = vmul.f32 %v6509, %v6509
      %v6604 = vmin.f32 16.0, %v6603
      %v6605 = vmul.f32 %v6604, 2.1237322e-06
      %v6606 = vadd.f32 %v6605, 0.00028619796
      %v6607 = vmul.f32 %v6604, %v6606
      %v6608 = vadd.f32 %v6607, 0.0036580483
      %v6609 = vmul.f32 %v6604, %v6608
      %v6610 = vadd.f32 %v6609, 0.05243302
      %v6611 = vmul.f32 %v6604, %v6610
      %v6612 = vadd.f32 %v6611, 0.18741608
      %v6613 = vmul.f32 %v6604, %v6612
      %v6614 = vadd.f32 %v6613, 1.1283791
      %v6615 = vmul.f32 %v6509, %v6614
      %v6616 = vmul.f32 %v6604, 3.8918573e-05
      %v6617 = vadd.f32 %v6616, 0.001143296
      %v6618 = vmul.f32 %v6604, %v6617
      %v6619 = vadd.f32 %v6618, 0.014752088
      %v6620 = vmul.f32 %v6604, %v6619
      %v6621 = vadd.f32 %v6620, 0.112945676
      %v6622 = vmul.f32 %v6604, %v6621
      %v6623 = vadd.f32 %v6622, 0.4994258
      %v6624 = vmul.f32 %v6604, %v6623
      %v6625 = vadd.f32 %v6624, 1.0
      %v6626 = vrcp.pop %v6625
      %v6627 = vmul.f32 %v6625, %v6626
      %v6628 = vsub.f32 1.0, %v6627
      %v6629 = vmul.f32 %v6626, %v6628
      %v6630 = vadd.f32 %v6626, %v6629
      %vm6631 = vweird.f32 %v6625
      %vm6632 = vweird.f32 %v6626
      %vm6633 = vmor %vm6631, %vm6632
      %v6634 = vsel %vm6633, %v6626, %v6630
      %v6635 = vand.u32 2147483647, %v6625
      %vm6636 = vcmp.eq.f32.partialorder %v6635, 8.507059e+37
      %v6637 = vand.u32 %v6625, 2147483648
      %v6638 = vor.u32 1.1754944e-38, %v6637
      %v6639 = vsel %vm6636, %v6638, %v6634
      %v6640 = vmul.f32 %v6615, %v6639
      %v6641 = vmin.f32 %v6640, 1.0
      %v6642 = vmax.f32 %v6641, -1.0
      %v6643 = vmul.f32 %v6510, %v6510
      %v6644 = vmin.f32 16.0, %v6643
      %v6645 = vmul.f32 %v6644, 2.1237322e-06
      %v6646 = vadd.f32 %v6645, 0.00028619796
      %v6647 = vmul.f32 %v6644, %v6646
      %v6648 = vadd.f32 %v6647, 0.0036580483
      %v6649 = vmul.f32 %v6644, %v6648
      %v6650 = vadd.f32 %v6649, 0.05243302
      %v6651 = vmul.f32 %v6644, %v6650
      %v6652 = vadd.f32 %v6651, 0.18741608
      %v6653 = vmul.f32 %v6644, %v6652
      %v6654 = vadd.f32 %v6653, 1.1283791
      %v6655 = vmul.f32 %v6510, %v6654
      %v6656 = vmul.f32 %v6644, 3.8918573e-05
      %v6657 = vadd.f32 %v6656, 0.001143296
      %v6658 = vmul.f32 %v6644, %v6657
      %v6659 = vadd.f32 %v6658, 0.014752088
      %v6660 = vmul.f32 %v6644, %v6659
      %v6661 = vadd.f32 %v6660, 0.112945676
      %v6662 = vmul.f32 %v6644, %v6661
      %v6663 = vadd.f32 %v6662, 0.4994258
      %v6664 = vmul.f32 %v6644, %v6663
      %v6665 = vadd.f32 %v6664, 1.0
      %v6666 = vrcp.pop %v6665
      %v6667 = vmul.f32 %v6665, %v6666
      %v6668 = vsub.f32 1.0, %v6667
      %v6669 = vmul.f32 %v6666, %v6668
      %v6670 = vadd.f32 %v6666, %v6669
      %vm6671 = vweird.f32 %v6665
      %vm6672 = vweird.f32 %v6666
      %vm6673 = vmor %vm6671, %vm6672
      %v6674 = vsel %vm6673, %v6666, %v6670
      %v6675 = vand.u32 2147483647, %v6665
      %vm6676 = vcmp.eq.f32.partialorder %v6675, 8.507059e+37
      %v6677 = vand.u32 %v6665, 2147483648
      %v6678 = vor.u32 1.1754944e-38, %v6677
      %v6679 = vsel %vm6676, %v6678, %v6674
      %v6680 = vmul.f32 %v6655, %v6679
      %v6681 = vmin.f32 %v6680, 1.0
      %v6682 = vmax.f32 %v6681, -1.0
      %v6683 = vmul.f32 %v6511, %v6511
      %v6684 = vmin.f32 16.0, %v6683
      %v6685 = vmul.f32 %v6684, 2.1237322e-06
      %v6686 = vadd.f32 %v6685, 0.00028619796
      %v6687 = vmul.f32 %v6684, %v6686
      %v6688 = vadd.f32 %v6687, 0.0036580483
      %v6689 = vmul.f32 %v6684, %v6688
      %v6690 = vadd.f32 %v6689, 0.05243302
      %v6691 = vmul.f32 %v6684, %v6690
      %v6692 = vadd.f32 %v6691, 0.18741608
      %v6693 = vmul.f32 %v6684, %v6692
      %v6694 = vadd.f32 %v6693, 1.1283791
      %v6695 = vmul.f32 %v6511, %v6694
      %v6696 = vmul.f32 %v6684, 3.8918573e-05
      %v6697 = vadd.f32 %v6696, 0.001143296
      %v6698 = vmul.f32 %v6684, %v6697
      %v6699 = vadd.f32 %v6698, 0.014752088
      %v6700 = vmul.f32 %v6684, %v6699
      %v6701 = vadd.f32 %v6700, 0.112945676
      %v6702 = vmul.f32 %v6684, %v6701
      %v6703 = vadd.f32 %v6702, 0.4994258
      %v6704 = vmul.f32 %v6684, %v6703
      %v6705 = vadd.f32 %v6704, 1.0
      %v6706 = vrcp.pop %v6705
      %v6707 = vmul.f32 %v6705, %v6706
      %v6708 = vsub.f32 1.0, %v6707
      %v6709 = vmul.f32 %v6706, %v6708
      %v6710 = vadd.f32 %v6706, %v6709
      %vm6711 = vweird.f32 %v6705
      %vm6712 = vweird.f32 %v6706
      %vm6713 = vmor %vm6711, %vm6712
      %v6714 = vsel %vm6713, %v6706, %v6710
      %v6715 = vand.u32 2147483647, %v6705
      %vm6716 = vcmp.eq.f32.partialorder %v6715, 8.507059e+37
      %v6717 = vand.u32 %v6705, 2147483648
      %v6718 = vor.u32 1.1754944e-38, %v6717
      %v6719 = vsel %vm6716, %v6718, %v6714
      %v6720 = vmul.f32 %v6695, %v6719
      %v6721 = vmin.f32 %v6720, 1.0
      %v6722 = vmax.f32 %v6721, -1.0
      %v6723 = vmul.f32 %v6512, %v6512
      %v6724 = vmin.f32 16.0, %v6723
      %v6725 = vmul.f32 %v6724, 2.1237322e-06
      %v6726 = vadd.f32 %v6725, 0.00028619796
      %v6727 = vmul.f32 %v6724, %v6726
      %v6728 = vadd.f32 %v6727, 0.0036580483
      %v6729 = vmul.f32 %v6724, %v6728
      %v6730 = vadd.f32 %v6729, 0.05243302
      %v6731 = vmul.f32 %v6724, %v6730
      %v6732 = vadd.f32 %v6731, 0.18741608
      %v6733 = vmul.f32 %v6724, %v6732
      %v6734 = vadd.f32 %v6733, 1.1283791
      %v6735 = vmul.f32 %v6512, %v6734
      %v6736 = vmul.f32 %v6724, 3.8918573e-05
      %v6737 = vadd.f32 %v6736, 0.001143296
      %v6738 = vmul.f32 %v6724, %v6737
      %v6739 = vadd.f32 %v6738, 0.014752088
      %v6740 = vmul.f32 %v6724, %v6739
      %v6741 = vadd.f32 %v6740, 0.112945676
      %v6742 = vmul.f32 %v6724, %v6741
      %v6743 = vadd.f32 %v6742, 0.4994258
      %v6744 = vmul.f32 %v6724, %v6743
      %v6745 = vadd.f32 %v6744, 1.0
      %v6746 = vrcp.pop %v6745
      %v6747 = vmul.f32 %v6745, %v6746
      %v6748 = vsub.f32 1.0, %v6747
      %v6749 = vmul.f32 %v6746, %v6748
      %v6750 = vadd.f32 %v6746, %v6749
      %vm6751 = vweird.f32 %v6745
      %vm6752 = vweird.f32 %v6746
      %vm6753 = vmor %vm6751, %vm6752
      %v6754 = vsel %vm6753, %v6746, %v6750
      %v6755 = vand.u32 2147483647, %v6745
      %vm6756 = vcmp.eq.f32.partialorder %v6755, 8.507059e+37
      %v6757 = vand.u32 %v6745, 2147483648
      %v6758 = vor.u32 1.1754944e-38, %v6757
      %v6759 = vsel %vm6756, %v6758, %v6754
      %v6760 = vmul.f32 %v6735, %v6759
      %v6761 = vmin.f32 %v6760, 1.0
      %v6762 = vmax.f32 %v6761, -1.0
      %v6763 = vmul.f32 %v6513, %v6513
      %v6764 = vmin.f32 16.0, %v6763
      %v6765 = vmul.f32 %v6764, 2.1237322e-06
      %v6766 = vadd.f32 %v6765, 0.00028619796
      %v6767 = vmul.f32 %v6764, %v6766
      %v6768 = vadd.f32 %v6767, 0.0036580483
      %v6769 = vmul.f32 %v6764, %v6768
      %v6770 = vadd.f32 %v6769, 0.05243302
      %v6771 = vmul.f32 %v6764, %v6770
      %v6772 = vadd.f32 %v6771, 0.18741608
      %v6773 = vmul.f32 %v6764, %v6772
      %v6774 = vadd.f32 %v6773, 1.1283791
      %v6775 = vmul.f32 %v6513, %v6774
      %v6776 = vmul.f32 %v6764, 3.8918573e-05
      %v6777 = vadd.f32 %v6776, 0.001143296
      %v6778 = vmul.f32 %v6764, %v6777
      %v6779 = vadd.f32 %v6778, 0.014752088
      %v6780 = vmul.f32 %v6764, %v6779
      %v6781 = vadd.f32 %v6780, 0.112945676
      %v6782 = vmul.f32 %v6764, %v6781
      %v6783 = vadd.f32 %v6782, 0.4994258
      %v6784 = vmul.f32 %v6764, %v6783
      %v6785 = vadd.f32 %v6784, 1.0
      %v6786 = vrcp.pop %v6785
      %v6787 = vmul.f32 %v6785, %v6786
      %v6788 = vsub.f32 1.0, %v6787
      %v6789 = vmul.f32 %v6786, %v6788
      %v6790 = vadd.f32 %v6786, %v6789
      %vm6791 = vweird.f32 %v6785
      %vm6792 = vweird.f32 %v6786
      %vm6793 = vmor %vm6791, %vm6792
      %v6794 = vsel %vm6793, %v6786, %v6790
      %v6795 = vand.u32 2147483647, %v6785
      %vm6796 = vcmp.eq.f32.partialorder %v6795, 8.507059e+37
      %v6797 = vand.u32 %v6785, 2147483648
      %v6798 = vor.u32 1.1754944e-38, %v6797
      %v6799 = vsel %vm6796, %v6798, %v6794
      %v6800 = vmul.f32 %v6775, %v6799
      %v6801 = vmin.f32 %v6800, 1.0
      %v6802 = vmax.f32 %v6801, -1.0
      %v6803 = vmul.f32 %v6514, %v6514
      %v6804 = vmin.f32 16.0, %v6803
      %v6805 = vmul.f32 %v6804, 2.1237322e-06
      %v6806 = vadd.f32 %v6805, 0.00028619796
      %v6807 = vmul.f32 %v6804, %v6806
      %v6808 = vadd.f32 %v6807, 0.0036580483
      %v6809 = vmul.f32 %v6804, %v6808
      %v6810 = vadd.f32 %v6809, 0.05243302
      %v6811 = vmul.f32 %v6804, %v6810
      %v6812 = vadd.f32 %v6811, 0.18741608
      %v6813 = vmul.f32 %v6804, %v6812
      %v6814 = vadd.f32 %v6813, 1.1283791
      %v6815 = vmul.f32 %v6514, %v6814
      %v6816 = vmul.f32 %v6804, 3.8918573e-05
      %v6817 = vadd.f32 %v6816, 0.001143296
      %v6818 = vmul.f32 %v6804, %v6817
      %v6819 = vadd.f32 %v6818, 0.014752088
      %v6820 = vmul.f32 %v6804, %v6819
      %v6821 = vadd.f32 %v6820, 0.112945676
      %v6822 = vmul.f32 %v6804, %v6821
      %v6823 = vadd.f32 %v6822, 0.4994258
      %v6824 = vmul.f32 %v6804, %v6823
      %v6825 = vadd.f32 %v6824, 1.0
      %v6826 = vrcp.pop %v6825
      %v6827 = vmul.f32 %v6825, %v6826
      %v6828 = vsub.f32 1.0, %v6827
      %v6829 = vmul.f32 %v6826, %v6828
      %v6830 = vadd.f32 %v6826, %v6829
      %vm6831 = vweird.f32 %v6825
      %vm6832 = vweird.f32 %v6826
      %vm6833 = vmor %vm6831, %vm6832
      %v6834 = vsel %vm6833, %v6826, %v6830
      %v6835 = vand.u32 2147483647, %v6825
      %vm6836 = vcmp.eq.f32.partialorder %v6835, 8.507059e+37
      %v6837 = vand.u32 %v6825, 2147483648
      %v6838 = vor.u32 1.1754944e-38, %v6837
      %v6839 = vsel %vm6836, %v6838, %v6834
      %v6840 = vmul.f32 %v6815, %v6839
      %v6841 = vmin.f32 %v6840, 1.0
      %v6842 = vmax.f32 %v6841, -1.0
      %v6843 = vmul.f32 %v6515, %v6515
      %v6844 = vmin.f32 16.0, %v6843
      %v6845 = vmul.f32 %v6844, 2.1237322e-06
      %v6846 = vadd.f32 %v6845, 0.00028619796
      %v6847 = vmul.f32 %v6844, %v6846
      %v6848 = vadd.f32 %v6847, 0.0036580483
      %v6849 = vmul.f32 %v6844, %v6848
      %v6850 = vadd.f32 %v6849, 0.05243302
      %v6851 = vmul.f32 %v6844, %v6850
      %v6852 = vadd.f32 %v6851, 0.18741608
      %v6853 = vmul.f32 %v6844, %v6852
      %v6854 = vadd.f32 %v6853, 1.1283791
      %v6855 = vmul.f32 %v6515, %v6854
      %v6856 = vmul.f32 %v6844, 3.8918573e-05
      %v6857 = vadd.f32 %v6856, 0.001143296
      %v6858 = vmul.f32 %v6844, %v6857
      %v6859 = vadd.f32 %v6858, 0.014752088
      %v6860 = vmul.f32 %v6844, %v6859
      %v6861 = vadd.f32 %v6860, 0.112945676
      %v6862 = vmul.f32 %v6844, %v6861
      %v6863 = vadd.f32 %v6862, 0.4994258
      %v6864 = vmul.f32 %v6844, %v6863
      %v6865 = vadd.f32 %v6864, 1.0
      %v6866 = vrcp.pop %v6865
      %v6867 = vmul.f32 %v6865, %v6866
      %v6868 = vsub.f32 1.0, %v6867
      %v6869 = vmul.f32 %v6866, %v6868
      %v6870 = vadd.f32 %v6866, %v6869
      %vm6871 = vweird.f32 %v6865
      %vm6872 = vweird.f32 %v6866
      %vm6873 = vmor %vm6871, %vm6872
      %v6874 = vsel %vm6873, %v6866, %v6870
      %v6875 = vand.u32 2147483647, %v6865
      %vm6876 = vcmp.eq.f32.partialorder %v6875, 8.507059e+37
      %v6877 = vand.u32 %v6865, 2147483648
      %v6878 = vor.u32 1.1754944e-38, %v6877
      %v6879 = vsel %vm6876, %v6878, %v6874
      %v6880 = vmul.f32 %v6855, %v6879
      %v6881 = vmin.f32 %v6880, 1.0
      %v6882 = vmax.f32 %v6881, -1.0
      %v6883 = vmul.f32 %v6516, %v6516
      %v6884 = vmin.f32 16.0, %v6883
      %v6885 = vmul.f32 %v6884, 2.1237322e-06
      %v6886 = vadd.f32 %v6885, 0.00028619796
      %v6887 = vmul.f32 %v6884, %v6886
      %v6888 = vadd.f32 %v6887, 0.0036580483
      %v6889 = vmul.f32 %v6884, %v6888
      %v6890 = vadd.f32 %v6889, 0.05243302
      %v6891 = vmul.f32 %v6884, %v6890
      %v6892 = vadd.f32 %v6891, 0.18741608
      %v6893 = vmul.f32 %v6884, %v6892
      %v6894 = vadd.f32 %v6893, 1.1283791
      %v6895 = vmul.f32 %v6516, %v6894
      %v6896 = vmul.f32 %v6884, 3.8918573e-05
      %v6897 = vadd.f32 %v6896, 0.001143296
      %v6898 = vmul.f32 %v6884, %v6897
      %v6899 = vadd.f32 %v6898, 0.014752088
      %v6900 = vmul.f32 %v6884, %v6899
      %v6901 = vadd.f32 %v6900, 0.112945676
      %v6902 = vmul.f32 %v6884, %v6901
      %v6903 = vadd.f32 %v6902, 0.4994258
      %v6904 = vmul.f32 %v6884, %v6903
      %v6905 = vadd.f32 %v6904, 1.0
      %v6906 = vrcp.pop %v6905
      %v6907 = vmul.f32 %v6905, %v6906
      %v6908 = vsub.f32 1.0, %v6907
      %v6909 = vmul.f32 %v6906, %v6908
      %v6910 = vadd.f32 %v6906, %v6909
      %vm6911 = vweird.f32 %v6905
      %vm6912 = vweird.f32 %v6906
      %vm6913 = vmor %vm6911, %vm6912
      %v6914 = vsel %vm6913, %v6906, %v6910
      %v6915 = vand.u32 2147483647, %v6905
      %vm6916 = vcmp.eq.f32.partialorder %v6915, 8.507059e+37
      %v6917 = vand.u32 %v6905, 2147483648
      %v6918 = vor.u32 1.1754944e-38, %v6917
      %v6919 = vsel %vm6916, %v6918, %v6914
      %v6920 = vmul.f32 %v6895, %v6919
      %v6921 = vmin.f32 %v6920, 1.0
      %v6922 = vmax.f32 %v6921, -1.0
      %v6923 = vmul.f32 %v6517, %v6517
      %v6924 = vmin.f32 16.0, %v6923
      %v6925 = vmul.f32 %v6924, 2.1237322e-06
      %v6926 = vadd.f32 %v6925, 0.00028619796
      %v6927 = vmul.f32 %v6924, %v6926
      %v6928 = vadd.f32 %v6927, 0.0036580483
      %v6929 = vmul.f32 %v6924, %v6928
      %v6930 = vadd.f32 %v6929, 0.05243302
      %v6931 = vmul.f32 %v6924, %v6930
      %v6932 = vadd.f32 %v6931, 0.18741608
      %v6933 = vmul.f32 %v6924, %v6932
      %v6934 = vadd.f32 %v6933, 1.1283791
      %v6935 = vmul.f32 %v6517, %v6934
      %v6936 = vmul.f32 %v6924, 3.8918573e-05
      %v6937 = vadd.f32 %v6936, 0.001143296
      %v6938 = vmul.f32 %v6924, %v6937
      %v6939 = vadd.f32 %v6938, 0.014752088
      %v6940 = vmul.f32 %v6924, %v6939
      %v6941 = vadd.f32 %v6940, 0.112945676
      %v6942 = vmul.f32 %v6924, %v6941
      %v6943 = vadd.f32 %v6942, 0.4994258
      %v6944 = vmul.f32 %v6924, %v6943
      %v6945 = vadd.f32 %v6944, 1.0
      %v6946 = vrcp.pop %v6945
      %v6947 = vmul.f32 %v6945, %v6946
      %v6948 = vsub.f32 1.0, %v6947
      %v6949 = vmul.f32 %v6946, %v6948
      %v6950 = vadd.f32 %v6946, %v6949
      %vm6951 = vweird.f32 %v6945
      %vm6952 = vweird.f32 %v6946
      %vm6953 = vmor %vm6951, %vm6952
      %v6954 = vsel %vm6953, %v6946, %v6950
      %v6955 = vand.u32 2147483647, %v6945
      %vm6956 = vcmp.eq.f32.partialorder %v6955, 8.507059e+37
      %v6957 = vand.u32 %v6945, 2147483648
      %v6958 = vor.u32 1.1754944e-38, %v6957
      %v6959 = vsel %vm6956, %v6958, %v6954
      %v6960 = vmul.f32 %v6935, %v6959
      %v6961 = vmin.f32 %v6960, 1.0
      %v6962 = vmax.f32 %v6961, -1.0
      %v6963 = vmul.f32 %v6518, %v6518
      %v6964 = vmin.f32 16.0, %v6963
      %v6965 = vmul.f32 %v6964, 2.1237322e-06
      %v6966 = vadd.f32 %v6965, 0.00028619796
      %v6967 = vmul.f32 %v6964, %v6966
      %v6968 = vadd.f32 %v6967, 0.0036580483
      %v6969 = vmul.f32 %v6964, %v6968
      %v6970 = vadd.f32 %v6969, 0.05243302
      %v6971 = vmul.f32 %v6964, %v6970
      %v6972 = vadd.f32 %v6971, 0.18741608
      %v6973 = vmul.f32 %v6964, %v6972
      %v6974 = vadd.f32 %v6973, 1.1283791
      %v6975 = vmul.f32 %v6518, %v6974
      %v6976 = vmul.f32 %v6964, 3.8918573e-05
      %v6977 = vadd.f32 %v6976, 0.001143296
      %v6978 = vmul.f32 %v6964, %v6977
      %v6979 = vadd.f32 %v6978, 0.014752088
      %v6980 = vmul.f32 %v6964, %v6979
      %v6981 = vadd.f32 %v6980, 0.112945676
      %v6982 = vmul.f32 %v6964, %v6981
      %v6983 = vadd.f32 %v6982, 0.4994258
      %v6984 = vmul.f32 %v6964, %v6983
      %v6985 = vadd.f32 %v6984, 1.0
      %v6986 = vrcp.pop %v6985
      %v6987 = vmul.f32 %v6985, %v6986
      %v6988 = vsub.f32 1.0, %v6987
      %v6989 = vmul.f32 %v6986, %v6988
      %v6990 = vadd.f32 %v6986, %v6989
      %vm6991 = vweird.f32 %v6985
      %vm6992 = vweird.f32 %v6986
      %vm6993 = vmor %vm6991, %vm6992
      %v6994 = vsel %vm6993, %v6986, %v6990
      %v6995 = vand.u32 2147483647, %v6985
      %vm6996 = vcmp.eq.f32.partialorder %v6995, 8.507059e+37
      %v6997 = vand.u32 %v6985, 2147483648
      %v6998 = vor.u32 1.1754944e-38, %v6997
      %v6999 = vsel %vm6996, %v6998, %v6994
      %v7000 = vmul.f32 %v6975, %v6999
      %v7001 = vmin.f32 %v7000, 1.0
      %v7002 = vmax.f32 %v7001, -1.0
      %v7003 = vmul.f32 %v6519, %v6519
      %v7004 = vmin.f32 16.0, %v7003
      %v7005 = vmul.f32 %v7004, 2.1237322e-06
      %v7006 = vadd.f32 %v7005, 0.00028619796
      %v7007 = vmul.f32 %v7004, %v7006
      %v7008 = vadd.f32 %v7007, 0.0036580483
      %v7009 = vmul.f32 %v7004, %v7008
      %v7010 = vadd.f32 %v7009, 0.05243302
      %v7011 = vmul.f32 %v7004, %v7010
      %v7012 = vadd.f32 %v7011, 0.18741608
      %v7013 = vmul.f32 %v7004, %v7012
      %v7014 = vadd.f32 %v7013, 1.1283791
      %v7015 = vmul.f32 %v6519, %v7014
      %v7016 = vmul.f32 %v7004, 3.8918573e-05
      %v7017 = vadd.f32 %v7016, 0.001143296
      %v7018 = vmul.f32 %v7004, %v7017
      %v7019 = vadd.f32 %v7018, 0.014752088
      %v7020 = vmul.f32 %v7004, %v7019
      %v7021 = vadd.f32 %v7020, 0.112945676
      %v7022 = vmul.f32 %v7004, %v7021
      %v7023 = vadd.f32 %v7022, 0.4994258
      %v7024 = vmul.f32 %v7004, %v7023
      %v7025 = vadd.f32 %v7024, 1.0
      %v7026 = vrcp.pop %v7025
      %v7027 = vmul.f32 %v7025, %v7026
      %v7028 = vsub.f32 1.0, %v7027
      %v7029 = vmul.f32 %v7026, %v7028
      %v7030 = vadd.f32 %v7026, %v7029
      %vm7031 = vweird.f32 %v7025
      %vm7032 = vweird.f32 %v7026
      %vm7033 = vmor %vm7031, %vm7032
      %v7034 = vsel %vm7033, %v7026, %v7030
      %v7035 = vand.u32 2147483647, %v7025
      %vm7036 = vcmp.eq.f32.partialorder %v7035, 8.507059e+37
      %v7037 = vand.u32 %v7025, 2147483648
      %v7038 = vor.u32 1.1754944e-38, %v7037
      %v7039 = vsel %vm7036, %v7038, %v7034
      %v7040 = vmul.f32 %v7015, %v7039
      %v7041 = vmin.f32 %v7040, 1.0
      %v7042 = vmax.f32 %v7041, -1.0
      %v7043 = vmul.f32 %v6520, %v6520
      %v7044 = vmin.f32 16.0, %v7043
      %v7045 = vmul.f32 %v7044, 2.1237322e-06
      %v7046 = vadd.f32 %v7045, 0.00028619796
      %v7047 = vmul.f32 %v7044, %v7046
      %v7048 = vadd.f32 %v7047, 0.0036580483
      %v7049 = vmul.f32 %v7044, %v7048
      %v7050 = vadd.f32 %v7049, 0.05243302
      %v7051 = vmul.f32 %v7044, %v7050
      %v7052 = vadd.f32 %v7051, 0.18741608
      %v7053 = vmul.f32 %v7044, %v7052
      %v7054 = vadd.f32 %v7053, 1.1283791
      %v7055 = vmul.f32 %v6520, %v7054
      %v7056 = vmul.f32 %v7044, 3.8918573e-05
      %v7057 = vadd.f32 %v7056, 0.001143296
      %v7058 = vmul.f32 %v7044, %v7057
      %v7059 = vadd.f32 %v7058, 0.014752088
      %v7060 = vmul.f32 %v7044, %v7059
      %v7061 = vadd.f32 %v7060, 0.112945676
      %v7062 = vmul.f32 %v7044, %v7061
      %v7063 = vadd.f32 %v7062, 0.4994258
      %v7064 = vmul.f32 %v7044, %v7063
      %v7065 = vadd.f32 %v7064, 1.0
      %v7066 = vrcp.pop %v7065
      %v7067 = vmul.f32 %v7065, %v7066
      %v7068 = vsub.f32 1.0, %v7067
      %v7069 = vmul.f32 %v7066, %v7068
      %v7070 = vadd.f32 %v7066, %v7069
      %vm7071 = vweird.f32 %v7065
      %vm7072 = vweird.f32 %v7066
      %vm7073 = vmor %vm7071, %vm7072
      %v7074 = vsel %vm7073, %v7066, %v7070
      %v7075 = vand.u32 2147483647, %v7065
      %vm7076 = vcmp.eq.f32.partialorder %v7075, 8.507059e+37
      %v7077 = vand.u32 %v7065, 2147483648
      %v7078 = vor.u32 1.1754944e-38, %v7077
      %v7079 = vsel %vm7076, %v7078, %v7074
      %v7080 = vmul.f32 %v7055, %v7079
      %v7081 = vmin.f32 %v7080, 1.0
      %v7082 = vmax.f32 %v7081, -1.0
      %v7083 = vmul.f32 %v6521, %v6521
      %v7084 = vmin.f32 16.0, %v7083
      %v7085 = vmul.f32 %v7084, 2.1237322e-06
      %v7086 = vadd.f32 %v7085, 0.00028619796
      %v7087 = vmul.f32 %v7084, %v7086
      %v7088 = vadd.f32 %v7087, 0.0036580483
      %v7089 = vmul.f32 %v7084, %v7088
      %v7090 = vadd.f32 %v7089, 0.05243302
      %v7091 = vmul.f32 %v7084, %v7090
      %v7092 = vadd.f32 %v7091, 0.18741608
      %v7093 = vmul.f32 %v7084, %v7092
      %v7094 = vadd.f32 %v7093, 1.1283791
      %v7095 = vmul.f32 %v6521, %v7094
      %v7096 = vmul.f32 %v7084, 3.8918573e-05
      %v7097 = vadd.f32 %v7096, 0.001143296
      %v7098 = vmul.f32 %v7084, %v7097
      %v7099 = vadd.f32 %v7098, 0.014752088
      %v7100 = vmul.f32 %v7084, %v7099
      %v7101 = vadd.f32 %v7100, 0.112945676
      %v7102 = vmul.f32 %v7084, %v7101
      %v7103 = vadd.f32 %v7102, 0.4994258
      %v7104 = vmul.f32 %v7084, %v7103
      %v7105 = vadd.f32 %v7104, 1.0
      %v7106 = vrcp.pop %v7105
      %v7107 = vmul.f32 %v7105, %v7106
      %v7108 = vsub.f32 1.0, %v7107
      %v7109 = vmul.f32 %v7106, %v7108
      %v7110 = vadd.f32 %v7106, %v7109
      %vm7111 = vweird.f32 %v7105
      %vm7112 = vweird.f32 %v7106
      %vm7113 = vmor %vm7111, %vm7112
      %v7114 = vsel %vm7113, %v7106, %v7110
      %v7115 = vand.u32 2147483647, %v7105
      %vm7116 = vcmp.eq.f32.partialorder %v7115, 8.507059e+37
      %v7117 = vand.u32 %v7105, 2147483648
      %v7118 = vor.u32 1.1754944e-38, %v7117
      %v7119 = vsel %vm7116, %v7118, %v7114
      %v7120 = vmul.f32 %v7095, %v7119
      %v7121 = vmin.f32 %v7120, 1.0
      %v7122 = vmax.f32 %v7121, -1.0
      %v7123 = vmul.f32 %v6522, %v6522
      %v7124 = vmin.f32 16.0, %v7123
      %v7125 = vmul.f32 %v7124, 2.1237322e-06
      %v7126 = vadd.f32 %v7125, 0.00028619796
      %v7127 = vmul.f32 %v7124, %v7126
      %v7128 = vadd.f32 %v7127, 0.0036580483
      %v7129 = vmul.f32 %v7124, %v7128
      %v7130 = vadd.f32 %v7129, 0.05243302
      %v7131 = vmul.f32 %v7124, %v7130
      %v7132 = vadd.f32 %v7131, 0.18741608
      %v7133 = vmul.f32 %v7124, %v7132
      %v7134 = vadd.f32 %v7133, 1.1283791
      %v7135 = vmul.f32 %v6522, %v7134
      %v7136 = vmul.f32 %v7124, 3.8918573e-05
      %v7137 = vadd.f32 %v7136, 0.001143296
      %v7138 = vmul.f32 %v7124, %v7137
      %v7139 = vadd.f32 %v7138, 0.014752088
      %v7140 = vmul.f32 %v7124, %v7139
      %v7141 = vadd.f32 %v7140, 0.112945676
      %v7142 = vmul.f32 %v7124, %v7141
      %v7143 = vadd.f32 %v7142, 0.4994258
      %v7144 = vmul.f32 %v7124, %v7143
      %v7145 = vadd.f32 %v7144, 1.0
      %v7146 = vrcp.pop %v7145
      %v7147 = vmul.f32 %v7145, %v7146
      %v7148 = vsub.f32 1.0, %v7147
      %v7149 = vmul.f32 %v7146, %v7148
      %v7150 = vadd.f32 %v7146, %v7149
      %vm7151 = vweird.f32 %v7145
      %vm7152 = vweird.f32 %v7146
      %vm7153 = vmor %vm7151, %vm7152
      %v7154 = vsel %vm7153, %v7146, %v7150
      %v7155 = vand.u32 2147483647, %v7145
      %vm7156 = vcmp.eq.f32.partialorder %v7155, 8.507059e+37
      %v7157 = vand.u32 %v7145, 2147483648
      %v7158 = vor.u32 1.1754944e-38, %v7157
      %v7159 = vsel %vm7156, %v7158, %v7154
      %v7160 = vmul.f32 %v7135, %v7159
      %v7161 = vmin.f32 %v7160, 1.0
      %v7162 = vmax.f32 %v7161, -1.0
      %v7163 = vadd.f32 %v6562, 1.0
      %v7164 = vadd.f32 %v6602, 1.0
      %v7165 = vadd.f32 %v6642, 1.0
      %v7166 = vadd.f32 %v6682, 1.0
      %v7167 = vadd.f32 %v6722, 1.0
      %v7168 = vadd.f32 %v6762, 1.0
      %v7169 = vadd.f32 %v6802, 1.0
      %v7170 = vadd.f32 %v6842, 1.0
      %v7171 = vadd.f32 %v6882, 1.0
      %v7172 = vadd.f32 %v6922, 1.0
      %v7173 = vadd.f32 %v6962, 1.0
      %v7174 = vadd.f32 %v7002, 1.0
      %v7175 = vadd.f32 %v7042, 1.0
      %v7176 = vadd.f32 %v7082, 1.0
      %v7177 = vadd.f32 %v7122, 1.0
      %v7178 = vadd.f32 %v7162, 1.0
      %v7179 = vmul.f32 %v6491, %v7163
      %v7180 = vmul.f32 %v6492, %v7164
      %v7181 = vmul.f32 %v6493, %v7165
      %v7182 = vmul.f32 %v6494, %v7166
      %v7183 = vmul.f32 %v6495, %v7167
      %v7184 = vmul.f32 %v6496, %v7168
      %v7185 = vmul.f32 %v6497, %v7169
      %v7186 = vmul.f32 %v6498, %v7170
      %v7187 = vmul.f32 %v6499, %v7171
      %v7188 = vmul.f32 %v6500, %v7172
      %v7189 = vmul.f32 %v6501, %v7173
      %v7190 = vmul.f32 %v6502, %v7174
      %v7191 = vmul.f32 %v6503, %v7175
      %v7192 = vmul.f32 %v6504, %v7176
      %v7193 = vmul.f32 %v6505, %v7177
      %v7194 = vmul.f32 %v6506, %v7178
      %v7195 = vpack.c.bf16 %v7180, %v7179
      %v7196 = vpack.c.bf16 %v7182, %v7181
      %v7197 = vpack.c.bf16 %v7184, %v7183
      %v7198 = vpack.c.bf16 %v7186, %v7185
      %v7199 = vpack.c.bf16 %v7188, %v7187
      %v7200 = vpack.c.bf16 %v7190, %v7189
      %v7201 = vpack.c.bf16 %v7192, %v7191
      %v7202 = vpack.c.bf16 %v7194, %v7193
      %v7203 = vld [vmem:[%s7] sm:$0xf]
      %v7204 = vld [vmem:[%s7 + $0x4] sm:$0xf]
      %v7205 = vld [vmem:[%s7 + $0x8] sm:$0xf]
      %v7206 = vld [vmem:[%s7 + $0xc] sm:$0xf]
      %v7207 = vld [vmem:[%s7 + $0x10] sm:$0xf]
      %v7208 = vld [vmem:[%s7 + $0x14] sm:$0xf]
      %v7209 = vld [vmem:[%s7 + $0x18] sm:$0xf]
      %v7210 = vld [vmem:[%s7 + $0x1c] sm:$0xf]
      %v7211 = vld [vmem:[%s7 + $0x20] sm:$0xf]
      %v7212 = vld [vmem:[%s7 + $0x24] sm:$0xf]
      %v7213 = vld [vmem:[%s7 + $0x28] sm:$0xf]
      %v7214 = vld [vmem:[%s7 + $0x2c] sm:$0xf]
      %v7215 = vld [vmem:[%s7 + $0x30] sm:$0xf]
      %v7216 = vld [vmem:[%s7 + $0x34] sm:$0xf]
      %v7217 = vld [vmem:[%s7 + $0x38] sm:$0xf]
      %v7218 = vld [vmem:[%s7 + $0x3c] sm:$0xf]
      %v7219 = vld [vmem:[%s8] sm:$0x1]
      %v7221 = vperm.slane %v7219, 0
      %v7239 = vunpack.c.l.b16 %v7203
      %v7240 = vunpack.c.l.b16 %v7204
      %v7241 = vunpack.c.l.b16 %v7205
      %v7242 = vunpack.c.l.b16 %v7206
      %v7243 = vunpack.c.l.b16 %v7207
      %v7244 = vunpack.c.l.b16 %v7208
      %v7245 = vunpack.c.l.b16 %v7209
      %v7246 = vunpack.c.l.b16 %v7210
      %v7247 = vunpack.c.l.b16 %v7211
      %v7248 = vunpack.c.l.b16 %v7212
      %v7249 = vunpack.c.l.b16 %v7213
      %v7250 = vunpack.c.l.b16 %v7214
      %v7251 = vunpack.c.l.b16 %v7215
      %v7252 = vunpack.c.l.b16 %v7216
      %v7253 = vunpack.c.l.b16 %v7217
      %v7254 = vunpack.c.l.b16 %v7218
      %v7255 = vpack.c.b16 %v7240, %v7239
      %v7256 = vpack.c.b16 %v7242, %v7241
      %v7257 = vpack.c.b16 %v7244, %v7243
      %v7258 = vpack.c.b16 %v7246, %v7245
      %v7259 = vpack.c.b16 %v7248, %v7247
      %v7260 = vpack.c.b16 %v7250, %v7249
      %v7261 = vpack.c.b16 %v7252, %v7251
      %v7262 = vpack.c.b16 %v7254, %v7253
      %7271 = vmatpush.bf16.msra.mxu0 %v7262
      %7272 = vmatpush.bf16.msra.mxu0 %v7261
      %7273 = vmatpush.bf16.msra.mxu0 %v7260
      %7274 = vmatpush.bf16.msra.mxu0 %v7259
      %7275 = vmatpush.bf16.msra.mxu0 %v7258
      %7276 = vmatpush.bf16.msra.mxu0 %v7257
      %7277 = vmatpush.bf16.msra.mxu0 %v7256
      %7278 = vmatpush.bf16.msra.mxu0 %v7255
      %7279 = vmatmul.bf16.gmra.mxu0 %v7195
      %v7280 = vpop.f32.mrf.mxu0
      %v7281 = vadd.f32 %v7221, %v7280
      %v7282 = vpop.f32.mrf.mxu0
      %v7283 = vadd.f32 %v7221, %v7282
      %7284 = vmatmul.bf16.gmra.mxu0 %v7196
      %v7285 = vpop.f32.mrf.mxu0
      %v7286 = vadd.f32 %v7221, %v7285
      %v7287 = vpop.f32.mrf.mxu0
      %v7288 = vadd.f32 %v7221, %v7287
      %7289 = vmatmul.bf16.gmra.mxu0 %v7197
      %v7290 = vpop.f32.mrf.mxu0
      %v7291 = vadd.f32 %v7221, %v7290
      %v7292 = vpop.f32.mrf.mxu0
      %v7293 = vadd.f32 %v7221, %v7292
      %7294 = vmatmul.bf16.gmra.mxu0 %v7198
      %v7295 = vpop.f32.mrf.mxu0
      %v7296 = vadd.f32 %v7221, %v7295
      %v7297 = vpop.f32.mrf.mxu0
      %v7298 = vadd.f32 %v7221, %v7297
      %7299 = vmatmul.bf16.gmra.mxu0 %v7199
      %v7300 = vpop.f32.mrf.mxu0
      %v7301 = vadd.f32 %v7221, %v7300
      %v7302 = vpop.f32.mrf.mxu0
      %v7303 = vadd.f32 %v7221, %v7302
      %7304 = vmatmul.bf16.gmra.mxu0 %v7200
      %v7305 = vpop.f32.mrf.mxu0
      %v7306 = vadd.f32 %v7221, %v7305
      %v7307 = vpop.f32.mrf.mxu0
      %v7308 = vadd.f32 %v7221, %v7307
      %7309 = vmatmul.bf16.gmra.mxu0 %v7201
      %v7310 = vpop.f32.mrf.mxu0
      %v7311 = vadd.f32 %v7221, %v7310
      %v7312 = vpop.f32.mrf.mxu0
      %v7313 = vadd.f32 %v7221, %v7312
      %7314 = vmatmul.bf16.gmra.mxu0 %v7202
      %v7315 = vpop.f32.mrf.mxu0
      %v7316 = vadd.f32 %v7221, %v7315
      %v7317 = vpop.f32.mrf.mxu0
      %v7318 = vadd.f32 %v7221, %v7317
      %7319 = vdwg.mxu0
      %v7320 = vld [vmem:[%s9] sm:$0x1]
      %v7322 = vperm.slane %v7320, 0
      %v7324 = vmul.f32 %v7281, %v7322
      %v7325 = vmul.f32 %v7283, %v7322
      %v7326 = vmul.f32 %v7286, %v7322
      %v7327 = vmul.f32 %v7288, %v7322
      %v7328 = vmul.f32 %v7291, %v7322
      %v7329 = vmul.f32 %v7293, %v7322
      %v7330 = vmul.f32 %v7296, %v7322
      %v7331 = vmul.f32 %v7298, %v7322
      %v7332 = vmul.f32 %v7301, %v7322
      %v7333 = vmul.f32 %v7303, %v7322
      %v7334 = vmul.f32 %v7306, %v7322
      %v7335 = vmul.f32 %v7308, %v7322
      %v7336 = vmul.f32 %v7311, %v7322
      %v7337 = vmul.f32 %v7313, %v7322
      %v7338 = vmul.f32 %v7316, %v7322
      %v7339 = vmul.f32 %v7318, %v7322
      %v7364 = vrot.slane %v590, 3
      %v7365 = vrot.slane %v591, 3
      %v7366 = vsel %vm2606, %v7364, %v7365
      %v7367 = vrot.slane %v592, 3
      %v7368 = vsel %vm2606, %v7365, %v7367
      %v7369 = vrot.slane %v593, 3
      %v7370 = vrot.slane %v594, 3
      %v7371 = vsel %vm2606, %v7369, %v7370
      %v7372 = vrot.slane %v595, 3
      %v7373 = vsel %vm2606, %v7370, %v7372
      %v7374 = vrot.slane %v596, 3
      %v7375 = vrot.slane %v597, 3
      %v7376 = vsel %vm2606, %v7374, %v7375
      %v7377 = vrot.slane %v598, 3
      %v7378 = vsel %vm2606, %v7375, %v7377
      %v7379 = vrot.slane %v599, 3
      %v7380 = vrot.slane %v600, 3
      %v7381 = vsel %vm2606, %v7379, %v7380
      %v7382 = vrot.slane %v601, 3
      %v7383 = vsel %vm2606, %v7380, %v7382
      %v7384 = vrot.slane %v602, 3
      %v7385 = vrot.slane %v603, 3
      %v7386 = vsel %vm2606, %v7384, %v7385
      %v7387 = vrot.slane %v604, 3
      %v7388 = vsel %vm2606, %v7385, %v7387
      %v7389 = vrot.slane %v605, 3
      %v7390 = vrot.slane %v606, 3
      %v7391 = vsel %vm2606, %v7389, %v7390
      %v7392 = vrot.slane %v607, 3
      %v7393 = vsel %vm2606, %v7390, %v7392
      %v7394 = vrot.slane %v608, 3
      %v7395 = vrot.slane %v609, 3
      %v7396 = vsel %vm2606, %v7394, %v7395
      %v7397 = vrot.slane %v610, 3
      %v7398 = vsel %vm2606, %v7395, %v7397
      %v7399 = vrot.slane %v611, 3
      %v7400 = vrot.slane %v612, 3
      %v7401 = vsel %vm2606, %v7399, %v7400
      %v7402 = vrot.slane %v613, 3
      %v7403 = vsel %vm2606, %v7400, %v7402
      %v7420 = vadd.f32 %v7324, %v7366
      %v7421 = vadd.f32 %v7325, %v7368
      %v7422 = vadd.f32 %v7326, %v7371
      %v7423 = vadd.f32 %v7327, %v7373
      %v7424 = vadd.f32 %v7328, %v7376
      %v7425 = vadd.f32 %v7329, %v7378
      %v7426 = vadd.f32 %v7330, %v7381
      %v7427 = vadd.f32 %v7331, %v7383
      %v7428 = vadd.f32 %v7332, %v7386
      %v7429 = vadd.f32 %v7333, %v7388
      %v7430 = vadd.f32 %v7334, %v7391
      %v7431 = vadd.f32 %v7335, %v7393
      %v7432 = vadd.f32 %v7336, %v7396
      %v7433 = vadd.f32 %v7337, %v7398
      %v7434 = vadd.f32 %v7338, %v7401
      %v7435 = vadd.f32 %v7339, %v7403
      %7436 = vst [vmem:[%s337] sm:$0xff] %v7420
      %7437 = vst [vmem:[%s337 + $0x8] sm:$0xff] %v7421
      %7438 = vst [vmem:[%s337 + $0x10] sm:$0xff] %v7422
      %7439 = vst [vmem:[%s337 + $0x18] sm:$0xff] %v7423
      %7440 = vst [vmem:[%s337 + $0x20] sm:$0xff] %v7424
      %7441 = vst [vmem:[%s337 + $0x28] sm:$0xff] %v7425
      %7442 = vst [vmem:[%s337 + $0x30] sm:$0xff] %v7426
      %7443 = vst [vmem:[%s337 + $0x38] sm:$0xff] %v7427
      %7444 = vst [vmem:[%s337 + $0x40] sm:$0xff] %v7428
      %7445 = vst [vmem:[%s337 + $0x48] sm:$0xff] %v7429
      %7446 = vst [vmem:[%s337 + $0x50] sm:$0xff] %v7430
      %7447 = vst [vmem:[%s337 + $0x58] sm:$0xff] %v7431
      %7448 = vst [vmem:[%s337 + $0x60] sm:$0xff] %v7432
      %7449 = vst [vmem:[%s337 + $0x68] sm:$0xff] %v7433
      %7450 = vst [vmem:[%s337 + $0x70] sm:$0xff] %v7434
      %7451 = vst [vmem:[%s337 + $0x78] sm:$0xff] %v7435
      %s7452 = smul.u32 8, %s26
      %p7453 = scmp.lt.s32.totalorder %s25, 1
      %s7454 = scalar_select %p7453, %s25, 1
      %p7455 = scmp.lt.s32.totalorder %s7452, 15
      %s7456 = scalar_select %p7455, %s7452, 15
      %s7457 = smul.addr %s7456, 2
      %s7458 = smul.addr %s7454, 32
      %s7459 = sadd.s32 %s7457, %s7458
      %s7460 = smul.addr %s7459, 8
      %s7461 = scalar_lea.vmem %s10, %s7460
      // Predicated region
      $region103: #{_convnext_block_impl.1} parent=55 // pred_check
        %p7462 = pneg %p242
      $region104: #{_convnext_block_impl.1} parent=55 // pred_check_branch
        %7464 = sbr.rel (%p7462) target = $region106
      $region105: #{_convnext_block_impl.1} parent=55 // pred_region
        %s7465 = smul.u32 8, %s26
      $region106: #{_convnext_block_impl.1} parent=55 // pred_fallthru
        _
    $region56: #{_convnext_block_impl.1} parent=5 // pred_fallthru
      _
    %p7466 = scmp.le.s32.totalorder 2, %s16
    // Predicated region
    $region107: #{_convnext_block_impl.1} parent=5 // pred_check
      %p7467 = pneg %p7466
    $region108: #{_convnext_block_impl.1} parent=5 // pred_check_branch
      %7469 = sbr.rel (%p7467) target = $region110
    $region109: #{_convnext_block_impl.1} parent=5 // pred_region
      %s7470 = ssub.s32 %s16, 2
      // Predicated region
      $region111: #{_convnext_block_impl.1} parent=109 // pred_check
        %p7471 = pneg %p248
      $region112: #{_convnext_block_impl.1} parent=109 // pred_check_branch
        %7473 = sbr.rel (%p7471) target = $region114
      $region113: #{_convnext_block_impl.1} parent=109 // pred_region
        %s7474 = smul.u32 8, %s28
        %p7475 = scmp.lt.s32.totalorder %s27, 1
        %s7476 = scalar_select %p7475, %s27, 1
        %p7477 = scmp.lt.s32.totalorder %s7474, 15
        %s7478 = scalar_select %p7477, %s7474, 15
        %s7479 = smul.addr %s7478, 2
        %s7480 = smul.addr %s7476, 32
        %s7481 = sadd.s32 %s7479, %s7480
        %s7482 = smul.addr %s7481, 8
        %s7483 = scalar_lea.vmem %s10, %s7482
      $region114: #{_convnext_block_impl.1} parent=109 // pred_fallthru
        _
    $region110: #{_convnext_block_impl.1} parent=5 // pred_fallthru
      _
  $region6: #{_convnext_block_impl.1} parent=0 // loop_footer
    %s20 = sadd.s32 1, %s16
  $region7: #{_convnext_block_impl.1} parent=0 // loop_footer_branch
    %15 = sbr.rel target = $region3
  $region8: #{_convnext_block_impl.1} parent=0 // loop_exit
    _
  %7484 = vsyncmov [#allocation3]
  %s7485 = vpop.sfrf %7484
  %p7486 = scmp.eq.s32.totalorder %s7485, 0
  %p7487 = pneg %p7486
  %7489 = shalt.err (%p7487)
  %s7490 = scalar_lea.sflag [#allocation3], 1
  %7491 = vsyncmov %s7490
  %s7492 = vpop.sfrf %7491
  %p7493 = scmp.eq.s32.totalorder %s7492, 0
  %p7494 = pneg %p7493
  %7496 = shalt.err (%p7494)

</llo_original>
